<compile_context>
chip_gen: v7x
topology: tpu7x:2x2x1
jax: 0.10.0
libtpu: 0.0.40
codegen_flags: <defaults>
</compile_context>

<pallas_src>
import functools

import numpy as np
import jax
import jax.numpy as jnp
from jax import lax
from jax.experimental import pallas as pl
from jax.experimental.pallas import tpu as pltpu


# Static (phase, dy, dx, ky, kx) table for the stride-2 ConvTranspose sub-pixel
# decomposition: output pixel (2a+py, 2b+px) (phase = 2*py+px) accumulates
# input (a+dy, b+dx) through transposed-conv weight W_t[:, :, ky, kx].
_PHASE_TAPS = (
    (0, 0, 0, 1, 1),
    (1, 0, 1, 1, 0),
    (1, 0, 0, 1, 2),
    (2, 1, 0, 0, 1),
    (2, 0, 0, 2, 1),
    (3, 1, 1, 0, 0),
    (3, 1, 0, 0, 2),
    (3, 0, 1, 2, 0),
    (3, 0, 0, 2, 2),
)


def _decoder_kernel(H, W, Cf,
                    x_ref, w123_ref, b123_ref, g123_ref, be123_ref,
                    w4_ref, b4_ref, scat_ref, cmask_ref,
                    o_ref, a_ref, b_ref):
    f32 = jnp.float32
    Wp = W + 2                    # padded width == flat row stride
    M = H * Wp                    # full-width rows computed per conv
    POFF = Wp + 1                 # flat offset of pixel (1, 1) in the padded grid
    OUT_HW = (2 * H) * (2 * W)

    # ---- stage 0: zero both padded activation buffers, scatter input rows in.
    a_ref[...] = jnp.zeros_like(a_ref)
    b_ref[...] = jnp.zeros_like(b_ref)
    for y in range(H):
        a_ref[POFF + y * Wp: POFF + y * Wp + W, :] = x_ref[y * W:(y + 1) * W, :]

    valid = cmask_ref[...] != 0.0          # (M, 1) True on non wrap-around columns

    # ---- layers 1..3: 3x3 stride-1 deconv (conv w/ flipped weights) + inverse GDN
    src, dst = a_ref, b_ref
    for l in range(3):
        acc = jnp.zeros((M, Cf), f32)
        for ky in range(3):
            base = ky * Wp
            # three kx taps, concatenated along channels -> one K = 3*C matmul
            tap = jnp.concatenate(
                [src[base + kx: base + kx + M, :] for kx in range(3)], axis=1)
            acc = acc + jnp.dot(tap, w123_ref[l, ky],
                                preferred_element_type=f32)
        acc = acc + b123_ref[l]                                    # (1, Cf)
        # inverse GDN: y = x * sqrt(beta + x^2 @ gamma^T)
        nrm = jnp.dot(acc * acc, g123_ref[l],
                      preferred_element_type=f32) + be123_ref[l]
        acc = acc * jnp.sqrt(nrm)
        # mask wrap-around columns -> writes the zero border for the next layer
        dst[POFF:POFF + M, :] = jnp.where(valid, acc, 0.0)
        src, dst = dst, src
    # after 3 layers the padded activation lives in `src`

    # ---- layer 4: stride-2 ConvTranspose via 4 sub-pixel phases,
    #      assembled into a lane-dense (2, 2H*2W) NCHW-style block.
    p_acc = [jnp.zeros((2, M), f32) for _ in range(4)]
    for t, (ph, dy, dx, _ky, _kx) in enumerate(_PHASE_TAPS):
        base = (dy + 1) * Wp + (dx + 1)
        tap = src[base:base + M, :]                                 # (M, Cf)
        p_acc[ph] = p_acc[ph] + jnp.einsum(
            'oc,sc->os', w4_ref[t], tap, preferred_element_type=f32)

    out = jnp.zeros((2, OUT_HW), f32)
    for ph in range(4):
        out = out + jnp.dot(p_acc[ph], scat_ref[ph], preferred_element_type=f32)
    o_ref[...] = (out + b4_ref[...]).astype(o_ref.dtype)


def _pack_params(params, H, W):
    """PyTorch-layout Balle2Decoder params -> packed kernel inputs."""
    Cl, Cf = params[0]['w_t'].shape[0], params[0]['w_t'].shape[1]
    # TODO(synk): support last_channel_num != num_filter (would need per-layer
    # weight inputs instead of the stacked (3, 3, 3C, C) slab).
    assert Cl == Cf, "packed kernel assumes last_channel_num == num_filter"

    w123, b123, g123, be123 = [], [], [], []
    for i in range(3):
        w_t = params[i]['w_t']                                     # (Cin, Cout, 3, 3)
        # deconv(s=1, p=1)  ==  conv(p=1) with spatially flipped weights
        wc = jnp.transpose(w_t[:, :, ::-1, ::-1], (2, 3, 0, 1))    # (ky, kx, Cin, Cout)
        w123.append(wc.reshape(3, 3 * Cl, Cf))                     # pack kx into K
        b123.append(params[i]['b'].reshape(1, Cf))
        g123.append(jnp.transpose(params[i]['gamma']))             # gamma^T
        be123.append(params[i]['beta'].reshape(1, Cf))
    w123, b123 = jnp.stack(w123), jnp.stack(b123)
    g123, be123 = jnp.stack(g123), jnp.stack(be123)

    w4_t = params[3]['w_t']                                        # (Cf, 2, 3, 3)
    w4 = jnp.stack([jnp.transpose(w4_t[:, :, ky, kx])              # (2, Cf)
                    for (_ph, _dy, _dx, ky, kx) in _PHASE_TAPS])
    b4 = params[3]['b'].reshape(2, 1)

    # host-side constants: wrap-around column mask + sub-pixel scatter matrices
    Wp = W + 2
    M = H * Wp
    cmask = np.zeros((M, 1), np.float32)
    scat = np.zeros((4, M, 4 * H * W), np.float32)
    for s in range(M):
        a, b = s // Wp, s % Wp
        if b < W:
            cmask[s, 0] = 1.0
            for ph in range(4):
                py, px = ph // 2, ph % 2
                scat[ph, s, (2 * a + py) * (2 * W) + (2 * b + px)] = 1.0
    return w123, b123, g123, be123, w4, b4, jnp.asarray(scat), jnp.asarray(cmask)


def balle2_decoder(x_nchw, params):
    N, C, H, W = x_nchw.shape
    Cf = params[0]['w_t'].shape[1]
    (w123, b123, g123, be123, w4, b4, scat, cmask) = _pack_params(params, H, W)

    Wp = W + 2
    M = H * Wp
    LBUF = ((M + 2 * Wp + 2 + 7) // 8) * 8        # tap reads reach M-1 + 2*Wp + 2
    OUT_HW = 4 * H * W

    # only non-fused XLA op: tiny NCHW -> (HW, C) relayout of the latent input
    x_hwc = jnp.transpose(x_nchw, (0, 2, 3, 1)).reshape(N, H * W, C)

    kernel = functools.partial(_decoder_kernel, H, W, Cf)
    out = pl.pallas_call(
        kernel,
        out_shape=jax.ShapeDtypeStruct((N, 2, OUT_HW), x_nchw.dtype),
        grid=(N,),
        in_specs=[
            pl.BlockSpec((None, H * W, C), lambda n: (n, 0, 0)),
            pl.BlockSpec(w123.shape, lambda n: (0, 0, 0, 0)),
            pl.BlockSpec(b123.shape, lambda n: (0, 0, 0)),
            pl.BlockSpec(g123.shape, lambda n: (0, 0, 0)),
            pl.BlockSpec(be123.shape, lambda n: (0, 0, 0)),
            pl.BlockSpec(w4.shape, lambda n: (0, 0, 0)),
            pl.BlockSpec(b4.shape, lambda n: (0, 0)),
            pl.BlockSpec(scat.shape, lambda n: (0, 0, 0)),
            pl.BlockSpec(cmask.shape, lambda n: (0, 0)),
        ],
        out_specs=pl.BlockSpec((None, 2, OUT_HW), lambda n: (n, 0, 0)),
        scratch_shapes=[
            pltpu.VMEM((LBUF, Cf), jnp.float32),
            pltpu.VMEM((LBUF, Cf), jnp.float32),
        ],
        compiler_params=pltpu.CompilerParams(
            dimension_semantics=("parallel",),
            vmem_limit_bytes=32 * 1024 * 1024),
    )(x_hwc, w123, b123, g123, be123, w4, b4, scat, cmask)

    return out.reshape(N, 2, 2 * H, 2 * W)          # free reshape: already NCHW order


def init_params(key, num_filter=128, last_channel=128):
    """Parameters in PyTorch layout: ConvTranspose2d weight (Cin, Cout, 3, 3)."""
    chans = [(last_channel, num_filter), (num_filter, num_filter),
             (num_filter, num_filter), (num_filter, 2)]
    params = []
    for i, (cin, cout) in enumerate(chans):
        key, kw, kb = jax.random.split(key, 3)
        w_t = jax.random.normal(kw, (cin, cout, 3, 3), jnp.float32) / jnp.sqrt(9.0 * cin)
        b = 0.01 * jax.random.normal(kb, (cout,), jnp.float32)
        layer = {'w_t': w_t, 'b': b}
        if i < 3:
            # GDN effective init: beta = 1, gamma = 0.1 * I
            layer['beta'] = jnp.ones((cout,), jnp.float32)
            layer['gamma'] = 0.1 * jnp.eye(cout, dtype=jnp.float32)
        params.append(layer)
    return params


def ref_decoder(x, params):
    """Pure-JAX reference of the PyTorch Balle2Decoder forward (NCHW)."""
    def deconv(h, w_t, b, stride, opad):
        k = jnp.transpose(w_t[:, :, ::-1, ::-1], (1, 0, 2, 3))     # OIHW
        y = lax.conv_general_dilated(
            h, k, window_strides=(1, 1),
            padding=((1, 1 + opad), (1, 1 + opad)),
            lhs_dilation=(stride, stride),
            dimension_numbers=("NCHW", "OIHW", "NCHW"),
            precision=lax.Precision.HIGHEST)
        return y + b.reshape(1, -1, 1, 1)

    def igdn(h, gamma, beta):
        nrm = jnp.einsum('ij,njhw->nihw', gamma, h * h,
                         precision=lax.Precision.HIGHEST) + beta.reshape(1, -1, 1, 1)
        return h * jnp.sqrt(nrm)

    h = x
    for i in range(3):
        h = deconv(h, params[i]['w_t'], params[i]['b'], 1, 0)
        h = igdn(h, params[i]['gamma'], params[i]['beta'])
    return deconv(h, params[3]['w_t'], params[3]['b'], 2, 1)


if __name__ == "__main__":
    key = jax.random.PRNGKey(0)
    key, kx = jax.random.split(key)
    N, C, H, W = 2, 128, 8, 8                      # last_channel_num = 128 (module default)
    x = jax.random.normal(kx, (N, C, H, W), jnp.float32)
    params = init_params(key, num_filter=128, last_channel=128)

    y = jax.block_until_ready(jax.jit(balle2_decoder)(x, params))
    assert y.shape == (N, 2, 2 * H, 2 * W), y.shape
    assert bool(jnp.all(jnp.isfinite(y)))

    # numerical check against a pure-JAX (XLA) reference of the torch module
    y_ref = jax.block_until_ready(jax.jit(ref_decoder)(x, params))
    np.testing.assert_allclose(np.asarray(y), np.asarray(y_ref), rtol=5e-2, atol=5e-2)

    print("KERNEL_OK")
</pallas_src>

<mosaic_0001>
module attributes {stable_mosaic.version = 11 : i64} {
  func.func @_decoder_kernel(%arg0: i32, %arg1: memref<1x64x128xf32, #tpu.memory_space<vmem>>, %arg2: memref<3x3x384x128xf32, #tpu.memory_space<vmem>>, %arg3: memref<3x1x128xf32, #tpu.memory_space<vmem>>, %arg4: memref<3x128x128xf32, #tpu.memory_space<vmem>>, %arg5: memref<3x1x128xf32, #tpu.memory_space<vmem>>, %arg6: memref<9x2x128xf32, #tpu.memory_space<vmem>>, %arg7: memref<2x1xf32, #tpu.memory_space<vmem>>, %arg8: memref<4x80x256xf32, #tpu.memory_space<vmem>>, %arg9: memref<80x1xf32, #tpu.memory_space<vmem>>, %arg10: memref<1x2x256xf32, #tpu.memory_space<vmem>>, %arg11: memref<104x128xf32, #tpu.memory_space<vmem>>, %arg12: memref<104x128xf32, #tpu.memory_space<vmem>>) attributes {dimension_semantics = [#tpu.dimension_semantics<parallel>], iteration_bounds = array<i64: 2>, scalar_prefetch = 0 : i64, scratch_operands = 2 : i64, tpu.core_type = #tpu.core_type<tc>, window_params = [{transform_indices = @transform_0, window_bounds = array<i64: 1, 64, 128>}, {pipeline_mode = #tpu.pipeline_mode<synchronous>, transform_indices = @transform_1, window_bounds = array<i64: 3, 3, 384, 128>}, {pipeline_mode = #tpu.pipeline_mode<synchronous>, transform_indices = @transform_2, window_bounds = array<i64: 3, 1, 128>}, {pipeline_mode = #tpu.pipeline_mode<synchronous>, transform_indices = @transform_3, window_bounds = array<i64: 3, 128, 128>}, {pipeline_mode = #tpu.pipeline_mode<synchronous>, transform_indices = @transform_4, window_bounds = array<i64: 3, 1, 128>}, {pipeline_mode = #tpu.pipeline_mode<synchronous>, transform_indices = @transform_5, window_bounds = array<i64: 9, 2, 128>}, {pipeline_mode = #tpu.pipeline_mode<synchronous>, transform_indices = @transform_6, window_bounds = array<i64: 2, 1>}, {pipeline_mode = #tpu.pipeline_mode<synchronous>, transform_indices = @transform_7, window_bounds = array<i64: 4, 80, 256>}, {pipeline_mode = #tpu.pipeline_mode<synchronous>, transform_indices = @transform_8, window_bounds = array<i64: 80, 1>}, {transform_indices = @transform_9, window_bounds = array<i64: 1, 2, 256>}]} {
    %cst = arith.constant 0.000000e+00 : f32
    %0 = vector.broadcast %cst : f32 to vector<104x128xf32>
    %c0 = arith.constant 0 : index
    %c0_0 = arith.constant 0 : index
    %1 = vector.load %arg11[%c0, %c0_0] : memref<104x128xf32, #tpu.memory_space<vmem>>, vector<104x128xf32>
    tpu.vector_store %arg11[%c0, %c0_0], %0 {strides = array<i32>} : memref<104x128xf32, #tpu.memory_space<vmem>>, vector<104x128xf32>,
    %cst_1 = arith.constant 0.000000e+00 : f32
    %2 = vector.broadcast %cst_1 : f32 to vector<104x128xf32>
    %c0_2 = arith.constant 0 : index
    %c0_3 = arith.constant 0 : index
    %3 = vector.load %arg12[%c0_2, %c0_3] : memref<104x128xf32, #tpu.memory_space<vmem>>, vector<104x128xf32>
    tpu.vector_store %arg12[%c0_2, %c0_3], %2 {strides = array<i32>} : memref<104x128xf32, #tpu.memory_space<vmem>>, vector<104x128xf32>,
    %c0_4 = arith.constant 0 : index
    %c0_5 = arith.constant 0 : index
    %c0_6 = arith.constant 0 : index
    %4 = vector.load %arg1[%c0_4, %c0_5, %c0_6] : memref<1x64x128xf32, #tpu.memory_space<vmem>>, vector<1x8x128xf32>
    %5 = vector.shape_cast %4 : vector<1x8x128xf32> to vector<8x128xf32>
    %c11 = arith.constant 11 : index
    %c0_7 = arith.constant 0 : index
    %6 = vector.load %arg11[%c11, %c0_7] : memref<104x128xf32, #tpu.memory_space<vmem>>, vector<8x128xf32>
    tpu.vector_store %arg11[%c11, %c0_7], %5 {strides = array<i32>} : memref<104x128xf32, #tpu.memory_space<vmem>>, vector<8x128xf32>,
    %c0_8 = arith.constant 0 : index
    %c8 = arith.constant 8 : index
    %c0_9 = arith.constant 0 : index
    %7 = vector.load %arg1[%c0_8, %c8, %c0_9] : memref<1x64x128xf32, #tpu.memory_space<vmem>>, vector<1x8x128xf32>
    %8 = vector.shape_cast %7 : vector<1x8x128xf32> to vector<8x128xf32>
    %c21 = arith.constant 21 : index
    %c0_10 = arith.constant 0 : index
    %9 = vector.load %arg11[%c21, %c0_10] : memref<104x128xf32, #tpu.memory_space<vmem>>, vector<8x128xf32>
    tpu.vector_store %arg11[%c21, %c0_10], %8 {strides = array<i32>} : memref<104x128xf32, #tpu.memory_space<vmem>>, vector<8x128xf32>,
    %c0_11 = arith.constant 0 : index
    %c16 = arith.constant 16 : index
    %c0_12 = arith.constant 0 : index
    %10 = vector.load %arg1[%c0_11, %c16, %c0_12] : memref<1x64x128xf32, #tpu.memory_space<vmem>>, vector<1x8x128xf32>
    %11 = vector.shape_cast %10 : vector<1x8x128xf32> to vector<8x128xf32>
    %c31 = arith.constant 31 : index
    %c0_13 = arith.constant 0 : index
    %12 = vector.load %arg11[%c31, %c0_13] : memref<104x128xf32, #tpu.memory_space<vmem>>, vector<8x128xf32>
    tpu.vector_store %arg11[%c31, %c0_13], %11 {strides = array<i32>} : memref<104x128xf32, #tpu.memory_space<vmem>>, vector<8x128xf32>,
    %c0_14 = arith.constant 0 : index
    %c24 = arith.constant 24 : index
    %c0_15 = arith.constant 0 : index
    %13 = vector.load %arg1[%c0_14, %c24, %c0_15] : memref<1x64x128xf32, #tpu.memory_space<vmem>>, vector<1x8x128xf32>
    %14 = vector.shape_cast %13 : vector<1x8x128xf32> to vector<8x128xf32>
    %c41 = arith.constant 41 : index
    %c0_16 = arith.constant 0 : index
    %15 = vector.load %arg11[%c41, %c0_16] : memref<104x128xf32, #tpu.memory_space<vmem>>, vector<8x128xf32>
    tpu.vector_store %arg11[%c41, %c0_16], %14 {strides = array<i32>} : memref<104x128xf32, #tpu.memory_space<vmem>>, vector<8x128xf32>,
    %c0_17 = arith.constant 0 : index
    %c32 = arith.constant 32 : index
    %c0_18 = arith.constant 0 : index
    %16 = vector.load %arg1[%c0_17, %c32, %c0_18] : memref<1x64x128xf32, #tpu.memory_space<vmem>>, vector<1x8x128xf32>
    %17 = vector.shape_cast %16 : vector<1x8x128xf32> to vector<8x128xf32>
    %c51 = arith.constant 51 : index
    %c0_19 = arith.constant 0 : index
    %18 = vector.load %arg11[%c51, %c0_19] : memref<104x128xf32, #tpu.memory_space<vmem>>, vector<8x128xf32>
    tpu.vector_store %arg11[%c51, %c0_19], %17 {strides = array<i32>} : memref<104x128xf32, #tpu.memory_space<vmem>>, vector<8x128xf32>,
    %c0_20 = arith.constant 0 : index
    %c40 = arith.constant 40 : index
    %c0_21 = arith.constant 0 : index
    %19 = vector.load %arg1[%c0_20, %c40, %c0_21] : memref<1x64x128xf32, #tpu.memory_space<vmem>>, vector<1x8x128xf32>
    %20 = vector.shape_cast %19 : vector<1x8x128xf32> to vector<8x128xf32>
    %c61 = arith.constant 61 : index
    %c0_22 = arith.constant 0 : index
    %21 = vector.load %arg11[%c61, %c0_22] : memref<104x128xf32, #tpu.memory_space<vmem>>, vector<8x128xf32>
    tpu.vector_store %arg11[%c61, %c0_22], %20 {strides = array<i32>} : memref<104x128xf32, #tpu.memory_space<vmem>>, vector<8x128xf32>,
    %c0_23 = arith.constant 0 : index
    %c48 = arith.constant 48 : index
    %c0_24 = arith.constant 0 : index
    %22 = vector.load %arg1[%c0_23, %c48, %c0_24] : memref<1x64x128xf32, #tpu.memory_space<vmem>>, vector<1x8x128xf32>
    %23 = vector.shape_cast %22 : vector<1x8x128xf32> to vector<8x128xf32>
    %c71 = arith.constant 71 : index
    %c0_25 = arith.constant 0 : index
    %24 = vector.load %arg11[%c71, %c0_25] : memref<104x128xf32, #tpu.memory_space<vmem>>, vector<8x128xf32>
    tpu.vector_store %arg11[%c71, %c0_25], %23 {strides = array<i32>} : memref<104x128xf32, #tpu.memory_space<vmem>>, vector<8x128xf32>,
    %c0_26 = arith.constant 0 : index
    %c56 = arith.constant 56 : index
    %c0_27 = arith.constant 0 : index
    %25 = vector.load %arg1[%c0_26, %c56, %c0_27] : memref<1x64x128xf32, #tpu.memory_space<vmem>>, vector<1x8x128xf32>
    %26 = vector.shape_cast %25 : vector<1x8x128xf32> to vector<8x128xf32>
    %c81 = arith.constant 81 : index
    %c0_28 = arith.constant 0 : index
    %27 = vector.load %arg11[%c81, %c0_28] : memref<104x128xf32, #tpu.memory_space<vmem>>, vector<8x128xf32>
    tpu.vector_store %arg11[%c81, %c0_28], %26 {strides = array<i32>} : memref<104x128xf32, #tpu.memory_space<vmem>>, vector<8x128xf32>,
    %c0_29 = arith.constant 0 : index
    %c0_30 = arith.constant 0 : index
    %28 = vector.load %arg9[%c0_29, %c0_30] : memref<80x1xf32, #tpu.memory_space<vmem>>, vector<80x1xf32>
    %cst_31 = arith.constant 0.000000e+00 : f32
    %29 = vector.broadcast %cst_31 : f32 to vector<80x1xf32>
    %30 = arith.cmpf one, %28, %29 : vector<80x1xf32>
    %cst_32 = arith.constant 0.000000e+00 : f32
    %31 = vector.broadcast %cst_32 : f32 to vector<80x128xf32>
    %c0_33 = arith.constant 0 : index
    %c0_34 = arith.constant 0 : index
    %32 = vector.load %arg11[%c0_33, %c0_34] : memref<104x128xf32, #tpu.memory_space<vmem>>, vector<80x128xf32>
    %c1 = arith.constant 1 : index
    %c0_35 = arith.constant 0 : index
    %33 = vector.load %arg11[%c1, %c0_35] : memref<104x128xf32, #tpu.memory_space<vmem>>, vector<80x128xf32>
    %c2 = arith.constant 2 : index
    %c0_36 = arith.constant 0 : index
    %34 = vector.load %arg11[%c2, %c0_36] : memref<104x128xf32, #tpu.memory_space<vmem>>, vector<80x128xf32>
    %35 = tpu.concatenate %32, %33, %34 in 1 : vector<80x128xf32>, vector<80x128xf32>, vector<80x128xf32> -> vector<80x384xf32>
    %c0_37 = arith.constant 0 : index
    %c0_38 = arith.constant 0 : index
    %c0_39 = arith.constant 0 : index
    %c0_40 = arith.constant 0 : index
    %36 = vector.load %arg2[%c0_37, %c0_38, %c0_39, %c0_40] : memref<3x3x384x128xf32, #tpu.memory_space<vmem>>, vector<1x1x384x128xf32>
    %37 = vector.shape_cast %36 : vector<1x1x384x128xf32> to vector<384x128xf32>
    %cst_41 = arith.constant dense<0.000000e+00> : vector<80x128xf32>
    %38 = tpu.matmul %35, %37, %cst_41 {dimension_numbers = #tpu.dot_dimension_numbers<[1], [0], [0], [1], [0, 0, 1, 1], [], []>} : vector<80x384xf32>, vector<384x128xf32>, vector<80x128xf32> -> vector<80x128xf32>
    %39 = arith.addf %31, %38 : vector<80x128xf32>
    %c10 = arith.constant 10 : index
    %c0_42 = arith.constant 0 : index
    %40 = vector.load %arg11[%c10, %c0_42] : memref<104x128xf32, #tpu.memory_space<vmem>>, vector<80x128xf32>
    %c11_43 = arith.constant 11 : index
    %c0_44 = arith.constant 0 : index
    %41 = vector.load %arg11[%c11_43, %c0_44] : memref<104x128xf32, #tpu.memory_space<vmem>>, vector<80x128xf32>
    %c12 = arith.constant 12 : index
    %c0_45 = arith.constant 0 : index
    %42 = vector.load %arg11[%c12, %c0_45] : memref<104x128xf32, #tpu.memory_space<vmem>>, vector<80x128xf32>
    %43 = tpu.concatenate %40, %41, %42 in 1 : vector<80x128xf32>, vector<80x128xf32>, vector<80x128xf32> -> vector<80x384xf32>
    %c0_46 = arith.constant 0 : index
    %c1_47 = arith.constant 1 : index
    %c0_48 = arith.constant 0 : index
    %c0_49 = arith.constant 0 : index
    %44 = vector.load %arg2[%c0_46, %c1_47, %c0_48, %c0_49] : memref<3x3x384x128xf32, #tpu.memory_space<vmem>>, vector<1x1x384x128xf32>
    %45 = vector.shape_cast %44 : vector<1x1x384x128xf32> to vector<384x128xf32>
    %cst_50 = arith.constant dense<0.000000e+00> : vector<80x128xf32>
    %46 = tpu.matmul %43, %45, %cst_50 {dimension_numbers = #tpu.dot_dimension_numbers<[1], [0], [0], [1], [0, 0, 1, 1], [], []>} : vector<80x384xf32>, vector<384x128xf32>, vector<80x128xf32> -> vector<80x128xf32>
    %47 = arith.addf %39, %46 : vector<80x128xf32>
    %c20 = arith.constant 20 : index
    %c0_51 = arith.constant 0 : index
    %48 = vector.load %arg11[%c20, %c0_51] : memref<104x128xf32, #tpu.memory_space<vmem>>, vector<80x128xf32>
    %c21_52 = arith.constant 21 : index
    %c0_53 = arith.constant 0 : index
    %49 = vector.load %arg11[%c21_52, %c0_53] : memref<104x128xf32, #tpu.memory_space<vmem>>, vector<80x128xf32>
    %c22 = arith.constant 22 : index
    %c0_54 = arith.constant 0 : index
    %50 = vector.load %arg11[%c22, %c0_54] : memref<104x128xf32, #tpu.memory_space<vmem>>, vector<80x128xf32>
    %51 = tpu.concatenate %48, %49, %50 in 1 : vector<80x128xf32>, vector<80x128xf32>, vector<80x128xf32> -> vector<80x384xf32>
    %c0_55 = arith.constant 0 : index
    %c2_56 = arith.constant 2 : index
    %c0_57 = arith.constant 0 : index
    %c0_58 = arith.constant 0 : index
    %52 = vector.load %arg2[%c0_55, %c2_56, %c0_57, %c0_58] : memref<3x3x384x128xf32, #tpu.memory_space<vmem>>, vector<1x1x384x128xf32>
    %53 = vector.shape_cast %52 : vector<1x1x384x128xf32> to vector<384x128xf32>
    %cst_59 = arith.constant dense<0.000000e+00> : vector<80x128xf32>
    %54 = tpu.matmul %51, %53, %cst_59 {dimension_numbers = #tpu.dot_dimension_numbers<[1], [0], [0], [1], [0, 0, 1, 1], [], []>} : vector<80x384xf32>, vector<384x128xf32>, vector<80x128xf32> -> vector<80x128xf32>
    %55 = arith.addf %47, %54 : vector<80x128xf32>
    %c0_60 = arith.constant 0 : index
    %c0_61 = arith.constant 0 : index
    %c0_62 = arith.constant 0 : index
    %56 = vector.load %arg3[%c0_60, %c0_61, %c0_62] : memref<3x1x128xf32, #tpu.memory_space<vmem>>, vector<1x1x128xf32>
    %57 = vector.shape_cast %56 : vector<1x1x128xf32> to vector<1x128xf32>
    %58 = vector.broadcast %57 : vector<1x128xf32> to vector<80x128xf32>
    %59 = arith.addf %55, %58 : vector<80x128xf32>
    %60 = arith.mulf %59, %59 : vector<80x128xf32>
    %c0_63 = arith.constant 0 : index
    %c0_64 = arith.constant 0 : index
    %c0_65 = arith.constant 0 : index
    %61 = vector.load %arg4[%c0_63, %c0_64, %c0_65] : memref<3x128x128xf32, #tpu.memory_space<vmem>>, vector<1x128x128xf32>
    %62 = vector.shape_cast %61 : vector<1x128x128xf32> to vector<128x128xf32>
    %cst_66 = arith.constant dense<0.000000e+00> : vector<80x128xf32>
    %63 = tpu.matmul %60, %62, %cst_66 {dimension_numbers = #tpu.dot_dimension_numbers<[1], [0], [0], [1], [0, 0, 1, 1], [], []>} : vector<80x128xf32>, vector<128x128xf32>, vector<80x128xf32> -> vector<80x128xf32>
    %c0_67 = arith.constant 0 : index
    %c0_68 = arith.constant 0 : index
    %c0_69 = arith.constant 0 : index
    %64 = vector.load %arg5[%c0_67, %c0_68, %c0_69] : memref<3x1x128xf32, #tpu.memory_space<vmem>>, vector<1x1x128xf32>
    %65 = vector.shape_cast %64 : vector<1x1x128xf32> to vector<1x128xf32>
    %66 = vector.broadcast %65 : vector<1x128xf32> to vector<80x128xf32>
    %67 = arith.addf %63, %66 : vector<80x128xf32>
    %68 = math.sqrt %67 : vector<80x128xf32>
    %69 = arith.mulf %59, %68 : vector<80x128xf32>
    %cst_70 = arith.constant 0.000000e+00 : f32
    %70 = vector.shape_cast %30 : vector<80x1xi1> to vector<80x1xi1>
    %71 = vector.broadcast %70 : vector<80x1xi1> to vector<80x128xi1>
    %72 = vector.broadcast %cst_70 : f32 to vector<80x128xf32>
    %73 = arith.select %71, %69, %72 : vector<80x128xi1>, vector<80x128xf32>
    %c11_71 = arith.constant 11 : index
    %c0_72 = arith.constant 0 : index
    %74 = vector.load %arg12[%c11_71, %c0_72] : memref<104x128xf32, #tpu.memory_space<vmem>>, vector<80x128xf32>
    tpu.vector_store %arg12[%c11_71, %c0_72], %73 {strides = array<i32>} : memref<104x128xf32, #tpu.memory_space<vmem>>, vector<80x128xf32>,
    %cst_73 = arith.constant 0.000000e+00 : f32
    %75 = vector.broadcast %cst_73 : f32 to vector<80x128xf32>
    %c0_74 = arith.constant 0 : index
    %c0_75 = arith.constant 0 : index
    %76 = vector.load %arg12[%c0_74, %c0_75] : memref<104x128xf32, #tpu.memory_space<vmem>>, vector<80x128xf32>
    %c1_76 = arith.constant 1 : index
    %c0_77 = arith.constant 0 : index
    %77 = vector.load %arg12[%c1_76, %c0_77] : memref<104x128xf32, #tpu.memory_space<vmem>>, vector<80x128xf32>
    %c2_78 = arith.constant 2 : index
    %c0_79 = arith.constant 0 : index
    %78 = vector.load %arg12[%c2_78, %c0_79] : memref<104x128xf32, #tpu.memory_space<vmem>>, vector<80x128xf32>
    %79 = tpu.concatenate %76, %77, %78 in 1 : vector<80x128xf32>, vector<80x128xf32>, vector<80x128xf32> -> vector<80x384xf32>
    %c1_80 = arith.constant 1 : index
    %c0_81 = arith.constant 0 : index
    %c0_82 = arith.constant 0 : index
    %c0_83 = arith.constant 0 : index
    %80 = vector.load %arg2[%c1_80, %c0_81, %c0_82, %c0_83] : memref<3x3x384x128xf32, #tpu.memory_space<vmem>>, vector<1x1x384x128xf32>
    %81 = vector.shape_cast %80 : vector<1x1x384x128xf32> to vector<384x128xf32>
    %cst_84 = arith.constant dense<0.000000e+00> : vector<80x128xf32>
    %82 = tpu.matmul %79, %81, %cst_84 {dimension_numbers = #tpu.dot_dimension_numbers<[1], [0], [0], [1], [0, 0, 1, 1], [], []>} : vector<80x384xf32>, vector<384x128xf32>, vector<80x128xf32> -> vector<80x128xf32>
    %83 = arith.addf %75, %82 : vector<80x128xf32>
    %c10_85 = arith.constant 10 : index
    %c0_86 = arith.constant 0 : index
    %84 = vector.load %arg12[%c10_85, %c0_86] : memref<104x128xf32, #tpu.memory_space<vmem>>, vector<80x128xf32>
    %c11_87 = arith.constant 11 : index
    %c0_88 = arith.constant 0 : index
    %85 = vector.load %arg12[%c11_87, %c0_88] : memref<104x128xf32, #tpu.memory_space<vmem>>, vector<80x128xf32>
    %c12_89 = arith.constant 12 : index
    %c0_90 = arith.constant 0 : index
    %86 = vector.load %arg12[%c12_89, %c0_90] : memref<104x128xf32, #tpu.memory_space<vmem>>, vector<80x128xf32>
    %87 = tpu.concatenate %84, %85, %86 in 1 : vector<80x128xf32>, vector<80x128xf32>, vector<80x128xf32> -> vector<80x384xf32>
    %c1_91 = arith.constant 1 : index
    %c1_92 = arith.constant 1 : index
    %c0_93 = arith.constant 0 : index
    %c0_94 = arith.constant 0 : index
    %88 = vector.load %arg2[%c1_91, %c1_92, %c0_93, %c0_94] : memref<3x3x384x128xf32, #tpu.memory_space<vmem>>, vector<1x1x384x128xf32>
    %89 = vector.shape_cast %88 : vector<1x1x384x128xf32> to vector<384x128xf32>
    %cst_95 = arith.constant dense<0.000000e+00> : vector<80x128xf32>
    %90 = tpu.matmul %87, %89, %cst_95 {dimension_numbers = #tpu.dot_dimension_numbers<[1], [0], [0], [1], [0, 0, 1, 1], [], []>} : vector<80x384xf32>, vector<384x128xf32>, vector<80x128xf32> -> vector<80x128xf32>
    %91 = arith.addf %83, %90 : vector<80x128xf32>
    %c20_96 = arith.constant 20 : index
    %c0_97 = arith.constant 0 : index
    %92 = vector.load %arg12[%c20_96, %c0_97] : memref<104x128xf32, #tpu.memory_space<vmem>>, vector<80x128xf32>
    %c21_98 = arith.constant 21 : index
    %c0_99 = arith.constant 0 : index
    %93 = vector.load %arg12[%c21_98, %c0_99] : memref<104x128xf32, #tpu.memory_space<vmem>>, vector<80x128xf32>
    %c22_100 = arith.constant 22 : index
    %c0_101 = arith.constant 0 : index
    %94 = vector.load %arg12[%c22_100, %c0_101] : memref<104x128xf32, #tpu.memory_space<vmem>>, vector<80x128xf32>
    %95 = tpu.concatenate %92, %93, %94 in 1 : vector<80x128xf32>, vector<80x128xf32>, vector<80x128xf32> -> vector<80x384xf32>
    %c1_102 = arith.constant 1 : index
    %c2_103 = arith.constant 2 : index
    %c0_104 = arith.constant 0 : index
    %c0_105 = arith.constant 0 : index
    %96 = vector.load %arg2[%c1_102, %c2_103, %c0_104, %c0_105] : memref<3x3x384x128xf32, #tpu.memory_space<vmem>>, vector<1x1x384x128xf32>
    %97 = vector.shape_cast %96 : vector<1x1x384x128xf32> to vector<384x128xf32>
    %cst_106 = arith.constant dense<0.000000e+00> : vector<80x128xf32>
    %98 = tpu.matmul %95, %97, %cst_106 {dimension_numbers = #tpu.dot_dimension_numbers<[1], [0], [0], [1], [0, 0, 1, 1], [], []>} : vector<80x384xf32>, vector<384x128xf32>, vector<80x128xf32> -> vector<80x128xf32>
    %99 = arith.addf %91, %98 : vector<80x128xf32>
    %c1_107 = arith.constant 1 : index
    %c0_108 = arith.constant 0 : index
    %c0_109 = arith.constant 0 : index
    %100 = vector.load %arg3[%c1_107, %c0_108, %c0_109] : memref<3x1x128xf32, #tpu.memory_space<vmem>>, vector<1x1x128xf32>
    %101 = vector.shape_cast %100 : vector<1x1x128xf32> to vector<1x128xf32>
    %102 = vector.broadcast %101 : vector<1x128xf32> to vector<80x128xf32>
    %103 = arith.addf %99, %102 : vector<80x128xf32>
    %104 = arith.mulf %103, %103 : vector<80x128xf32>
    %c1_110 = arith.constant 1 : index
    %c0_111 = arith.constant 0 : index
    %c0_112 = arith.constant 0 : index
    %105 = vector.load %arg4[%c1_110, %c0_111, %c0_112] : memref<3x128x128xf32, #tpu.memory_space<vmem>>, vector<1x128x128xf32>
    %106 = vector.shape_cast %105 : vector<1x128x128xf32> to vector<128x128xf32>
    %cst_113 = arith.constant dense<0.000000e+00> : vector<80x128xf32>
    %107 = tpu.matmul %104, %106, %cst_113 {dimension_numbers = #tpu.dot_dimension_numbers<[1], [0], [0], [1], [0, 0, 1, 1], [], []>} : vector<80x128xf32>, vector<128x128xf32>, vector<80x128xf32> -> vector<80x128xf32>
    %c1_114 = arith.constant 1 : index
    %c0_115 = arith.constant 0 : index
    %c0_116 = arith.constant 0 : index
    %108 = vector.load %arg5[%c1_114, %c0_115, %c0_116] : memref<3x1x128xf32, #tpu.memory_space<vmem>>, vector<1x1x128xf32>
    %109 = vector.shape_cast %108 : vector<1x1x128xf32> to vector<1x128xf32>
    %110 = vector.broadcast %109 : vector<1x128xf32> to vector<80x128xf32>
    %111 = arith.addf %107, %110 : vector<80x128xf32>
    %112 = math.sqrt %111 : vector<80x128xf32>
    %113 = arith.mulf %103, %112 : vector<80x128xf32>
    %cst_117 = arith.constant 0.000000e+00 : f32
    %114 = vector.shape_cast %30 : vector<80x1xi1> to vector<80x1xi1>
    %115 = vector.broadcast %114 : vector<80x1xi1> to vector<80x128xi1>
    %116 = vector.broadcast %cst_117 : f32 to vector<80x128xf32>
    %117 = arith.select %115, %113, %116 : vector<80x128xi1>, vector<80x128xf32>
    %c11_118 = arith.constant 11 : index
    %c0_119 = arith.constant 0 : index
    %118 = vector.load %arg11[%c11_118, %c0_119] : memref<104x128xf32, #tpu.memory_space<vmem>>, vector<80x128xf32>
    tpu.vector_store %arg11[%c11_118, %c0_119], %117 {strides = array<i32>} : memref<104x128xf32, #tpu.memory_space<vmem>>, vector<80x128xf32>,
    %cst_120 = arith.constant 0.000000e+00 : f32
    %119 = vector.broadcast %cst_120 : f32 to vector<80x128xf32>
    %c0_121 = arith.constant 0 : index
    %c0_122 = arith.constant 0 : index
    %120 = vector.load %arg11[%c0_121, %c0_122] : memref<104x128xf32, #tpu.memory_space<vmem>>, vector<80x128xf32>
    %c1_123 = arith.constant 1 : index
    %c0_124 = arith.constant 0 : index
    %121 = vector.load %arg11[%c1_123, %c0_124] : memref<104x128xf32, #tpu.memory_space<vmem>>, vector<80x128xf32>
    %c2_125 = arith.constant 2 : index
    %c0_126 = arith.constant 0 : index
    %122 = vector.load %arg11[%c2_125, %c0_126] : memref<104x128xf32, #tpu.memory_space<vmem>>, vector<80x128xf32>
    %123 = tpu.concatenate %120, %121, %122 in 1 : vector<80x128xf32>, vector<80x128xf32>, vector<80x128xf32> -> vector<80x384xf32>
    %c2_127 = arith.constant 2 : index
    %c0_128 = arith.constant 0 : index
    %c0_129 = arith.constant 0 : index
    %c0_130 = arith.constant 0 : index
    %124 = vector.load %arg2[%c2_127, %c0_128, %c0_129, %c0_130] : memref<3x3x384x128xf32, #tpu.memory_space<vmem>>, vector<1x1x384x128xf32>
    %125 = vector.shape_cast %124 : vector<1x1x384x128xf32> to vector<384x128xf32>
    %cst_131 = arith.constant dense<0.000000e+00> : vector<80x128xf32>
    %126 = tpu.matmul %123, %125, %cst_131 {dimension_numbers = #tpu.dot_dimension_numbers<[1], [0], [0], [1], [0, 0, 1, 1], [], []>} : vector<80x384xf32>, vector<384x128xf32>, vector<80x128xf32> -> vector<80x128xf32>
    %127 = arith.addf %119, %126 : vector<80x128xf32>
    %c10_132 = arith.constant 10 : index
    %c0_133 = arith.constant 0 : index
    %128 = vector.load %arg11[%c10_132, %c0_133] : memref<104x128xf32, #tpu.memory_space<vmem>>, vector<80x128xf32>
    %c11_134 = arith.constant 11 : index
    %c0_135 = arith.constant 0 : index
    %129 = vector.load %arg11[%c11_134, %c0_135] : memref<104x128xf32, #tpu.memory_space<vmem>>, vector<80x128xf32>
    %c12_136 = arith.constant 12 : index
    %c0_137 = arith.constant 0 : index
    %130 = vector.load %arg11[%c12_136, %c0_137] : memref<104x128xf32, #tpu.memory_space<vmem>>, vector<80x128xf32>
    %131 = tpu.concatenate %128, %129, %130 in 1 : vector<80x128xf32>, vector<80x128xf32>, vector<80x128xf32> -> vector<80x384xf32>
    %c2_138 = arith.constant 2 : index
    %c1_139 = arith.constant 1 : index
    %c0_140 = arith.constant 0 : index
    %c0_141 = arith.constant 0 : index
    %132 = vector.load %arg2[%c2_138, %c1_139, %c0_140, %c0_141] : memref<3x3x384x128xf32, #tpu.memory_space<vmem>>, vector<1x1x384x128xf32>
    %133 = vector.shape_cast %132 : vector<1x1x384x128xf32> to vector<384x128xf32>
    %cst_142 = arith.constant dense<0.000000e+00> : vector<80x128xf32>
    %134 = tpu.matmul %131, %133, %cst_142 {dimension_numbers = #tpu.dot_dimension_numbers<[1], [0], [0], [1], [0, 0, 1, 1], [], []>} : vector<80x384xf32>, vector<384x128xf32>, vector<80x128xf32> -> vector<80x128xf32>
    %135 = arith.addf %127, %134 : vector<80x128xf32>
    %c20_143 = arith.constant 20 : index
    %c0_144 = arith.constant 0 : index
    %136 = vector.load %arg11[%c20_143, %c0_144] : memref<104x128xf32, #tpu.memory_space<vmem>>, vector<80x128xf32>
    %c21_145 = arith.constant 21 : index
    %c0_146 = arith.constant 0 : index
    %137 = vector.load %arg11[%c21_145, %c0_146] : memref<104x128xf32, #tpu.memory_space<vmem>>, vector<80x128xf32>
    %c22_147 = arith.constant 22 : index
    %c0_148 = arith.constant 0 : index
    %138 = vector.load %arg11[%c22_147, %c0_148] : memref<104x128xf32, #tpu.memory_space<vmem>>, vector<80x128xf32>
    %139 = tpu.concatenate %136, %137, %138 in 1 : vector<80x128xf32>, vector<80x128xf32>, vector<80x128xf32> -> vector<80x384xf32>
    %c2_149 = arith.constant 2 : index
    %c2_150 = arith.constant 2 : index
    %c0_151 = arith.constant 0 : index
    %c0_152 = arith.constant 0 : index
    %140 = vector.load %arg2[%c2_149, %c2_150, %c0_151, %c0_152] : memref<3x3x384x128xf32, #tpu.memory_space<vmem>>, vector<1x1x384x128xf32>
    %141 = vector.shape_cast %140 : vector<1x1x384x128xf32> to vector<384x128xf32>
    %cst_153 = arith.constant dense<0.000000e+00> : vector<80x128xf32>
    %142 = tpu.matmul %139, %141, %cst_153 {dimension_numbers = #tpu.dot_dimension_numbers<[1], [0], [0], [1], [0, 0, 1, 1], [], []>} : vector<80x384xf32>, vector<384x128xf32>, vector<80x128xf32> -> vector<80x128xf32>
    %143 = arith.addf %135, %142 : vector<80x128xf32>
    %c2_154 = arith.constant 2 : index
    %c0_155 = arith.constant 0 : index
    %c0_156 = arith.constant 0 : index
    %144 = vector.load %arg3[%c2_154, %c0_155, %c0_156] : memref<3x1x128xf32, #tpu.memory_space<vmem>>, vector<1x1x128xf32>
    %145 = vector.shape_cast %144 : vector<1x1x128xf32> to vector<1x128xf32>
    %146 = vector.broadcast %145 : vector<1x128xf32> to vector<80x128xf32>
    %147 = arith.addf %143, %146 : vector<80x128xf32>
    %148 = arith.mulf %147, %147 : vector<80x128xf32>
    %c2_157 = arith.constant 2 : index
    %c0_158 = arith.constant 0 : index
    %c0_159 = arith.constant 0 : index
    %149 = vector.load %arg4[%c2_157, %c0_158, %c0_159] : memref<3x128x128xf32, #tpu.memory_space<vmem>>, vector<1x128x128xf32>
    %150 = vector.shape_cast %149 : vector<1x128x128xf32> to vector<128x128xf32>
    %cst_160 = arith.constant dense<0.000000e+00> : vector<80x128xf32>
    %151 = tpu.matmul %148, %150, %cst_160 {dimension_numbers = #tpu.dot_dimension_numbers<[1], [0], [0], [1], [0, 0, 1, 1], [], []>} : vector<80x128xf32>, vector<128x128xf32>, vector<80x128xf32> -> vector<80x128xf32>
    %c2_161 = arith.constant 2 : index
    %c0_162 = arith.constant 0 : index
    %c0_163 = arith.constant 0 : index
    %152 = vector.load %arg5[%c2_161, %c0_162, %c0_163] : memref<3x1x128xf32, #tpu.memory_space<vmem>>, vector<1x1x128xf32>
    %153 = vector.shape_cast %152 : vector<1x1x128xf32> to vector<1x128xf32>
    %154 = vector.broadcast %153 : vector<1x128xf32> to vector<80x128xf32>
    %155 = arith.addf %151, %154 : vector<80x128xf32>
    %156 = math.sqrt %155 : vector<80x128xf32>
    %157 = arith.mulf %147, %156 : vector<80x128xf32>
    %cst_164 = arith.constant 0.000000e+00 : f32
    %158 = vector.shape_cast %30 : vector<80x1xi1> to vector<80x1xi1>
    %159 = vector.broadcast %158 : vector<80x1xi1> to vector<80x128xi1>
    %160 = vector.broadcast %cst_164 : f32 to vector<80x128xf32>
    %161 = arith.select %159, %157, %160 : vector<80x128xi1>, vector<80x128xf32>
    %c11_165 = arith.constant 11 : index
    %c0_166 = arith.constant 0 : index
    %162 = vector.load %arg12[%c11_165, %c0_166] : memref<104x128xf32, #tpu.memory_space<vmem>>, vector<80x128xf32>
    tpu.vector_store %arg12[%c11_165, %c0_166], %161 {strides = array<i32>} : memref<104x128xf32, #tpu.memory_space<vmem>>, vector<80x128xf32>,
    %cst_167 = arith.constant 0.000000e+00 : f32
    %163 = vector.broadcast %cst_167 : f32 to vector<2x80xf32>
    %cst_168 = arith.constant 0.000000e+00 : f32
    %164 = vector.broadcast %cst_168 : f32 to vector<2x80xf32>
    %cst_169 = arith.constant 0.000000e+00 : f32
    %165 = vector.broadcast %cst_169 : f32 to vector<2x80xf32>
    %cst_170 = arith.constant 0.000000e+00 : f32
    %166 = vector.broadcast %cst_170 : f32 to vector<2x80xf32>
    %c11_171 = arith.constant 11 : index
    %c0_172 = arith.constant 0 : index
    %167 = vector.load %arg12[%c11_171, %c0_172] : memref<104x128xf32, #tpu.memory_space<vmem>>, vector<80x128xf32>
    %c0_173 = arith.constant 0 : index
    %c0_174 = arith.constant 0 : index
    %c0_175 = arith.constant 0 : index
    %168 = vector.load %arg6[%c0_173, %c0_174, %c0_175] : memref<9x2x128xf32, #tpu.memory_space<vmem>>, vector<1x2x128xf32>
    %169 = vector.shape_cast %168 : vector<1x2x128xf32> to vector<2x128xf32>
    "tpu.trace_start"() <{level = 10 : i32, message = "oc,sc->os"}> : () -> ()
    %cst_176 = arith.constant dense<0.000000e+00> : vector<2x80xf32>
    %170 = tpu.matmul %169, %167, %cst_176 {dimension_numbers = #tpu.dot_dimension_numbers<[1], [1], [0], [0], [0, 0, 1, 0], [], []>} : vector<2x128xf32>, vector<80x128xf32>, vector<2x80xf32> -> vector<2x80xf32>
    "tpu.trace_stop"() : () -> ()
    %171 = arith.addf %163, %170 : vector<2x80xf32>
    %c12_177 = arith.constant 12 : index
    %c0_178 = arith.constant 0 : index
    %172 = vector.load %arg12[%c12_177, %c0_178] : memref<104x128xf32, #tpu.memory_space<vmem>>, vector<80x128xf32>
    %c1_179 = arith.constant 1 : index
    %c0_180 = arith.constant 0 : index
    %c0_181 = arith.constant 0 : index
    %173 = vector.load %arg6[%c1_179, %c0_180, %c0_181] : memref<9x2x128xf32, #tpu.memory_space<vmem>>, vector<1x2x128xf32>
    %174 = vector.shape_cast %173 : vector<1x2x128xf32> to vector<2x128xf32>
    "tpu.trace_start"() <{level = 10 : i32, message = "oc,sc->os"}> : () -> ()
    %cst_182 = arith.constant dense<0.000000e+00> : vector<2x80xf32>
    %175 = tpu.matmul %174, %172, %cst_182 {dimension_numbers = #tpu.dot_dimension_numbers<[1], [1], [0], [0], [0, 0, 1, 0], [], []>} : vector<2x128xf32>, vector<80x128xf32>, vector<2x80xf32> -> vector<2x80xf32>
    "tpu.trace_stop"() : () -> ()
    %176 = arith.addf %164, %175 : vector<2x80xf32>
    %c11_183 = arith.constant 11 : index
    %c0_184 = arith.constant 0 : index
    %177 = vector.load %arg12[%c11_183, %c0_184] : memref<104x128xf32, #tpu.memory_space<vmem>>, vector<80x128xf32>
    %c2_185 = arith.constant 2 : index
    %c0_186 = arith.constant 0 : index
    %c0_187 = arith.constant 0 : index
    %178 = vector.load %arg6[%c2_185, %c0_186, %c0_187] : memref<9x2x128xf32, #tpu.memory_space<vmem>>, vector<1x2x128xf32>
    %179 = vector.shape_cast %178 : vector<1x2x128xf32> to vector<2x128xf32>
    "tpu.trace_start"() <{level = 10 : i32, message = "oc,sc->os"}> : () -> ()
    %cst_188 = arith.constant dense<0.000000e+00> : vector<2x80xf32>
    %180 = tpu.matmul %179, %177, %cst_188 {dimension_numbers = #tpu.dot_dimension_numbers<[1], [1], [0], [0], [0, 0, 1, 0], [], []>} : vector<2x128xf32>, vector<80x128xf32>, vector<2x80xf32> -> vector<2x80xf32>
    "tpu.trace_stop"() : () -> ()
    %181 = arith.addf %176, %180 : vector<2x80xf32>
    %c21_189 = arith.constant 21 : index
    %c0_190 = arith.constant 0 : index
    %182 = vector.load %arg12[%c21_189, %c0_190] : memref<104x128xf32, #tpu.memory_space<vmem>>, vector<80x128xf32>
    %c3 = arith.constant 3 : index
    %c0_191 = arith.constant 0 : index
    %c0_192 = arith.constant 0 : index
    %183 = vector.load %arg6[%c3, %c0_191, %c0_192] : memref<9x2x128xf32, #tpu.memory_space<vmem>>, vector<1x2x128xf32>
    %184 = vector.shape_cast %183 : vector<1x2x128xf32> to vector<2x128xf32>
    "tpu.trace_start"() <{level = 10 : i32, message = "oc,sc->os"}> : () -> ()
    %cst_193 = arith.constant dense<0.000000e+00> : vector<2x80xf32>
    %185 = tpu.matmul %184, %182, %cst_193 {dimension_numbers = #tpu.dot_dimension_numbers<[1], [1], [0], [0], [0, 0, 1, 0], [], []>} : vector<2x128xf32>, vector<80x128xf32>, vector<2x80xf32> -> vector<2x80xf32>
    "tpu.trace_stop"() : () -> ()
    %186 = arith.addf %165, %185 : vector<2x80xf32>
    %c11_194 = arith.constant 11 : index
    %c0_195 = arith.constant 0 : index
    %187 = vector.load %arg12[%c11_194, %c0_195] : memref<104x128xf32, #tpu.memory_space<vmem>>, vector<80x128xf32>
    %c4 = arith.constant 4 : index
    %c0_196 = arith.constant 0 : index
    %c0_197 = arith.constant 0 : index
    %188 = vector.load %arg6[%c4, %c0_196, %c0_197] : memref<9x2x128xf32, #tpu.memory_space<vmem>>, vector<1x2x128xf32>
    %189 = vector.shape_cast %188 : vector<1x2x128xf32> to vector<2x128xf32>
    "tpu.trace_start"() <{level = 10 : i32, message = "oc,sc->os"}> : () -> ()
    %cst_198 = arith.constant dense<0.000000e+00> : vector<2x80xf32>
    %190 = tpu.matmul %189, %187, %cst_198 {dimension_numbers = #tpu.dot_dimension_numbers<[1], [1], [0], [0], [0, 0, 1, 0], [], []>} : vector<2x128xf32>, vector<80x128xf32>, vector<2x80xf32> -> vector<2x80xf32>
    "tpu.trace_stop"() : () -> ()
    %191 = arith.addf %186, %190 : vector<2x80xf32>
    %c22_199 = arith.constant 22 : index
    %c0_200 = arith.constant 0 : index
    %192 = vector.load %arg12[%c22_199, %c0_200] : memref<104x128xf32, #tpu.memory_space<vmem>>, vector<80x128xf32>
    %c5 = arith.constant 5 : index
    %c0_201 = arith.constant 0 : index
    %c0_202 = arith.constant 0 : index
    %193 = vector.load %arg6[%c5, %c0_201, %c0_202] : memref<9x2x128xf32, #tpu.memory_space<vmem>>, vector<1x2x128xf32>
    %194 = vector.shape_cast %193 : vector<1x2x128xf32> to vector<2x128xf32>
    "tpu.trace_start"() <{level = 10 : i32, message = "oc,sc->os"}> : () -> ()
    %cst_203 = arith.constant dense<0.000000e+00> : vector<2x80xf32>
    %195 = tpu.matmul %194, %192, %cst_203 {dimension_numbers = #tpu.dot_dimension_numbers<[1], [1], [0], [0], [0, 0, 1, 0], [], []>} : vector<2x128xf32>, vector<80x128xf32>, vector<2x80xf32> -> vector<2x80xf32>
    "tpu.trace_stop"() : () -> ()
    %196 = arith.addf %166, %195 : vector<2x80xf32>
    %c21_204 = arith.constant 21 : index
    %c0_205 = arith.constant 0 : index
    %197 = vector.load %arg12[%c21_204, %c0_205] : memref<104x128xf32, #tpu.memory_space<vmem>>, vector<80x128xf32>
    %c6 = arith.constant 6 : index
    %c0_206 = arith.constant 0 : index
    %c0_207 = arith.constant 0 : index
    %198 = vector.load %arg6[%c6, %c0_206, %c0_207] : memref<9x2x128xf32, #tpu.memory_space<vmem>>, vector<1x2x128xf32>
    %199 = vector.shape_cast %198 : vector<1x2x128xf32> to vector<2x128xf32>
    "tpu.trace_start"() <{level = 10 : i32, message = "oc,sc->os"}> : () -> ()
    %cst_208 = arith.constant dense<0.000000e+00> : vector<2x80xf32>
    %200 = tpu.matmul %199, %197, %cst_208 {dimension_numbers = #tpu.dot_dimension_numbers<[1], [1], [0], [0], [0, 0, 1, 0], [], []>} : vector<2x128xf32>, vector<80x128xf32>, vector<2x80xf32> -> vector<2x80xf32>
    "tpu.trace_stop"() : () -> ()
    %201 = arith.addf %196, %200 : vector<2x80xf32>
    %c12_209 = arith.constant 12 : index
    %c0_210 = arith.constant 0 : index
    %202 = vector.load %arg12[%c12_209, %c0_210] : memref<104x128xf32, #tpu.memory_space<vmem>>, vector<80x128xf32>
    %c7 = arith.constant 7 : index
    %c0_211 = arith.constant 0 : index
    %c0_212 = arith.constant 0 : index
    %203 = vector.load %arg6[%c7, %c0_211, %c0_212] : memref<9x2x128xf32, #tpu.memory_space<vmem>>, vector<1x2x128xf32>
    %204 = vector.shape_cast %203 : vector<1x2x128xf32> to vector<2x128xf32>
    "tpu.trace_start"() <{level = 10 : i32, message = "oc,sc->os"}> : () -> ()
    %cst_213 = arith.constant dense<0.000000e+00> : vector<2x80xf32>
    %205 = tpu.matmul %204, %202, %cst_213 {dimension_numbers = #tpu.dot_dimension_numbers<[1], [1], [0], [0], [0, 0, 1, 0], [], []>} : vector<2x128xf32>, vector<80x128xf32>, vector<2x80xf32> -> vector<2x80xf32>
    "tpu.trace_stop"() : () -> ()
    %206 = arith.addf %201, %205 : vector<2x80xf32>
    %c11_214 = arith.constant 11 : index
    %c0_215 = arith.constant 0 : index
    %207 = vector.load %arg12[%c11_214, %c0_215] : memref<104x128xf32, #tpu.memory_space<vmem>>, vector<80x128xf32>
    %c8_216 = arith.constant 8 : index
    %c0_217 = arith.constant 0 : index
    %c0_218 = arith.constant 0 : index
    %208 = vector.load %arg6[%c8_216, %c0_217, %c0_218] : memref<9x2x128xf32, #tpu.memory_space<vmem>>, vector<1x2x128xf32>
    %209 = vector.shape_cast %208 : vector<1x2x128xf32> to vector<2x128xf32>
    "tpu.trace_start"() <{level = 10 : i32, message = "oc,sc->os"}> : () -> ()
    %cst_219 = arith.constant dense<0.000000e+00> : vector<2x80xf32>
    %210 = tpu.matmul %209, %207, %cst_219 {dimension_numbers = #tpu.dot_dimension_numbers<[1], [1], [0], [0], [0, 0, 1, 0], [], []>} : vector<2x128xf32>, vector<80x128xf32>, vector<2x80xf32> -> vector<2x80xf32>
    "tpu.trace_stop"() : () -> ()
    %211 = arith.addf %206, %210 : vector<2x80xf32>
    %cst_220 = arith.constant 0.000000e+00 : f32
    %212 = vector.broadcast %cst_220 : f32 to vector<2x256xf32>
    %c0_221 = arith.constant 0 : index
    %c0_222 = arith.constant 0 : index
    %c0_223 = arith.constant 0 : index
    %213 = vector.load %arg8[%c0_221, %c0_222, %c0_223] : memref<4x80x256xf32, #tpu.memory_space<vmem>>, vector<1x80x256xf32>
    %214 = vector.shape_cast %213 : vector<1x80x256xf32> to vector<80x256xf32>
    %cst_224 = arith.constant dense<0.000000e+00> : vector<2x256xf32>
    %215 = tpu.matmul %171, %214, %cst_224 {dimension_numbers = #tpu.dot_dimension_numbers<[1], [0], [0], [1], [0, 0, 1, 1], [], []>} : vector<2x80xf32>, vector<80x256xf32>, vector<2x256xf32> -> vector<2x256xf32>
    %216 = arith.addf %212, %215 : vector<2x256xf32>
    %c1_225 = arith.constant 1 : index
    %c0_226 = arith.constant 0 : index
    %c0_227 = arith.constant 0 : index
    %217 = vector.load %arg8[%c1_225, %c0_226, %c0_227] : memref<4x80x256xf32, #tpu.memory_space<vmem>>, vector<1x80x256xf32>
    %218 = vector.shape_cast %217 : vector<1x80x256xf32> to vector<80x256xf32>
    %cst_228 = arith.constant dense<0.000000e+00> : vector<2x256xf32>
    %219 = tpu.matmul %181, %218, %cst_228 {dimension_numbers = #tpu.dot_dimension_numbers<[1], [0], [0], [1], [0, 0, 1, 1], [], []>} : vector<2x80xf32>, vector<80x256xf32>, vector<2x256xf32> -> vector<2x256xf32>
    %220 = arith.addf %216, %219 : vector<2x256xf32>
    %c2_229 = arith.constant 2 : index
    %c0_230 = arith.constant 0 : index
    %c0_231 = arith.constant 0 : index
    %221 = vector.load %arg8[%c2_229, %c0_230, %c0_231] : memref<4x80x256xf32, #tpu.memory_space<vmem>>, vector<1x80x256xf32>
    %222 = vector.shape_cast %221 : vector<1x80x256xf32> to vector<80x256xf32>
    %cst_232 = arith.constant dense<0.000000e+00> : vector<2x256xf32>
    %223 = tpu.matmul %191, %222, %cst_232 {dimension_numbers = #tpu.dot_dimension_numbers<[1], [0], [0], [1], [0, 0, 1, 1], [], []>} : vector<2x80xf32>, vector<80x256xf32>, vector<2x256xf32> -> vector<2x256xf32>
    %224 = arith.addf %220, %223 : vector<2x256xf32>
    %c3_233 = arith.constant 3 : index
    %c0_234 = arith.constant 0 : index
    %c0_235 = arith.constant 0 : index
    %225 = vector.load %arg8[%c3_233, %c0_234, %c0_235] : memref<4x80x256xf32, #tpu.memory_space<vmem>>, vector<1x80x256xf32>
    %226 = vector.shape_cast %225 : vector<1x80x256xf32> to vector<80x256xf32>
    %cst_236 = arith.constant dense<0.000000e+00> : vector<2x256xf32>
    %227 = tpu.matmul %211, %226, %cst_236 {dimension_numbers = #tpu.dot_dimension_numbers<[1], [0], [0], [1], [0, 0, 1, 1], [], []>} : vector<2x80xf32>, vector<80x256xf32>, vector<2x256xf32> -> vector<2x256xf32>
    %228 = arith.addf %224, %227 : vector<2x256xf32>
    %c0_237 = arith.constant 0 : index
    %c0_238 = arith.constant 0 : index
    %229 = vector.load %arg7[%c0_237, %c0_238] : memref<2x1xf32, #tpu.memory_space<vmem>>, vector<2x1xf32>
    %230 = vector.broadcast %229 : vector<2x1xf32> to vector<2x256xf32>
    %231 = arith.addf %228, %230 : vector<2x256xf32>
    %c0_239 = arith.constant 0 : index
    %c0_240 = arith.constant 0 : index
    %c0_241 = arith.constant 0 : index
    %232 = vector.load %arg10[%c0_239, %c0_240, %c0_241] : memref<1x2x256xf32, #tpu.memory_space<vmem>>, vector<1x2x256xf32>
    %233 = vector.shape_cast %232 : vector<1x2x256xf32> to vector<2x256xf32>
    %234 = vector.shape_cast %231 : vector<2x256xf32> to vector<1x2x256xf32>
    tpu.vector_store %arg10[%c0_239, %c0_240, %c0_241], %234 {strides = array<i32>} : memref<1x2x256xf32, #tpu.memory_space<vmem>>, vector<1x2x256xf32>,
    return
  }
  func.func @transform_0(%arg0: i32) -> (i32, i32, i32) {
    %c0_i32 = arith.constant 0 : i32
    %c0_i32_0 = arith.constant 0 : i32
    %c0_i32_1 = arith.constant 0 : i32
    return %arg0, %c0_i32, %c0_i32_0 : i32, i32, i32
  }
  func.func @transform_1(%arg0: i32) -> (i32, i32, i32, i32) {
    %c0_i32 = arith.constant 0 : i32
    %c0_i32_0 = arith.constant 0 : i32
    %c0_i32_1 = arith.constant 0 : i32
    %c0_i32_2 = arith.constant 0 : i32
    %c0_i32_3 = arith.constant 0 : i32
    return %c0_i32, %c0_i32_0, %c0_i32_1, %c0_i32_2 : i32, i32, i32, i32
  }
  func.func @transform_2(%arg0: i32) -> (i32, i32, i32) {
    %c0_i32 = arith.constant 0 : i32
    %c0_i32_0 = arith.constant 0 : i32
    %c0_i32_1 = arith.constant 0 : i32
    %c0_i32_2 = arith.constant 0 : i32
    return %c0_i32, %c0_i32_0, %c0_i32_1 : i32, i32, i32
  }
  func.func @transform_3(%arg0: i32) -> (i32, i32, i32) {
    %c0_i32 = arith.constant 0 : i32
    %c0_i32_0 = arith.constant 0 : i32
    %c0_i32_1 = arith.constant 0 : i32
    %c0_i32_2 = arith.constant 0 : i32
    return %c0_i32, %c0_i32_0, %c0_i32_1 : i32, i32, i32
  }
  func.func @transform_4(%arg0: i32) -> (i32, i32, i32) {
    %c0_i32 = arith.constant 0 : i32
    %c0_i32_0 = arith.constant 0 : i32
    %c0_i32_1 = arith.constant 0 : i32
    %c0_i32_2 = arith.constant 0 : i32
    return %c0_i32, %c0_i32_0, %c0_i32_1 : i32, i32, i32
  }
  func.func @transform_5(%arg0: i32) -> (i32, i32, i32) {
    %c0_i32 = arith.constant 0 : i32
    %c0_i32_0 = arith.constant 0 : i32
    %c0_i32_1 = arith.constant 0 : i32
    %c0_i32_2 = arith.constant 0 : i32
    return %c0_i32, %c0_i32_0, %c0_i32_1 : i32, i32, i32
  }
  func.func @transform_6(%arg0: i32) -> (i32, i32) {
    %c0_i32 = arith.constant 0 : i32
    %c0_i32_0 = arith.constant 0 : i32
    %c0_i32_1 = arith.constant 0 : i32
    return %c0_i32, %c0_i32_0 : i32, i32
  }
  func.func @transform_7(%arg0: i32) -> (i32, i32, i32) {
    %c0_i32 = arith.constant 0 : i32
    %c0_i32_0 = arith.constant 0 : i32
    %c0_i32_1 = arith.constant 0 : i32
    %c0_i32_2 = arith.constant 0 : i32
    return %c0_i32, %c0_i32_0, %c0_i32_1 : i32, i32, i32
  }
  func.func @transform_8(%arg0: i32) -> (i32, i32) {
    %c0_i32 = arith.constant 0 : i32
    %c0_i32_0 = arith.constant 0 : i32
    %c0_i32_1 = arith.constant 0 : i32
    return %c0_i32, %c0_i32_0 : i32, i32
  }
  func.func @transform_9(%arg0: i32) -> (i32, i32, i32) {
    %c0_i32 = arith.constant 0 : i32
    %c0_i32_0 = arith.constant 0 : i32
    %c0_i32_1 = arith.constant 0 : i32
    return %arg0, %c0_i32, %c0_i32_0 : i32, i32, i32
  }
}

</mosaic_0001>

<llo_original>
// kernel: balle2_decoder.1
$region0: #{balle2_decoder.1}
  #allocation0 [shape = 'u32[]', space=smem, size = 0x4, offset = 0x4, fixed_abs, tag = 'smem constant byte address 0x4 - core index']
  #allocation1 [shape = 'u32[144,128]{1,0:T(1,128)}', space=vmem, size = 0x12000, scoped, tag = 'internal scratch']
  #allocation2 [shape = 'f32[104,128]{1,0:T(8,128)}', space=vmem, size = 0xd000, scoped, tag = 'scratch operand']
  #allocation3 [shape = 'f32[104,128]{1,0:T(8,128)}', space=vmem, size = 0xd000, scoped, tag = 'scratch operand']
  %s0 = inlined_call_operand.vmem [shape: f32[2,64,128], index: 0, kind: input, shape index: {}]
  %s1 = inlined_call_operand.vmem [shape: f32[3,3,384,128], index: 1, kind: input, shape index: {}]
  %s2 = inlined_call_operand.vmem [shape: f32[3,1,128], index: 2, kind: input, shape index: {}]
  %s3 = inlined_call_operand.vmem [shape: f32[3,128,128], index: 3, kind: input, shape index: {}]
  %s4 = inlined_call_operand.vmem [shape: f32[3,1,128], index: 4, kind: input, shape index: {}]
  %s5 = inlined_call_operand.vmem [shape: f32[9,2,128], index: 5, kind: input, shape index: {}]
  %s6 = inlined_call_operand.vmem [shape: f32[2,1], index: 6, kind: input, shape index: {}]
  %s7 = inlined_call_operand.vmem [shape: f32[4,80,256], index: 7, kind: input, shape index: {}]
  %s8 = inlined_call_operand.vmem [shape: f32[80,1], index: 8, kind: input, shape index: {}]
  %s9 = inlined_call_operand.vmem [shape: f32[2,2,256], index: 9, kind: output, shape index: {}]
  %s10 = sld [smem:[#allocation0]]
  $region69: #{balle2_decoder.1} parent=0
    _
  %s12 = ssub.s32 1, %s10
  %s13 = scalar_select 0, %s12, %s10
  loop: start=0, step=1, limit=4
  $region2: #{balle2_decoder.1} parent=0 // loop_pre_header
    _
  $region3: #{balle2_decoder.1} parent=0 // loop_header
    %s15 = sphi 0, %s19
    %p16 = scmp.ge.s32.totalorder %s15, 4
    %s25 = sphi 0, %s27
    %s28 = sphi 0, %s25
    %s29 = sphi 0, %s28
    %s45 = sphi 0, %s29
    %s49 = sphi 0, %s49
    %s51 = sphi 0, %s49
    %s52 = sphi 0, %s51
    %s66 = sphi 0, %s52
    %s70 = sphi 0, %s70
    %s72 = sphi 0, %s70
    %s73 = sphi 0, %s72
    %s87 = sphi 0, %s73
    %s91 = sphi 0, %s91
    %s93 = sphi 0, %s91
    %s94 = sphi 0, %s93
    %s108 = sphi 0, %s94
    %s112 = sphi 0, %s112
    %s114 = sphi 0, %s112
    %s115 = sphi 0, %s114
    %s129 = sphi 0, %s115
    %s133 = sphi 0, %s133
    %s135 = sphi 0, %s133
    %s136 = sphi 0, %s135
    %s150 = sphi 0, %s136
    %s154 = sphi 0, %s154
    %s156 = sphi 0, %s154
    %s157 = sphi 0, %s156
    %s171 = sphi 0, %s157
    %s175 = sphi 0, %s175
    %s177 = sphi 0, %s175
    %s178 = sphi 0, %s177
    %s192 = sphi 0, %s178
    %s196 = sphi 0, %s196
    %s198 = sphi 0, %s196
    %s199 = sphi 0, %s198
    %s213 = sphi 0, %s199
    %s219 = sphi 0, %s221
    %s222 = sphi 0, %s219
    %s223 = sphi 0, %s222
    %s239 = sphi 0, %s223
  $region4: #{balle2_decoder.1} parent=0 // loop_header_branch
    %18 = sbr.rel (%p16) target = $region8
  $region5: #{balle2_decoder.1} parent=0 // loop_body
    %s20 = ssub.s32 %s15, 1
    %s21 = ssub.s32 %s15, 2
    %s22 = sadd.s32 %s15, 1
    %s23 = ssub.s32 %s15, %s22
    %p24 = scmp.eq.s32.totalorder %s23, 0
    %s26 = sadd.s32 %s25, 1
    %s27 = scalar_select %p24, %s25, %s26
    %p30 = pneg %p24
    %p31 = scmp.eq.s32.totalorder %s15, 1
    %p32 = por %p30, %p31
    %p33 = scmp.ne.s32.totalorder %s25, %s28
    %p34 = scmp.eq.s32.totalorder %s15, 0
    %p35 = por %p33, %p34
    %p36 = scmp.ne.s32.totalorder %s25, %s28
    %p37 = scmp.eq.s32.totalorder %s20, 1
    %p38 = por %p36, %p37
    %p39 = scmp.ne.s32.totalorder %s28, %s29
    %p40 = scmp.eq.s32.totalorder %s20, 0
    %p41 = por %p39, %p40
    %p42 = scmp.ne.s32.totalorder %s28, %s29
    %p43 = scmp.eq.s32.totalorder %s21, 1
    %p44 = por %p42, %p43
    %p46 = scmp.ne.s32.totalorder %s29, %s45
    %p47 = scmp.eq.s32.totalorder %s21, 0
    %p48 = por %p46, %p47
    %s50 = sadd.s32 %s49, 1
    %p53 = scmp.eq.s32.totalorder %s15, 1
    %p54 = scmp.ne.s32.totalorder %s49, %s51
    %p55 = scmp.eq.s32.totalorder %s15, 0
    %p56 = por %p54, %p55
    %p57 = scmp.ne.s32.totalorder %s49, %s51
    %p58 = scmp.eq.s32.totalorder %s20, 1
    %p59 = por %p57, %p58
    %p60 = scmp.ne.s32.totalorder %s51, %s52
    %p61 = scmp.eq.s32.totalorder %s20, 0
    %p62 = por %p60, %p61
    %p63 = scmp.ne.s32.totalorder %s51, %s52
    %p64 = scmp.eq.s32.totalorder %s21, 1
    %p65 = por %p63, %p64
    %p67 = scmp.ne.s32.totalorder %s52, %s66
    %p68 = scmp.eq.s32.totalorder %s21, 0
    %p69 = por %p67, %p68
    %s71 = sadd.s32 %s70, 1
    %p74 = scmp.eq.s32.totalorder %s15, 1
    %p75 = scmp.ne.s32.totalorder %s70, %s72
    %p76 = scmp.eq.s32.totalorder %s15, 0
    %p77 = por %p75, %p76
    %p78 = scmp.ne.s32.totalorder %s70, %s72
    %p79 = scmp.eq.s32.totalorder %s20, 1
    %p80 = por %p78, %p79
    %p81 = scmp.ne.s32.totalorder %s72, %s73
    %p82 = scmp.eq.s32.totalorder %s20, 0
    %p83 = por %p81, %p82
    %p84 = scmp.ne.s32.totalorder %s72, %s73
    %p85 = scmp.eq.s32.totalorder %s21, 1
    %p86 = por %p84, %p85
    %p88 = scmp.ne.s32.totalorder %s73, %s87
    %p89 = scmp.eq.s32.totalorder %s21, 0
    %p90 = por %p88, %p89
    %s92 = sadd.s32 %s91, 1
    %p95 = scmp.eq.s32.totalorder %s15, 1
    %p96 = scmp.ne.s32.totalorder %s91, %s93
    %p97 = scmp.eq.s32.totalorder %s15, 0
    %p98 = por %p96, %p97
    %p99 = scmp.ne.s32.totalorder %s91, %s93
    %p100 = scmp.eq.s32.totalorder %s20, 1
    %p101 = por %p99, %p100
    %p102 = scmp.ne.s32.totalorder %s93, %s94
    %p103 = scmp.eq.s32.totalorder %s20, 0
    %p104 = por %p102, %p103
    %p105 = scmp.ne.s32.totalorder %s93, %s94
    %p106 = scmp.eq.s32.totalorder %s21, 1
    %p107 = por %p105, %p106
    %p109 = scmp.ne.s32.totalorder %s94, %s108
    %p110 = scmp.eq.s32.totalorder %s21, 0
    %p111 = por %p109, %p110
    %s113 = sadd.s32 %s112, 1
    %p116 = scmp.eq.s32.totalorder %s15, 1
    %p117 = scmp.ne.s32.totalorder %s112, %s114
    %p118 = scmp.eq.s32.totalorder %s15, 0
    %p119 = por %p117, %p118
    %p120 = scmp.ne.s32.totalorder %s112, %s114
    %p121 = scmp.eq.s32.totalorder %s20, 1
    %p122 = por %p120, %p121
    %p123 = scmp.ne.s32.totalorder %s114, %s115
    %p124 = scmp.eq.s32.totalorder %s20, 0
    %p125 = por %p123, %p124
    %p126 = scmp.ne.s32.totalorder %s114, %s115
    %p127 = scmp.eq.s32.totalorder %s21, 1
    %p128 = por %p126, %p127
    %p130 = scmp.ne.s32.totalorder %s115, %s129
    %p131 = scmp.eq.s32.totalorder %s21, 0
    %p132 = por %p130, %p131
    %s134 = sadd.s32 %s133, 1
    %p137 = scmp.eq.s32.totalorder %s15, 1
    %p138 = scmp.ne.s32.totalorder %s133, %s135
    %p139 = scmp.eq.s32.totalorder %s15, 0
    %p140 = por %p138, %p139
    %p141 = scmp.ne.s32.totalorder %s133, %s135
    %p142 = scmp.eq.s32.totalorder %s20, 1
    %p143 = por %p141, %p142
    %p144 = scmp.ne.s32.totalorder %s135, %s136
    %p145 = scmp.eq.s32.totalorder %s20, 0
    %p146 = por %p144, %p145
    %p147 = scmp.ne.s32.totalorder %s135, %s136
    %p148 = scmp.eq.s32.totalorder %s21, 1
    %p149 = por %p147, %p148
    %p151 = scmp.ne.s32.totalorder %s136, %s150
    %p152 = scmp.eq.s32.totalorder %s21, 0
    %p153 = por %p151, %p152
    %s155 = sadd.s32 %s154, 1
    %p158 = scmp.eq.s32.totalorder %s15, 1
    %p159 = scmp.ne.s32.totalorder %s154, %s156
    %p160 = scmp.eq.s32.totalorder %s15, 0
    %p161 = por %p159, %p160
    %p162 = scmp.ne.s32.totalorder %s154, %s156
    %p163 = scmp.eq.s32.totalorder %s20, 1
    %p164 = por %p162, %p163
    %p165 = scmp.ne.s32.totalorder %s156, %s157
    %p166 = scmp.eq.s32.totalorder %s20, 0
    %p167 = por %p165, %p166
    %p168 = scmp.ne.s32.totalorder %s156, %s157
    %p169 = scmp.eq.s32.totalorder %s21, 1
    %p170 = por %p168, %p169
    %p172 = scmp.ne.s32.totalorder %s157, %s171
    %p173 = scmp.eq.s32.totalorder %s21, 0
    %p174 = por %p172, %p173
    %s176 = sadd.s32 %s175, 1
    %p179 = scmp.eq.s32.totalorder %s15, 1
    %p180 = scmp.ne.s32.totalorder %s175, %s177
    %p181 = scmp.eq.s32.totalorder %s15, 0
    %p182 = por %p180, %p181
    %p183 = scmp.ne.s32.totalorder %s175, %s177
    %p184 = scmp.eq.s32.totalorder %s20, 1
    %p185 = por %p183, %p184
    %p186 = scmp.ne.s32.totalorder %s177, %s178
    %p187 = scmp.eq.s32.totalorder %s20, 0
    %p188 = por %p186, %p187
    %p189 = scmp.ne.s32.totalorder %s177, %s178
    %p190 = scmp.eq.s32.totalorder %s21, 1
    %p191 = por %p189, %p190
    %p193 = scmp.ne.s32.totalorder %s178, %s192
    %p194 = scmp.eq.s32.totalorder %s21, 0
    %p195 = por %p193, %p194
    %s197 = sadd.s32 %s196, 1
    %p200 = scmp.eq.s32.totalorder %s15, 1
    %p201 = scmp.ne.s32.totalorder %s196, %s198
    %p202 = scmp.eq.s32.totalorder %s15, 0
    %p203 = por %p201, %p202
    %p204 = scmp.ne.s32.totalorder %s196, %s198
    %p205 = scmp.eq.s32.totalorder %s20, 1
    %p206 = por %p204, %p205
    %p207 = scmp.ne.s32.totalorder %s198, %s199
    %p208 = scmp.eq.s32.totalorder %s20, 0
    %p209 = por %p207, %p208
    %p210 = scmp.ne.s32.totalorder %s198, %s199
    %p211 = scmp.eq.s32.totalorder %s21, 1
    %p212 = por %p210, %p211
    %p214 = scmp.ne.s32.totalorder %s199, %s213
    %p215 = scmp.eq.s32.totalorder %s21, 0
    %p216 = por %p214, %p215
    %s217 = ssub.s32 %s15, %s22
    %p218 = scmp.eq.s32.totalorder %s217, 0
    %s220 = sadd.s32 %s219, 1
    %s221 = scalar_select %p218, %s219, %s220
    %p224 = pneg %p218
    %p225 = scmp.eq.s32.totalorder %s15, 1
    %p226 = por %p224, %p225
    %p227 = scmp.ne.s32.totalorder %s219, %s222
    %p228 = scmp.eq.s32.totalorder %s15, 0
    %p229 = por %p227, %p228
    %p230 = scmp.ne.s32.totalorder %s219, %s222
    %p231 = scmp.eq.s32.totalorder %s20, 1
    %p232 = por %p230, %p231
    %p233 = scmp.ne.s32.totalorder %s222, %s223
    %p234 = scmp.eq.s32.totalorder %s20, 0
    %p235 = por %p233, %p234
    %p236 = scmp.ne.s32.totalorder %s222, %s223
    %p237 = scmp.eq.s32.totalorder %s21, 1
    %p238 = por %p236, %p237
    %p240 = scmp.ne.s32.totalorder %s223, %s239
    %p241 = scmp.eq.s32.totalorder %s21, 0
    %p242 = por %p240, %p241
    %p243 = scmp.le.s32.totalorder 1, %s15
    %p244 = scmp.lt.s32.totalorder %s15, 3
    %p245 = pnand %p243, %p244
    %p246 = pneg %p245
    // Predicated region
    $region9: #{balle2_decoder.1} parent=5 // pred_check
      _
    $region10: #{balle2_decoder.1} parent=5 // pred_check_branch
      %248 = sbr.rel (%p245) target = $region12
    $region11: #{balle2_decoder.1} parent=5 // pred_region
      %s249 = ssub.s32 %s15, 1
      // Predicated region
      $region13: #{balle2_decoder.1} parent=11 // pred_check
        %p250 = pneg %p62
      $region14: #{balle2_decoder.1} parent=11 // pred_check_branch
        %252 = sbr.rel (%p250) target = $region16
      $region15: #{balle2_decoder.1} parent=11 // pred_region
        _
      $region16: #{balle2_decoder.1} parent=11 // pred_fallthru
        _
      // Predicated region
      $region17: #{balle2_decoder.1} parent=11 // pred_check
        %p253 = pneg %p83
      $region18: #{balle2_decoder.1} parent=11 // pred_check_branch
        %255 = sbr.rel (%p253) target = $region20
      $region19: #{balle2_decoder.1} parent=11 // pred_region
        _
      $region20: #{balle2_decoder.1} parent=11 // pred_fallthru
        _
      // Predicated region
      $region21: #{balle2_decoder.1} parent=11 // pred_check
        %p256 = pneg %p104
      $region22: #{balle2_decoder.1} parent=11 // pred_check_branch
        %258 = sbr.rel (%p256) target = $region24
      $region23: #{balle2_decoder.1} parent=11 // pred_region
        _
      $region24: #{balle2_decoder.1} parent=11 // pred_fallthru
        _
      // Predicated region
      $region25: #{balle2_decoder.1} parent=11 // pred_check
        %p259 = pneg %p125
      $region26: #{balle2_decoder.1} parent=11 // pred_check_branch
        %261 = sbr.rel (%p259) target = $region28
      $region27: #{balle2_decoder.1} parent=11 // pred_region
        _
      $region28: #{balle2_decoder.1} parent=11 // pred_fallthru
        _
      // Predicated region
      $region29: #{balle2_decoder.1} parent=11 // pred_check
        %p262 = pneg %p146
      $region30: #{balle2_decoder.1} parent=11 // pred_check_branch
        %264 = sbr.rel (%p262) target = $region32
      $region31: #{balle2_decoder.1} parent=11 // pred_region
        _
      $region32: #{balle2_decoder.1} parent=11 // pred_fallthru
        _
      // Predicated region
      $region33: #{balle2_decoder.1} parent=11 // pred_check
        %p265 = pneg %p167
      $region34: #{balle2_decoder.1} parent=11 // pred_check_branch
        %267 = sbr.rel (%p265) target = $region36
      $region35: #{balle2_decoder.1} parent=11 // pred_region
        _
      $region36: #{balle2_decoder.1} parent=11 // pred_fallthru
        _
      // Predicated region
      $region37: #{balle2_decoder.1} parent=11 // pred_check
        %p268 = pneg %p188
      $region38: #{balle2_decoder.1} parent=11 // pred_check_branch
        %270 = sbr.rel (%p268) target = $region40
      $region39: #{balle2_decoder.1} parent=11 // pred_region
        _
      $region40: #{balle2_decoder.1} parent=11 // pred_fallthru
        _
      // Predicated region
      $region41: #{balle2_decoder.1} parent=11 // pred_check
        %p271 = pneg %p209
      $region42: #{balle2_decoder.1} parent=11 // pred_check_branch
        %273 = sbr.rel (%p271) target = $region44
      $region43: #{balle2_decoder.1} parent=11 // pred_region
        _
      $region44: #{balle2_decoder.1} parent=11 // pred_fallthru
        _
    $region12: #{balle2_decoder.1} parent=5 // pred_fallthru
      _
    %p274 = scmp.lt.s32.totalorder %s15, 2
    // Predicated region
    $region45: #{balle2_decoder.1} parent=5 // pred_check
      %p275 = pneg %p274
    $region46: #{balle2_decoder.1} parent=5 // pred_check_branch
      %277 = sbr.rel (%p275) target = $region48
    $region47: #{balle2_decoder.1} parent=5 // pred_region
      // Predicated region
      $region49: #{balle2_decoder.1} parent=47 // pred_check
        %p278 = pneg %p35
      $region50: #{balle2_decoder.1} parent=47 // pred_check_branch
        %280 = sbr.rel (%p278) target = $region52
      $region51: #{balle2_decoder.1} parent=47 // pred_region
        %p281 = scmp.lt.s32.totalorder %s15, 1
        %s282 = scalar_select %p281, %s15, 1
        %s283 = smul.addr %s282, 8
        %s284 = smul.addr %s283, 8
        %s285 = scalar_lea.vmem %s0, %s284
      $region52: #{balle2_decoder.1} parent=47 // pred_fallthru
        _
    $region48: #{balle2_decoder.1} parent=5 // pred_fallthru
      _
    %p286 = scmp.le.s32.totalorder 1, %s15
    %p287 = scmp.lt.s32.totalorder %s15, 3
    %p288 = pnand %p286, %p287
    %p289 = pneg %p288
    // Predicated region
    $region53: #{balle2_decoder.1} parent=5 // pred_check
      _
    $region54: #{balle2_decoder.1} parent=5 // pred_check_branch
      %291 = sbr.rel (%p288) target = $region56
    $region55: #{balle2_decoder.1} parent=5 // pred_region
      %s292 = ssub.s32 %s15, 1
      %p293 = scmp.lt.s32.totalorder %s20, 1
      %s294 = scalar_select %p293, %s20, 1
      %s295 = smul.addr %s294, 8
      %s296 = smul.addr %s295, 8
      %s297 = scalar_lea.vmem %s0, %s296
      %p298 = pneg %p41
      %p299 = pneg %p38
      %p300 = pneg %p62
      %p301 = pneg %p59
      %p302 = pneg %p83
      %p303 = pneg %p80
      %p304 = pneg %p104
      %p305 = pneg %p101
      %p306 = pneg %p125
      %p307 = pneg %p122
      %p308 = pneg %p146
      %p309 = pneg %p143
      %p310 = pneg %p167
      %p311 = pneg %p164
      %p312 = pneg %p188
      %p313 = pneg %p185
      %p314 = pneg %p209
      %p315 = pneg %p206
      %p316 = pneg %p235
      %p317 = pneg %p232
      %p318 = scmp.lt.s32.totalorder %s20, 1
      %s319 = scalar_select %p318, %s20, 1
      %s320 = smul.addr %s319, 2
      %s321 = smul.addr %s320, 2
      %s322 = scalar_lea.vmem %s9, %s321
      %p323 = scmp.lt.s32.totalorder %s20, 1
      %s324 = scalar_select %p323, %s20, 1
      %s325 = smul.addr %s324, 8
      %s326 = smul.addr %s325, 8
      %s327 = scalar_lea.vmem %s0, %s326
      %p328 = scmp.lt.s32.totalorder %s20, 1
      %s329 = scalar_select %p328, %s20, 1
      %s330 = smul.addr %s329, 2
      %s331 = smul.addr %s330, 2
      %s332 = scalar_lea.vmem %s9, %s331
      %333 = vst [vmem:[#allocation2] sm:$0xff] 0.0
      %334 = vst [vmem:[#allocation2 + $0x8] sm:$0xff] 0.0
      %335 = vst [vmem:[#allocation2 + $0x10] sm:$0xff] 0.0
      %336 = vst [vmem:[#allocation2 + $0x18] sm:$0xff] 0.0
      %337 = vst [vmem:[#allocation2 + $0x20] sm:$0xff] 0.0
      %338 = vst [vmem:[#allocation2 + $0x28] sm:$0xff] 0.0
      %339 = vst [vmem:[#allocation2 + $0x30] sm:$0xff] 0.0
      %340 = vst [vmem:[#allocation2 + $0x38] sm:$0xff] 0.0
      %341 = vst [vmem:[#allocation2 + $0x40] sm:$0xff] 0.0
      %342 = vst [vmem:[#allocation2 + $0x48] sm:$0xff] 0.0
      %343 = vst [vmem:[#allocation2 + $0x50] sm:$0xff] 0.0
      %344 = vst [vmem:[#allocation2 + $0x58] sm:$0xff] 0.0
      %345 = vst [vmem:[#allocation2 + $0x60] sm:$0xff] 0.0
      %346 = vst [vmem:[#allocation3] sm:$0xff] 0.0
      %347 = vst [vmem:[#allocation3 + $0x8] sm:$0xff] 0.0
      %348 = vst [vmem:[#allocation3 + $0x10] sm:$0xff] 0.0
      %349 = vst [vmem:[#allocation3 + $0x18] sm:$0xff] 0.0
      %350 = vst [vmem:[#allocation3 + $0x20] sm:$0xff] 0.0
      %351 = vst [vmem:[#allocation3 + $0x28] sm:$0xff] 0.0
      %352 = vst [vmem:[#allocation3 + $0x30] sm:$0xff] 0.0
      %353 = vst [vmem:[#allocation3 + $0x38] sm:$0xff] 0.0
      %354 = vst [vmem:[#allocation3 + $0x40] sm:$0xff] 0.0
      %355 = vst [vmem:[#allocation3 + $0x48] sm:$0xff] 0.0
      %356 = vst [vmem:[#allocation3 + $0x50] sm:$0xff] 0.0
      %357 = vst [vmem:[#allocation3 + $0x58] sm:$0xff] 0.0
      %358 = vst [vmem:[#allocation3 + $0x60] sm:$0xff] 0.0
      %v359 = vld [vmem:[%s327] sm:$0xff]
      %360 = vst [vmem:[#allocation2 + $0xb] sm:$0xff] %v359
      %v361 = vld [vmem:[%s327 + $0x8] sm:$0xff]
      %362 = vst [vmem:[#allocation2 + $0x15] sm:$0xff] %v361
      %v363 = vld [vmem:[%s327 + $0x10] sm:$0xff]
      %364 = vst [vmem:[#allocation2 + $0x1f] sm:$0xff] %v363
      %v365 = vld [vmem:[%s327 + $0x18] sm:$0xff]
      %366 = vst [vmem:[#allocation2 + $0x29] sm:$0xff] %v365
      %v367 = vld [vmem:[%s327 + $0x20] sm:$0xff]
      %368 = vst [vmem:[#allocation2 + $0x33] sm:$0xff] %v367
      %v369 = vld [vmem:[%s327 + $0x28] sm:$0xff]
      %370 = vst [vmem:[#allocation2 + $0x3d] sm:$0xff] %v369
      %v371 = vld [vmem:[%s327 + $0x30] sm:$0xff]
      %372 = vst [vmem:[#allocation2 + $0x47] sm:$0xff] %v371
      %v373 = vld [vmem:[%s327 + $0x38] sm:$0xff]
      %374 = vst [vmem:[#allocation2 + $0x51] sm:$0xff] %v373
      %v375 = vld [vmem:[%s8] sm:$0xff]
      %v376 = vld [vmem:[%s8 + $0x8] sm:$0xff]
      %v377 = vld [vmem:[%s8 + $0x10] sm:$0xff]
      %v378 = vld [vmem:[%s8 + $0x18] sm:$0xff]
      %v379 = vld [vmem:[%s8 + $0x20] sm:$0xff]
      %v380 = vld [vmem:[%s8 + $0x28] sm:$0xff]
      %v381 = vld [vmem:[%s8 + $0x30] sm:$0xff]
      %v382 = vld [vmem:[%s8 + $0x38] sm:$0xff]
      %v383 = vld [vmem:[%s8 + $0x40] sm:$0xff]
      %v384 = vld [vmem:[%s8 + $0x48] sm:$0xff]
      %vm385 = vcmp.ne.f32.partialorder %v375, 0.0
      %vm386 = vcmp.ne.f32.partialorder %v376, 0.0
      %vm387 = vcmp.ne.f32.partialorder %v377, 0.0
      %vm388 = vcmp.ne.f32.partialorder %v378, 0.0
      %vm389 = vcmp.ne.f32.partialorder %v379, 0.0
      %vm390 = vcmp.ne.f32.partialorder %v380, 0.0
      %vm391 = vcmp.ne.f32.partialorder %v381, 0.0
      %vm392 = vcmp.ne.f32.partialorder %v382, 0.0
      %vm393 = vcmp.ne.f32.partialorder %v383, 0.0
      %vm394 = vcmp.ne.f32.partialorder %v384, 0.0
      %v395 = vld [vmem:[#allocation2] sm:$0xff]
      %v396 = vld [vmem:[#allocation2 + $0x8] sm:$0xff]
      %v397 = vld [vmem:[#allocation2 + $0x10] sm:$0xff]
      %v398 = vld [vmem:[#allocation2 + $0x18] sm:$0xff]
      %v399 = vld [vmem:[#allocation2 + $0x20] sm:$0xff]
      %v400 = vld [vmem:[#allocation2 + $0x28] sm:$0xff]
      %v401 = vld [vmem:[#allocation2 + $0x30] sm:$0xff]
      %v402 = vld [vmem:[#allocation2 + $0x38] sm:$0xff]
      %v403 = vld [vmem:[#allocation2 + $0x40] sm:$0xff]
      %v404 = vld [vmem:[#allocation2 + $0x48] sm:$0xff]
      %v405 = vld [vmem:[#allocation2 + $0x1] sm:$0xff]
      %v406 = vld [vmem:[#allocation2 + $0x9] sm:$0xff]
      %v407 = vld [vmem:[#allocation2 + $0x11] sm:$0xff]
      %v408 = vld [vmem:[#allocation2 + $0x19] sm:$0xff]
      %v409 = vld [vmem:[#allocation2 + $0x21] sm:$0xff]
      %v410 = vld [vmem:[#allocation2 + $0x29] sm:$0xff]
      %v411 = vld [vmem:[#allocation2 + $0x31] sm:$0xff]
      %v412 = vld [vmem:[#allocation2 + $0x39] sm:$0xff]
      %v413 = vld [vmem:[#allocation2 + $0x41] sm:$0xff]
      %v414 = vld [vmem:[#allocation2 + $0x49] sm:$0xff]
      %v415 = vld [vmem:[#allocation2 + $0x2] sm:$0xff]
      %v416 = vld [vmem:[#allocation2 + $0xa] sm:$0xff]
      %v417 = vld [vmem:[#allocation2 + $0x12] sm:$0xff]
      %v418 = vld [vmem:[#allocation2 + $0x1a] sm:$0xff]
      %v419 = vld [vmem:[#allocation2 + $0x22] sm:$0xff]
      %v420 = vld [vmem:[#allocation2 + $0x2a] sm:$0xff]
      %v421 = vld [vmem:[#allocation2 + $0x32] sm:$0xff]
      %v422 = vld [vmem:[#allocation2 + $0x3a] sm:$0xff]
      %v423 = vld [vmem:[#allocation2 + $0x42] sm:$0xff]
      %v424 = vld [vmem:[#allocation2 + $0x4a] sm:$0xff]
      %v425 = vld [vmem:[%s1] sm:$0xff]
      %v426 = vld [vmem:[%s1 + $0x8] sm:$0xff]
      %v427 = vld [vmem:[%s1 + $0x10] sm:$0xff]
      %v428 = vld [vmem:[%s1 + $0x18] sm:$0xff]
      %v429 = vld [vmem:[%s1 + $0x20] sm:$0xff]
      %v430 = vld [vmem:[%s1 + $0x28] sm:$0xff]
      %v431 = vld [vmem:[%s1 + $0x30] sm:$0xff]
      %v432 = vld [vmem:[%s1 + $0x38] sm:$0xff]
      %v433 = vld [vmem:[%s1 + $0x40] sm:$0xff]
      %v434 = vld [vmem:[%s1 + $0x48] sm:$0xff]
      %v435 = vld [vmem:[%s1 + $0x50] sm:$0xff]
      %v436 = vld [vmem:[%s1 + $0x58] sm:$0xff]
      %v437 = vld [vmem:[%s1 + $0x60] sm:$0xff]
      %v438 = vld [vmem:[%s1 + $0x68] sm:$0xff]
      %v439 = vld [vmem:[%s1 + $0x70] sm:$0xff]
      %v440 = vld [vmem:[%s1 + $0x78] sm:$0xff]
      %v441 = vld [vmem:[%s1 + $0x80] sm:$0xff]
      %v442 = vld [vmem:[%s1 + $0x88] sm:$0xff]
      %v443 = vld [vmem:[%s1 + $0x90] sm:$0xff]
      %v444 = vld [vmem:[%s1 + $0x98] sm:$0xff]
      %v445 = vld [vmem:[%s1 + $0xa0] sm:$0xff]
      %v446 = vld [vmem:[%s1 + $0xa8] sm:$0xff]
      %v447 = vld [vmem:[%s1 + $0xb0] sm:$0xff]
      %v448 = vld [vmem:[%s1 + $0xb8] sm:$0xff]
      %v449 = vld [vmem:[%s1 + $0xc0] sm:$0xff]
      %v450 = vld [vmem:[%s1 + $0xc8] sm:$0xff]
      %v451 = vld [vmem:[%s1 + $0xd0] sm:$0xff]
      %v452 = vld [vmem:[%s1 + $0xd8] sm:$0xff]
      %v453 = vld [vmem:[%s1 + $0xe0] sm:$0xff]
      %v454 = vld [vmem:[%s1 + $0xe8] sm:$0xff]
      %v455 = vld [vmem:[%s1 + $0xf0] sm:$0xff]
      %v456 = vld [vmem:[%s1 + $0xf8] sm:$0xff]
      %v457 = vld [vmem:[%s1 + $0x100] sm:$0xff]
      %v458 = vld [vmem:[%s1 + $0x108] sm:$0xff]
      %v459 = vld [vmem:[%s1 + $0x110] sm:$0xff]
      %v460 = vld [vmem:[%s1 + $0x118] sm:$0xff]
      %v461 = vld [vmem:[%s1 + $0x120] sm:$0xff]
      %v462 = vld [vmem:[%s1 + $0x128] sm:$0xff]
      %v463 = vld [vmem:[%s1 + $0x130] sm:$0xff]
      %v464 = vld [vmem:[%s1 + $0x138] sm:$0xff]
      %v465 = vld [vmem:[%s1 + $0x140] sm:$0xff]
      %v466 = vld [vmem:[%s1 + $0x148] sm:$0xff]
      %v467 = vld [vmem:[%s1 + $0x150] sm:$0xff]
      %v468 = vld [vmem:[%s1 + $0x158] sm:$0xff]
      %v469 = vld [vmem:[%s1 + $0x160] sm:$0xff]
      %v470 = vld [vmem:[%s1 + $0x168] sm:$0xff]
      %v471 = vld [vmem:[%s1 + $0x170] sm:$0xff]
      %v472 = vld [vmem:[%s1 + $0x178] sm:$0xff]
      %v473 = vld [vmem:[#allocation2 + $0x52] sm:$0xff]
      %v474 = vld [vmem:[#allocation2 + $0xb] sm:$0xff]
      %v475 = vld [vmem:[#allocation2 + $0x13] sm:$0xff]
      %v476 = vld [vmem:[#allocation2 + $0x1b] sm:$0xff]
      %v477 = vld [vmem:[#allocation2 + $0x23] sm:$0xff]
      %v478 = vld [vmem:[#allocation2 + $0x2b] sm:$0xff]
      %v479 = vld [vmem:[#allocation2 + $0x33] sm:$0xff]
      %v480 = vld [vmem:[#allocation2 + $0x3b] sm:$0xff]
      %v481 = vld [vmem:[#allocation2 + $0x43] sm:$0xff]
      %v482 = vld [vmem:[#allocation2 + $0x4b] sm:$0xff]
      %v483 = vld [vmem:[#allocation2 + $0x53] sm:$0xff]
      %v484 = vld [vmem:[#allocation2 + $0xc] sm:$0xff]
      %v485 = vld [vmem:[#allocation2 + $0x14] sm:$0xff]
      %v486 = vld [vmem:[#allocation2 + $0x1c] sm:$0xff]
      %v487 = vld [vmem:[#allocation2 + $0x24] sm:$0xff]
      %v488 = vld [vmem:[#allocation2 + $0x2c] sm:$0xff]
      %v489 = vld [vmem:[#allocation2 + $0x34] sm:$0xff]
      %v490 = vld [vmem:[#allocation2 + $0x3c] sm:$0xff]
      %v491 = vld [vmem:[#allocation2 + $0x44] sm:$0xff]
      %v492 = vld [vmem:[#allocation2 + $0x4c] sm:$0xff]
      %v493 = vld [vmem:[#allocation2 + $0x54] sm:$0xff]
      %s494 = scalar_lea.vmem %s1, 384
      %v495 = vld [vmem:[%s494] sm:$0xff]
      %v496 = vld [vmem:[%s494 + $0x8] sm:$0xff]
      %v497 = vld [vmem:[%s494 + $0x10] sm:$0xff]
      %v498 = vld [vmem:[%s494 + $0x18] sm:$0xff]
      %v499 = vld [vmem:[%s494 + $0x20] sm:$0xff]
      %v500 = vld [vmem:[%s494 + $0x28] sm:$0xff]
      %v501 = vld [vmem:[%s494 + $0x30] sm:$0xff]
      %v502 = vld [vmem:[%s494 + $0x38] sm:$0xff]
      %v503 = vld [vmem:[%s494 + $0x40] sm:$0xff]
      %v504 = vld [vmem:[%s494 + $0x48] sm:$0xff]
      %v505 = vld [vmem:[%s494 + $0x50] sm:$0xff]
      %v506 = vld [vmem:[%s494 + $0x58] sm:$0xff]
      %v507 = vld [vmem:[%s494 + $0x60] sm:$0xff]
      %v508 = vld [vmem:[%s494 + $0x68] sm:$0xff]
      %v509 = vld [vmem:[%s494 + $0x70] sm:$0xff]
      %v510 = vld [vmem:[%s494 + $0x78] sm:$0xff]
      %v511 = vld [vmem:[%s494 + $0x80] sm:$0xff]
      %v512 = vld [vmem:[%s494 + $0x88] sm:$0xff]
      %v513 = vld [vmem:[%s494 + $0x90] sm:$0xff]
      %v514 = vld [vmem:[%s494 + $0x98] sm:$0xff]
      %v515 = vld [vmem:[%s494 + $0xa0] sm:$0xff]
      %v516 = vld [vmem:[%s494 + $0xa8] sm:$0xff]
      %v517 = vld [vmem:[%s494 + $0xb0] sm:$0xff]
      %v518 = vld [vmem:[%s494 + $0xb8] sm:$0xff]
      %v519 = vld [vmem:[%s494 + $0xc0] sm:$0xff]
      %v520 = vld [vmem:[%s494 + $0xc8] sm:$0xff]
      %v521 = vld [vmem:[%s494 + $0xd0] sm:$0xff]
      %v522 = vld [vmem:[%s494 + $0xd8] sm:$0xff]
      %v523 = vld [vmem:[%s494 + $0xe0] sm:$0xff]
      %v524 = vld [vmem:[%s494 + $0xe8] sm:$0xff]
      %v525 = vld [vmem:[%s494 + $0xf0] sm:$0xff]
      %v526 = vld [vmem:[%s494 + $0xf8] sm:$0xff]
      %v527 = vld [vmem:[%s494 + $0x100] sm:$0xff]
      %v528 = vld [vmem:[%s494 + $0x108] sm:$0xff]
      %v529 = vld [vmem:[%s494 + $0x110] sm:$0xff]
      %v530 = vld [vmem:[%s494 + $0x118] sm:$0xff]
      %v531 = vld [vmem:[%s494 + $0x120] sm:$0xff]
      %v532 = vld [vmem:[%s494 + $0x128] sm:$0xff]
      %v533 = vld [vmem:[%s494 + $0x130] sm:$0xff]
      %v534 = vld [vmem:[%s494 + $0x138] sm:$0xff]
      %v535 = vld [vmem:[%s494 + $0x140] sm:$0xff]
      %v536 = vld [vmem:[%s494 + $0x148] sm:$0xff]
      %v537 = vld [vmem:[%s494 + $0x150] sm:$0xff]
      %v538 = vld [vmem:[%s494 + $0x158] sm:$0xff]
      %v539 = vld [vmem:[%s494 + $0x160] sm:$0xff]
      %v540 = vld [vmem:[%s494 + $0x168] sm:$0xff]
      %v541 = vld [vmem:[%s494 + $0x170] sm:$0xff]
      %v542 = vld [vmem:[%s494 + $0x178] sm:$0xff]
      %543 = vmatprep.subr.mxu0 0.0
      %544 = vmatpush1.msra.mxu0 %v495
      %545 = vmatprep.subr.mxu0 0.0
      %546 = vmatpush1.msra.mxu0 %v496
      %547 = vmatprep.subr.mxu0 0.0
      %548 = vmatpush1.msra.mxu0 %v497
      %549 = vmatprep.subr.mxu0 0.0
      %550 = vmatpush1.msra.mxu0 %v498
      %551 = vmatprep.subr.mxu0 0.0
      %552 = vmatpush1.msra.mxu0 %v499
      %553 = vmatprep.subr.mxu0 0.0
      %554 = vmatpush1.msra.mxu0 %v500
      %555 = vmatprep.subr.mxu0 0.0
      %556 = vmatpush1.msra.mxu0 %v501
      %557 = vmatprep.subr.mxu0 0.0
      %558 = vmatpush1.msra.mxu0 %v502
      %559 = vmatprep.subr.mxu0 0.0
      %560 = vmatpush1.msra.mxu0 %v503
      %561 = vmatprep.subr.mxu0 0.0
      %562 = vmatpush1.msra.mxu0 %v504
      %563 = vmatprep.subr.mxu0 0.0
      %564 = vmatpush1.msra.mxu0 %v505
      %565 = vmatprep.subr.mxu0 0.0
      %566 = vmatpush1.msra.mxu0 %v506
      %567 = vmatprep.subr.mxu0 0.0
      %568 = vmatpush1.msra.mxu0 %v507
      %569 = vmatprep.subr.mxu0 0.0
      %570 = vmatpush1.msra.mxu0 %v508
      %571 = vmatprep.subr.mxu0 0.0
      %572 = vmatpush1.msra.mxu0 %v509
      %573 = vmatprep.subr.mxu0 0.0
      %574 = vmatpush1.msra.mxu0 %v510
      %575 = vmatprep.subr.mxu0 0.0
      %576 = vmatpush1.msra.mxu0 %v511
      %577 = vmatprep.subr.mxu0 0.0
      %578 = vmatpush1.msra.mxu0 %v512
      %579 = vmatprep.subr.mxu0 0.0
      %580 = vmatpush1.msra.mxu0 %v513
      %581 = vmatprep.subr.mxu0 0.0
      %582 = vmatpush1.msra.mxu0 %v514
      %583 = vmatprep.subr.mxu0 0.0
      %584 = vmatpush1.msra.mxu0 %v515
      %585 = vmatprep.subr.mxu0 0.0
      %586 = vmatpush1.msra.mxu0 %v516
      %587 = vmatprep.subr.mxu0 0.0
      %588 = vmatpush1.msra.mxu0 %v517
      %589 = vmatprep.subr.mxu0 0.0
      %590 = vmatpush1.msra.mxu0 %v518
      %591 = vmatprep.subr.mxu0 0.0
      %592 = vmatpush1.msra.mxu0 %v519
      %593 = vmatprep.subr.mxu0 0.0
      %594 = vmatpush1.msra.mxu0 %v520
      %595 = vmatprep.subr.mxu0 0.0
      %596 = vmatpush1.msra.mxu0 %v521
      %597 = vmatprep.subr.mxu0 0.0
      %598 = vmatpush1.msra.mxu0 %v522
      %599 = vmatprep.subr.mxu0 0.0
      %600 = vmatpush1.msra.mxu0 %v523
      %601 = vmatprep.subr.mxu0 0.0
      %602 = vmatpush1.msra.mxu0 %v524
      %603 = vmatprep.subr.mxu0 0.0
      %604 = vmatpush1.msra.mxu0 %v525
      %605 = vmatprep.subr.mxu0 0.0
      %606 = vmatpush1.msra.mxu0 %v526
      %607 = vmatprep.mubr.f32.mxu0 %v474
      %608 = vmatmul.mubr.f32.gmra.mrb[0].mxu0 %v416
      %v609 = vpop.f32.mrb[0].mxu0
      %v610 = vadd.f32 0.0, %v609
      %v611 = vpop.f32.mrb[0].mxu0
      %612 = vmatprep.mubr.f32.mxu0 %v475
      %613 = vmatmul.mubr.f32.gmra.mrb[0].mxu0 %v417
      %v614 = vpop.f32.mrb[0].mxu0
      %v615 = vadd.f32 0.0, %v614
      %v616 = vpop.f32.mrb[0].mxu0
      %617 = vmatprep.mubr.f32.mxu0 %v476
      %618 = vmatmul.mubr.f32.gmra.mrb[0].mxu0 %v418
      %v619 = vpop.f32.mrb[0].mxu0
      %v620 = vadd.f32 0.0, %v619
      %v621 = vpop.f32.mrb[0].mxu0
      %622 = vmatprep.mubr.f32.mxu0 %v477
      %623 = vmatmul.mubr.f32.gmra.mrb[0].mxu0 %v419
      %v624 = vpop.f32.mrb[0].mxu0
      %v625 = vadd.f32 0.0, %v624
      %v626 = vpop.f32.mrb[0].mxu0
      %627 = vmatprep.mubr.f32.mxu0 %v478
      %628 = vmatmul.mubr.f32.gmra.mrb[0].mxu0 %v420
      %v629 = vpop.f32.mrb[0].mxu0
      %v630 = vadd.f32 0.0, %v629
      %v631 = vpop.f32.mrb[0].mxu0
      %632 = vmatprep.mubr.f32.mxu0 %v479
      %633 = vmatmul.mubr.f32.gmra.mrb[0].mxu0 %v421
      %v634 = vpop.f32.mrb[0].mxu0
      %v635 = vadd.f32 0.0, %v634
      %v636 = vpop.f32.mrb[0].mxu0
      %637 = vmatprep.mubr.f32.mxu0 %v480
      %638 = vmatmul.mubr.f32.gmra.mrb[0].mxu0 %v422
      %v639 = vpop.f32.mrb[0].mxu0
      %v640 = vadd.f32 0.0, %v639
      %v641 = vpop.f32.mrb[0].mxu0
      %642 = vmatprep.mubr.f32.mxu0 %v481
      %643 = vmatmul.mubr.f32.gmra.mrb[0].mxu0 %v423
      %v644 = vpop.f32.mrb[0].mxu0
      %v645 = vadd.f32 0.0, %v644
      %v646 = vpop.f32.mrb[0].mxu0
      %647 = vmatprep.mubr.f32.mxu0 %v482
      %648 = vmatmul.mubr.f32.gmra.mrb[0].mxu0 %v424
      %v649 = vpop.f32.mrb[0].mxu0
      %v650 = vadd.f32 0.0, %v649
      %v651 = vpop.f32.mrb[0].mxu0
      %652 = vmatprep.mubr.f32.mxu0 %v483
      %653 = vmatmul.mubr.f32.gmra.mrb[0].mxu0 %v473
      %v654 = vpop.f32.mrb[0].mxu0
      %v655 = vadd.f32 0.0, %v654
      %v656 = vpop.f32.mrb[0].mxu0
      %657 = vdwg.mxu0
      %658 = vmatprep.subr.mxu0 0.0
      %659 = vmatpush1.msra.mxu0 %v527
      %660 = vmatprep.subr.mxu0 0.0
      %661 = vmatpush1.msra.mxu0 %v528
      %662 = vmatprep.subr.mxu0 0.0
      %663 = vmatpush1.msra.mxu0 %v529
      %664 = vmatprep.subr.mxu0 0.0
      %665 = vmatpush1.msra.mxu0 %v530
      %666 = vmatprep.subr.mxu0 0.0
      %667 = vmatpush1.msra.mxu0 %v531
      %668 = vmatprep.subr.mxu0 0.0
      %669 = vmatpush1.msra.mxu0 %v532
      %670 = vmatprep.subr.mxu0 0.0
      %671 = vmatpush1.msra.mxu0 %v533
      %672 = vmatprep.subr.mxu0 0.0
      %673 = vmatpush1.msra.mxu0 %v534
      %674 = vmatprep.subr.mxu0 0.0
      %675 = vmatpush1.msra.mxu0 %v535
      %676 = vmatprep.subr.mxu0 0.0
      %677 = vmatpush1.msra.mxu0 %v536
      %678 = vmatprep.subr.mxu0 0.0
      %679 = vmatpush1.msra.mxu0 %v537
      %680 = vmatprep.subr.mxu0 0.0
      %681 = vmatpush1.msra.mxu0 %v538
      %682 = vmatprep.subr.mxu0 0.0
      %683 = vmatpush1.msra.mxu0 %v539
      %684 = vmatprep.subr.mxu0 0.0
      %685 = vmatpush1.msra.mxu0 %v540
      %686 = vmatprep.subr.mxu0 0.0
      %687 = vmatpush1.msra.mxu0 %v541
      %688 = vmatprep.subr.mxu0 0.0
      %689 = vmatpush1.msra.mxu0 %v542
      %690 = vmatprep.subr.mxu0 0.0
      %691 = vmatpush1.msra.mxu0 0.0
      %692 = vmatprep.subr.mxu0 0.0
      %693 = vmatpush1.msra.mxu0 0.0
      %694 = vmatprep.subr.mxu0 0.0
      %695 = vmatpush1.msra.mxu0 0.0
      %696 = vmatprep.subr.mxu0 0.0
      %697 = vmatpush1.msra.mxu0 0.0
      %698 = vmatprep.subr.mxu0 0.0
      %699 = vmatpush1.msra.mxu0 0.0
      %700 = vmatprep.subr.mxu0 0.0
      %701 = vmatpush1.msra.mxu0 0.0
      %702 = vmatprep.subr.mxu0 0.0
      %703 = vmatpush1.msra.mxu0 0.0
      %704 = vmatprep.subr.mxu0 0.0
      %705 = vmatpush1.msra.mxu0 0.0
      %706 = vmatprep.subr.mxu0 0.0
      %707 = vmatpush1.msra.mxu0 0.0
      %708 = vmatprep.subr.mxu0 0.0
      %709 = vmatpush1.msra.mxu0 0.0
      %710 = vmatprep.subr.mxu0 0.0
      %711 = vmatpush1.msra.mxu0 0.0
      %712 = vmatprep.subr.mxu0 0.0
      %713 = vmatpush1.msra.mxu0 0.0
      %714 = vmatprep.subr.mxu0 0.0
      %715 = vmatpush1.msra.mxu0 0.0
      %716 = vmatprep.subr.mxu0 0.0
      %717 = vmatpush1.msra.mxu0 0.0
      %718 = vmatprep.subr.mxu0 0.0
      %719 = vmatpush1.msra.mxu0 0.0
      %720 = vmatprep.subr.mxu0 0.0
      %721 = vmatpush1.msra.mxu0 0.0
      %722 = vmatprep.mubr.f32.mxu0 0.0
      %723 = vmatmul.mubr.f32.gmra.mrb[0].mxu0 %v484
      %v724 = vpop.f32.mrb[0].mxu0
      %v725 = vadd.f32 %v610, %v724
      %v726 = vpop.f32.mrb[0].mxu0
      %727 = vmatprep.mubr.f32.mxu0 0.0
      %728 = vmatmul.mubr.f32.gmra.mrb[0].mxu0 %v485
      %v729 = vpop.f32.mrb[0].mxu0
      %v730 = vadd.f32 %v615, %v729
      %v731 = vpop.f32.mrb[0].mxu0
      %732 = vmatprep.mubr.f32.mxu0 0.0
      %733 = vmatmul.mubr.f32.gmra.mrb[0].mxu0 %v486
      %v734 = vpop.f32.mrb[0].mxu0
      %v735 = vadd.f32 %v620, %v734
      %v736 = vpop.f32.mrb[0].mxu0
      %737 = vmatprep.mubr.f32.mxu0 0.0
      %738 = vmatmul.mubr.f32.gmra.mrb[0].mxu0 %v487
      %v739 = vpop.f32.mrb[0].mxu0
      %v740 = vadd.f32 %v625, %v739
      %v741 = vpop.f32.mrb[0].mxu0
      %742 = vmatprep.mubr.f32.mxu0 0.0
      %743 = vmatmul.mubr.f32.gmra.mrb[0].mxu0 %v488
      %v744 = vpop.f32.mrb[0].mxu0
      %v745 = vadd.f32 %v630, %v744
      %v746 = vpop.f32.mrb[0].mxu0
      %747 = vmatprep.mubr.f32.mxu0 0.0
      %748 = vmatmul.mubr.f32.gmra.mrb[0].mxu0 %v489
      %v749 = vpop.f32.mrb[0].mxu0
      %v750 = vadd.f32 %v635, %v749
      %v751 = vpop.f32.mrb[0].mxu0
      %752 = vmatprep.mubr.f32.mxu0 0.0
      %753 = vmatmul.mubr.f32.gmra.mrb[0].mxu0 %v490
      %v754 = vpop.f32.mrb[0].mxu0
      %v755 = vadd.f32 %v640, %v754
      %v756 = vpop.f32.mrb[0].mxu0
      %757 = vmatprep.mubr.f32.mxu0 0.0
      %758 = vmatmul.mubr.f32.gmra.mrb[0].mxu0 %v491
      %v759 = vpop.f32.mrb[0].mxu0
      %v760 = vadd.f32 %v645, %v759
      %v761 = vpop.f32.mrb[0].mxu0
      %762 = vmatprep.mubr.f32.mxu0 0.0
      %763 = vmatmul.mubr.f32.gmra.mrb[0].mxu0 %v492
      %v764 = vpop.f32.mrb[0].mxu0
      %v765 = vadd.f32 %v650, %v764
      %v766 = vpop.f32.mrb[0].mxu0
      %767 = vmatprep.mubr.f32.mxu0 0.0
      %768 = vmatmul.mubr.f32.gmra.mrb[0].mxu0 %v493
      %v769 = vpop.f32.mrb[0].mxu0
      %v770 = vadd.f32 %v655, %v769
      %v771 = vpop.f32.mrb[0].mxu0
      %772 = vdwg.mxu0
      %773 = vmatprep.subr.mxu0 0.0
      %774 = vmatpush1.msra.mxu0 %v425
      %775 = vmatprep.subr.mxu0 0.0
      %776 = vmatpush1.msra.mxu0 %v426
      %777 = vmatprep.subr.mxu0 0.0
      %778 = vmatpush1.msra.mxu0 %v427
      %779 = vmatprep.subr.mxu0 0.0
      %780 = vmatpush1.msra.mxu0 %v428
      %781 = vmatprep.subr.mxu0 0.0
      %782 = vmatpush1.msra.mxu0 %v429
      %783 = vmatprep.subr.mxu0 0.0
      %784 = vmatpush1.msra.mxu0 %v430
      %785 = vmatprep.subr.mxu0 0.0
      %786 = vmatpush1.msra.mxu0 %v431
      %787 = vmatprep.subr.mxu0 0.0
      %788 = vmatpush1.msra.mxu0 %v432
      %789 = vmatprep.subr.mxu0 0.0
      %790 = vmatpush1.msra.mxu0 %v433
      %791 = vmatprep.subr.mxu0 0.0
      %792 = vmatpush1.msra.mxu0 %v434
      %793 = vmatprep.subr.mxu0 0.0
      %794 = vmatpush1.msra.mxu0 %v435
      %795 = vmatprep.subr.mxu0 0.0
      %796 = vmatpush1.msra.mxu0 %v436
      %797 = vmatprep.subr.mxu0 0.0
      %798 = vmatpush1.msra.mxu0 %v437
      %799 = vmatprep.subr.mxu0 0.0
      %800 = vmatpush1.msra.mxu0 %v438
      %801 = vmatprep.subr.mxu0 0.0
      %802 = vmatpush1.msra.mxu0 %v439
      %803 = vmatprep.subr.mxu0 0.0
      %804 = vmatpush1.msra.mxu0 %v440
      %805 = vmatprep.subr.mxu0 0.0
      %806 = vmatpush1.msra.mxu0 %v441
      %807 = vmatprep.subr.mxu0 0.0
      %808 = vmatpush1.msra.mxu0 %v442
      %809 = vmatprep.subr.mxu0 0.0
      %810 = vmatpush1.msra.mxu0 %v443
      %811 = vmatprep.subr.mxu0 0.0
      %812 = vmatpush1.msra.mxu0 %v444
      %813 = vmatprep.subr.mxu0 0.0
      %814 = vmatpush1.msra.mxu0 %v445
      %815 = vmatprep.subr.mxu0 0.0
      %816 = vmatpush1.msra.mxu0 %v446
      %817 = vmatprep.subr.mxu0 0.0
      %818 = vmatpush1.msra.mxu0 %v447
      %819 = vmatprep.subr.mxu0 0.0
      %820 = vmatpush1.msra.mxu0 %v448
      %821 = vmatprep.subr.mxu0 0.0
      %822 = vmatpush1.msra.mxu0 %v449
      %823 = vmatprep.subr.mxu0 0.0
      %824 = vmatpush1.msra.mxu0 %v450
      %825 = vmatprep.subr.mxu0 0.0
      %826 = vmatpush1.msra.mxu0 %v451
      %827 = vmatprep.subr.mxu0 0.0
      %828 = vmatpush1.msra.mxu0 %v452
      %829 = vmatprep.subr.mxu0 0.0
      %830 = vmatpush1.msra.mxu0 %v453
      %831 = vmatprep.subr.mxu0 0.0
      %832 = vmatpush1.msra.mxu0 %v454
      %833 = vmatprep.subr.mxu0 0.0
      %834 = vmatpush1.msra.mxu0 %v455
      %835 = vmatprep.subr.mxu0 0.0
      %836 = vmatpush1.msra.mxu0 %v456
      %837 = vmatprep.mubr.f32.mxu0 %v405
      %838 = vmatmul.mubr.f32.gmra.mrb[0].mxu0 %v395
      %v839 = vpop.f32.mrb[0].mxu0
      %v840 = vadd.f32 %v725, %v839
      %v841 = vpop.f32.mrb[0].mxu0
      %842 = vmatprep.mubr.f32.mxu0 %v406
      %843 = vmatmul.mubr.f32.gmra.mrb[0].mxu0 %v396
      %v844 = vpop.f32.mrb[0].mxu0
      %v845 = vadd.f32 %v730, %v844
      %v846 = vpop.f32.mrb[0].mxu0
      %847 = vmatprep.mubr.f32.mxu0 %v407
      %848 = vmatmul.mubr.f32.gmra.mrb[0].mxu0 %v397
      %v849 = vpop.f32.mrb[0].mxu0
      %v850 = vadd.f32 %v735, %v849
      %v851 = vpop.f32.mrb[0].mxu0
      %852 = vmatprep.mubr.f32.mxu0 %v408
      %853 = vmatmul.mubr.f32.gmra.mrb[0].mxu0 %v398
      %v854 = vpop.f32.mrb[0].mxu0
      %v855 = vadd.f32 %v740, %v854
      %v856 = vpop.f32.mrb[0].mxu0
      %857 = vmatprep.mubr.f32.mxu0 %v409
      %858 = vmatmul.mubr.f32.gmra.mrb[0].mxu0 %v399
      %v859 = vpop.f32.mrb[0].mxu0
      %v860 = vadd.f32 %v745, %v859
      %v861 = vpop.f32.mrb[0].mxu0
      %862 = vmatprep.mubr.f32.mxu0 %v410
      %863 = vmatmul.mubr.f32.gmra.mrb[0].mxu0 %v400
      %v864 = vpop.f32.mrb[0].mxu0
      %v865 = vadd.f32 %v750, %v864
      %v866 = vpop.f32.mrb[0].mxu0
      %867 = vmatprep.mubr.f32.mxu0 %v411
      %868 = vmatmul.mubr.f32.gmra.mrb[0].mxu0 %v401
      %v869 = vpop.f32.mrb[0].mxu0
      %v870 = vadd.f32 %v755, %v869
      %v871 = vpop.f32.mrb[0].mxu0
      %872 = vmatprep.mubr.f32.mxu0 %v412
      %873 = vmatmul.mubr.f32.gmra.mrb[0].mxu0 %v402
      %v874 = vpop.f32.mrb[0].mxu0
      %v875 = vadd.f32 %v760, %v874
      %v876 = vpop.f32.mrb[0].mxu0
      %877 = vmatprep.mubr.f32.mxu0 %v413
      %878 = vmatmul.mubr.f32.gmra.mrb[0].mxu0 %v403
      %v879 = vpop.f32.mrb[0].mxu0
      %v880 = vadd.f32 %v765, %v879
      %v881 = vpop.f32.mrb[0].mxu0
      %882 = vmatprep.mubr.f32.mxu0 %v414
      %883 = vmatmul.mubr.f32.gmra.mrb[0].mxu0 %v404
      %v884 = vpop.f32.mrb[0].mxu0
      %v885 = vadd.f32 %v770, %v884
      %v886 = vpop.f32.mrb[0].mxu0
      %887 = vdwg.mxu0
      %888 = vmatprep.subr.mxu0 0.0
      %889 = vmatpush1.msra.mxu0 %v457
      %890 = vmatprep.subr.mxu0 0.0
      %891 = vmatpush1.msra.mxu0 %v458
      %892 = vmatprep.subr.mxu0 0.0
      %893 = vmatpush1.msra.mxu0 %v459
      %894 = vmatprep.subr.mxu0 0.0
      %895 = vmatpush1.msra.mxu0 %v460
      %896 = vmatprep.subr.mxu0 0.0
      %897 = vmatpush1.msra.mxu0 %v461
      %898 = vmatprep.subr.mxu0 0.0
      %899 = vmatpush1.msra.mxu0 %v462
      %900 = vmatprep.subr.mxu0 0.0
      %901 = vmatpush1.msra.mxu0 %v463
      %902 = vmatprep.subr.mxu0 0.0
      %903 = vmatpush1.msra.mxu0 %v464
      %904 = vmatprep.subr.mxu0 0.0
      %905 = vmatpush1.msra.mxu0 %v465
      %906 = vmatprep.subr.mxu0 0.0
      %907 = vmatpush1.msra.mxu0 %v466
      %908 = vmatprep.subr.mxu0 0.0
      %909 = vmatpush1.msra.mxu0 %v467
      %910 = vmatprep.subr.mxu0 0.0
      %911 = vmatpush1.msra.mxu0 %v468
      %912 = vmatprep.subr.mxu0 0.0
      %913 = vmatpush1.msra.mxu0 %v469
      %914 = vmatprep.subr.mxu0 0.0
      %915 = vmatpush1.msra.mxu0 %v470
      %916 = vmatprep.subr.mxu0 0.0
      %917 = vmatpush1.msra.mxu0 %v471
      %918 = vmatprep.subr.mxu0 0.0
      %919 = vmatpush1.msra.mxu0 %v472
      %920 = vmatprep.subr.mxu0 0.0
      %921 = vmatpush1.msra.mxu0 0.0
      %922 = vmatprep.subr.mxu0 0.0
      %923 = vmatpush1.msra.mxu0 0.0
      %924 = vmatprep.subr.mxu0 0.0
      %925 = vmatpush1.msra.mxu0 0.0
      %926 = vmatprep.subr.mxu0 0.0
      %927 = vmatpush1.msra.mxu0 0.0
      %928 = vmatprep.subr.mxu0 0.0
      %929 = vmatpush1.msra.mxu0 0.0
      %930 = vmatprep.subr.mxu0 0.0
      %931 = vmatpush1.msra.mxu0 0.0
      %932 = vmatprep.subr.mxu0 0.0
      %933 = vmatpush1.msra.mxu0 0.0
      %934 = vmatprep.subr.mxu0 0.0
      %935 = vmatpush1.msra.mxu0 0.0
      %936 = vmatprep.subr.mxu0 0.0
      %937 = vmatpush1.msra.mxu0 0.0
      %938 = vmatprep.subr.mxu0 0.0
      %939 = vmatpush1.msra.mxu0 0.0
      %940 = vmatprep.subr.mxu0 0.0
      %941 = vmatpush1.msra.mxu0 0.0
      %942 = vmatprep.subr.mxu0 0.0
      %943 = vmatpush1.msra.mxu0 0.0
      %944 = vmatprep.subr.mxu0 0.0
      %945 = vmatpush1.msra.mxu0 0.0
      %946 = vmatprep.subr.mxu0 0.0
      %947 = vmatpush1.msra.mxu0 0.0
      %948 = vmatprep.subr.mxu0 0.0
      %949 = vmatpush1.msra.mxu0 0.0
      %950 = vmatprep.subr.mxu0 0.0
      %951 = vmatpush1.msra.mxu0 0.0
      %952 = vmatprep.mubr.f32.mxu0 0.0
      %953 = vmatmul.mubr.f32.gmra.mrb[0].mxu0 %v415
      %v954 = vpop.f32.mrb[0].mxu0
      %v955 = vadd.f32 %v840, %v954
      %v956 = vpop.f32.mrb[0].mxu0
      %957 = vmatprep.mubr.f32.mxu0 0.0
      %958 = vmatmul.mubr.f32.gmra.mrb[0].mxu0 %v416
      %v959 = vpop.f32.mrb[0].mxu0
      %v960 = vadd.f32 %v845, %v959
      %v961 = vpop.f32.mrb[0].mxu0
      %962 = vmatprep.mubr.f32.mxu0 0.0
      %963 = vmatmul.mubr.f32.gmra.mrb[0].mxu0 %v417
      %v964 = vpop.f32.mrb[0].mxu0
      %v965 = vadd.f32 %v850, %v964
      %v966 = vpop.f32.mrb[0].mxu0
      %967 = vmatprep.mubr.f32.mxu0 0.0
      %968 = vmatmul.mubr.f32.gmra.mrb[0].mxu0 %v418
      %v969 = vpop.f32.mrb[0].mxu0
      %v970 = vadd.f32 %v855, %v969
      %v971 = vpop.f32.mrb[0].mxu0
      %972 = vmatprep.mubr.f32.mxu0 0.0
      %973 = vmatmul.mubr.f32.gmra.mrb[0].mxu0 %v419
      %v974 = vpop.f32.mrb[0].mxu0
      %v975 = vadd.f32 %v860, %v974
      %v976 = vpop.f32.mrb[0].mxu0
      %977 = vmatprep.mubr.f32.mxu0 0.0
      %978 = vmatmul.mubr.f32.gmra.mrb[0].mxu0 %v420
      %v979 = vpop.f32.mrb[0].mxu0
      %v980 = vadd.f32 %v865, %v979
      %v981 = vpop.f32.mrb[0].mxu0
      %982 = vmatprep.mubr.f32.mxu0 0.0
      %983 = vmatmul.mubr.f32.gmra.mrb[0].mxu0 %v421
      %v984 = vpop.f32.mrb[0].mxu0
      %v985 = vadd.f32 %v870, %v984
      %v986 = vpop.f32.mrb[0].mxu0
      %987 = vmatprep.mubr.f32.mxu0 0.0
      %988 = vmatmul.mubr.f32.gmra.mrb[0].mxu0 %v422
      %v989 = vpop.f32.mrb[0].mxu0
      %v990 = vadd.f32 %v875, %v989
      %v991 = vpop.f32.mrb[0].mxu0
      %992 = vmatprep.mubr.f32.mxu0 0.0
      %993 = vmatmul.mubr.f32.gmra.mrb[0].mxu0 %v423
      %v994 = vpop.f32.mrb[0].mxu0
      %v995 = vadd.f32 %v880, %v994
      %v996 = vpop.f32.mrb[0].mxu0
      %997 = vmatprep.mubr.f32.mxu0 0.0
      %998 = vmatmul.mubr.f32.gmra.mrb[0].mxu0 %v424
      %v999 = vpop.f32.mrb[0].mxu0
      %v1000 = vadd.f32 %v885, %v999
      %v1001 = vpop.f32.mrb[0].mxu0
      %1002 = vdwg.mxu0
      %v1003 = vld [vmem:[#allocation2 + $0x14] sm:$0xff]
      %v1004 = vld [vmem:[#allocation2 + $0x1c] sm:$0xff]
      %v1005 = vld [vmem:[#allocation2 + $0x24] sm:$0xff]
      %v1006 = vld [vmem:[#allocation2 + $0x2c] sm:$0xff]
      %v1007 = vld [vmem:[#allocation2 + $0x34] sm:$0xff]
      %v1008 = vld [vmem:[#allocation2 + $0x3c] sm:$0xff]
      %v1009 = vld [vmem:[#allocation2 + $0x44] sm:$0xff]
      %v1010 = vld [vmem:[#allocation2 + $0x4c] sm:$0xff]
      %v1011 = vld [vmem:[#allocation2 + $0x54] sm:$0xff]
      %v1012 = vld [vmem:[#allocation2 + $0x5c] sm:$0xff]
      %v1013 = vld [vmem:[#allocation2 + $0x15] sm:$0xff]
      %v1014 = vld [vmem:[#allocation2 + $0x1d] sm:$0xff]
      %v1015 = vld [vmem:[#allocation2 + $0x25] sm:$0xff]
      %v1016 = vld [vmem:[#allocation2 + $0x2d] sm:$0xff]
      %v1017 = vld [vmem:[#allocation2 + $0x35] sm:$0xff]
      %v1018 = vld [vmem:[#allocation2 + $0x3d] sm:$0xff]
      %v1019 = vld [vmem:[#allocation2 + $0x45] sm:$0xff]
      %v1020 = vld [vmem:[#allocation2 + $0x4d] sm:$0xff]
      %v1021 = vld [vmem:[#allocation2 + $0x55] sm:$0xff]
      %v1022 = vld [vmem:[#allocation2 + $0x5d] sm:$0xff]
      %v1023 = vld [vmem:[#allocation2 + $0x16] sm:$0xff]
      %v1024 = vld [vmem:[#allocation2 + $0x1e] sm:$0xff]
      %v1025 = vld [vmem:[#allocation2 + $0x26] sm:$0xff]
      %v1026 = vld [vmem:[#allocation2 + $0x2e] sm:$0xff]
      %v1027 = vld [vmem:[#allocation2 + $0x36] sm:$0xff]
      %v1028 = vld [vmem:[#allocation2 + $0x3e] sm:$0xff]
      %v1029 = vld [vmem:[#allocation2 + $0x46] sm:$0xff]
      %v1030 = vld [vmem:[#allocation2 + $0x4e] sm:$0xff]
      %v1031 = vld [vmem:[#allocation2 + $0x56] sm:$0xff]
      %v1032 = vld [vmem:[#allocation2 + $0x5e] sm:$0xff]
      %s1033 = scalar_lea.vmem %s1, 768
      %v1034 = vld [vmem:[%s1033] sm:$0xff]
      %v1035 = vld [vmem:[%s1033 + $0x8] sm:$0xff]
      %v1036 = vld [vmem:[%s1033 + $0x10] sm:$0xff]
      %v1037 = vld [vmem:[%s1033 + $0x18] sm:$0xff]
      %v1038 = vld [vmem:[%s1033 + $0x20] sm:$0xff]
      %v1039 = vld [vmem:[%s1033 + $0x28] sm:$0xff]
      %v1040 = vld [vmem:[%s1033 + $0x30] sm:$0xff]
      %v1041 = vld [vmem:[%s1033 + $0x38] sm:$0xff]
      %v1042 = vld [vmem:[%s1033 + $0x40] sm:$0xff]
      %v1043 = vld [vmem:[%s1033 + $0x48] sm:$0xff]
      %v1044 = vld [vmem:[%s1033 + $0x50] sm:$0xff]
      %v1045 = vld [vmem:[%s1033 + $0x58] sm:$0xff]
      %v1046 = vld [vmem:[%s1033 + $0x60] sm:$0xff]
      %v1047 = vld [vmem:[%s1033 + $0x68] sm:$0xff]
      %v1048 = vld [vmem:[%s1033 + $0x70] sm:$0xff]
      %v1049 = vld [vmem:[%s1033 + $0x78] sm:$0xff]
      %v1050 = vld [vmem:[%s1033 + $0x80] sm:$0xff]
      %v1051 = vld [vmem:[%s1033 + $0x88] sm:$0xff]
      %v1052 = vld [vmem:[%s1033 + $0x90] sm:$0xff]
      %v1053 = vld [vmem:[%s1033 + $0x98] sm:$0xff]
      %v1054 = vld [vmem:[%s1033 + $0xa0] sm:$0xff]
      %v1055 = vld [vmem:[%s1033 + $0xa8] sm:$0xff]
      %v1056 = vld [vmem:[%s1033 + $0xb0] sm:$0xff]
      %v1057 = vld [vmem:[%s1033 + $0xb8] sm:$0xff]
      %v1058 = vld [vmem:[%s1033 + $0xc0] sm:$0xff]
      %v1059 = vld [vmem:[%s1033 + $0xc8] sm:$0xff]
      %v1060 = vld [vmem:[%s1033 + $0xd0] sm:$0xff]
      %v1061 = vld [vmem:[%s1033 + $0xd8] sm:$0xff]
      %v1062 = vld [vmem:[%s1033 + $0xe0] sm:$0xff]
      %v1063 = vld [vmem:[%s1033 + $0xe8] sm:$0xff]
      %v1064 = vld [vmem:[%s1033 + $0xf0] sm:$0xff]
      %v1065 = vld [vmem:[%s1033 + $0xf8] sm:$0xff]
      %v1066 = vld [vmem:[%s1033 + $0x100] sm:$0xff]
      %v1067 = vld [vmem:[%s1033 + $0x108] sm:$0xff]
      %v1068 = vld [vmem:[%s1033 + $0x110] sm:$0xff]
      %v1069 = vld [vmem:[%s1033 + $0x118] sm:$0xff]
      %v1070 = vld [vmem:[%s1033 + $0x120] sm:$0xff]
      %v1071 = vld [vmem:[%s1033 + $0x128] sm:$0xff]
      %v1072 = vld [vmem:[%s1033 + $0x130] sm:$0xff]
      %v1073 = vld [vmem:[%s1033 + $0x138] sm:$0xff]
      %v1074 = vld [vmem:[%s1033 + $0x140] sm:$0xff]
      %v1075 = vld [vmem:[%s1033 + $0x148] sm:$0xff]
      %v1076 = vld [vmem:[%s1033 + $0x150] sm:$0xff]
      %v1077 = vld [vmem:[%s1033 + $0x158] sm:$0xff]
      %v1078 = vld [vmem:[%s1033 + $0x160] sm:$0xff]
      %v1079 = vld [vmem:[%s1033 + $0x168] sm:$0xff]
      %v1080 = vld [vmem:[%s1033 + $0x170] sm:$0xff]
      %v1081 = vld [vmem:[%s1033 + $0x178] sm:$0xff]
      %1082 = vmatprep.subr.mxu0 0.0
      %1083 = vmatpush1.msra.mxu0 %v1034
      %1084 = vmatprep.subr.mxu0 0.0
      %1085 = vmatpush1.msra.mxu0 %v1035
      %1086 = vmatprep.subr.mxu0 0.0
      %1087 = vmatpush1.msra.mxu0 %v1036
      %1088 = vmatprep.subr.mxu0 0.0
      %1089 = vmatpush1.msra.mxu0 %v1037
      %1090 = vmatprep.subr.mxu0 0.0
      %1091 = vmatpush1.msra.mxu0 %v1038
      %1092 = vmatprep.subr.mxu0 0.0
      %1093 = vmatpush1.msra.mxu0 %v1039
      %1094 = vmatprep.subr.mxu0 0.0
      %1095 = vmatpush1.msra.mxu0 %v1040
      %1096 = vmatprep.subr.mxu0 0.0
      %1097 = vmatpush1.msra.mxu0 %v1041
      %1098 = vmatprep.subr.mxu0 0.0
      %1099 = vmatpush1.msra.mxu0 %v1042
      %1100 = vmatprep.subr.mxu0 0.0
      %1101 = vmatpush1.msra.mxu0 %v1043
      %1102 = vmatprep.subr.mxu0 0.0
      %1103 = vmatpush1.msra.mxu0 %v1044
      %1104 = vmatprep.subr.mxu0 0.0
      %1105 = vmatpush1.msra.mxu0 %v1045
      %1106 = vmatprep.subr.mxu0 0.0
      %1107 = vmatpush1.msra.mxu0 %v1046
      %1108 = vmatprep.subr.mxu0 0.0
      %1109 = vmatpush1.msra.mxu0 %v1047
      %1110 = vmatprep.subr.mxu0 0.0
      %1111 = vmatpush1.msra.mxu0 %v1048
      %1112 = vmatprep.subr.mxu0 0.0
      %1113 = vmatpush1.msra.mxu0 %v1049
      %1114 = vmatprep.subr.mxu0 0.0
      %1115 = vmatpush1.msra.mxu0 %v1050
      %1116 = vmatprep.subr.mxu0 0.0
      %1117 = vmatpush1.msra.mxu0 %v1051
      %1118 = vmatprep.subr.mxu0 0.0
      %1119 = vmatpush1.msra.mxu0 %v1052
      %1120 = vmatprep.subr.mxu0 0.0
      %1121 = vmatpush1.msra.mxu0 %v1053
      %1122 = vmatprep.subr.mxu0 0.0
      %1123 = vmatpush1.msra.mxu0 %v1054
      %1124 = vmatprep.subr.mxu0 0.0
      %1125 = vmatpush1.msra.mxu0 %v1055
      %1126 = vmatprep.subr.mxu0 0.0
      %1127 = vmatpush1.msra.mxu0 %v1056
      %1128 = vmatprep.subr.mxu0 0.0
      %1129 = vmatpush1.msra.mxu0 %v1057
      %1130 = vmatprep.subr.mxu0 0.0
      %1131 = vmatpush1.msra.mxu0 %v1058
      %1132 = vmatprep.subr.mxu0 0.0
      %1133 = vmatpush1.msra.mxu0 %v1059
      %1134 = vmatprep.subr.mxu0 0.0
      %1135 = vmatpush1.msra.mxu0 %v1060
      %1136 = vmatprep.subr.mxu0 0.0
      %1137 = vmatpush1.msra.mxu0 %v1061
      %1138 = vmatprep.subr.mxu0 0.0
      %1139 = vmatpush1.msra.mxu0 %v1062
      %1140 = vmatprep.subr.mxu0 0.0
      %1141 = vmatpush1.msra.mxu0 %v1063
      %1142 = vmatprep.subr.mxu0 0.0
      %1143 = vmatpush1.msra.mxu0 %v1064
      %1144 = vmatprep.subr.mxu0 0.0
      %1145 = vmatpush1.msra.mxu0 %v1065
      %1146 = vmatprep.mubr.f32.mxu0 %v1013
      %1147 = vmatmul.mubr.f32.gmra.mrb[0].mxu0 %v1003
      %v1148 = vpop.f32.mrb[0].mxu0
      %v1149 = vadd.f32 0.0, %v1148
      %v1150 = vpop.f32.mrb[0].mxu0
      %1151 = vmatprep.mubr.f32.mxu0 %v1014
      %1152 = vmatmul.mubr.f32.gmra.mrb[0].mxu0 %v1004
      %v1153 = vpop.f32.mrb[0].mxu0
      %v1154 = vadd.f32 0.0, %v1153
      %v1155 = vpop.f32.mrb[0].mxu0
      %1156 = vmatprep.mubr.f32.mxu0 %v1015
      %1157 = vmatmul.mubr.f32.gmra.mrb[0].mxu0 %v1005
      %v1158 = vpop.f32.mrb[0].mxu0
      %v1159 = vadd.f32 0.0, %v1158
      %v1160 = vpop.f32.mrb[0].mxu0
      %1161 = vmatprep.mubr.f32.mxu0 %v1016
      %1162 = vmatmul.mubr.f32.gmra.mrb[0].mxu0 %v1006
      %v1163 = vpop.f32.mrb[0].mxu0
      %v1164 = vadd.f32 0.0, %v1163
      %v1165 = vpop.f32.mrb[0].mxu0
      %1166 = vmatprep.mubr.f32.mxu0 %v1017
      %1167 = vmatmul.mubr.f32.gmra.mrb[0].mxu0 %v1007
      %v1168 = vpop.f32.mrb[0].mxu0
      %v1169 = vadd.f32 0.0, %v1168
      %v1170 = vpop.f32.mrb[0].mxu0
      %1171 = vmatprep.mubr.f32.mxu0 %v1018
      %1172 = vmatmul.mubr.f32.gmra.mrb[0].mxu0 %v1008
      %v1173 = vpop.f32.mrb[0].mxu0
      %v1174 = vadd.f32 0.0, %v1173
      %v1175 = vpop.f32.mrb[0].mxu0
      %1176 = vmatprep.mubr.f32.mxu0 %v1019
      %1177 = vmatmul.mubr.f32.gmra.mrb[0].mxu0 %v1009
      %v1178 = vpop.f32.mrb[0].mxu0
      %v1179 = vadd.f32 0.0, %v1178
      %v1180 = vpop.f32.mrb[0].mxu0
      %1181 = vmatprep.mubr.f32.mxu0 %v1020
      %1182 = vmatmul.mubr.f32.gmra.mrb[0].mxu0 %v1010
      %v1183 = vpop.f32.mrb[0].mxu0
      %v1184 = vadd.f32 0.0, %v1183
      %v1185 = vpop.f32.mrb[0].mxu0
      %1186 = vmatprep.mubr.f32.mxu0 %v1021
      %1187 = vmatmul.mubr.f32.gmra.mrb[0].mxu0 %v1011
      %v1188 = vpop.f32.mrb[0].mxu0
      %v1189 = vadd.f32 0.0, %v1188
      %v1190 = vpop.f32.mrb[0].mxu0
      %1191 = vmatprep.mubr.f32.mxu0 %v1022
      %1192 = vmatmul.mubr.f32.gmra.mrb[0].mxu0 %v1012
      %v1193 = vpop.f32.mrb[0].mxu0
      %v1194 = vadd.f32 0.0, %v1193
      %v1195 = vpop.f32.mrb[0].mxu0
      %1196 = vdwg.mxu0
      %1197 = vmatprep.subr.mxu0 0.0
      %1198 = vmatpush1.msra.mxu0 %v1066
      %1199 = vmatprep.subr.mxu0 0.0
      %1200 = vmatpush1.msra.mxu0 %v1067
      %1201 = vmatprep.subr.mxu0 0.0
      %1202 = vmatpush1.msra.mxu0 %v1068
      %1203 = vmatprep.subr.mxu0 0.0
      %1204 = vmatpush1.msra.mxu0 %v1069
      %1205 = vmatprep.subr.mxu0 0.0
      %1206 = vmatpush1.msra.mxu0 %v1070
      %1207 = vmatprep.subr.mxu0 0.0
      %1208 = vmatpush1.msra.mxu0 %v1071
      %1209 = vmatprep.subr.mxu0 0.0
      %1210 = vmatpush1.msra.mxu0 %v1072
      %1211 = vmatprep.subr.mxu0 0.0
      %1212 = vmatpush1.msra.mxu0 %v1073
      %1213 = vmatprep.subr.mxu0 0.0
      %1214 = vmatpush1.msra.mxu0 %v1074
      %1215 = vmatprep.subr.mxu0 0.0
      %1216 = vmatpush1.msra.mxu0 %v1075
      %1217 = vmatprep.subr.mxu0 0.0
      %1218 = vmatpush1.msra.mxu0 %v1076
      %1219 = vmatprep.subr.mxu0 0.0
      %1220 = vmatpush1.msra.mxu0 %v1077
      %1221 = vmatprep.subr.mxu0 0.0
      %1222 = vmatpush1.msra.mxu0 %v1078
      %1223 = vmatprep.subr.mxu0 0.0
      %1224 = vmatpush1.msra.mxu0 %v1079
      %1225 = vmatprep.subr.mxu0 0.0
      %1226 = vmatpush1.msra.mxu0 %v1080
      %1227 = vmatprep.subr.mxu0 0.0
      %1228 = vmatpush1.msra.mxu0 %v1081
      %1229 = vmatprep.subr.mxu0 0.0
      %1230 = vmatpush1.msra.mxu0 0.0
      %1231 = vmatprep.subr.mxu0 0.0
      %1232 = vmatpush1.msra.mxu0 0.0
      %1233 = vmatprep.subr.mxu0 0.0
      %1234 = vmatpush1.msra.mxu0 0.0
      %1235 = vmatprep.subr.mxu0 0.0
      %1236 = vmatpush1.msra.mxu0 0.0
      %1237 = vmatprep.subr.mxu0 0.0
      %1238 = vmatpush1.msra.mxu0 0.0
      %1239 = vmatprep.subr.mxu0 0.0
      %1240 = vmatpush1.msra.mxu0 0.0
      %1241 = vmatprep.subr.mxu0 0.0
      %1242 = vmatpush1.msra.mxu0 0.0
      %1243 = vmatprep.subr.mxu0 0.0
      %1244 = vmatpush1.msra.mxu0 0.0
      %1245 = vmatprep.subr.mxu0 0.0
      %1246 = vmatpush1.msra.mxu0 0.0
      %1247 = vmatprep.subr.mxu0 0.0
      %1248 = vmatpush1.msra.mxu0 0.0
      %1249 = vmatprep.subr.mxu0 0.0
      %1250 = vmatpush1.msra.mxu0 0.0
      %1251 = vmatprep.subr.mxu0 0.0
      %1252 = vmatpush1.msra.mxu0 0.0
      %1253 = vmatprep.subr.mxu0 0.0
      %1254 = vmatpush1.msra.mxu0 0.0
      %1255 = vmatprep.subr.mxu0 0.0
      %1256 = vmatpush1.msra.mxu0 0.0
      %1257 = vmatprep.subr.mxu0 0.0
      %1258 = vmatpush1.msra.mxu0 0.0
      %1259 = vmatprep.subr.mxu0 0.0
      %1260 = vmatpush1.msra.mxu0 0.0
      %1261 = vmatprep.mubr.f32.mxu0 0.0
      %1262 = vmatmul.mubr.f32.gmra.mrb[0].mxu0 %v1023
      %v1263 = vpop.f32.mrb[0].mxu0
      %v1264 = vadd.f32 %v1149, %v1263
      %v1265 = vpop.f32.mrb[0].mxu0
      %1266 = vmatprep.mubr.f32.mxu0 0.0
      %1267 = vmatmul.mubr.f32.gmra.mrb[0].mxu0 %v1024
      %v1268 = vpop.f32.mrb[0].mxu0
      %v1269 = vadd.f32 %v1154, %v1268
      %v1270 = vpop.f32.mrb[0].mxu0
      %1271 = vmatprep.mubr.f32.mxu0 0.0
      %1272 = vmatmul.mubr.f32.gmra.mrb[0].mxu0 %v1025
      %v1273 = vpop.f32.mrb[0].mxu0
      %v1274 = vadd.f32 %v1159, %v1273
      %v1275 = vpop.f32.mrb[0].mxu0
      %1276 = vmatprep.mubr.f32.mxu0 0.0
      %1277 = vmatmul.mubr.f32.gmra.mrb[0].mxu0 %v1026
      %v1278 = vpop.f32.mrb[0].mxu0
      %v1279 = vadd.f32 %v1164, %v1278
      %v1280 = vpop.f32.mrb[0].mxu0
      %1281 = vmatprep.mubr.f32.mxu0 0.0
      %1282 = vmatmul.mubr.f32.gmra.mrb[0].mxu0 %v1027
      %v1283 = vpop.f32.mrb[0].mxu0
      %v1284 = vadd.f32 %v1169, %v1283
      %v1285 = vpop.f32.mrb[0].mxu0
      %1286 = vmatprep.mubr.f32.mxu0 0.0
      %1287 = vmatmul.mubr.f32.gmra.mrb[0].mxu0 %v1028
      %v1288 = vpop.f32.mrb[0].mxu0
      %v1289 = vadd.f32 %v1174, %v1288
      %v1290 = vpop.f32.mrb[0].mxu0
      %1291 = vmatprep.mubr.f32.mxu0 0.0
      %1292 = vmatmul.mubr.f32.gmra.mrb[0].mxu0 %v1029
      %v1293 = vpop.f32.mrb[0].mxu0
      %v1294 = vadd.f32 %v1179, %v1293
      %v1295 = vpop.f32.mrb[0].mxu0
      %1296 = vmatprep.mubr.f32.mxu0 0.0
      %1297 = vmatmul.mubr.f32.gmra.mrb[0].mxu0 %v1030
      %v1298 = vpop.f32.mrb[0].mxu0
      %v1299 = vadd.f32 %v1184, %v1298
      %v1300 = vpop.f32.mrb[0].mxu0
      %1301 = vmatprep.mubr.f32.mxu0 0.0
      %1302 = vmatmul.mubr.f32.gmra.mrb[0].mxu0 %v1031
      %v1303 = vpop.f32.mrb[0].mxu0
      %v1304 = vadd.f32 %v1189, %v1303
      %v1305 = vpop.f32.mrb[0].mxu0
      %1306 = vmatprep.mubr.f32.mxu0 0.0
      %1307 = vmatmul.mubr.f32.gmra.mrb[0].mxu0 %v1032
      %v1308 = vpop.f32.mrb[0].mxu0
      %v1309 = vadd.f32 %v1194, %v1308
      %v1310 = vpop.f32.mrb[0].mxu0
      %1311 = vdwg.mxu0
      %v1312 = vadd.f32 %v955, %v1264
      %v1313 = vadd.f32 %v960, %v1269
      %v1314 = vadd.f32 %v965, %v1274
      %v1315 = vadd.f32 %v970, %v1279
      %v1316 = vadd.f32 %v975, %v1284
      %v1317 = vadd.f32 %v980, %v1289
      %v1318 = vadd.f32 %v985, %v1294
      %v1319 = vadd.f32 %v990, %v1299
      %v1320 = vadd.f32 %v995, %v1304
      %v1321 = vadd.f32 %v1000, %v1309
      %v1322 = vld [vmem:[%s2] sm:$0x1]
      %v1324 = vlaneseq
      %v1325 = vshrl.u32 %v1324, 7
      %v1326 = vsub.s32 0, %v1325
      %v1327 = vrot.slane %v1322, %v1326
      %v1329 = vadd.f32 %v1312, %v1327
      %v1330 = vadd.f32 %v1313, %v1327
      %v1331 = vadd.f32 %v1314, %v1327
      %v1332 = vadd.f32 %v1315, %v1327
      %v1333 = vadd.f32 %v1316, %v1327
      %v1334 = vadd.f32 %v1317, %v1327
      %v1335 = vadd.f32 %v1318, %v1327
      %v1336 = vadd.f32 %v1319, %v1327
      %v1337 = vadd.f32 %v1320, %v1327
      %v1338 = vadd.f32 %v1321, %v1327
      %v1339 = vmul.f32 %v1329, %v1329
      %v1340 = vmul.f32 %v1330, %v1330
      %v1341 = vmul.f32 %v1331, %v1331
      %v1342 = vmul.f32 %v1332, %v1332
      %v1343 = vmul.f32 %v1333, %v1333
      %v1344 = vmul.f32 %v1334, %v1334
      %v1345 = vmul.f32 %v1335, %v1335
      %v1346 = vmul.f32 %v1336, %v1336
      %v1347 = vmul.f32 %v1337, %v1337
      %v1348 = vmul.f32 %v1338, %v1338
      %v1349 = vld [vmem:[%s3] sm:$0xff]
      %v1350 = vld [vmem:[%s3 + $0x8] sm:$0xff]
      %v1351 = vld [vmem:[%s3 + $0x10] sm:$0xff]
      %v1352 = vld [vmem:[%s3 + $0x18] sm:$0xff]
      %v1353 = vld [vmem:[%s3 + $0x20] sm:$0xff]
      %v1354 = vld [vmem:[%s3 + $0x28] sm:$0xff]
      %v1355 = vld [vmem:[%s3 + $0x30] sm:$0xff]
      %v1356 = vld [vmem:[%s3 + $0x38] sm:$0xff]
      %v1357 = vld [vmem:[%s3 + $0x40] sm:$0xff]
      %v1358 = vld [vmem:[%s3 + $0x48] sm:$0xff]
      %v1359 = vld [vmem:[%s3 + $0x50] sm:$0xff]
      %v1360 = vld [vmem:[%s3 + $0x58] sm:$0xff]
      %v1361 = vld [vmem:[%s3 + $0x60] sm:$0xff]
      %v1362 = vld [vmem:[%s3 + $0x68] sm:$0xff]
      %v1363 = vld [vmem:[%s3 + $0x70] sm:$0xff]
      %v1364 = vld [vmem:[%s3 + $0x78] sm:$0xff]
      %v1365 = vld [vmem:[%s4] sm:$0x1]
      %v1367 = vlaneseq
      %v1368 = vshrl.u32 %v1367, 7
      %v1369 = vsub.s32 0, %v1368
      %v1370 = vrot.slane %v1365, %v1369
      %1372 = vmatprep.subr.mxu0 0.0
      %1373 = vmatpush1.msra.mxu0 %v1349
      %1374 = vmatprep.subr.mxu0 0.0
      %1375 = vmatpush1.msra.mxu0 %v1350
      %1376 = vmatprep.subr.mxu0 0.0
      %1377 = vmatpush1.msra.mxu0 %v1351
      %1378 = vmatprep.subr.mxu0 0.0
      %1379 = vmatpush1.msra.mxu0 %v1352
      %1380 = vmatprep.subr.mxu0 0.0
      %1381 = vmatpush1.msra.mxu0 %v1353
      %1382 = vmatprep.subr.mxu0 0.0
      %1383 = vmatpush1.msra.mxu0 %v1354
      %1384 = vmatprep.subr.mxu0 0.0
      %1385 = vmatpush1.msra.mxu0 %v1355
      %1386 = vmatprep.subr.mxu0 0.0
      %1387 = vmatpush1.msra.mxu0 %v1356
      %1388 = vmatprep.subr.mxu0 0.0
      %1389 = vmatpush1.msra.mxu0 %v1357
      %1390 = vmatprep.subr.mxu0 0.0
      %1391 = vmatpush1.msra.mxu0 %v1358
      %1392 = vmatprep.subr.mxu0 0.0
      %1393 = vmatpush1.msra.mxu0 %v1359
      %1394 = vmatprep.subr.mxu0 0.0
      %1395 = vmatpush1.msra.mxu0 %v1360
      %1396 = vmatprep.subr.mxu0 0.0
      %1397 = vmatpush1.msra.mxu0 %v1361
      %1398 = vmatprep.subr.mxu0 0.0
      %1399 = vmatpush1.msra.mxu0 %v1362
      %1400 = vmatprep.subr.mxu0 0.0
      %1401 = vmatpush1.msra.mxu0 %v1363
      %1402 = vmatprep.subr.mxu0 0.0
      %1403 = vmatpush1.msra.mxu0 %v1364
      %1404 = vmatprep.subr.mxu0 0.0
      %1405 = vmatpush1.msra.mxu0 0.0
      %1406 = vmatprep.subr.mxu0 0.0
      %1407 = vmatpush1.msra.mxu0 0.0
      %1408 = vmatprep.subr.mxu0 0.0
      %1409 = vmatpush1.msra.mxu0 0.0
      %1410 = vmatprep.subr.mxu0 0.0
      %1411 = vmatpush1.msra.mxu0 0.0
      %1412 = vmatprep.subr.mxu0 0.0
      %1413 = vmatpush1.msra.mxu0 0.0
      %1414 = vmatprep.subr.mxu0 0.0
      %1415 = vmatpush1.msra.mxu0 0.0
      %1416 = vmatprep.subr.mxu0 0.0
      %1417 = vmatpush1.msra.mxu0 0.0
      %1418 = vmatprep.subr.mxu0 0.0
      %1419 = vmatpush1.msra.mxu0 0.0
      %1420 = vmatprep.subr.mxu0 0.0
      %1421 = vmatpush1.msra.mxu0 0.0
      %1422 = vmatprep.subr.mxu0 0.0
      %1423 = vmatpush1.msra.mxu0 0.0
      %1424 = vmatprep.subr.mxu0 0.0
      %1425 = vmatpush1.msra.mxu0 0.0
      %1426 = vmatprep.subr.mxu0 0.0
      %1427 = vmatpush1.msra.mxu0 0.0
      %1428 = vmatprep.subr.mxu0 0.0
      %1429 = vmatpush1.msra.mxu0 0.0
      %1430 = vmatprep.subr.mxu0 0.0
      %1431 = vmatpush1.msra.mxu0 0.0
      %1432 = vmatprep.subr.mxu0 0.0
      %1433 = vmatpush1.msra.mxu0 0.0
      %1434 = vmatprep.subr.mxu0 0.0
      %1435 = vmatpush1.msra.mxu0 0.0
      %1436 = vmatprep.mubr.f32.mxu0 0.0
      %1437 = vmatmul.mubr.f32.gmra.mrb[0].mxu0 %v1339
      %v1438 = vpop.f32.mrb[0].mxu0
      %v1439 = vadd.f32 %v1370, %v1438
      %v1440 = vpop.f32.mrb[0].mxu0
      %1441 = vmatprep.mubr.f32.mxu0 0.0
      %1442 = vmatmul.mubr.f32.gmra.mrb[0].mxu0 %v1340
      %v1443 = vpop.f32.mrb[0].mxu0
      %v1444 = vadd.f32 %v1370, %v1443
      %v1445 = vpop.f32.mrb[0].mxu0
      %1446 = vmatprep.mubr.f32.mxu0 0.0
      %1447 = vmatmul.mubr.f32.gmra.mrb[0].mxu0 %v1341
      %v1448 = vpop.f32.mrb[0].mxu0
      %v1449 = vadd.f32 %v1370, %v1448
      %v1450 = vpop.f32.mrb[0].mxu0
      %1451 = vmatprep.mubr.f32.mxu0 0.0
      %1452 = vmatmul.mubr.f32.gmra.mrb[0].mxu0 %v1342
      %v1453 = vpop.f32.mrb[0].mxu0
      %v1454 = vadd.f32 %v1370, %v1453
      %v1455 = vpop.f32.mrb[0].mxu0
      %1456 = vmatprep.mubr.f32.mxu0 0.0
      %1457 = vmatmul.mubr.f32.gmra.mrb[0].mxu0 %v1343
      %v1458 = vpop.f32.mrb[0].mxu0
      %v1459 = vadd.f32 %v1370, %v1458
      %v1460 = vpop.f32.mrb[0].mxu0
      %1461 = vmatprep.mubr.f32.mxu0 0.0
      %1462 = vmatmul.mubr.f32.gmra.mrb[0].mxu0 %v1344
      %v1463 = vpop.f32.mrb[0].mxu0
      %v1464 = vadd.f32 %v1370, %v1463
      %v1465 = vpop.f32.mrb[0].mxu0
      %1466 = vmatprep.mubr.f32.mxu0 0.0
      %1467 = vmatmul.mubr.f32.gmra.mrb[0].mxu0 %v1345
      %v1468 = vpop.f32.mrb[0].mxu0
      %v1469 = vadd.f32 %v1370, %v1468
      %v1470 = vpop.f32.mrb[0].mxu0
      %1471 = vmatprep.mubr.f32.mxu0 0.0
      %1472 = vmatmul.mubr.f32.gmra.mrb[0].mxu0 %v1346
      %v1473 = vpop.f32.mrb[0].mxu0
      %v1474 = vadd.f32 %v1370, %v1473
      %v1475 = vpop.f32.mrb[0].mxu0
      %1476 = vmatprep.mubr.f32.mxu0 0.0
      %1477 = vmatmul.mubr.f32.gmra.mrb[0].mxu0 %v1347
      %v1478 = vpop.f32.mrb[0].mxu0
      %v1479 = vadd.f32 %v1370, %v1478
      %v1480 = vpop.f32.mrb[0].mxu0
      %1481 = vmatprep.mubr.f32.mxu0 0.0
      %1482 = vmatmul.mubr.f32.gmra.mrb[0].mxu0 %v1348
      %v1483 = vpop.f32.mrb[0].mxu0
      %v1484 = vadd.f32 %v1370, %v1483
      %v1485 = vpop.f32.mrb[0].mxu0
      %1486 = vdwg.mxu0
      %v1487 = vrsqrt.pop %v1439
      %v1488 = vmul.f32 %v1439, %v1487
      %vm1489 = vcmp.eq.f32.partialorder %v1439, inf
      %v1490 = vsel %vm1489, %v1439, %v1488
      %vm1491 = vcmp.eq.f32.partialorder %v1439, 0.0
      %v1492 = vand.u32 %v1439, 2147483648
      %v1493 = vsel %vm1491, %v1492, %v1490
      %v1494 = vrsqrt.pop %v1444
      %v1495 = vmul.f32 %v1444, %v1494
      %vm1496 = vcmp.eq.f32.partialorder %v1444, inf
      %v1497 = vsel %vm1496, %v1444, %v1495
      %vm1498 = vcmp.eq.f32.partialorder %v1444, 0.0
      %v1499 = vand.u32 %v1444, 2147483648
      %v1500 = vsel %vm1498, %v1499, %v1497
      %v1501 = vrsqrt.pop %v1449
      %v1502 = vmul.f32 %v1449, %v1501
      %vm1503 = vcmp.eq.f32.partialorder %v1449, inf
      %v1504 = vsel %vm1503, %v1449, %v1502
      %vm1505 = vcmp.eq.f32.partialorder %v1449, 0.0
      %v1506 = vand.u32 %v1449, 2147483648
      %v1507 = vsel %vm1505, %v1506, %v1504
      %v1508 = vrsqrt.pop %v1454
      %v1509 = vmul.f32 %v1454, %v1508
      %vm1510 = vcmp.eq.f32.partialorder %v1454, inf
      %v1511 = vsel %vm1510, %v1454, %v1509
      %vm1512 = vcmp.eq.f32.partialorder %v1454, 0.0
      %v1513 = vand.u32 %v1454, 2147483648
      %v1514 = vsel %vm1512, %v1513, %v1511
      %v1515 = vrsqrt.pop %v1459
      %v1516 = vmul.f32 %v1459, %v1515
      %vm1517 = vcmp.eq.f32.partialorder %v1459, inf
      %v1518 = vsel %vm1517, %v1459, %v1516
      %vm1519 = vcmp.eq.f32.partialorder %v1459, 0.0
      %v1520 = vand.u32 %v1459, 2147483648
      %v1521 = vsel %vm1519, %v1520, %v1518
      %v1522 = vrsqrt.pop %v1464
      %v1523 = vmul.f32 %v1464, %v1522
      %vm1524 = vcmp.eq.f32.partialorder %v1464, inf
      %v1525 = vsel %vm1524, %v1464, %v1523
      %vm1526 = vcmp.eq.f32.partialorder %v1464, 0.0
      %v1527 = vand.u32 %v1464, 2147483648
      %v1528 = vsel %vm1526, %v1527, %v1525
      %v1529 = vrsqrt.pop %v1469
      %v1530 = vmul.f32 %v1469, %v1529
      %vm1531 = vcmp.eq.f32.partialorder %v1469, inf
      %v1532 = vsel %vm1531, %v1469, %v1530
      %vm1533 = vcmp.eq.f32.partialorder %v1469, 0.0
      %v1534 = vand.u32 %v1469, 2147483648
      %v1535 = vsel %vm1533, %v1534, %v1532
      %v1536 = vrsqrt.pop %v1474
      %v1537 = vmul.f32 %v1474, %v1536
      %vm1538 = vcmp.eq.f32.partialorder %v1474, inf
      %v1539 = vsel %vm1538, %v1474, %v1537
      %vm1540 = vcmp.eq.f32.partialorder %v1474, 0.0
      %v1541 = vand.u32 %v1474, 2147483648
      %v1542 = vsel %vm1540, %v1541, %v1539
      %v1543 = vrsqrt.pop %v1479
      %v1544 = vmul.f32 %v1479, %v1543
      %vm1545 = vcmp.eq.f32.partialorder %v1479, inf
      %v1546 = vsel %vm1545, %v1479, %v1544
      %vm1547 = vcmp.eq.f32.partialorder %v1479, 0.0
      %v1548 = vand.u32 %v1479, 2147483648
      %v1549 = vsel %vm1547, %v1548, %v1546
      %v1550 = vrsqrt.pop %v1484
      %v1551 = vmul.f32 %v1484, %v1550
      %vm1552 = vcmp.eq.f32.partialorder %v1484, inf
      %v1553 = vsel %vm1552, %v1484, %v1551
      %vm1554 = vcmp.eq.f32.partialorder %v1484, 0.0
      %v1555 = vand.u32 %v1484, 2147483648
      %v1556 = vsel %vm1554, %v1555, %v1553
      %v1557 = vmul.f32 %v1329, %v1493
      %v1558 = vmul.f32 %v1330, %v1500
      %v1559 = vmul.f32 %v1331, %v1507
      %v1560 = vmul.f32 %v1332, %v1514
      %v1561 = vmul.f32 %v1333, %v1521
      %v1562 = vmul.f32 %v1334, %v1528
      %v1563 = vmul.f32 %v1335, %v1535
      %v1564 = vmul.f32 %v1336, %v1542
      %v1565 = vmul.f32 %v1337, %v1549
      %v1566 = vmul.f32 %v1338, %v1556
      %v1567 = vsel %vm385, 1, 0
      %v1568 = vsel %vm386, 1, 0
      %v1569 = vsel %vm387, 1, 0
      %v1570 = vsel %vm388, 1, 0
      %v1571 = vsel %vm389, 1, 0
      %v1572 = vsel %vm390, 1, 0
      %v1573 = vsel %vm391, 1, 0
      %v1574 = vsel %vm392, 1, 0
      %v1575 = vsel %vm393, 1, 0
      %v1576 = vsel %vm394, 1, 0
      %1577 = vset.pattern.permute.xlu0 0
      %1578 = vperm.xlu0 %1577, %v1567
      %v1579 = vpop.permute.xlu0 %1578
      %1580 = vset.pattern.permute.xlu0 0
      %1581 = vperm.xlu0 %1580, %v1568
      %v1582 = vpop.permute.xlu0 %1581
      %1583 = vset.pattern.permute.xlu0 0
      %1584 = vperm.xlu0 %1583, %v1569
      %v1585 = vpop.permute.xlu0 %1584
      %1586 = vset.pattern.permute.xlu0 0
      %1587 = vperm.xlu0 %1586, %v1570
      %v1588 = vpop.permute.xlu0 %1587
      %1589 = vset.pattern.permute.xlu0 0
      %1590 = vperm.xlu0 %1589, %v1571
      %v1591 = vpop.permute.xlu0 %1590
      %1592 = vset.pattern.permute.xlu0 0
      %1593 = vperm.xlu0 %1592, %v1572
      %v1594 = vpop.permute.xlu0 %1593
      %1595 = vset.pattern.permute.xlu0 0
      %1596 = vperm.xlu0 %1595, %v1573
      %v1597 = vpop.permute.xlu0 %1596
      %1598 = vset.pattern.permute.xlu0 0
      %1599 = vperm.xlu0 %1598, %v1574
      %v1600 = vpop.permute.xlu0 %1599
      %1601 = vset.pattern.permute.xlu0 0
      %1602 = vperm.xlu0 %1601, %v1575
      %v1603 = vpop.permute.xlu0 %1602
      %1604 = vset.pattern.permute.xlu0 0
      %1605 = vperm.xlu0 %1604, %v1576
      %v1606 = vpop.permute.xlu0 %1605
      %vm1607 = vcmp.eq.s32.totalorder %v1579, 1
      %vm1608 = vcmp.eq.s32.totalorder %v1582, 1
      %vm1609 = vcmp.eq.s32.totalorder %v1585, 1
      %vm1610 = vcmp.eq.s32.totalorder %v1588, 1
      %vm1611 = vcmp.eq.s32.totalorder %v1591, 1
      %vm1612 = vcmp.eq.s32.totalorder %v1594, 1
      %vm1613 = vcmp.eq.s32.totalorder %v1597, 1
      %vm1614 = vcmp.eq.s32.totalorder %v1600, 1
      %vm1615 = vcmp.eq.s32.totalorder %v1603, 1
      %vm1616 = vcmp.eq.s32.totalorder %v1606, 1
      %v1617 = vsel %vm1607, %v1557, 0.0
      %v1618 = vsel %vm1608, %v1558, 0.0
      %v1619 = vsel %vm1609, %v1559, 0.0
      %v1620 = vsel %vm1610, %v1560, 0.0
      %v1621 = vsel %vm1611, %v1561, 0.0
      %v1622 = vsel %vm1612, %v1562, 0.0
      %v1623 = vsel %vm1613, %v1563, 0.0
      %v1624 = vsel %vm1614, %v1564, 0.0
      %v1625 = vsel %vm1615, %v1565, 0.0
      %v1626 = vsel %vm1616, %v1566, 0.0
      %1627 = vst [vmem:[#allocation3 + $0xb] sm:$0xff] %v1617
      %1628 = vst [vmem:[#allocation3 + $0x13] sm:$0xff] %v1618
      %1629 = vst [vmem:[#allocation3 + $0x1b] sm:$0xff] %v1619
      %1630 = vst [vmem:[#allocation3 + $0x23] sm:$0xff] %v1620
      %1631 = vst [vmem:[#allocation3 + $0x2b] sm:$0xff] %v1621
      %1632 = vst [vmem:[#allocation3 + $0x33] sm:$0xff] %v1622
      %1633 = vst [vmem:[#allocation3 + $0x3b] sm:$0xff] %v1623
      %1634 = vst [vmem:[#allocation3 + $0x43] sm:$0xff] %v1624
      %1635 = vst [vmem:[#allocation3 + $0x4b] sm:$0xff] %v1625
      %1636 = vst [vmem:[#allocation3 + $0x53] sm:$0xff] %v1626
      %v1637 = vld [vmem:[#allocation3] sm:$0xff]
      %v1638 = vld [vmem:[#allocation3 + $0x8] sm:$0xff]
      %v1639 = vld [vmem:[#allocation3 + $0x10] sm:$0xff]
      %v1640 = vld [vmem:[#allocation3 + $0x18] sm:$0xff]
      %v1641 = vld [vmem:[#allocation3 + $0x20] sm:$0xff]
      %v1642 = vld [vmem:[#allocation3 + $0x28] sm:$0xff]
      %v1643 = vld [vmem:[#allocation3 + $0x30] sm:$0xff]
      %v1644 = vld [vmem:[#allocation3 + $0x38] sm:$0xff]
      %v1645 = vld [vmem:[#allocation3 + $0x40] sm:$0xff]
      %v1646 = vld [vmem:[#allocation3 + $0x48] sm:$0xff]
      %v1647 = vld [vmem:[#allocation3 + $0x1] sm:$0xff]
      %v1648 = vld [vmem:[#allocation3 + $0x9] sm:$0xff]
      %v1649 = vld [vmem:[#allocation3 + $0x11] sm:$0xff]
      %v1650 = vld [vmem:[#allocation3 + $0x19] sm:$0xff]
      %v1651 = vld [vmem:[#allocation3 + $0x21] sm:$0xff]
      %v1652 = vld [vmem:[#allocation3 + $0x29] sm:$0xff]
      %v1653 = vld [vmem:[#allocation3 + $0x31] sm:$0xff]
      %v1654 = vld [vmem:[#allocation3 + $0x39] sm:$0xff]
      %v1655 = vld [vmem:[#allocation3 + $0x41] sm:$0xff]
      %v1656 = vld [vmem:[#allocation3 + $0x49] sm:$0xff]
      %v1657 = vld [vmem:[#allocation3 + $0x2] sm:$0xff]
      %v1658 = vld [vmem:[#allocation3 + $0xa] sm:$0xff]
      %v1659 = vld [vmem:[#allocation3 + $0x12] sm:$0xff]
      %v1660 = vld [vmem:[#allocation3 + $0x1a] sm:$0xff]
      %v1661 = vld [vmem:[#allocation3 + $0x22] sm:$0xff]
      %v1662 = vld [vmem:[#allocation3 + $0x2a] sm:$0xff]
      %v1663 = vld [vmem:[#allocation3 + $0x32] sm:$0xff]
      %v1664 = vld [vmem:[#allocation3 + $0x3a] sm:$0xff]
      %v1665 = vld [vmem:[#allocation3 + $0x42] sm:$0xff]
      %v1666 = vld [vmem:[#allocation3 + $0x4a] sm:$0xff]
      %s1667 = scalar_lea.vmem %s1, 1152
      %v1668 = vld [vmem:[%s1667] sm:$0xff]
      %v1669 = vld [vmem:[%s1667 + $0x8] sm:$0xff]
      %v1670 = vld [vmem:[%s1667 + $0x10] sm:$0xff]
      %v1671 = vld [vmem:[%s1667 + $0x18] sm:$0xff]
      %v1672 = vld [vmem:[%s1667 + $0x20] sm:$0xff]
      %v1673 = vld [vmem:[%s1667 + $0x28] sm:$0xff]
      %v1674 = vld [vmem:[%s1667 + $0x30] sm:$0xff]
      %v1675 = vld [vmem:[%s1667 + $0x38] sm:$0xff]
      %v1676 = vld [vmem:[%s1667 + $0x40] sm:$0xff]
      %v1677 = vld [vmem:[%s1667 + $0x48] sm:$0xff]
      %v1678 = vld [vmem:[%s1667 + $0x50] sm:$0xff]
      %v1679 = vld [vmem:[%s1667 + $0x58] sm:$0xff]
      %v1680 = vld [vmem:[%s1667 + $0x60] sm:$0xff]
      %v1681 = vld [vmem:[%s1667 + $0x68] sm:$0xff]
      %v1682 = vld [vmem:[%s1667 + $0x70] sm:$0xff]
      %v1683 = vld [vmem:[%s1667 + $0x78] sm:$0xff]
      %v1684 = vld [vmem:[%s1667 + $0x80] sm:$0xff]
      %v1685 = vld [vmem:[%s1667 + $0x88] sm:$0xff]
      %v1686 = vld [vmem:[%s1667 + $0x90] sm:$0xff]
      %v1687 = vld [vmem:[%s1667 + $0x98] sm:$0xff]
      %v1688 = vld [vmem:[%s1667 + $0xa0] sm:$0xff]
      %v1689 = vld [vmem:[%s1667 + $0xa8] sm:$0xff]
      %v1690 = vld [vmem:[%s1667 + $0xb0] sm:$0xff]
      %v1691 = vld [vmem:[%s1667 + $0xb8] sm:$0xff]
      %v1692 = vld [vmem:[%s1667 + $0xc0] sm:$0xff]
      %v1693 = vld [vmem:[%s1667 + $0xc8] sm:$0xff]
      %v1694 = vld [vmem:[%s1667 + $0xd0] sm:$0xff]
      %v1695 = vld [vmem:[%s1667 + $0xd8] sm:$0xff]
      %v1696 = vld [vmem:[%s1667 + $0xe0] sm:$0xff]
      %v1697 = vld [vmem:[%s1667 + $0xe8] sm:$0xff]
      %v1698 = vld [vmem:[%s1667 + $0xf0] sm:$0xff]
      %v1699 = vld [vmem:[%s1667 + $0xf8] sm:$0xff]
      %v1700 = vld [vmem:[%s1667 + $0x100] sm:$0xff]
      %v1701 = vld [vmem:[%s1667 + $0x108] sm:$0xff]
      %v1702 = vld [vmem:[%s1667 + $0x110] sm:$0xff]
      %v1703 = vld [vmem:[%s1667 + $0x118] sm:$0xff]
      %v1704 = vld [vmem:[%s1667 + $0x120] sm:$0xff]
      %v1705 = vld [vmem:[%s1667 + $0x128] sm:$0xff]
      %v1706 = vld [vmem:[%s1667 + $0x130] sm:$0xff]
      %v1707 = vld [vmem:[%s1667 + $0x138] sm:$0xff]
      %v1708 = vld [vmem:[%s1667 + $0x140] sm:$0xff]
      %v1709 = vld [vmem:[%s1667 + $0x148] sm:$0xff]
      %v1710 = vld [vmem:[%s1667 + $0x150] sm:$0xff]
      %v1711 = vld [vmem:[%s1667 + $0x158] sm:$0xff]
      %v1712 = vld [vmem:[%s1667 + $0x160] sm:$0xff]
      %v1713 = vld [vmem:[%s1667 + $0x168] sm:$0xff]
      %v1714 = vld [vmem:[%s1667 + $0x170] sm:$0xff]
      %v1715 = vld [vmem:[%s1667 + $0x178] sm:$0xff]
      %v1716 = vld [vmem:[#allocation3 + $0x52] sm:$0xff]
      %v1717 = vld [vmem:[#allocation3 + $0xb] sm:$0xff]
      %v1718 = vld [vmem:[#allocation3 + $0x13] sm:$0xff]
      %v1719 = vld [vmem:[#allocation3 + $0x1b] sm:$0xff]
      %v1720 = vld [vmem:[#allocation3 + $0x23] sm:$0xff]
      %v1721 = vld [vmem:[#allocation3 + $0x2b] sm:$0xff]
      %v1722 = vld [vmem:[#allocation3 + $0x33] sm:$0xff]
      %v1723 = vld [vmem:[#allocation3 + $0x3b] sm:$0xff]
      %v1724 = vld [vmem:[#allocation3 + $0x43] sm:$0xff]
      %v1725 = vld [vmem:[#allocation3 + $0x4b] sm:$0xff]
      %v1726 = vld [vmem:[#allocation3 + $0x53] sm:$0xff]
      %v1727 = vld [vmem:[#allocation3 + $0xc] sm:$0xff]
      %v1728 = vld [vmem:[#allocation3 + $0x14] sm:$0xff]
      %v1729 = vld [vmem:[#allocation3 + $0x1c] sm:$0xff]
      %v1730 = vld [vmem:[#allocation3 + $0x24] sm:$0xff]
      %v1731 = vld [vmem:[#allocation3 + $0x2c] sm:$0xff]
      %v1732 = vld [vmem:[#allocation3 + $0x34] sm:$0xff]
      %v1733 = vld [vmem:[#allocation3 + $0x3c] sm:$0xff]
      %v1734 = vld [vmem:[#allocation3 + $0x44] sm:$0xff]
      %v1735 = vld [vmem:[#allocation3 + $0x4c] sm:$0xff]
      %v1736 = vld [vmem:[#allocation3 + $0x54] sm:$0xff]
      %s1737 = scalar_lea.vmem %s1, 1536
      %v1738 = vld [vmem:[%s1737] sm:$0xff]
      %v1739 = vld [vmem:[%s1737 + $0x8] sm:$0xff]
      %v1740 = vld [vmem:[%s1737 + $0x10] sm:$0xff]
      %v1741 = vld [vmem:[%s1737 + $0x18] sm:$0xff]
      %v1742 = vld [vmem:[%s1737 + $0x20] sm:$0xff]
      %v1743 = vld [vmem:[%s1737 + $0x28] sm:$0xff]
      %v1744 = vld [vmem:[%s1737 + $0x30] sm:$0xff]
      %v1745 = vld [vmem:[%s1737 + $0x38] sm:$0xff]
      %v1746 = vld [vmem:[%s1737 + $0x40] sm:$0xff]
      %v1747 = vld [vmem:[%s1737 + $0x48] sm:$0xff]
      %v1748 = vld [vmem:[%s1737 + $0x50] sm:$0xff]
      %v1749 = vld [vmem:[%s1737 + $0x58] sm:$0xff]
      %v1750 = vld [vmem:[%s1737 + $0x60] sm:$0xff]
      %v1751 = vld [vmem:[%s1737 + $0x68] sm:$0xff]
      %v1752 = vld [vmem:[%s1737 + $0x70] sm:$0xff]
      %v1753 = vld [vmem:[%s1737 + $0x78] sm:$0xff]
      %v1754 = vld [vmem:[%s1737 + $0x80] sm:$0xff]
      %v1755 = vld [vmem:[%s1737 + $0x88] sm:$0xff]
      %v1756 = vld [vmem:[%s1737 + $0x90] sm:$0xff]
      %v1757 = vld [vmem:[%s1737 + $0x98] sm:$0xff]
      %v1758 = vld [vmem:[%s1737 + $0xa0] sm:$0xff]
      %v1759 = vld [vmem:[%s1737 + $0xa8] sm:$0xff]
      %v1760 = vld [vmem:[%s1737 + $0xb0] sm:$0xff]
      %v1761 = vld [vmem:[%s1737 + $0xb8] sm:$0xff]
      %v1762 = vld [vmem:[%s1737 + $0xc0] sm:$0xff]
      %v1763 = vld [vmem:[%s1737 + $0xc8] sm:$0xff]
      %v1764 = vld [vmem:[%s1737 + $0xd0] sm:$0xff]
      %v1765 = vld [vmem:[%s1737 + $0xd8] sm:$0xff]
      %v1766 = vld [vmem:[%s1737 + $0xe0] sm:$0xff]
      %v1767 = vld [vmem:[%s1737 + $0xe8] sm:$0xff]
      %v1768 = vld [vmem:[%s1737 + $0xf0] sm:$0xff]
      %v1769 = vld [vmem:[%s1737 + $0xf8] sm:$0xff]
      %v1770 = vld [vmem:[%s1737 + $0x100] sm:$0xff]
      %v1771 = vld [vmem:[%s1737 + $0x108] sm:$0xff]
      %v1772 = vld [vmem:[%s1737 + $0x110] sm:$0xff]
      %v1773 = vld [vmem:[%s1737 + $0x118] sm:$0xff]
      %v1774 = vld [vmem:[%s1737 + $0x120] sm:$0xff]
      %v1775 = vld [vmem:[%s1737 + $0x128] sm:$0xff]
      %v1776 = vld [vmem:[%s1737 + $0x130] sm:$0xff]
      %v1777 = vld [vmem:[%s1737 + $0x138] sm:$0xff]
      %v1778 = vld [vmem:[%s1737 + $0x140] sm:$0xff]
      %v1779 = vld [vmem:[%s1737 + $0x148] sm:$0xff]
      %v1780 = vld [vmem:[%s1737 + $0x150] sm:$0xff]
      %v1781 = vld [vmem:[%s1737 + $0x158] sm:$0xff]
      %v1782 = vld [vmem:[%s1737 + $0x160] sm:$0xff]
      %v1783 = vld [vmem:[%s1737 + $0x168] sm:$0xff]
      %v1784 = vld [vmem:[%s1737 + $0x170] sm:$0xff]
      %v1785 = vld [vmem:[%s1737 + $0x178] sm:$0xff]
      %1786 = vmatprep.subr.mxu0 0.0
      %1787 = vmatpush1.msra.mxu0 %v1738
      %1788 = vmatprep.subr.mxu0 0.0
      %1789 = vmatpush1.msra.mxu0 %v1739
      %1790 = vmatprep.subr.mxu0 0.0
      %1791 = vmatpush1.msra.mxu0 %v1740
      %1792 = vmatprep.subr.mxu0 0.0
      %1793 = vmatpush1.msra.mxu0 %v1741
      %1794 = vmatprep.subr.mxu0 0.0
      %1795 = vmatpush1.msra.mxu0 %v1742
      %1796 = vmatprep.subr.mxu0 0.0
      %1797 = vmatpush1.msra.mxu0 %v1743
      %1798 = vmatprep.subr.mxu0 0.0
      %1799 = vmatpush1.msra.mxu0 %v1744
      %1800 = vmatprep.subr.mxu0 0.0
      %1801 = vmatpush1.msra.mxu0 %v1745
      %1802 = vmatprep.subr.mxu0 0.0
      %1803 = vmatpush1.msra.mxu0 %v1746
      %1804 = vmatprep.subr.mxu0 0.0
      %1805 = vmatpush1.msra.mxu0 %v1747
      %1806 = vmatprep.subr.mxu0 0.0
      %1807 = vmatpush1.msra.mxu0 %v1748
      %1808 = vmatprep.subr.mxu0 0.0
      %1809 = vmatpush1.msra.mxu0 %v1749
      %1810 = vmatprep.subr.mxu0 0.0
      %1811 = vmatpush1.msra.mxu0 %v1750
      %1812 = vmatprep.subr.mxu0 0.0
      %1813 = vmatpush1.msra.mxu0 %v1751
      %1814 = vmatprep.subr.mxu0 0.0
      %1815 = vmatpush1.msra.mxu0 %v1752
      %1816 = vmatprep.subr.mxu0 0.0
      %1817 = vmatpush1.msra.mxu0 %v1753
      %1818 = vmatprep.subr.mxu0 0.0
      %1819 = vmatpush1.msra.mxu0 %v1754
      %1820 = vmatprep.subr.mxu0 0.0
      %1821 = vmatpush1.msra.mxu0 %v1755
      %1822 = vmatprep.subr.mxu0 0.0
      %1823 = vmatpush1.msra.mxu0 %v1756
      %1824 = vmatprep.subr.mxu0 0.0
      %1825 = vmatpush1.msra.mxu0 %v1757
      %1826 = vmatprep.subr.mxu0 0.0
      %1827 = vmatpush1.msra.mxu0 %v1758
      %1828 = vmatprep.subr.mxu0 0.0
      %1829 = vmatpush1.msra.mxu0 %v1759
      %1830 = vmatprep.subr.mxu0 0.0
      %1831 = vmatpush1.msra.mxu0 %v1760
      %1832 = vmatprep.subr.mxu0 0.0
      %1833 = vmatpush1.msra.mxu0 %v1761
      %1834 = vmatprep.subr.mxu0 0.0
      %1835 = vmatpush1.msra.mxu0 %v1762
      %1836 = vmatprep.subr.mxu0 0.0
      %1837 = vmatpush1.msra.mxu0 %v1763
      %1838 = vmatprep.subr.mxu0 0.0
      %1839 = vmatpush1.msra.mxu0 %v1764
      %1840 = vmatprep.subr.mxu0 0.0
      %1841 = vmatpush1.msra.mxu0 %v1765
      %1842 = vmatprep.subr.mxu0 0.0
      %1843 = vmatpush1.msra.mxu0 %v1766
      %1844 = vmatprep.subr.mxu0 0.0
      %1845 = vmatpush1.msra.mxu0 %v1767
      %1846 = vmatprep.subr.mxu0 0.0
      %1847 = vmatpush1.msra.mxu0 %v1768
      %1848 = vmatprep.subr.mxu0 0.0
      %1849 = vmatpush1.msra.mxu0 %v1769
      %1850 = vmatprep.mubr.f32.mxu0 %v1717
      %1851 = vmatmul.mubr.f32.gmra.mrb[0].mxu0 %v1658
      %v1852 = vpop.f32.mrb[0].mxu0
      %v1853 = vadd.f32 0.0, %v1852
      %v1854 = vpop.f32.mrb[0].mxu0
      %1855 = vmatprep.mubr.f32.mxu0 %v1718
      %1856 = vmatmul.mubr.f32.gmra.mrb[0].mxu0 %v1659
      %v1857 = vpop.f32.mrb[0].mxu0
      %v1858 = vadd.f32 0.0, %v1857
      %v1859 = vpop.f32.mrb[0].mxu0
      %1860 = vmatprep.mubr.f32.mxu0 %v1719
      %1861 = vmatmul.mubr.f32.gmra.mrb[0].mxu0 %v1660
      %v1862 = vpop.f32.mrb[0].mxu0
      %v1863 = vadd.f32 0.0, %v1862
      %v1864 = vpop.f32.mrb[0].mxu0
      %1865 = vmatprep.mubr.f32.mxu0 %v1720
      %1866 = vmatmul.mubr.f32.gmra.mrb[0].mxu0 %v1661
      %v1867 = vpop.f32.mrb[0].mxu0
      %v1868 = vadd.f32 0.0, %v1867
      %v1869 = vpop.f32.mrb[0].mxu0
      %1870 = vmatprep.mubr.f32.mxu0 %v1721
      %1871 = vmatmul.mubr.f32.gmra.mrb[0].mxu0 %v1662
      %v1872 = vpop.f32.mrb[0].mxu0
      %v1873 = vadd.f32 0.0, %v1872
      %v1874 = vpop.f32.mrb[0].mxu0
      %1875 = vmatprep.mubr.f32.mxu0 %v1722
      %1876 = vmatmul.mubr.f32.gmra.mrb[0].mxu0 %v1663
      %v1877 = vpop.f32.mrb[0].mxu0
      %v1878 = vadd.f32 0.0, %v1877
      %v1879 = vpop.f32.mrb[0].mxu0
      %1880 = vmatprep.mubr.f32.mxu0 %v1723
      %1881 = vmatmul.mubr.f32.gmra.mrb[0].mxu0 %v1664
      %v1882 = vpop.f32.mrb[0].mxu0
      %v1883 = vadd.f32 0.0, %v1882
      %v1884 = vpop.f32.mrb[0].mxu0
      %1885 = vmatprep.mubr.f32.mxu0 %v1724
      %1886 = vmatmul.mubr.f32.gmra.mrb[0].mxu0 %v1665
      %v1887 = vpop.f32.mrb[0].mxu0
      %v1888 = vadd.f32 0.0, %v1887
      %v1889 = vpop.f32.mrb[0].mxu0
      %1890 = vmatprep.mubr.f32.mxu0 %v1725
      %1891 = vmatmul.mubr.f32.gmra.mrb[0].mxu0 %v1666
      %v1892 = vpop.f32.mrb[0].mxu0
      %v1893 = vadd.f32 0.0, %v1892
      %v1894 = vpop.f32.mrb[0].mxu0
      %1895 = vmatprep.mubr.f32.mxu0 %v1726
      %1896 = vmatmul.mubr.f32.gmra.mrb[0].mxu0 %v1716
      %v1897 = vpop.f32.mrb[0].mxu0
      %v1898 = vadd.f32 0.0, %v1897
      %v1899 = vpop.f32.mrb[0].mxu0
      %1900 = vdwg.mxu0
      %1901 = vmatprep.subr.mxu0 0.0
      %1902 = vmatpush1.msra.mxu0 %v1770
      %1903 = vmatprep.subr.mxu0 0.0
      %1904 = vmatpush1.msra.mxu0 %v1771
      %1905 = vmatprep.subr.mxu0 0.0
      %1906 = vmatpush1.msra.mxu0 %v1772
      %1907 = vmatprep.subr.mxu0 0.0
      %1908 = vmatpush1.msra.mxu0 %v1773
      %1909 = vmatprep.subr.mxu0 0.0
      %1910 = vmatpush1.msra.mxu0 %v1774
      %1911 = vmatprep.subr.mxu0 0.0
      %1912 = vmatpush1.msra.mxu0 %v1775
      %1913 = vmatprep.subr.mxu0 0.0
      %1914 = vmatpush1.msra.mxu0 %v1776
      %1915 = vmatprep.subr.mxu0 0.0
      %1916 = vmatpush1.msra.mxu0 %v1777
      %1917 = vmatprep.subr.mxu0 0.0
      %1918 = vmatpush1.msra.mxu0 %v1778
      %1919 = vmatprep.subr.mxu0 0.0
      %1920 = vmatpush1.msra.mxu0 %v1779
      %1921 = vmatprep.subr.mxu0 0.0
      %1922 = vmatpush1.msra.mxu0 %v1780
      %1923 = vmatprep.subr.mxu0 0.0
      %1924 = vmatpush1.msra.mxu0 %v1781
      %1925 = vmatprep.subr.mxu0 0.0
      %1926 = vmatpush1.msra.mxu0 %v1782
      %1927 = vmatprep.subr.mxu0 0.0
      %1928 = vmatpush1.msra.mxu0 %v1783
      %1929 = vmatprep.subr.mxu0 0.0
      %1930 = vmatpush1.msra.mxu0 %v1784
      %1931 = vmatprep.subr.mxu0 0.0
      %1932 = vmatpush1.msra.mxu0 %v1785
      %1933 = vmatprep.subr.mxu0 0.0
      %1934 = vmatpush1.msra.mxu0 0.0
      %1935 = vmatprep.subr.mxu0 0.0
      %1936 = vmatpush1.msra.mxu0 0.0
      %1937 = vmatprep.subr.mxu0 0.0
      %1938 = vmatpush1.msra.mxu0 0.0
      %1939 = vmatprep.subr.mxu0 0.0
      %1940 = vmatpush1.msra.mxu0 0.0
      %1941 = vmatprep.subr.mxu0 0.0
      %1942 = vmatpush1.msra.mxu0 0.0
      %1943 = vmatprep.subr.mxu0 0.0
      %1944 = vmatpush1.msra.mxu0 0.0
      %1945 = vmatprep.subr.mxu0 0.0
      %1946 = vmatpush1.msra.mxu0 0.0
      %1947 = vmatprep.subr.mxu0 0.0
      %1948 = vmatpush1.msra.mxu0 0.0
      %1949 = vmatprep.subr.mxu0 0.0
      %1950 = vmatpush1.msra.mxu0 0.0
      %1951 = vmatprep.subr.mxu0 0.0
      %1952 = vmatpush1.msra.mxu0 0.0
      %1953 = vmatprep.subr.mxu0 0.0
      %1954 = vmatpush1.msra.mxu0 0.0
      %1955 = vmatprep.subr.mxu0 0.0
      %1956 = vmatpush1.msra.mxu0 0.0
      %1957 = vmatprep.subr.mxu0 0.0
      %1958 = vmatpush1.msra.mxu0 0.0
      %1959 = vmatprep.subr.mxu0 0.0
      %1960 = vmatpush1.msra.mxu0 0.0
      %1961 = vmatprep.subr.mxu0 0.0
      %1962 = vmatpush1.msra.mxu0 0.0
      %1963 = vmatprep.subr.mxu0 0.0
      %1964 = vmatpush1.msra.mxu0 0.0
      %1965 = vmatprep.mubr.f32.mxu0 0.0
      %1966 = vmatmul.mubr.f32.gmra.mrb[0].mxu0 %v1727
      %v1967 = vpop.f32.mrb[0].mxu0
      %v1968 = vadd.f32 %v1853, %v1967
      %v1969 = vpop.f32.mrb[0].mxu0
      %1970 = vmatprep.mubr.f32.mxu0 0.0
      %1971 = vmatmul.mubr.f32.gmra.mrb[0].mxu0 %v1728
      %v1972 = vpop.f32.mrb[0].mxu0
      %v1973 = vadd.f32 %v1858, %v1972
      %v1974 = vpop.f32.mrb[0].mxu0
      %1975 = vmatprep.mubr.f32.mxu0 0.0
      %1976 = vmatmul.mubr.f32.gmra.mrb[0].mxu0 %v1729
      %v1977 = vpop.f32.mrb[0].mxu0
      %v1978 = vadd.f32 %v1863, %v1977
      %v1979 = vpop.f32.mrb[0].mxu0
      %1980 = vmatprep.mubr.f32.mxu0 0.0
      %1981 = vmatmul.mubr.f32.gmra.mrb[0].mxu0 %v1730
      %v1982 = vpop.f32.mrb[0].mxu0
      %v1983 = vadd.f32 %v1868, %v1982
      %v1984 = vpop.f32.mrb[0].mxu0
      %1985 = vmatprep.mubr.f32.mxu0 0.0
      %1986 = vmatmul.mubr.f32.gmra.mrb[0].mxu0 %v1731
      %v1987 = vpop.f32.mrb[0].mxu0
      %v1988 = vadd.f32 %v1873, %v1987
      %v1989 = vpop.f32.mrb[0].mxu0
      %1990 = vmatprep.mubr.f32.mxu0 0.0
      %1991 = vmatmul.mubr.f32.gmra.mrb[0].mxu0 %v1732
      %v1992 = vpop.f32.mrb[0].mxu0
      %v1993 = vadd.f32 %v1878, %v1992
      %v1994 = vpop.f32.mrb[0].mxu0
      %1995 = vmatprep.mubr.f32.mxu0 0.0
      %1996 = vmatmul.mubr.f32.gmra.mrb[0].mxu0 %v1733
      %v1997 = vpop.f32.mrb[0].mxu0
      %v1998 = vadd.f32 %v1883, %v1997
      %v1999 = vpop.f32.mrb[0].mxu0
      %2000 = vmatprep.mubr.f32.mxu0 0.0
      %2001 = vmatmul.mubr.f32.gmra.mrb[0].mxu0 %v1734
      %v2002 = vpop.f32.mrb[0].mxu0
      %v2003 = vadd.f32 %v1888, %v2002
      %v2004 = vpop.f32.mrb[0].mxu0
      %2005 = vmatprep.mubr.f32.mxu0 0.0
      %2006 = vmatmul.mubr.f32.gmra.mrb[0].mxu0 %v1735
      %v2007 = vpop.f32.mrb[0].mxu0
      %v2008 = vadd.f32 %v1893, %v2007
      %v2009 = vpop.f32.mrb[0].mxu0
      %2010 = vmatprep.mubr.f32.mxu0 0.0
      %2011 = vmatmul.mubr.f32.gmra.mrb[0].mxu0 %v1736
      %v2012 = vpop.f32.mrb[0].mxu0
      %v2013 = vadd.f32 %v1898, %v2012
      %v2014 = vpop.f32.mrb[0].mxu0
      %2015 = vdwg.mxu0
      %2016 = vmatprep.subr.mxu0 0.0
      %2017 = vmatpush1.msra.mxu0 %v1668
      %2018 = vmatprep.subr.mxu0 0.0
      %2019 = vmatpush1.msra.mxu0 %v1669
      %2020 = vmatprep.subr.mxu0 0.0
      %2021 = vmatpush1.msra.mxu0 %v1670
      %2022 = vmatprep.subr.mxu0 0.0
      %2023 = vmatpush1.msra.mxu0 %v1671
      %2024 = vmatprep.subr.mxu0 0.0
      %2025 = vmatpush1.msra.mxu0 %v1672
      %2026 = vmatprep.subr.mxu0 0.0
      %2027 = vmatpush1.msra.mxu0 %v1673
      %2028 = vmatprep.subr.mxu0 0.0
      %2029 = vmatpush1.msra.mxu0 %v1674
      %2030 = vmatprep.subr.mxu0 0.0
      %2031 = vmatpush1.msra.mxu0 %v1675
      %2032 = vmatprep.subr.mxu0 0.0
      %2033 = vmatpush1.msra.mxu0 %v1676
      %2034 = vmatprep.subr.mxu0 0.0
      %2035 = vmatpush1.msra.mxu0 %v1677
      %2036 = vmatprep.subr.mxu0 0.0
      %2037 = vmatpush1.msra.mxu0 %v1678
      %2038 = vmatprep.subr.mxu0 0.0
      %2039 = vmatpush1.msra.mxu0 %v1679
      %2040 = vmatprep.subr.mxu0 0.0
      %2041 = vmatpush1.msra.mxu0 %v1680
      %2042 = vmatprep.subr.mxu0 0.0
      %2043 = vmatpush1.msra.mxu0 %v1681
      %2044 = vmatprep.subr.mxu0 0.0
      %2045 = vmatpush1.msra.mxu0 %v1682
      %2046 = vmatprep.subr.mxu0 0.0
      %2047 = vmatpush1.msra.mxu0 %v1683
      %2048 = vmatprep.subr.mxu0 0.0
      %2049 = vmatpush1.msra.mxu0 %v1684
      %2050 = vmatprep.subr.mxu0 0.0
      %2051 = vmatpush1.msra.mxu0 %v1685
      %2052 = vmatprep.subr.mxu0 0.0
      %2053 = vmatpush1.msra.mxu0 %v1686
      %2054 = vmatprep.subr.mxu0 0.0
      %2055 = vmatpush1.msra.mxu0 %v1687
      %2056 = vmatprep.subr.mxu0 0.0
      %2057 = vmatpush1.msra.mxu0 %v1688
      %2058 = vmatprep.subr.mxu0 0.0
      %2059 = vmatpush1.msra.mxu0 %v1689
      %2060 = vmatprep.subr.mxu0 0.0
      %2061 = vmatpush1.msra.mxu0 %v1690
      %2062 = vmatprep.subr.mxu0 0.0
      %2063 = vmatpush1.msra.mxu0 %v1691
      %2064 = vmatprep.subr.mxu0 0.0
      %2065 = vmatpush1.msra.mxu0 %v1692
      %2066 = vmatprep.subr.mxu0 0.0
      %2067 = vmatpush1.msra.mxu0 %v1693
      %2068 = vmatprep.subr.mxu0 0.0
      %2069 = vmatpush1.msra.mxu0 %v1694
      %2070 = vmatprep.subr.mxu0 0.0
      %2071 = vmatpush1.msra.mxu0 %v1695
      %2072 = vmatprep.subr.mxu0 0.0
      %2073 = vmatpush1.msra.mxu0 %v1696
      %2074 = vmatprep.subr.mxu0 0.0
      %2075 = vmatpush1.msra.mxu0 %v1697
      %2076 = vmatprep.subr.mxu0 0.0
      %2077 = vmatpush1.msra.mxu0 %v1698
      %2078 = vmatprep.subr.mxu0 0.0
      %2079 = vmatpush1.msra.mxu0 %v1699
      %2080 = vmatprep.mubr.f32.mxu0 %v1647
      %2081 = vmatmul.mubr.f32.gmra.mrb[0].mxu0 %v1637
      %v2082 = vpop.f32.mrb[0].mxu0
      %v2083 = vadd.f32 %v1968, %v2082
      %v2084 = vpop.f32.mrb[0].mxu0
      %2085 = vmatprep.mubr.f32.mxu0 %v1648
      %2086 = vmatmul.mubr.f32.gmra.mrb[0].mxu0 %v1638
      %v2087 = vpop.f32.mrb[0].mxu0
      %v2088 = vadd.f32 %v1973, %v2087
      %v2089 = vpop.f32.mrb[0].mxu0
      %2090 = vmatprep.mubr.f32.mxu0 %v1649
      %2091 = vmatmul.mubr.f32.gmra.mrb[0].mxu0 %v1639
      %v2092 = vpop.f32.mrb[0].mxu0
      %v2093 = vadd.f32 %v1978, %v2092
      %v2094 = vpop.f32.mrb[0].mxu0
      %2095 = vmatprep.mubr.f32.mxu0 %v1650
      %2096 = vmatmul.mubr.f32.gmra.mrb[0].mxu0 %v1640
      %v2097 = vpop.f32.mrb[0].mxu0
      %v2098 = vadd.f32 %v1983, %v2097
      %v2099 = vpop.f32.mrb[0].mxu0
      %2100 = vmatprep.mubr.f32.mxu0 %v1651
      %2101 = vmatmul.mubr.f32.gmra.mrb[0].mxu0 %v1641
      %v2102 = vpop.f32.mrb[0].mxu0
      %v2103 = vadd.f32 %v1988, %v2102
      %v2104 = vpop.f32.mrb[0].mxu0
      %2105 = vmatprep.mubr.f32.mxu0 %v1652
      %2106 = vmatmul.mubr.f32.gmra.mrb[0].mxu0 %v1642
      %v2107 = vpop.f32.mrb[0].mxu0
      %v2108 = vadd.f32 %v1993, %v2107
      %v2109 = vpop.f32.mrb[0].mxu0
      %2110 = vmatprep.mubr.f32.mxu0 %v1653
      %2111 = vmatmul.mubr.f32.gmra.mrb[0].mxu0 %v1643
      %v2112 = vpop.f32.mrb[0].mxu0
      %v2113 = vadd.f32 %v1998, %v2112
      %v2114 = vpop.f32.mrb[0].mxu0
      %2115 = vmatprep.mubr.f32.mxu0 %v1654
      %2116 = vmatmul.mubr.f32.gmra.mrb[0].mxu0 %v1644
      %v2117 = vpop.f32.mrb[0].mxu0
      %v2118 = vadd.f32 %v2003, %v2117
      %v2119 = vpop.f32.mrb[0].mxu0
      %2120 = vmatprep.mubr.f32.mxu0 %v1655
      %2121 = vmatmul.mubr.f32.gmra.mrb[0].mxu0 %v1645
      %v2122 = vpop.f32.mrb[0].mxu0
      %v2123 = vadd.f32 %v2008, %v2122
      %v2124 = vpop.f32.mrb[0].mxu0
      %2125 = vmatprep.mubr.f32.mxu0 %v1656
      %2126 = vmatmul.mubr.f32.gmra.mrb[0].mxu0 %v1646
      %v2127 = vpop.f32.mrb[0].mxu0
      %v2128 = vadd.f32 %v2013, %v2127
      %v2129 = vpop.f32.mrb[0].mxu0
      %2130 = vdwg.mxu0
      %2131 = vmatprep.subr.mxu0 0.0
      %2132 = vmatpush1.msra.mxu0 %v1700
      %2133 = vmatprep.subr.mxu0 0.0
      %2134 = vmatpush1.msra.mxu0 %v1701
      %2135 = vmatprep.subr.mxu0 0.0
      %2136 = vmatpush1.msra.mxu0 %v1702
      %2137 = vmatprep.subr.mxu0 0.0
      %2138 = vmatpush1.msra.mxu0 %v1703
      %2139 = vmatprep.subr.mxu0 0.0
      %2140 = vmatpush1.msra.mxu0 %v1704
      %2141 = vmatprep.subr.mxu0 0.0
      %2142 = vmatpush1.msra.mxu0 %v1705
      %2143 = vmatprep.subr.mxu0 0.0
      %2144 = vmatpush1.msra.mxu0 %v1706
      %2145 = vmatprep.subr.mxu0 0.0
      %2146 = vmatpush1.msra.mxu0 %v1707
      %2147 = vmatprep.subr.mxu0 0.0
      %2148 = vmatpush1.msra.mxu0 %v1708
      %2149 = vmatprep.subr.mxu0 0.0
      %2150 = vmatpush1.msra.mxu0 %v1709
      %2151 = vmatprep.subr.mxu0 0.0
      %2152 = vmatpush1.msra.mxu0 %v1710
      %2153 = vmatprep.subr.mxu0 0.0
      %2154 = vmatpush1.msra.mxu0 %v1711
      %2155 = vmatprep.subr.mxu0 0.0
      %2156 = vmatpush1.msra.mxu0 %v1712
      %2157 = vmatprep.subr.mxu0 0.0
      %2158 = vmatpush1.msra.mxu0 %v1713
      %2159 = vmatprep.subr.mxu0 0.0
      %2160 = vmatpush1.msra.mxu0 %v1714
      %2161 = vmatprep.subr.mxu0 0.0
      %2162 = vmatpush1.msra.mxu0 %v1715
      %2163 = vmatprep.subr.mxu0 0.0
      %2164 = vmatpush1.msra.mxu0 0.0
      %2165 = vmatprep.subr.mxu0 0.0
      %2166 = vmatpush1.msra.mxu0 0.0
      %2167 = vmatprep.subr.mxu0 0.0
      %2168 = vmatpush1.msra.mxu0 0.0
      %2169 = vmatprep.subr.mxu0 0.0
      %2170 = vmatpush1.msra.mxu0 0.0
      %2171 = vmatprep.subr.mxu0 0.0
      %2172 = vmatpush1.msra.mxu0 0.0
      %2173 = vmatprep.subr.mxu0 0.0
      %2174 = vmatpush1.msra.mxu0 0.0
      %2175 = vmatprep.subr.mxu0 0.0
      %2176 = vmatpush1.msra.mxu0 0.0
      %2177 = vmatprep.subr.mxu0 0.0
      %2178 = vmatpush1.msra.mxu0 0.0
      %2179 = vmatprep.subr.mxu0 0.0
      %2180 = vmatpush1.msra.mxu0 0.0
      %2181 = vmatprep.subr.mxu0 0.0
      %2182 = vmatpush1.msra.mxu0 0.0
      %2183 = vmatprep.subr.mxu0 0.0
      %2184 = vmatpush1.msra.mxu0 0.0
      %2185 = vmatprep.subr.mxu0 0.0
      %2186 = vmatpush1.msra.mxu0 0.0
      %2187 = vmatprep.subr.mxu0 0.0
      %2188 = vmatpush1.msra.mxu0 0.0
      %2189 = vmatprep.subr.mxu0 0.0
      %2190 = vmatpush1.msra.mxu0 0.0
      %2191 = vmatprep.subr.mxu0 0.0
      %2192 = vmatpush1.msra.mxu0 0.0
      %2193 = vmatprep.subr.mxu0 0.0
      %2194 = vmatpush1.msra.mxu0 0.0
      %2195 = vmatprep.mubr.f32.mxu0 0.0
      %2196 = vmatmul.mubr.f32.gmra.mrb[0].mxu0 %v1657
      %v2197 = vpop.f32.mrb[0].mxu0
      %v2198 = vadd.f32 %v2083, %v2197
      %v2199 = vpop.f32.mrb[0].mxu0
      %2200 = vmatprep.mubr.f32.mxu0 0.0
      %2201 = vmatmul.mubr.f32.gmra.mrb[0].mxu0 %v1658
      %v2202 = vpop.f32.mrb[0].mxu0
      %v2203 = vadd.f32 %v2088, %v2202
      %v2204 = vpop.f32.mrb[0].mxu0
      %2205 = vmatprep.mubr.f32.mxu0 0.0
      %2206 = vmatmul.mubr.f32.gmra.mrb[0].mxu0 %v1659
      %v2207 = vpop.f32.mrb[0].mxu0
      %v2208 = vadd.f32 %v2093, %v2207
      %v2209 = vpop.f32.mrb[0].mxu0
      %2210 = vmatprep.mubr.f32.mxu0 0.0
      %2211 = vmatmul.mubr.f32.gmra.mrb[0].mxu0 %v1660
      %v2212 = vpop.f32.mrb[0].mxu0
      %v2213 = vadd.f32 %v2098, %v2212
      %v2214 = vpop.f32.mrb[0].mxu0
      %2215 = vmatprep.mubr.f32.mxu0 0.0
      %2216 = vmatmul.mubr.f32.gmra.mrb[0].mxu0 %v1661
      %v2217 = vpop.f32.mrb[0].mxu0
      %v2218 = vadd.f32 %v2103, %v2217
      %v2219 = vpop.f32.mrb[0].mxu0
      %2220 = vmatprep.mubr.f32.mxu0 0.0
      %2221 = vmatmul.mubr.f32.gmra.mrb[0].mxu0 %v1662
      %v2222 = vpop.f32.mrb[0].mxu0
      %v2223 = vadd.f32 %v2108, %v2222
      %v2224 = vpop.f32.mrb[0].mxu0
      %2225 = vmatprep.mubr.f32.mxu0 0.0
      %2226 = vmatmul.mubr.f32.gmra.mrb[0].mxu0 %v1663
      %v2227 = vpop.f32.mrb[0].mxu0
      %v2228 = vadd.f32 %v2113, %v2227
      %v2229 = vpop.f32.mrb[0].mxu0
      %2230 = vmatprep.mubr.f32.mxu0 0.0
      %2231 = vmatmul.mubr.f32.gmra.mrb[0].mxu0 %v1664
      %v2232 = vpop.f32.mrb[0].mxu0
      %v2233 = vadd.f32 %v2118, %v2232
      %v2234 = vpop.f32.mrb[0].mxu0
      %2235 = vmatprep.mubr.f32.mxu0 0.0
      %2236 = vmatmul.mubr.f32.gmra.mrb[0].mxu0 %v1665
      %v2237 = vpop.f32.mrb[0].mxu0
      %v2238 = vadd.f32 %v2123, %v2237
      %v2239 = vpop.f32.mrb[0].mxu0
      %2240 = vmatprep.mubr.f32.mxu0 0.0
      %2241 = vmatmul.mubr.f32.gmra.mrb[0].mxu0 %v1666
      %v2242 = vpop.f32.mrb[0].mxu0
      %v2243 = vadd.f32 %v2128, %v2242
      %v2244 = vpop.f32.mrb[0].mxu0
      %2245 = vdwg.mxu0
      %v2246 = vld [vmem:[#allocation3 + $0x14] sm:$0xff]
      %v2247 = vld [vmem:[#allocation3 + $0x1c] sm:$0xff]
      %v2248 = vld [vmem:[#allocation3 + $0x24] sm:$0xff]
      %v2249 = vld [vmem:[#allocation3 + $0x2c] sm:$0xff]
      %v2250 = vld [vmem:[#allocation3 + $0x34] sm:$0xff]
      %v2251 = vld [vmem:[#allocation3 + $0x3c] sm:$0xff]
      %v2252 = vld [vmem:[#allocation3 + $0x44] sm:$0xff]
      %v2253 = vld [vmem:[#allocation3 + $0x4c] sm:$0xff]
      %v2254 = vld [vmem:[#allocation3 + $0x54] sm:$0xff]
      %v2255 = vld [vmem:[#allocation3 + $0x5c] sm:$0xff]
      %v2256 = vld [vmem:[#allocation3 + $0x15] sm:$0xff]
      %v2257 = vld [vmem:[#allocation3 + $0x1d] sm:$0xff]
      %v2258 = vld [vmem:[#allocation3 + $0x25] sm:$0xff]
      %v2259 = vld [vmem:[#allocation3 + $0x2d] sm:$0xff]
      %v2260 = vld [vmem:[#allocation3 + $0x35] sm:$0xff]
      %v2261 = vld [vmem:[#allocation3 + $0x3d] sm:$0xff]
      %v2262 = vld [vmem:[#allocation3 + $0x45] sm:$0xff]
      %v2263 = vld [vmem:[#allocation3 + $0x4d] sm:$0xff]
      %v2264 = vld [vmem:[#allocation3 + $0x55] sm:$0xff]
      %v2265 = vld [vmem:[#allocation3 + $0x5d] sm:$0xff]
      %v2266 = vld [vmem:[#allocation3 + $0x16] sm:$0xff]
      %v2267 = vld [vmem:[#allocation3 + $0x1e] sm:$0xff]
      %v2268 = vld [vmem:[#allocation3 + $0x26] sm:$0xff]
      %v2269 = vld [vmem:[#allocation3 + $0x2e] sm:$0xff]
      %v2270 = vld [vmem:[#allocation3 + $0x36] sm:$0xff]
      %v2271 = vld [vmem:[#allocation3 + $0x3e] sm:$0xff]
      %v2272 = vld [vmem:[#allocation3 + $0x46] sm:$0xff]
      %v2273 = vld [vmem:[#allocation3 + $0x4e] sm:$0xff]
      %v2274 = vld [vmem:[#allocation3 + $0x56] sm:$0xff]
      %v2275 = vld [vmem:[#allocation3 + $0x5e] sm:$0xff]
      %s2276 = scalar_lea.vmem %s1, 1920
      %v2277 = vld [vmem:[%s2276] sm:$0xff]
      %v2278 = vld [vmem:[%s2276 + $0x8] sm:$0xff]
      %v2279 = vld [vmem:[%s2276 + $0x10] sm:$0xff]
      %v2280 = vld [vmem:[%s2276 + $0x18] sm:$0xff]
      %v2281 = vld [vmem:[%s2276 + $0x20] sm:$0xff]
      %v2282 = vld [vmem:[%s2276 + $0x28] sm:$0xff]
      %v2283 = vld [vmem:[%s2276 + $0x30] sm:$0xff]
      %v2284 = vld [vmem:[%s2276 + $0x38] sm:$0xff]
      %v2285 = vld [vmem:[%s2276 + $0x40] sm:$0xff]
      %v2286 = vld [vmem:[%s2276 + $0x48] sm:$0xff]
      %v2287 = vld [vmem:[%s2276 + $0x50] sm:$0xff]
      %v2288 = vld [vmem:[%s2276 + $0x58] sm:$0xff]
      %v2289 = vld [vmem:[%s2276 + $0x60] sm:$0xff]
      %v2290 = vld [vmem:[%s2276 + $0x68] sm:$0xff]
      %v2291 = vld [vmem:[%s2276 + $0x70] sm:$0xff]
      %v2292 = vld [vmem:[%s2276 + $0x78] sm:$0xff]
      %v2293 = vld [vmem:[%s2276 + $0x80] sm:$0xff]
      %v2294 = vld [vmem:[%s2276 + $0x88] sm:$0xff]
      %v2295 = vld [vmem:[%s2276 + $0x90] sm:$0xff]
      %v2296 = vld [vmem:[%s2276 + $0x98] sm:$0xff]
      %v2297 = vld [vmem:[%s2276 + $0xa0] sm:$0xff]
      %v2298 = vld [vmem:[%s2276 + $0xa8] sm:$0xff]
      %v2299 = vld [vmem:[%s2276 + $0xb0] sm:$0xff]
      %v2300 = vld [vmem:[%s2276 + $0xb8] sm:$0xff]
      %v2301 = vld [vmem:[%s2276 + $0xc0] sm:$0xff]
      %v2302 = vld [vmem:[%s2276 + $0xc8] sm:$0xff]
      %v2303 = vld [vmem:[%s2276 + $0xd0] sm:$0xff]
      %v2304 = vld [vmem:[%s2276 + $0xd8] sm:$0xff]
      %v2305 = vld [vmem:[%s2276 + $0xe0] sm:$0xff]
      %v2306 = vld [vmem:[%s2276 + $0xe8] sm:$0xff]
      %v2307 = vld [vmem:[%s2276 + $0xf0] sm:$0xff]
      %v2308 = vld [vmem:[%s2276 + $0xf8] sm:$0xff]
      %v2309 = vld [vmem:[%s2276 + $0x100] sm:$0xff]
      %v2310 = vld [vmem:[%s2276 + $0x108] sm:$0xff]
      %v2311 = vld [vmem:[%s2276 + $0x110] sm:$0xff]
      %v2312 = vld [vmem:[%s2276 + $0x118] sm:$0xff]
      %v2313 = vld [vmem:[%s2276 + $0x120] sm:$0xff]
      %v2314 = vld [vmem:[%s2276 + $0x128] sm:$0xff]
      %v2315 = vld [vmem:[%s2276 + $0x130] sm:$0xff]
      %v2316 = vld [vmem:[%s2276 + $0x138] sm:$0xff]
      %v2317 = vld [vmem:[%s2276 + $0x140] sm:$0xff]
      %v2318 = vld [vmem:[%s2276 + $0x148] sm:$0xff]
      %v2319 = vld [vmem:[%s2276 + $0x150] sm:$0xff]
      %v2320 = vld [vmem:[%s2276 + $0x158] sm:$0xff]
      %v2321 = vld [vmem:[%s2276 + $0x160] sm:$0xff]
      %v2322 = vld [vmem:[%s2276 + $0x168] sm:$0xff]
      %v2323 = vld [vmem:[%s2276 + $0x170] sm:$0xff]
      %v2324 = vld [vmem:[%s2276 + $0x178] sm:$0xff]
      %2325 = vmatprep.subr.mxu0 0.0
      %2326 = vmatpush1.msra.mxu0 %v2277
      %2327 = vmatprep.subr.mxu0 0.0
      %2328 = vmatpush1.msra.mxu0 %v2278
      %2329 = vmatprep.subr.mxu0 0.0
      %2330 = vmatpush1.msra.mxu0 %v2279
      %2331 = vmatprep.subr.mxu0 0.0
      %2332 = vmatpush1.msra.mxu0 %v2280
      %2333 = vmatprep.subr.mxu0 0.0
      %2334 = vmatpush1.msra.mxu0 %v2281
      %2335 = vmatprep.subr.mxu0 0.0
      %2336 = vmatpush1.msra.mxu0 %v2282
      %2337 = vmatprep.subr.mxu0 0.0
      %2338 = vmatpush1.msra.mxu0 %v2283
      %2339 = vmatprep.subr.mxu0 0.0
      %2340 = vmatpush1.msra.mxu0 %v2284
      %2341 = vmatprep.subr.mxu0 0.0
      %2342 = vmatpush1.msra.mxu0 %v2285
      %2343 = vmatprep.subr.mxu0 0.0
      %2344 = vmatpush1.msra.mxu0 %v2286
      %2345 = vmatprep.subr.mxu0 0.0
      %2346 = vmatpush1.msra.mxu0 %v2287
      %2347 = vmatprep.subr.mxu0 0.0
      %2348 = vmatpush1.msra.mxu0 %v2288
      %2349 = vmatprep.subr.mxu0 0.0
      %2350 = vmatpush1.msra.mxu0 %v2289
      %2351 = vmatprep.subr.mxu0 0.0
      %2352 = vmatpush1.msra.mxu0 %v2290
      %2353 = vmatprep.subr.mxu0 0.0
      %2354 = vmatpush1.msra.mxu0 %v2291
      %2355 = vmatprep.subr.mxu0 0.0
      %2356 = vmatpush1.msra.mxu0 %v2292
      %2357 = vmatprep.subr.mxu0 0.0
      %2358 = vmatpush1.msra.mxu0 %v2293
      %2359 = vmatprep.subr.mxu0 0.0
      %2360 = vmatpush1.msra.mxu0 %v2294
      %2361 = vmatprep.subr.mxu0 0.0
      %2362 = vmatpush1.msra.mxu0 %v2295
      %2363 = vmatprep.subr.mxu0 0.0
      %2364 = vmatpush1.msra.mxu0 %v2296
      %2365 = vmatprep.subr.mxu0 0.0
      %2366 = vmatpush1.msra.mxu0 %v2297
      %2367 = vmatprep.subr.mxu0 0.0
      %2368 = vmatpush1.msra.mxu0 %v2298
      %2369 = vmatprep.subr.mxu0 0.0
      %2370 = vmatpush1.msra.mxu0 %v2299
      %2371 = vmatprep.subr.mxu0 0.0
      %2372 = vmatpush1.msra.mxu0 %v2300
      %2373 = vmatprep.subr.mxu0 0.0
      %2374 = vmatpush1.msra.mxu0 %v2301
      %2375 = vmatprep.subr.mxu0 0.0
      %2376 = vmatpush1.msra.mxu0 %v2302
      %2377 = vmatprep.subr.mxu0 0.0
      %2378 = vmatpush1.msra.mxu0 %v2303
      %2379 = vmatprep.subr.mxu0 0.0
      %2380 = vmatpush1.msra.mxu0 %v2304
      %2381 = vmatprep.subr.mxu0 0.0
      %2382 = vmatpush1.msra.mxu0 %v2305
      %2383 = vmatprep.subr.mxu0 0.0
      %2384 = vmatpush1.msra.mxu0 %v2306
      %2385 = vmatprep.subr.mxu0 0.0
      %2386 = vmatpush1.msra.mxu0 %v2307
      %2387 = vmatprep.subr.mxu0 0.0
      %2388 = vmatpush1.msra.mxu0 %v2308
      %2389 = vmatprep.mubr.f32.mxu0 %v2256
      %2390 = vmatmul.mubr.f32.gmra.mrb[0].mxu0 %v2246
      %v2391 = vpop.f32.mrb[0].mxu0
      %v2392 = vadd.f32 0.0, %v2391
      %v2393 = vpop.f32.mrb[0].mxu0
      %2394 = vmatprep.mubr.f32.mxu0 %v2257
      %2395 = vmatmul.mubr.f32.gmra.mrb[0].mxu0 %v2247
      %v2396 = vpop.f32.mrb[0].mxu0
      %v2397 = vadd.f32 0.0, %v2396
      %v2398 = vpop.f32.mrb[0].mxu0
      %2399 = vmatprep.mubr.f32.mxu0 %v2258
      %2400 = vmatmul.mubr.f32.gmra.mrb[0].mxu0 %v2248
      %v2401 = vpop.f32.mrb[0].mxu0
      %v2402 = vadd.f32 0.0, %v2401
      %v2403 = vpop.f32.mrb[0].mxu0
      %2404 = vmatprep.mubr.f32.mxu0 %v2259
      %2405 = vmatmul.mubr.f32.gmra.mrb[0].mxu0 %v2249
      %v2406 = vpop.f32.mrb[0].mxu0
      %v2407 = vadd.f32 0.0, %v2406
      %v2408 = vpop.f32.mrb[0].mxu0
      %2409 = vmatprep.mubr.f32.mxu0 %v2260
      %2410 = vmatmul.mubr.f32.gmra.mrb[0].mxu0 %v2250
      %v2411 = vpop.f32.mrb[0].mxu0
      %v2412 = vadd.f32 0.0, %v2411
      %v2413 = vpop.f32.mrb[0].mxu0
      %2414 = vmatprep.mubr.f32.mxu0 %v2261
      %2415 = vmatmul.mubr.f32.gmra.mrb[0].mxu0 %v2251
      %v2416 = vpop.f32.mrb[0].mxu0
      %v2417 = vadd.f32 0.0, %v2416
      %v2418 = vpop.f32.mrb[0].mxu0
      %2419 = vmatprep.mubr.f32.mxu0 %v2262
      %2420 = vmatmul.mubr.f32.gmra.mrb[0].mxu0 %v2252
      %v2421 = vpop.f32.mrb[0].mxu0
      %v2422 = vadd.f32 0.0, %v2421
      %v2423 = vpop.f32.mrb[0].mxu0
      %2424 = vmatprep.mubr.f32.mxu0 %v2263
      %2425 = vmatmul.mubr.f32.gmra.mrb[0].mxu0 %v2253
      %v2426 = vpop.f32.mrb[0].mxu0
      %v2427 = vadd.f32 0.0, %v2426
      %v2428 = vpop.f32.mrb[0].mxu0
      %2429 = vmatprep.mubr.f32.mxu0 %v2264
      %2430 = vmatmul.mubr.f32.gmra.mrb[0].mxu0 %v2254
      %v2431 = vpop.f32.mrb[0].mxu0
      %v2432 = vadd.f32 0.0, %v2431
      %v2433 = vpop.f32.mrb[0].mxu0
      %2434 = vmatprep.mubr.f32.mxu0 %v2265
      %2435 = vmatmul.mubr.f32.gmra.mrb[0].mxu0 %v2255
      %v2436 = vpop.f32.mrb[0].mxu0
      %v2437 = vadd.f32 0.0, %v2436
      %v2438 = vpop.f32.mrb[0].mxu0
      %2439 = vdwg.mxu0
      %2440 = vmatprep.subr.mxu0 0.0
      %2441 = vmatpush1.msra.mxu0 %v2309
      %2442 = vmatprep.subr.mxu0 0.0
      %2443 = vmatpush1.msra.mxu0 %v2310
      %2444 = vmatprep.subr.mxu0 0.0
      %2445 = vmatpush1.msra.mxu0 %v2311
      %2446 = vmatprep.subr.mxu0 0.0
      %2447 = vmatpush1.msra.mxu0 %v2312
      %2448 = vmatprep.subr.mxu0 0.0
      %2449 = vmatpush1.msra.mxu0 %v2313
      %2450 = vmatprep.subr.mxu0 0.0
      %2451 = vmatpush1.msra.mxu0 %v2314
      %2452 = vmatprep.subr.mxu0 0.0
      %2453 = vmatpush1.msra.mxu0 %v2315
      %2454 = vmatprep.subr.mxu0 0.0
      %2455 = vmatpush1.msra.mxu0 %v2316
      %2456 = vmatprep.subr.mxu0 0.0
      %2457 = vmatpush1.msra.mxu0 %v2317
      %2458 = vmatprep.subr.mxu0 0.0
      %2459 = vmatpush1.msra.mxu0 %v2318
      %2460 = vmatprep.subr.mxu0 0.0
      %2461 = vmatpush1.msra.mxu0 %v2319
      %2462 = vmatprep.subr.mxu0 0.0
      %2463 = vmatpush1.msra.mxu0 %v2320
      %2464 = vmatprep.subr.mxu0 0.0
      %2465 = vmatpush1.msra.mxu0 %v2321
      %2466 = vmatprep.subr.mxu0 0.0
      %2467 = vmatpush1.msra.mxu0 %v2322
      %2468 = vmatprep.subr.mxu0 0.0
      %2469 = vmatpush1.msra.mxu0 %v2323
      %2470 = vmatprep.subr.mxu0 0.0
      %2471 = vmatpush1.msra.mxu0 %v2324
      %2472 = vmatprep.subr.mxu0 0.0
      %2473 = vmatpush1.msra.mxu0 0.0
      %2474 = vmatprep.subr.mxu0 0.0
      %2475 = vmatpush1.msra.mxu0 0.0
      %2476 = vmatprep.subr.mxu0 0.0
      %2477 = vmatpush1.msra.mxu0 0.0
      %2478 = vmatprep.subr.mxu0 0.0
      %2479 = vmatpush1.msra.mxu0 0.0
      %2480 = vmatprep.subr.mxu0 0.0
      %2481 = vmatpush1.msra.mxu0 0.0
      %2482 = vmatprep.subr.mxu0 0.0
      %2483 = vmatpush1.msra.mxu0 0.0
      %2484 = vmatprep.subr.mxu0 0.0
      %2485 = vmatpush1.msra.mxu0 0.0
      %2486 = vmatprep.subr.mxu0 0.0
      %2487 = vmatpush1.msra.mxu0 0.0
      %2488 = vmatprep.subr.mxu0 0.0
      %2489 = vmatpush1.msra.mxu0 0.0
      %2490 = vmatprep.subr.mxu0 0.0
      %2491 = vmatpush1.msra.mxu0 0.0
      %2492 = vmatprep.subr.mxu0 0.0
      %2493 = vmatpush1.msra.mxu0 0.0
      %2494 = vmatprep.subr.mxu0 0.0
      %2495 = vmatpush1.msra.mxu0 0.0
      %2496 = vmatprep.subr.mxu0 0.0
      %2497 = vmatpush1.msra.mxu0 0.0
      %2498 = vmatprep.subr.mxu0 0.0
      %2499 = vmatpush1.msra.mxu0 0.0
      %2500 = vmatprep.subr.mxu0 0.0
      %2501 = vmatpush1.msra.mxu0 0.0
      %2502 = vmatprep.subr.mxu0 0.0
      %2503 = vmatpush1.msra.mxu0 0.0
      %2504 = vmatprep.mubr.f32.mxu0 0.0
      %2505 = vmatmul.mubr.f32.gmra.mrb[0].mxu0 %v2266
      %v2506 = vpop.f32.mrb[0].mxu0
      %v2507 = vadd.f32 %v2392, %v2506
      %v2508 = vpop.f32.mrb[0].mxu0
      %2509 = vmatprep.mubr.f32.mxu0 0.0
      %2510 = vmatmul.mubr.f32.gmra.mrb[0].mxu0 %v2267
      %v2511 = vpop.f32.mrb[0].mxu0
      %v2512 = vadd.f32 %v2397, %v2511
      %v2513 = vpop.f32.mrb[0].mxu0
      %2514 = vmatprep.mubr.f32.mxu0 0.0
      %2515 = vmatmul.mubr.f32.gmra.mrb[0].mxu0 %v2268
      %v2516 = vpop.f32.mrb[0].mxu0
      %v2517 = vadd.f32 %v2402, %v2516
      %v2518 = vpop.f32.mrb[0].mxu0
      %2519 = vmatprep.mubr.f32.mxu0 0.0
      %2520 = vmatmul.mubr.f32.gmra.mrb[0].mxu0 %v2269
      %v2521 = vpop.f32.mrb[0].mxu0
      %v2522 = vadd.f32 %v2407, %v2521
      %v2523 = vpop.f32.mrb[0].mxu0
      %2524 = vmatprep.mubr.f32.mxu0 0.0
      %2525 = vmatmul.mubr.f32.gmra.mrb[0].mxu0 %v2270
      %v2526 = vpop.f32.mrb[0].mxu0
      %v2527 = vadd.f32 %v2412, %v2526
      %v2528 = vpop.f32.mrb[0].mxu0
      %2529 = vmatprep.mubr.f32.mxu0 0.0
      %2530 = vmatmul.mubr.f32.gmra.mrb[0].mxu0 %v2271
      %v2531 = vpop.f32.mrb[0].mxu0
      %v2532 = vadd.f32 %v2417, %v2531
      %v2533 = vpop.f32.mrb[0].mxu0
      %2534 = vmatprep.mubr.f32.mxu0 0.0
      %2535 = vmatmul.mubr.f32.gmra.mrb[0].mxu0 %v2272
      %v2536 = vpop.f32.mrb[0].mxu0
      %v2537 = vadd.f32 %v2422, %v2536
      %v2538 = vpop.f32.mrb[0].mxu0
      %2539 = vmatprep.mubr.f32.mxu0 0.0
      %2540 = vmatmul.mubr.f32.gmra.mrb[0].mxu0 %v2273
      %v2541 = vpop.f32.mrb[0].mxu0
      %v2542 = vadd.f32 %v2427, %v2541
      %v2543 = vpop.f32.mrb[0].mxu0
      %2544 = vmatprep.mubr.f32.mxu0 0.0
      %2545 = vmatmul.mubr.f32.gmra.mrb[0].mxu0 %v2274
      %v2546 = vpop.f32.mrb[0].mxu0
      %v2547 = vadd.f32 %v2432, %v2546
      %v2548 = vpop.f32.mrb[0].mxu0
      %2549 = vmatprep.mubr.f32.mxu0 0.0
      %2550 = vmatmul.mubr.f32.gmra.mrb[0].mxu0 %v2275
      %v2551 = vpop.f32.mrb[0].mxu0
      %v2552 = vadd.f32 %v2437, %v2551
      %v2553 = vpop.f32.mrb[0].mxu0
      %2554 = vdwg.mxu0
      %v2555 = vadd.f32 %v2198, %v2507
      %v2556 = vadd.f32 %v2203, %v2512
      %v2557 = vadd.f32 %v2208, %v2517
      %v2558 = vadd.f32 %v2213, %v2522
      %v2559 = vadd.f32 %v2218, %v2527
      %v2560 = vadd.f32 %v2223, %v2532
      %v2561 = vadd.f32 %v2228, %v2537
      %v2562 = vadd.f32 %v2233, %v2542
      %v2563 = vadd.f32 %v2238, %v2547
      %v2564 = vadd.f32 %v2243, %v2552
      %s2565 = scalar_lea.vmem %s2, 1
      %v2566 = vld [vmem:[%s2565] sm:$0x1]
      %v2568 = vlaneseq
      %v2569 = vshrl.u32 %v2568, 7
      %v2570 = vsub.s32 0, %v2569
      %v2571 = vrot.slane %v2566, %v2570
      %v2573 = vadd.f32 %v2555, %v2571
      %v2574 = vadd.f32 %v2556, %v2571
      %v2575 = vadd.f32 %v2557, %v2571
      %v2576 = vadd.f32 %v2558, %v2571
      %v2577 = vadd.f32 %v2559, %v2571
      %v2578 = vadd.f32 %v2560, %v2571
      %v2579 = vadd.f32 %v2561, %v2571
      %v2580 = vadd.f32 %v2562, %v2571
      %v2581 = vadd.f32 %v2563, %v2571
      %v2582 = vadd.f32 %v2564, %v2571
      %v2583 = vmul.f32 %v2573, %v2573
      %v2584 = vmul.f32 %v2574, %v2574
      %v2585 = vmul.f32 %v2575, %v2575
      %v2586 = vmul.f32 %v2576, %v2576
      %v2587 = vmul.f32 %v2577, %v2577
      %v2588 = vmul.f32 %v2578, %v2578
      %v2589 = vmul.f32 %v2579, %v2579
      %v2590 = vmul.f32 %v2580, %v2580
      %v2591 = vmul.f32 %v2581, %v2581
      %v2592 = vmul.f32 %v2582, %v2582
      %s2593 = scalar_lea.vmem %s3, 128
      %v2594 = vld [vmem:[%s2593] sm:$0xff]
      %v2595 = vld [vmem:[%s2593 + $0x8] sm:$0xff]
      %v2596 = vld [vmem:[%s2593 + $0x10] sm:$0xff]
      %v2597 = vld [vmem:[%s2593 + $0x18] sm:$0xff]
      %v2598 = vld [vmem:[%s2593 + $0x20] sm:$0xff]
      %v2599 = vld [vmem:[%s2593 + $0x28] sm:$0xff]
      %v2600 = vld [vmem:[%s2593 + $0x30] sm:$0xff]
      %v2601 = vld [vmem:[%s2593 + $0x38] sm:$0xff]
      %v2602 = vld [vmem:[%s2593 + $0x40] sm:$0xff]
      %v2603 = vld [vmem:[%s2593 + $0x48] sm:$0xff]
      %v2604 = vld [vmem:[%s2593 + $0x50] sm:$0xff]
      %v2605 = vld [vmem:[%s2593 + $0x58] sm:$0xff]
      %v2606 = vld [vmem:[%s2593 + $0x60] sm:$0xff]
      %v2607 = vld [vmem:[%s2593 + $0x68] sm:$0xff]
      %v2608 = vld [vmem:[%s2593 + $0x70] sm:$0xff]
      %v2609 = vld [vmem:[%s2593 + $0x78] sm:$0xff]
      %s2610 = scalar_lea.vmem %s4, 1
      %v2611 = vld [vmem:[%s2610] sm:$0x1]
      %v2613 = vlaneseq
      %v2614 = vshrl.u32 %v2613, 7
      %v2615 = vsub.s32 0, %v2614
      %v2616 = vrot.slane %v2611, %v2615
      %2618 = vmatprep.subr.mxu0 0.0
      %2619 = vmatpush1.msra.mxu0 %v2594
      %2620 = vmatprep.subr.mxu0 0.0
      %2621 = vmatpush1.msra.mxu0 %v2595
      %2622 = vmatprep.subr.mxu0 0.0
      %2623 = vmatpush1.msra.mxu0 %v2596
      %2624 = vmatprep.subr.mxu0 0.0
      %2625 = vmatpush1.msra.mxu0 %v2597
      %2626 = vmatprep.subr.mxu0 0.0
      %2627 = vmatpush1.msra.mxu0 %v2598
      %2628 = vmatprep.subr.mxu0 0.0
      %2629 = vmatpush1.msra.mxu0 %v2599
      %2630 = vmatprep.subr.mxu0 0.0
      %2631 = vmatpush1.msra.mxu0 %v2600
      %2632 = vmatprep.subr.mxu0 0.0
      %2633 = vmatpush1.msra.mxu0 %v2601
      %2634 = vmatprep.subr.mxu0 0.0
      %2635 = vmatpush1.msra.mxu0 %v2602
      %2636 = vmatprep.subr.mxu0 0.0
      %2637 = vmatpush1.msra.mxu0 %v2603
      %2638 = vmatprep.subr.mxu0 0.0
      %2639 = vmatpush1.msra.mxu0 %v2604
      %2640 = vmatprep.subr.mxu0 0.0
      %2641 = vmatpush1.msra.mxu0 %v2605
      %2642 = vmatprep.subr.mxu0 0.0
      %2643 = vmatpush1.msra.mxu0 %v2606
      %2644 = vmatprep.subr.mxu0 0.0
      %2645 = vmatpush1.msra.mxu0 %v2607
      %2646 = vmatprep.subr.mxu0 0.0
      %2647 = vmatpush1.msra.mxu0 %v2608
      %2648 = vmatprep.subr.mxu0 0.0
      %2649 = vmatpush1.msra.mxu0 %v2609
      %2650 = vmatprep.subr.mxu0 0.0
      %2651 = vmatpush1.msra.mxu0 0.0
      %2652 = vmatprep.subr.mxu0 0.0
      %2653 = vmatpush1.msra.mxu0 0.0
      %2654 = vmatprep.subr.mxu0 0.0
      %2655 = vmatpush1.msra.mxu0 0.0
      %2656 = vmatprep.subr.mxu0 0.0
      %2657 = vmatpush1.msra.mxu0 0.0
      %2658 = vmatprep.subr.mxu0 0.0
      %2659 = vmatpush1.msra.mxu0 0.0
      %2660 = vmatprep.subr.mxu0 0.0
      %2661 = vmatpush1.msra.mxu0 0.0
      %2662 = vmatprep.subr.mxu0 0.0
      %2663 = vmatpush1.msra.mxu0 0.0
      %2664 = vmatprep.subr.mxu0 0.0
      %2665 = vmatpush1.msra.mxu0 0.0
      %2666 = vmatprep.subr.mxu0 0.0
      %2667 = vmatpush1.msra.mxu0 0.0
      %2668 = vmatprep.subr.mxu0 0.0
      %2669 = vmatpush1.msra.mxu0 0.0
      %2670 = vmatprep.subr.mxu0 0.0
      %2671 = vmatpush1.msra.mxu0 0.0
      %2672 = vmatprep.subr.mxu0 0.0
      %2673 = vmatpush1.msra.mxu0 0.0
      %2674 = vmatprep.subr.mxu0 0.0
      %2675 = vmatpush1.msra.mxu0 0.0
      %2676 = vmatprep.subr.mxu0 0.0
      %2677 = vmatpush1.msra.mxu0 0.0
      %2678 = vmatprep.subr.mxu0 0.0
      %2679 = vmatpush1.msra.mxu0 0.0
      %2680 = vmatprep.subr.mxu0 0.0
      %2681 = vmatpush1.msra.mxu0 0.0
      %2682 = vmatprep.mubr.f32.mxu0 0.0
      %2683 = vmatmul.mubr.f32.gmra.mrb[0].mxu0 %v2583
      %v2684 = vpop.f32.mrb[0].mxu0
      %v2685 = vadd.f32 %v2616, %v2684
      %v2686 = vpop.f32.mrb[0].mxu0
      %2687 = vmatprep.mubr.f32.mxu0 0.0
      %2688 = vmatmul.mubr.f32.gmra.mrb[0].mxu0 %v2584
      %v2689 = vpop.f32.mrb[0].mxu0
      %v2690 = vadd.f32 %v2616, %v2689
      %v2691 = vpop.f32.mrb[0].mxu0
      %2692 = vmatprep.mubr.f32.mxu0 0.0
      %2693 = vmatmul.mubr.f32.gmra.mrb[0].mxu0 %v2585
      %v2694 = vpop.f32.mrb[0].mxu0
      %v2695 = vadd.f32 %v2616, %v2694
      %v2696 = vpop.f32.mrb[0].mxu0
      %2697 = vmatprep.mubr.f32.mxu0 0.0
      %2698 = vmatmul.mubr.f32.gmra.mrb[0].mxu0 %v2586
      %v2699 = vpop.f32.mrb[0].mxu0
      %v2700 = vadd.f32 %v2616, %v2699
      %v2701 = vpop.f32.mrb[0].mxu0
      %2702 = vmatprep.mubr.f32.mxu0 0.0
      %2703 = vmatmul.mubr.f32.gmra.mrb[0].mxu0 %v2587
      %v2704 = vpop.f32.mrb[0].mxu0
      %v2705 = vadd.f32 %v2616, %v2704
      %v2706 = vpop.f32.mrb[0].mxu0
      %2707 = vmatprep.mubr.f32.mxu0 0.0
      %2708 = vmatmul.mubr.f32.gmra.mrb[0].mxu0 %v2588
      %v2709 = vpop.f32.mrb[0].mxu0
      %v2710 = vadd.f32 %v2616, %v2709
      %v2711 = vpop.f32.mrb[0].mxu0
      %2712 = vmatprep.mubr.f32.mxu0 0.0
      %2713 = vmatmul.mubr.f32.gmra.mrb[0].mxu0 %v2589
      %v2714 = vpop.f32.mrb[0].mxu0
      %v2715 = vadd.f32 %v2616, %v2714
      %v2716 = vpop.f32.mrb[0].mxu0
      %2717 = vmatprep.mubr.f32.mxu0 0.0
      %2718 = vmatmul.mubr.f32.gmra.mrb[0].mxu0 %v2590
      %v2719 = vpop.f32.mrb[0].mxu0
      %v2720 = vadd.f32 %v2616, %v2719
      %v2721 = vpop.f32.mrb[0].mxu0
      %2722 = vmatprep.mubr.f32.mxu0 0.0
      %2723 = vmatmul.mubr.f32.gmra.mrb[0].mxu0 %v2591
      %v2724 = vpop.f32.mrb[0].mxu0
      %v2725 = vadd.f32 %v2616, %v2724
      %v2726 = vpop.f32.mrb[0].mxu0
      %2727 = vmatprep.mubr.f32.mxu0 0.0
      %2728 = vmatmul.mubr.f32.gmra.mrb[0].mxu0 %v2592
      %v2729 = vpop.f32.mrb[0].mxu0
      %v2730 = vadd.f32 %v2616, %v2729
      %v2731 = vpop.f32.mrb[0].mxu0
      %2732 = vdwg.mxu0
      %v2733 = vrsqrt.pop %v2685
      %v2734 = vmul.f32 %v2685, %v2733
      %vm2735 = vcmp.eq.f32.partialorder %v2685, inf
      %v2736 = vsel %vm2735, %v2685, %v2734
      %vm2737 = vcmp.eq.f32.partialorder %v2685, 0.0
      %v2738 = vand.u32 %v2685, 2147483648
      %v2739 = vsel %vm2737, %v2738, %v2736
      %v2740 = vrsqrt.pop %v2690
      %v2741 = vmul.f32 %v2690, %v2740
      %vm2742 = vcmp.eq.f32.partialorder %v2690, inf
      %v2743 = vsel %vm2742, %v2690, %v2741
      %vm2744 = vcmp.eq.f32.partialorder %v2690, 0.0
      %v2745 = vand.u32 %v2690, 2147483648
      %v2746 = vsel %vm2744, %v2745, %v2743
      %v2747 = vrsqrt.pop %v2695
      %v2748 = vmul.f32 %v2695, %v2747
      %vm2749 = vcmp.eq.f32.partialorder %v2695, inf
      %v2750 = vsel %vm2749, %v2695, %v2748
      %vm2751 = vcmp.eq.f32.partialorder %v2695, 0.0
      %v2752 = vand.u32 %v2695, 2147483648
      %v2753 = vsel %vm2751, %v2752, %v2750
      %v2754 = vrsqrt.pop %v2700
      %v2755 = vmul.f32 %v2700, %v2754
      %vm2756 = vcmp.eq.f32.partialorder %v2700, inf
      %v2757 = vsel %vm2756, %v2700, %v2755
      %vm2758 = vcmp.eq.f32.partialorder %v2700, 0.0
      %v2759 = vand.u32 %v2700, 2147483648
      %v2760 = vsel %vm2758, %v2759, %v2757
      %v2761 = vrsqrt.pop %v2705
      %v2762 = vmul.f32 %v2705, %v2761
      %vm2763 = vcmp.eq.f32.partialorder %v2705, inf
      %v2764 = vsel %vm2763, %v2705, %v2762
      %vm2765 = vcmp.eq.f32.partialorder %v2705, 0.0
      %v2766 = vand.u32 %v2705, 2147483648
      %v2767 = vsel %vm2765, %v2766, %v2764
      %v2768 = vrsqrt.pop %v2710
      %v2769 = vmul.f32 %v2710, %v2768
      %vm2770 = vcmp.eq.f32.partialorder %v2710, inf
      %v2771 = vsel %vm2770, %v2710, %v2769
      %vm2772 = vcmp.eq.f32.partialorder %v2710, 0.0
      %v2773 = vand.u32 %v2710, 2147483648
      %v2774 = vsel %vm2772, %v2773, %v2771
      %v2775 = vrsqrt.pop %v2715
      %v2776 = vmul.f32 %v2715, %v2775
      %vm2777 = vcmp.eq.f32.partialorder %v2715, inf
      %v2778 = vsel %vm2777, %v2715, %v2776
      %vm2779 = vcmp.eq.f32.partialorder %v2715, 0.0
      %v2780 = vand.u32 %v2715, 2147483648
      %v2781 = vsel %vm2779, %v2780, %v2778
      %v2782 = vrsqrt.pop %v2720
      %v2783 = vmul.f32 %v2720, %v2782
      %vm2784 = vcmp.eq.f32.partialorder %v2720, inf
      %v2785 = vsel %vm2784, %v2720, %v2783
      %vm2786 = vcmp.eq.f32.partialorder %v2720, 0.0
      %v2787 = vand.u32 %v2720, 2147483648
      %v2788 = vsel %vm2786, %v2787, %v2785
      %v2789 = vrsqrt.pop %v2725
      %v2790 = vmul.f32 %v2725, %v2789
      %vm2791 = vcmp.eq.f32.partialorder %v2725, inf
      %v2792 = vsel %vm2791, %v2725, %v2790
      %vm2793 = vcmp.eq.f32.partialorder %v2725, 0.0
      %v2794 = vand.u32 %v2725, 2147483648
      %v2795 = vsel %vm2793, %v2794, %v2792
      %v2796 = vrsqrt.pop %v2730
      %v2797 = vmul.f32 %v2730, %v2796
      %vm2798 = vcmp.eq.f32.partialorder %v2730, inf
      %v2799 = vsel %vm2798, %v2730, %v2797
      %vm2800 = vcmp.eq.f32.partialorder %v2730, 0.0
      %v2801 = vand.u32 %v2730, 2147483648
      %v2802 = vsel %vm2800, %v2801, %v2799
      %v2803 = vmul.f32 %v2573, %v2739
      %v2804 = vmul.f32 %v2574, %v2746
      %v2805 = vmul.f32 %v2575, %v2753
      %v2806 = vmul.f32 %v2576, %v2760
      %v2807 = vmul.f32 %v2577, %v2767
      %v2808 = vmul.f32 %v2578, %v2774
      %v2809 = vmul.f32 %v2579, %v2781
      %v2810 = vmul.f32 %v2580, %v2788
      %v2811 = vmul.f32 %v2581, %v2795
      %v2812 = vmul.f32 %v2582, %v2802
      %v2813 = vsel %vm1607, %v2803, 0.0
      %v2814 = vsel %vm1608, %v2804, 0.0
      %v2815 = vsel %vm1609, %v2805, 0.0
      %v2816 = vsel %vm1610, %v2806, 0.0
      %v2817 = vsel %vm1611, %v2807, 0.0
      %v2818 = vsel %vm1612, %v2808, 0.0
      %v2819 = vsel %vm1613, %v2809, 0.0
      %v2820 = vsel %vm1614, %v2810, 0.0
      %v2821 = vsel %vm1615, %v2811, 0.0
      %v2822 = vsel %vm1616, %v2812, 0.0
      %2823 = vst [vmem:[#allocation2 + $0xb] sm:$0xff] %v2813
      %2824 = vst [vmem:[#allocation2 + $0x13] sm:$0xff] %v2814
      %2825 = vst [vmem:[#allocation2 + $0x1b] sm:$0xff] %v2815
      %2826 = vst [vmem:[#allocation2 + $0x23] sm:$0xff] %v2816
      %2827 = vst [vmem:[#allocation2 + $0x2b] sm:$0xff] %v2817
      %2828 = vst [vmem:[#allocation2 + $0x33] sm:$0xff] %v2818
      %2829 = vst [vmem:[#allocation2 + $0x3b] sm:$0xff] %v2819
      %2830 = vst [vmem:[#allocation2 + $0x43] sm:$0xff] %v2820
      %2831 = vst [vmem:[#allocation2 + $0x4b] sm:$0xff] %v2821
      %2832 = vst [vmem:[#allocation2 + $0x53] sm:$0xff] %v2822
      %v2833 = vld [vmem:[#allocation2] sm:$0xff]
      %v2834 = vld [vmem:[#allocation2 + $0x8] sm:$0xff]
      %v2835 = vld [vmem:[#allocation2 + $0x10] sm:$0xff]
      %v2836 = vld [vmem:[#allocation2 + $0x18] sm:$0xff]
      %v2837 = vld [vmem:[#allocation2 + $0x20] sm:$0xff]
      %v2838 = vld [vmem:[#allocation2 + $0x28] sm:$0xff]
      %v2839 = vld [vmem:[#allocation2 + $0x30] sm:$0xff]
      %v2840 = vld [vmem:[#allocation2 + $0x38] sm:$0xff]
      %v2841 = vld [vmem:[#allocation2 + $0x40] sm:$0xff]
      %v2842 = vld [vmem:[#allocation2 + $0x48] sm:$0xff]
      %v2843 = vld [vmem:[#allocation2 + $0x1] sm:$0xff]
      %v2844 = vld [vmem:[#allocation2 + $0x9] sm:$0xff]
      %v2845 = vld [vmem:[#allocation2 + $0x11] sm:$0xff]
      %v2846 = vld [vmem:[#allocation2 + $0x19] sm:$0xff]
      %v2847 = vld [vmem:[#allocation2 + $0x21] sm:$0xff]
      %v2848 = vld [vmem:[#allocation2 + $0x29] sm:$0xff]
      %v2849 = vld [vmem:[#allocation2 + $0x31] sm:$0xff]
      %v2850 = vld [vmem:[#allocation2 + $0x39] sm:$0xff]
      %v2851 = vld [vmem:[#allocation2 + $0x41] sm:$0xff]
      %v2852 = vld [vmem:[#allocation2 + $0x49] sm:$0xff]
      %v2853 = vld [vmem:[#allocation2 + $0x2] sm:$0xff]
      %v2854 = vld [vmem:[#allocation2 + $0xa] sm:$0xff]
      %v2855 = vld [vmem:[#allocation2 + $0x12] sm:$0xff]
      %v2856 = vld [vmem:[#allocation2 + $0x1a] sm:$0xff]
      %v2857 = vld [vmem:[#allocation2 + $0x22] sm:$0xff]
      %v2858 = vld [vmem:[#allocation2 + $0x2a] sm:$0xff]
      %v2859 = vld [vmem:[#allocation2 + $0x32] sm:$0xff]
      %v2860 = vld [vmem:[#allocation2 + $0x3a] sm:$0xff]
      %v2861 = vld [vmem:[#allocation2 + $0x42] sm:$0xff]
      %v2862 = vld [vmem:[#allocation2 + $0x4a] sm:$0xff]
      %s2863 = scalar_lea.vmem %s1, 2304
      %v2864 = vld [vmem:[%s2863] sm:$0xff]
      %v2865 = vld [vmem:[%s2863 + $0x8] sm:$0xff]
      %v2866 = vld [vmem:[%s2863 + $0x10] sm:$0xff]
      %v2867 = vld [vmem:[%s2863 + $0x18] sm:$0xff]
      %v2868 = vld [vmem:[%s2863 + $0x20] sm:$0xff]
      %v2869 = vld [vmem:[%s2863 + $0x28] sm:$0xff]
      %v2870 = vld [vmem:[%s2863 + $0x30] sm:$0xff]
      %v2871 = vld [vmem:[%s2863 + $0x38] sm:$0xff]
      %v2872 = vld [vmem:[%s2863 + $0x40] sm:$0xff]
      %v2873 = vld [vmem:[%s2863 + $0x48] sm:$0xff]
      %v2874 = vld [vmem:[%s2863 + $0x50] sm:$0xff]
      %v2875 = vld [vmem:[%s2863 + $0x58] sm:$0xff]
      %v2876 = vld [vmem:[%s2863 + $0x60] sm:$0xff]
      %v2877 = vld [vmem:[%s2863 + $0x68] sm:$0xff]
      %v2878 = vld [vmem:[%s2863 + $0x70] sm:$0xff]
      %v2879 = vld [vmem:[%s2863 + $0x78] sm:$0xff]
      %v2880 = vld [vmem:[%s2863 + $0x80] sm:$0xff]
      %v2881 = vld [vmem:[%s2863 + $0x88] sm:$0xff]
      %v2882 = vld [vmem:[%s2863 + $0x90] sm:$0xff]
      %v2883 = vld [vmem:[%s2863 + $0x98] sm:$0xff]
      %v2884 = vld [vmem:[%s2863 + $0xa0] sm:$0xff]
      %v2885 = vld [vmem:[%s2863 + $0xa8] sm:$0xff]
      %v2886 = vld [vmem:[%s2863 + $0xb0] sm:$0xff]
      %v2887 = vld [vmem:[%s2863 + $0xb8] sm:$0xff]
      %v2888 = vld [vmem:[%s2863 + $0xc0] sm:$0xff]
      %v2889 = vld [vmem:[%s2863 + $0xc8] sm:$0xff]
      %v2890 = vld [vmem:[%s2863 + $0xd0] sm:$0xff]
      %v2891 = vld [vmem:[%s2863 + $0xd8] sm:$0xff]
      %v2892 = vld [vmem:[%s2863 + $0xe0] sm:$0xff]
      %v2893 = vld [vmem:[%s2863 + $0xe8] sm:$0xff]
      %v2894 = vld [vmem:[%s2863 + $0xf0] sm:$0xff]
      %v2895 = vld [vmem:[%s2863 + $0xf8] sm:$0xff]
      %v2896 = vld [vmem:[%s2863 + $0x100] sm:$0xff]
      %v2897 = vld [vmem:[%s2863 + $0x108] sm:$0xff]
      %v2898 = vld [vmem:[%s2863 + $0x110] sm:$0xff]
      %v2899 = vld [vmem:[%s2863 + $0x118] sm:$0xff]
      %v2900 = vld [vmem:[%s2863 + $0x120] sm:$0xff]
      %v2901 = vld [vmem:[%s2863 + $0x128] sm:$0xff]
      %v2902 = vld [vmem:[%s2863 + $0x130] sm:$0xff]
      %v2903 = vld [vmem:[%s2863 + $0x138] sm:$0xff]
      %v2904 = vld [vmem:[%s2863 + $0x140] sm:$0xff]
      %v2905 = vld [vmem:[%s2863 + $0x148] sm:$0xff]
      %v2906 = vld [vmem:[%s2863 + $0x150] sm:$0xff]
      %v2907 = vld [vmem:[%s2863 + $0x158] sm:$0xff]
      %v2908 = vld [vmem:[%s2863 + $0x160] sm:$0xff]
      %v2909 = vld [vmem:[%s2863 + $0x168] sm:$0xff]
      %v2910 = vld [vmem:[%s2863 + $0x170] sm:$0xff]
      %v2911 = vld [vmem:[%s2863 + $0x178] sm:$0xff]
      %v2912 = vld [vmem:[#allocation2 + $0x52] sm:$0xff]
      %v2913 = vld [vmem:[#allocation2 + $0xb] sm:$0xff]
      %v2914 = vld [vmem:[#allocation2 + $0x13] sm:$0xff]
      %v2915 = vld [vmem:[#allocation2 + $0x1b] sm:$0xff]
      %v2916 = vld [vmem:[#allocation2 + $0x23] sm:$0xff]
      %v2917 = vld [vmem:[#allocation2 + $0x2b] sm:$0xff]
      %v2918 = vld [vmem:[#allocation2 + $0x33] sm:$0xff]
      %v2919 = vld [vmem:[#allocation2 + $0x3b] sm:$0xff]
      %v2920 = vld [vmem:[#allocation2 + $0x43] sm:$0xff]
      %v2921 = vld [vmem:[#allocation2 + $0x4b] sm:$0xff]
      %v2922 = vld [vmem:[#allocation2 + $0x53] sm:$0xff]
      %v2923 = vld [vmem:[#allocation2 + $0xc] sm:$0xff]
      %v2924 = vld [vmem:[#allocation2 + $0x14] sm:$0xff]
      %v2925 = vld [vmem:[#allocation2 + $0x1c] sm:$0xff]
      %v2926 = vld [vmem:[#allocation2 + $0x24] sm:$0xff]
      %v2927 = vld [vmem:[#allocation2 + $0x2c] sm:$0xff]
      %v2928 = vld [vmem:[#allocation2 + $0x34] sm:$0xff]
      %v2929 = vld [vmem:[#allocation2 + $0x3c] sm:$0xff]
      %v2930 = vld [vmem:[#allocation2 + $0x44] sm:$0xff]
      %v2931 = vld [vmem:[#allocation2 + $0x4c] sm:$0xff]
      %v2932 = vld [vmem:[#allocation2 + $0x54] sm:$0xff]
      %s2933 = scalar_lea.vmem %s1, 2688
      %v2934 = vld [vmem:[%s2933] sm:$0xff]
      %v2935 = vld [vmem:[%s2933 + $0x8] sm:$0xff]
      %v2936 = vld [vmem:[%s2933 + $0x10] sm:$0xff]
      %v2937 = vld [vmem:[%s2933 + $0x18] sm:$0xff]
      %v2938 = vld [vmem:[%s2933 + $0x20] sm:$0xff]
      %v2939 = vld [vmem:[%s2933 + $0x28] sm:$0xff]
      %v2940 = vld [vmem:[%s2933 + $0x30] sm:$0xff]
      %v2941 = vld [vmem:[%s2933 + $0x38] sm:$0xff]
      %v2942 = vld [vmem:[%s2933 + $0x40] sm:$0xff]
      %v2943 = vld [vmem:[%s2933 + $0x48] sm:$0xff]
      %v2944 = vld [vmem:[%s2933 + $0x50] sm:$0xff]
      %v2945 = vld [vmem:[%s2933 + $0x58] sm:$0xff]
      %v2946 = vld [vmem:[%s2933 + $0x60] sm:$0xff]
      %v2947 = vld [vmem:[%s2933 + $0x68] sm:$0xff]
      %v2948 = vld [vmem:[%s2933 + $0x70] sm:$0xff]
      %v2949 = vld [vmem:[%s2933 + $0x78] sm:$0xff]
      %v2950 = vld [vmem:[%s2933 + $0x80] sm:$0xff]
      %v2951 = vld [vmem:[%s2933 + $0x88] sm:$0xff]
      %v2952 = vld [vmem:[%s2933 + $0x90] sm:$0xff]
      %v2953 = vld [vmem:[%s2933 + $0x98] sm:$0xff]
      %v2954 = vld [vmem:[%s2933 + $0xa0] sm:$0xff]
      %v2955 = vld [vmem:[%s2933 + $0xa8] sm:$0xff]
      %v2956 = vld [vmem:[%s2933 + $0xb0] sm:$0xff]
      %v2957 = vld [vmem:[%s2933 + $0xb8] sm:$0xff]
      %v2958 = vld [vmem:[%s2933 + $0xc0] sm:$0xff]
      %v2959 = vld [vmem:[%s2933 + $0xc8] sm:$0xff]
      %v2960 = vld [vmem:[%s2933 + $0xd0] sm:$0xff]
      %v2961 = vld [vmem:[%s2933 + $0xd8] sm:$0xff]
      %v2962 = vld [vmem:[%s2933 + $0xe0] sm:$0xff]
      %v2963 = vld [vmem:[%s2933 + $0xe8] sm:$0xff]
      %v2964 = vld [vmem:[%s2933 + $0xf0] sm:$0xff]
      %v2965 = vld [vmem:[%s2933 + $0xf8] sm:$0xff]
      %v2966 = vld [vmem:[%s2933 + $0x100] sm:$0xff]
      %v2967 = vld [vmem:[%s2933 + $0x108] sm:$0xff]
      %v2968 = vld [vmem:[%s2933 + $0x110] sm:$0xff]
      %v2969 = vld [vmem:[%s2933 + $0x118] sm:$0xff]
      %v2970 = vld [vmem:[%s2933 + $0x120] sm:$0xff]
      %v2971 = vld [vmem:[%s2933 + $0x128] sm:$0xff]
      %v2972 = vld [vmem:[%s2933 + $0x130] sm:$0xff]
      %v2973 = vld [vmem:[%s2933 + $0x138] sm:$0xff]
      %v2974 = vld [vmem:[%s2933 + $0x140] sm:$0xff]
      %v2975 = vld [vmem:[%s2933 + $0x148] sm:$0xff]
      %v2976 = vld [vmem:[%s2933 + $0x150] sm:$0xff]
      %v2977 = vld [vmem:[%s2933 + $0x158] sm:$0xff]
      %v2978 = vld [vmem:[%s2933 + $0x160] sm:$0xff]
      %v2979 = vld [vmem:[%s2933 + $0x168] sm:$0xff]
      %v2980 = vld [vmem:[%s2933 + $0x170] sm:$0xff]
      %v2981 = vld [vmem:[%s2933 + $0x178] sm:$0xff]
      %2982 = vmatprep.subr.mxu0 0.0
      %2983 = vmatpush1.msra.mxu0 %v2934
      %2984 = vmatprep.subr.mxu0 0.0
      %2985 = vmatpush1.msra.mxu0 %v2935
      %2986 = vmatprep.subr.mxu0 0.0
      %2987 = vmatpush1.msra.mxu0 %v2936
      %2988 = vmatprep.subr.mxu0 0.0
      %2989 = vmatpush1.msra.mxu0 %v2937
      %2990 = vmatprep.subr.mxu0 0.0
      %2991 = vmatpush1.msra.mxu0 %v2938
      %2992 = vmatprep.subr.mxu0 0.0
      %2993 = vmatpush1.msra.mxu0 %v2939
      %2994 = vmatprep.subr.mxu0 0.0
      %2995 = vmatpush1.msra.mxu0 %v2940
      %2996 = vmatprep.subr.mxu0 0.0
      %2997 = vmatpush1.msra.mxu0 %v2941
      %2998 = vmatprep.subr.mxu0 0.0
      %2999 = vmatpush1.msra.mxu0 %v2942
      %3000 = vmatprep.subr.mxu0 0.0
      %3001 = vmatpush1.msra.mxu0 %v2943
      %3002 = vmatprep.subr.mxu0 0.0
      %3003 = vmatpush1.msra.mxu0 %v2944
      %3004 = vmatprep.subr.mxu0 0.0
      %3005 = vmatpush1.msra.mxu0 %v2945
      %3006 = vmatprep.subr.mxu0 0.0
      %3007 = vmatpush1.msra.mxu0 %v2946
      %3008 = vmatprep.subr.mxu0 0.0
      %3009 = vmatpush1.msra.mxu0 %v2947
      %3010 = vmatprep.subr.mxu0 0.0
      %3011 = vmatpush1.msra.mxu0 %v2948
      %3012 = vmatprep.subr.mxu0 0.0
      %3013 = vmatpush1.msra.mxu0 %v2949
      %3014 = vmatprep.subr.mxu0 0.0
      %3015 = vmatpush1.msra.mxu0 %v2950
      %3016 = vmatprep.subr.mxu0 0.0
      %3017 = vmatpush1.msra.mxu0 %v2951
      %3018 = vmatprep.subr.mxu0 0.0
      %3019 = vmatpush1.msra.mxu0 %v2952
      %3020 = vmatprep.subr.mxu0 0.0
      %3021 = vmatpush1.msra.mxu0 %v2953
      %3022 = vmatprep.subr.mxu0 0.0
      %3023 = vmatpush1.msra.mxu0 %v2954
      %3024 = vmatprep.subr.mxu0 0.0
      %3025 = vmatpush1.msra.mxu0 %v2955
      %3026 = vmatprep.subr.mxu0 0.0
      %3027 = vmatpush1.msra.mxu0 %v2956
      %3028 = vmatprep.subr.mxu0 0.0
      %3029 = vmatpush1.msra.mxu0 %v2957
      %3030 = vmatprep.subr.mxu0 0.0
      %3031 = vmatpush1.msra.mxu0 %v2958
      %3032 = vmatprep.subr.mxu0 0.0
      %3033 = vmatpush1.msra.mxu0 %v2959
      %3034 = vmatprep.subr.mxu0 0.0
      %3035 = vmatpush1.msra.mxu0 %v2960
      %3036 = vmatprep.subr.mxu0 0.0
      %3037 = vmatpush1.msra.mxu0 %v2961
      %3038 = vmatprep.subr.mxu0 0.0
      %3039 = vmatpush1.msra.mxu0 %v2962
      %3040 = vmatprep.subr.mxu0 0.0
      %3041 = vmatpush1.msra.mxu0 %v2963
      %3042 = vmatprep.subr.mxu0 0.0
      %3043 = vmatpush1.msra.mxu0 %v2964
      %3044 = vmatprep.subr.mxu0 0.0
      %3045 = vmatpush1.msra.mxu0 %v2965
      %3046 = vmatprep.mubr.f32.mxu0 %v2913
      %3047 = vmatmul.mubr.f32.gmra.mrb[0].mxu0 %v2854
      %v3048 = vpop.f32.mrb[0].mxu0
      %v3049 = vadd.f32 0.0, %v3048
      %v3050 = vpop.f32.mrb[0].mxu0
      %3051 = vmatprep.mubr.f32.mxu0 %v2914
      %3052 = vmatmul.mubr.f32.gmra.mrb[0].mxu0 %v2855
      %v3053 = vpop.f32.mrb[0].mxu0
      %v3054 = vadd.f32 0.0, %v3053
      %v3055 = vpop.f32.mrb[0].mxu0
      %3056 = vmatprep.mubr.f32.mxu0 %v2915
      %3057 = vmatmul.mubr.f32.gmra.mrb[0].mxu0 %v2856
      %v3058 = vpop.f32.mrb[0].mxu0
      %v3059 = vadd.f32 0.0, %v3058
      %v3060 = vpop.f32.mrb[0].mxu0
      %3061 = vmatprep.mubr.f32.mxu0 %v2916
      %3062 = vmatmul.mubr.f32.gmra.mrb[0].mxu0 %v2857
      %v3063 = vpop.f32.mrb[0].mxu0
      %v3064 = vadd.f32 0.0, %v3063
      %v3065 = vpop.f32.mrb[0].mxu0
      %3066 = vmatprep.mubr.f32.mxu0 %v2917
      %3067 = vmatmul.mubr.f32.gmra.mrb[0].mxu0 %v2858
      %v3068 = vpop.f32.mrb[0].mxu0
      %v3069 = vadd.f32 0.0, %v3068
      %v3070 = vpop.f32.mrb[0].mxu0
      %3071 = vmatprep.mubr.f32.mxu0 %v2918
      %3072 = vmatmul.mubr.f32.gmra.mrb[0].mxu0 %v2859
      %v3073 = vpop.f32.mrb[0].mxu0
      %v3074 = vadd.f32 0.0, %v3073
      %v3075 = vpop.f32.mrb[0].mxu0
      %3076 = vmatprep.mubr.f32.mxu0 %v2919
      %3077 = vmatmul.mubr.f32.gmra.mrb[0].mxu0 %v2860
      %v3078 = vpop.f32.mrb[0].mxu0
      %v3079 = vadd.f32 0.0, %v3078
      %v3080 = vpop.f32.mrb[0].mxu0
      %3081 = vmatprep.mubr.f32.mxu0 %v2920
      %3082 = vmatmul.mubr.f32.gmra.mrb[0].mxu0 %v2861
      %v3083 = vpop.f32.mrb[0].mxu0
      %v3084 = vadd.f32 0.0, %v3083
      %v3085 = vpop.f32.mrb[0].mxu0
      %3086 = vmatprep.mubr.f32.mxu0 %v2921
      %3087 = vmatmul.mubr.f32.gmra.mrb[0].mxu0 %v2862
      %v3088 = vpop.f32.mrb[0].mxu0
      %v3089 = vadd.f32 0.0, %v3088
      %v3090 = vpop.f32.mrb[0].mxu0
      %3091 = vmatprep.mubr.f32.mxu0 %v2922
      %3092 = vmatmul.mubr.f32.gmra.mrb[0].mxu0 %v2912
      %v3093 = vpop.f32.mrb[0].mxu0
      %v3094 = vadd.f32 0.0, %v3093
      %v3095 = vpop.f32.mrb[0].mxu0
      %3096 = vdwg.mxu0
      %3097 = vmatprep.subr.mxu0 0.0
      %3098 = vmatpush1.msra.mxu0 %v2966
      %3099 = vmatprep.subr.mxu0 0.0
      %3100 = vmatpush1.msra.mxu0 %v2967
      %3101 = vmatprep.subr.mxu0 0.0
      %3102 = vmatpush1.msra.mxu0 %v2968
      %3103 = vmatprep.subr.mxu0 0.0
      %3104 = vmatpush1.msra.mxu0 %v2969
      %3105 = vmatprep.subr.mxu0 0.0
      %3106 = vmatpush1.msra.mxu0 %v2970
      %3107 = vmatprep.subr.mxu0 0.0
      %3108 = vmatpush1.msra.mxu0 %v2971
      %3109 = vmatprep.subr.mxu0 0.0
      %3110 = vmatpush1.msra.mxu0 %v2972
      %3111 = vmatprep.subr.mxu0 0.0
      %3112 = vmatpush1.msra.mxu0 %v2973
      %3113 = vmatprep.subr.mxu0 0.0
      %3114 = vmatpush1.msra.mxu0 %v2974
      %3115 = vmatprep.subr.mxu0 0.0
      %3116 = vmatpush1.msra.mxu0 %v2975
      %3117 = vmatprep.subr.mxu0 0.0
      %3118 = vmatpush1.msra.mxu0 %v2976
      %3119 = vmatprep.subr.mxu0 0.0
      %3120 = vmatpush1.msra.mxu0 %v2977
      %3121 = vmatprep.subr.mxu0 0.0
      %3122 = vmatpush1.msra.mxu0 %v2978
      %3123 = vmatprep.subr.mxu0 0.0
      %3124 = vmatpush1.msra.mxu0 %v2979
      %3125 = vmatprep.subr.mxu0 0.0
      %3126 = vmatpush1.msra.mxu0 %v2980
      %3127 = vmatprep.subr.mxu0 0.0
      %3128 = vmatpush1.msra.mxu0 %v2981
      %3129 = vmatprep.subr.mxu0 0.0
      %3130 = vmatpush1.msra.mxu0 0.0
      %3131 = vmatprep.subr.mxu0 0.0
      %3132 = vmatpush1.msra.mxu0 0.0
      %3133 = vmatprep.subr.mxu0 0.0
      %3134 = vmatpush1.msra.mxu0 0.0
      %3135 = vmatprep.subr.mxu0 0.0
      %3136 = vmatpush1.msra.mxu0 0.0
      %3137 = vmatprep.subr.mxu0 0.0
      %3138 = vmatpush1.msra.mxu0 0.0
      %3139 = vmatprep.subr.mxu0 0.0
      %3140 = vmatpush1.msra.mxu0 0.0
      %3141 = vmatprep.subr.mxu0 0.0
      %3142 = vmatpush1.msra.mxu0 0.0
      %3143 = vmatprep.subr.mxu0 0.0
      %3144 = vmatpush1.msra.mxu0 0.0
      %3145 = vmatprep.subr.mxu0 0.0
      %3146 = vmatpush1.msra.mxu0 0.0
      %3147 = vmatprep.subr.mxu0 0.0
      %3148 = vmatpush1.msra.mxu0 0.0
      %3149 = vmatprep.subr.mxu0 0.0
      %3150 = vmatpush1.msra.mxu0 0.0
      %3151 = vmatprep.subr.mxu0 0.0
      %3152 = vmatpush1.msra.mxu0 0.0
      %3153 = vmatprep.subr.mxu0 0.0
      %3154 = vmatpush1.msra.mxu0 0.0
      %3155 = vmatprep.subr.mxu0 0.0
      %3156 = vmatpush1.msra.mxu0 0.0
      %3157 = vmatprep.subr.mxu0 0.0
      %3158 = vmatpush1.msra.mxu0 0.0
      %3159 = vmatprep.subr.mxu0 0.0
      %3160 = vmatpush1.msra.mxu0 0.0
      %3161 = vmatprep.mubr.f32.mxu0 0.0
      %3162 = vmatmul.mubr.f32.gmra.mrb[0].mxu0 %v2923
      %v3163 = vpop.f32.mrb[0].mxu0
      %v3164 = vadd.f32 %v3049, %v3163
      %v3165 = vpop.f32.mrb[0].mxu0
      %3166 = vmatprep.mubr.f32.mxu0 0.0
      %3167 = vmatmul.mubr.f32.gmra.mrb[0].mxu0 %v2924
      %v3168 = vpop.f32.mrb[0].mxu0
      %v3169 = vadd.f32 %v3054, %v3168
      %v3170 = vpop.f32.mrb[0].mxu0
      %3171 = vmatprep.mubr.f32.mxu0 0.0
      %3172 = vmatmul.mubr.f32.gmra.mrb[0].mxu0 %v2925
      %v3173 = vpop.f32.mrb[0].mxu0
      %v3174 = vadd.f32 %v3059, %v3173
      %v3175 = vpop.f32.mrb[0].mxu0
      %3176 = vmatprep.mubr.f32.mxu0 0.0
      %3177 = vmatmul.mubr.f32.gmra.mrb[0].mxu0 %v2926
      %v3178 = vpop.f32.mrb[0].mxu0
      %v3179 = vadd.f32 %v3064, %v3178
      %v3180 = vpop.f32.mrb[0].mxu0
      %3181 = vmatprep.mubr.f32.mxu0 0.0
      %3182 = vmatmul.mubr.f32.gmra.mrb[0].mxu0 %v2927
      %v3183 = vpop.f32.mrb[0].mxu0
      %v3184 = vadd.f32 %v3069, %v3183
      %v3185 = vpop.f32.mrb[0].mxu0
      %3186 = vmatprep.mubr.f32.mxu0 0.0
      %3187 = vmatmul.mubr.f32.gmra.mrb[0].mxu0 %v2928
      %v3188 = vpop.f32.mrb[0].mxu0
      %v3189 = vadd.f32 %v3074, %v3188
      %v3190 = vpop.f32.mrb[0].mxu0
      %3191 = vmatprep.mubr.f32.mxu0 0.0
      %3192 = vmatmul.mubr.f32.gmra.mrb[0].mxu0 %v2929
      %v3193 = vpop.f32.mrb[0].mxu0
      %v3194 = vadd.f32 %v3079, %v3193
      %v3195 = vpop.f32.mrb[0].mxu0
      %3196 = vmatprep.mubr.f32.mxu0 0.0
      %3197 = vmatmul.mubr.f32.gmra.mrb[0].mxu0 %v2930
      %v3198 = vpop.f32.mrb[0].mxu0
      %v3199 = vadd.f32 %v3084, %v3198
      %v3200 = vpop.f32.mrb[0].mxu0
      %3201 = vmatprep.mubr.f32.mxu0 0.0
      %3202 = vmatmul.mubr.f32.gmra.mrb[0].mxu0 %v2931
      %v3203 = vpop.f32.mrb[0].mxu0
      %v3204 = vadd.f32 %v3089, %v3203
      %v3205 = vpop.f32.mrb[0].mxu0
      %3206 = vmatprep.mubr.f32.mxu0 0.0
      %3207 = vmatmul.mubr.f32.gmra.mrb[0].mxu0 %v2932
      %v3208 = vpop.f32.mrb[0].mxu0
      %v3209 = vadd.f32 %v3094, %v3208
      %v3210 = vpop.f32.mrb[0].mxu0
      %3211 = vdwg.mxu0
      %3212 = vmatprep.subr.mxu0 0.0
      %3213 = vmatpush1.msra.mxu0 %v2864
      %3214 = vmatprep.subr.mxu0 0.0
      %3215 = vmatpush1.msra.mxu0 %v2865
      %3216 = vmatprep.subr.mxu0 0.0
      %3217 = vmatpush1.msra.mxu0 %v2866
      %3218 = vmatprep.subr.mxu0 0.0
      %3219 = vmatpush1.msra.mxu0 %v2867
      %3220 = vmatprep.subr.mxu0 0.0
      %3221 = vmatpush1.msra.mxu0 %v2868
      %3222 = vmatprep.subr.mxu0 0.0
      %3223 = vmatpush1.msra.mxu0 %v2869
      %3224 = vmatprep.subr.mxu0 0.0
      %3225 = vmatpush1.msra.mxu0 %v2870
      %3226 = vmatprep.subr.mxu0 0.0
      %3227 = vmatpush1.msra.mxu0 %v2871
      %3228 = vmatprep.subr.mxu0 0.0
      %3229 = vmatpush1.msra.mxu0 %v2872
      %3230 = vmatprep.subr.mxu0 0.0
      %3231 = vmatpush1.msra.mxu0 %v2873
      %3232 = vmatprep.subr.mxu0 0.0
      %3233 = vmatpush1.msra.mxu0 %v2874
      %3234 = vmatprep.subr.mxu0 0.0
      %3235 = vmatpush1.msra.mxu0 %v2875
      %3236 = vmatprep.subr.mxu0 0.0
      %3237 = vmatpush1.msra.mxu0 %v2876
      %3238 = vmatprep.subr.mxu0 0.0
      %3239 = vmatpush1.msra.mxu0 %v2877
      %3240 = vmatprep.subr.mxu0 0.0
      %3241 = vmatpush1.msra.mxu0 %v2878
      %3242 = vmatprep.subr.mxu0 0.0
      %3243 = vmatpush1.msra.mxu0 %v2879
      %3244 = vmatprep.subr.mxu0 0.0
      %3245 = vmatpush1.msra.mxu0 %v2880
      %3246 = vmatprep.subr.mxu0 0.0
      %3247 = vmatpush1.msra.mxu0 %v2881
      %3248 = vmatprep.subr.mxu0 0.0
      %3249 = vmatpush1.msra.mxu0 %v2882
      %3250 = vmatprep.subr.mxu0 0.0
      %3251 = vmatpush1.msra.mxu0 %v2883
      %3252 = vmatprep.subr.mxu0 0.0
      %3253 = vmatpush1.msra.mxu0 %v2884
      %3254 = vmatprep.subr.mxu0 0.0
      %3255 = vmatpush1.msra.mxu0 %v2885
      %3256 = vmatprep.subr.mxu0 0.0
      %3257 = vmatpush1.msra.mxu0 %v2886
      %3258 = vmatprep.subr.mxu0 0.0
      %3259 = vmatpush1.msra.mxu0 %v2887
      %3260 = vmatprep.subr.mxu0 0.0
      %3261 = vmatpush1.msra.mxu0 %v2888
      %3262 = vmatprep.subr.mxu0 0.0
      %3263 = vmatpush1.msra.mxu0 %v2889
      %3264 = vmatprep.subr.mxu0 0.0
      %3265 = vmatpush1.msra.mxu0 %v2890
      %3266 = vmatprep.subr.mxu0 0.0
      %3267 = vmatpush1.msra.mxu0 %v2891
      %3268 = vmatprep.subr.mxu0 0.0
      %3269 = vmatpush1.msra.mxu0 %v2892
      %3270 = vmatprep.subr.mxu0 0.0
      %3271 = vmatpush1.msra.mxu0 %v2893
      %3272 = vmatprep.subr.mxu0 0.0
      %3273 = vmatpush1.msra.mxu0 %v2894
      %3274 = vmatprep.subr.mxu0 0.0
      %3275 = vmatpush1.msra.mxu0 %v2895
      %3276 = vmatprep.mubr.f32.mxu0 %v2843
      %3277 = vmatmul.mubr.f32.gmra.mrb[0].mxu0 %v2833
      %v3278 = vpop.f32.mrb[0].mxu0
      %v3279 = vadd.f32 %v3164, %v3278
      %v3280 = vpop.f32.mrb[0].mxu0
      %3281 = vmatprep.mubr.f32.mxu0 %v2844
      %3282 = vmatmul.mubr.f32.gmra.mrb[0].mxu0 %v2834
      %v3283 = vpop.f32.mrb[0].mxu0
      %v3284 = vadd.f32 %v3169, %v3283
      %v3285 = vpop.f32.mrb[0].mxu0
      %3286 = vmatprep.mubr.f32.mxu0 %v2845
      %3287 = vmatmul.mubr.f32.gmra.mrb[0].mxu0 %v2835
      %v3288 = vpop.f32.mrb[0].mxu0
      %v3289 = vadd.f32 %v3174, %v3288
      %v3290 = vpop.f32.mrb[0].mxu0
      %3291 = vmatprep.mubr.f32.mxu0 %v2846
      %3292 = vmatmul.mubr.f32.gmra.mrb[0].mxu0 %v2836
      %v3293 = vpop.f32.mrb[0].mxu0
      %v3294 = vadd.f32 %v3179, %v3293
      %v3295 = vpop.f32.mrb[0].mxu0
      %3296 = vmatprep.mubr.f32.mxu0 %v2847
      %3297 = vmatmul.mubr.f32.gmra.mrb[0].mxu0 %v2837
      %v3298 = vpop.f32.mrb[0].mxu0
      %v3299 = vadd.f32 %v3184, %v3298
      %v3300 = vpop.f32.mrb[0].mxu0
      %3301 = vmatprep.mubr.f32.mxu0 %v2848
      %3302 = vmatmul.mubr.f32.gmra.mrb[0].mxu0 %v2838
      %v3303 = vpop.f32.mrb[0].mxu0
      %v3304 = vadd.f32 %v3189, %v3303
      %v3305 = vpop.f32.mrb[0].mxu0
      %3306 = vmatprep.mubr.f32.mxu0 %v2849
      %3307 = vmatmul.mubr.f32.gmra.mrb[0].mxu0 %v2839
      %v3308 = vpop.f32.mrb[0].mxu0
      %v3309 = vadd.f32 %v3194, %v3308
      %v3310 = vpop.f32.mrb[0].mxu0
      %3311 = vmatprep.mubr.f32.mxu0 %v2850
      %3312 = vmatmul.mubr.f32.gmra.mrb[0].mxu0 %v2840
      %v3313 = vpop.f32.mrb[0].mxu0
      %v3314 = vadd.f32 %v3199, %v3313
      %v3315 = vpop.f32.mrb[0].mxu0
      %3316 = vmatprep.mubr.f32.mxu0 %v2851
      %3317 = vmatmul.mubr.f32.gmra.mrb[0].mxu0 %v2841
      %v3318 = vpop.f32.mrb[0].mxu0
      %v3319 = vadd.f32 %v3204, %v3318
      %v3320 = vpop.f32.mrb[0].mxu0
      %3321 = vmatprep.mubr.f32.mxu0 %v2852
      %3322 = vmatmul.mubr.f32.gmra.mrb[0].mxu0 %v2842
      %v3323 = vpop.f32.mrb[0].mxu0
      %v3324 = vadd.f32 %v3209, %v3323
      %v3325 = vpop.f32.mrb[0].mxu0
      %3326 = vdwg.mxu0
      %3327 = vmatprep.subr.mxu0 0.0
      %3328 = vmatpush1.msra.mxu0 %v2896
      %3329 = vmatprep.subr.mxu0 0.0
      %3330 = vmatpush1.msra.mxu0 %v2897
      %3331 = vmatprep.subr.mxu0 0.0
      %3332 = vmatpush1.msra.mxu0 %v2898
      %3333 = vmatprep.subr.mxu0 0.0
      %3334 = vmatpush1.msra.mxu0 %v2899
      %3335 = vmatprep.subr.mxu0 0.0
      %3336 = vmatpush1.msra.mxu0 %v2900
      %3337 = vmatprep.subr.mxu0 0.0
      %3338 = vmatpush1.msra.mxu0 %v2901
      %3339 = vmatprep.subr.mxu0 0.0
      %3340 = vmatpush1.msra.mxu0 %v2902
      %3341 = vmatprep.subr.mxu0 0.0
      %3342 = vmatpush1.msra.mxu0 %v2903
      %3343 = vmatprep.subr.mxu0 0.0
      %3344 = vmatpush1.msra.mxu0 %v2904
      %3345 = vmatprep.subr.mxu0 0.0
      %3346 = vmatpush1.msra.mxu0 %v2905
      %3347 = vmatprep.subr.mxu0 0.0
      %3348 = vmatpush1.msra.mxu0 %v2906
      %3349 = vmatprep.subr.mxu0 0.0
      %3350 = vmatpush1.msra.mxu0 %v2907
      %3351 = vmatprep.subr.mxu0 0.0
      %3352 = vmatpush1.msra.mxu0 %v2908
      %3353 = vmatprep.subr.mxu0 0.0
      %3354 = vmatpush1.msra.mxu0 %v2909
      %3355 = vmatprep.subr.mxu0 0.0
      %3356 = vmatpush1.msra.mxu0 %v2910
      %3357 = vmatprep.subr.mxu0 0.0
      %3358 = vmatpush1.msra.mxu0 %v2911
      %3359 = vmatprep.subr.mxu0 0.0
      %3360 = vmatpush1.msra.mxu0 0.0
      %3361 = vmatprep.subr.mxu0 0.0
      %3362 = vmatpush1.msra.mxu0 0.0
      %3363 = vmatprep.subr.mxu0 0.0
      %3364 = vmatpush1.msra.mxu0 0.0
      %3365 = vmatprep.subr.mxu0 0.0
      %3366 = vmatpush1.msra.mxu0 0.0
      %3367 = vmatprep.subr.mxu0 0.0
      %3368 = vmatpush1.msra.mxu0 0.0
      %3369 = vmatprep.subr.mxu0 0.0
      %3370 = vmatpush1.msra.mxu0 0.0
      %3371 = vmatprep.subr.mxu0 0.0
      %3372 = vmatpush1.msra.mxu0 0.0
      %3373 = vmatprep.subr.mxu0 0.0
      %3374 = vmatpush1.msra.mxu0 0.0
      %3375 = vmatprep.subr.mxu0 0.0
      %3376 = vmatpush1.msra.mxu0 0.0
      %3377 = vmatprep.subr.mxu0 0.0
      %3378 = vmatpush1.msra.mxu0 0.0
      %3379 = vmatprep.subr.mxu0 0.0
      %3380 = vmatpush1.msra.mxu0 0.0
      %3381 = vmatprep.subr.mxu0 0.0
      %3382 = vmatpush1.msra.mxu0 0.0
      %3383 = vmatprep.subr.mxu0 0.0
      %3384 = vmatpush1.msra.mxu0 0.0
      %3385 = vmatprep.subr.mxu0 0.0
      %3386 = vmatpush1.msra.mxu0 0.0
      %3387 = vmatprep.subr.mxu0 0.0
      %3388 = vmatpush1.msra.mxu0 0.0
      %3389 = vmatprep.subr.mxu0 0.0
      %3390 = vmatpush1.msra.mxu0 0.0
      %3391 = vmatprep.mubr.f32.mxu0 0.0
      %3392 = vmatmul.mubr.f32.gmra.mrb[0].mxu0 %v2853
      %v3393 = vpop.f32.mrb[0].mxu0
      %v3394 = vadd.f32 %v3279, %v3393
      %v3395 = vpop.f32.mrb[0].mxu0
      %3396 = vmatprep.mubr.f32.mxu0 0.0
      %3397 = vmatmul.mubr.f32.gmra.mrb[0].mxu0 %v2854
      %v3398 = vpop.f32.mrb[0].mxu0
      %v3399 = vadd.f32 %v3284, %v3398
      %v3400 = vpop.f32.mrb[0].mxu0
      %3401 = vmatprep.mubr.f32.mxu0 0.0
      %3402 = vmatmul.mubr.f32.gmra.mrb[0].mxu0 %v2855
      %v3403 = vpop.f32.mrb[0].mxu0
      %v3404 = vadd.f32 %v3289, %v3403
      %v3405 = vpop.f32.mrb[0].mxu0
      %3406 = vmatprep.mubr.f32.mxu0 0.0
      %3407 = vmatmul.mubr.f32.gmra.mrb[0].mxu0 %v2856
      %v3408 = vpop.f32.mrb[0].mxu0
      %v3409 = vadd.f32 %v3294, %v3408
      %v3410 = vpop.f32.mrb[0].mxu0
      %3411 = vmatprep.mubr.f32.mxu0 0.0
      %3412 = vmatmul.mubr.f32.gmra.mrb[0].mxu0 %v2857
      %v3413 = vpop.f32.mrb[0].mxu0
      %v3414 = vadd.f32 %v3299, %v3413
      %v3415 = vpop.f32.mrb[0].mxu0
      %3416 = vmatprep.mubr.f32.mxu0 0.0
      %3417 = vmatmul.mubr.f32.gmra.mrb[0].mxu0 %v2858
      %v3418 = vpop.f32.mrb[0].mxu0
      %v3419 = vadd.f32 %v3304, %v3418
      %v3420 = vpop.f32.mrb[0].mxu0
      %3421 = vmatprep.mubr.f32.mxu0 0.0
      %3422 = vmatmul.mubr.f32.gmra.mrb[0].mxu0 %v2859
      %v3423 = vpop.f32.mrb[0].mxu0
      %v3424 = vadd.f32 %v3309, %v3423
      %v3425 = vpop.f32.mrb[0].mxu0
      %3426 = vmatprep.mubr.f32.mxu0 0.0
      %3427 = vmatmul.mubr.f32.gmra.mrb[0].mxu0 %v2860
      %v3428 = vpop.f32.mrb[0].mxu0
      %v3429 = vadd.f32 %v3314, %v3428
      %v3430 = vpop.f32.mrb[0].mxu0
      %3431 = vmatprep.mubr.f32.mxu0 0.0
      %3432 = vmatmul.mubr.f32.gmra.mrb[0].mxu0 %v2861
      %v3433 = vpop.f32.mrb[0].mxu0
      %v3434 = vadd.f32 %v3319, %v3433
      %v3435 = vpop.f32.mrb[0].mxu0
      %3436 = vmatprep.mubr.f32.mxu0 0.0
      %3437 = vmatmul.mubr.f32.gmra.mrb[0].mxu0 %v2862
      %v3438 = vpop.f32.mrb[0].mxu0
      %v3439 = vadd.f32 %v3324, %v3438
      %v3440 = vpop.f32.mrb[0].mxu0
      %3441 = vdwg.mxu0
      %v3442 = vld [vmem:[#allocation2 + $0x14] sm:$0xff]
      %v3443 = vld [vmem:[#allocation2 + $0x1c] sm:$0xff]
      %v3444 = vld [vmem:[#allocation2 + $0x24] sm:$0xff]
      %v3445 = vld [vmem:[#allocation2 + $0x2c] sm:$0xff]
      %v3446 = vld [vmem:[#allocation2 + $0x34] sm:$0xff]
      %v3447 = vld [vmem:[#allocation2 + $0x3c] sm:$0xff]
      %v3448 = vld [vmem:[#allocation2 + $0x44] sm:$0xff]
      %v3449 = vld [vmem:[#allocation2 + $0x4c] sm:$0xff]
      %v3450 = vld [vmem:[#allocation2 + $0x54] sm:$0xff]
      %v3451 = vld [vmem:[#allocation2 + $0x5c] sm:$0xff]
      %v3452 = vld [vmem:[#allocation2 + $0x15] sm:$0xff]
      %v3453 = vld [vmem:[#allocation2 + $0x1d] sm:$0xff]
      %v3454 = vld [vmem:[#allocation2 + $0x25] sm:$0xff]
      %v3455 = vld [vmem:[#allocation2 + $0x2d] sm:$0xff]
      %v3456 = vld [vmem:[#allocation2 + $0x35] sm:$0xff]
      %v3457 = vld [vmem:[#allocation2 + $0x3d] sm:$0xff]
      %v3458 = vld [vmem:[#allocation2 + $0x45] sm:$0xff]
      %v3459 = vld [vmem:[#allocation2 + $0x4d] sm:$0xff]
      %v3460 = vld [vmem:[#allocation2 + $0x55] sm:$0xff]
      %v3461 = vld [vmem:[#allocation2 + $0x5d] sm:$0xff]
      %v3462 = vld [vmem:[#allocation2 + $0x16] sm:$0xff]
      %v3463 = vld [vmem:[#allocation2 + $0x1e] sm:$0xff]
      %v3464 = vld [vmem:[#allocation2 + $0x26] sm:$0xff]
      %v3465 = vld [vmem:[#allocation2 + $0x2e] sm:$0xff]
      %v3466 = vld [vmem:[#allocation2 + $0x36] sm:$0xff]
      %v3467 = vld [vmem:[#allocation2 + $0x3e] sm:$0xff]
      %v3468 = vld [vmem:[#allocation2 + $0x46] sm:$0xff]
      %v3469 = vld [vmem:[#allocation2 + $0x4e] sm:$0xff]
      %v3470 = vld [vmem:[#allocation2 + $0x56] sm:$0xff]
      %v3471 = vld [vmem:[#allocation2 + $0x5e] sm:$0xff]
      %s3472 = scalar_lea.vmem %s1, 3072
      %v3473 = vld [vmem:[%s3472] sm:$0xff]
      %v3474 = vld [vmem:[%s3472 + $0x8] sm:$0xff]
      %v3475 = vld [vmem:[%s3472 + $0x10] sm:$0xff]
      %v3476 = vld [vmem:[%s3472 + $0x18] sm:$0xff]
      %v3477 = vld [vmem:[%s3472 + $0x20] sm:$0xff]
      %v3478 = vld [vmem:[%s3472 + $0x28] sm:$0xff]
      %v3479 = vld [vmem:[%s3472 + $0x30] sm:$0xff]
      %v3480 = vld [vmem:[%s3472 + $0x38] sm:$0xff]
      %v3481 = vld [vmem:[%s3472 + $0x40] sm:$0xff]
      %v3482 = vld [vmem:[%s3472 + $0x48] sm:$0xff]
      %v3483 = vld [vmem:[%s3472 + $0x50] sm:$0xff]
      %v3484 = vld [vmem:[%s3472 + $0x58] sm:$0xff]
      %v3485 = vld [vmem:[%s3472 + $0x60] sm:$0xff]
      %v3486 = vld [vmem:[%s3472 + $0x68] sm:$0xff]
      %v3487 = vld [vmem:[%s3472 + $0x70] sm:$0xff]
      %v3488 = vld [vmem:[%s3472 + $0x78] sm:$0xff]
      %v3489 = vld [vmem:[%s3472 + $0x80] sm:$0xff]
      %v3490 = vld [vmem:[%s3472 + $0x88] sm:$0xff]
      %v3491 = vld [vmem:[%s3472 + $0x90] sm:$0xff]
      %v3492 = vld [vmem:[%s3472 + $0x98] sm:$0xff]
      %v3493 = vld [vmem:[%s3472 + $0xa0] sm:$0xff]
      %v3494 = vld [vmem:[%s3472 + $0xa8] sm:$0xff]
      %v3495 = vld [vmem:[%s3472 + $0xb0] sm:$0xff]
      %v3496 = vld [vmem:[%s3472 + $0xb8] sm:$0xff]
      %v3497 = vld [vmem:[%s3472 + $0xc0] sm:$0xff]
      %v3498 = vld [vmem:[%s3472 + $0xc8] sm:$0xff]
      %v3499 = vld [vmem:[%s3472 + $0xd0] sm:$0xff]
      %v3500 = vld [vmem:[%s3472 + $0xd8] sm:$0xff]
      %v3501 = vld [vmem:[%s3472 + $0xe0] sm:$0xff]
      %v3502 = vld [vmem:[%s3472 + $0xe8] sm:$0xff]
      %v3503 = vld [vmem:[%s3472 + $0xf0] sm:$0xff]
      %v3504 = vld [vmem:[%s3472 + $0xf8] sm:$0xff]
      %v3505 = vld [vmem:[%s3472 + $0x100] sm:$0xff]
      %v3506 = vld [vmem:[%s3472 + $0x108] sm:$0xff]
      %v3507 = vld [vmem:[%s3472 + $0x110] sm:$0xff]
      %v3508 = vld [vmem:[%s3472 + $0x118] sm:$0xff]
      %v3509 = vld [vmem:[%s3472 + $0x120] sm:$0xff]
      %v3510 = vld [vmem:[%s3472 + $0x128] sm:$0xff]
      %v3511 = vld [vmem:[%s3472 + $0x130] sm:$0xff]
      %v3512 = vld [vmem:[%s3472 + $0x138] sm:$0xff]
      %v3513 = vld [vmem:[%s3472 + $0x140] sm:$0xff]
      %v3514 = vld [vmem:[%s3472 + $0x148] sm:$0xff]
      %v3515 = vld [vmem:[%s3472 + $0x150] sm:$0xff]
      %v3516 = vld [vmem:[%s3472 + $0x158] sm:$0xff]
      %v3517 = vld [vmem:[%s3472 + $0x160] sm:$0xff]
      %v3518 = vld [vmem:[%s3472 + $0x168] sm:$0xff]
      %v3519 = vld [vmem:[%s3472 + $0x170] sm:$0xff]
      %v3520 = vld [vmem:[%s3472 + $0x178] sm:$0xff]
      %3521 = vmatprep.subr.mxu0 0.0
      %3522 = vmatpush1.msra.mxu0 %v3473
      %3523 = vmatprep.subr.mxu0 0.0
      %3524 = vmatpush1.msra.mxu0 %v3474
      %3525 = vmatprep.subr.mxu0 0.0
      %3526 = vmatpush1.msra.mxu0 %v3475
      %3527 = vmatprep.subr.mxu0 0.0
      %3528 = vmatpush1.msra.mxu0 %v3476
      %3529 = vmatprep.subr.mxu0 0.0
      %3530 = vmatpush1.msra.mxu0 %v3477
      %3531 = vmatprep.subr.mxu0 0.0
      %3532 = vmatpush1.msra.mxu0 %v3478
      %3533 = vmatprep.subr.mxu0 0.0
      %3534 = vmatpush1.msra.mxu0 %v3479
      %3535 = vmatprep.subr.mxu0 0.0
      %3536 = vmatpush1.msra.mxu0 %v3480
      %3537 = vmatprep.subr.mxu0 0.0
      %3538 = vmatpush1.msra.mxu0 %v3481
      %3539 = vmatprep.subr.mxu0 0.0
      %3540 = vmatpush1.msra.mxu0 %v3482
      %3541 = vmatprep.subr.mxu0 0.0
      %3542 = vmatpush1.msra.mxu0 %v3483
      %3543 = vmatprep.subr.mxu0 0.0
      %3544 = vmatpush1.msra.mxu0 %v3484
      %3545 = vmatprep.subr.mxu0 0.0
      %3546 = vmatpush1.msra.mxu0 %v3485
      %3547 = vmatprep.subr.mxu0 0.0
      %3548 = vmatpush1.msra.mxu0 %v3486
      %3549 = vmatprep.subr.mxu0 0.0
      %3550 = vmatpush1.msra.mxu0 %v3487
      %3551 = vmatprep.subr.mxu0 0.0
      %3552 = vmatpush1.msra.mxu0 %v3488
      %3553 = vmatprep.subr.mxu0 0.0
      %3554 = vmatpush1.msra.mxu0 %v3489
      %3555 = vmatprep.subr.mxu0 0.0
      %3556 = vmatpush1.msra.mxu0 %v3490
      %3557 = vmatprep.subr.mxu0 0.0
      %3558 = vmatpush1.msra.mxu0 %v3491
      %3559 = vmatprep.subr.mxu0 0.0
      %3560 = vmatpush1.msra.mxu0 %v3492
      %3561 = vmatprep.subr.mxu0 0.0
      %3562 = vmatpush1.msra.mxu0 %v3493
      %3563 = vmatprep.subr.mxu0 0.0
      %3564 = vmatpush1.msra.mxu0 %v3494
      %3565 = vmatprep.subr.mxu0 0.0
      %3566 = vmatpush1.msra.mxu0 %v3495
      %3567 = vmatprep.subr.mxu0 0.0
      %3568 = vmatpush1.msra.mxu0 %v3496
      %3569 = vmatprep.subr.mxu0 0.0
      %3570 = vmatpush1.msra.mxu0 %v3497
      %3571 = vmatprep.subr.mxu0 0.0
      %3572 = vmatpush1.msra.mxu0 %v3498
      %3573 = vmatprep.subr.mxu0 0.0
      %3574 = vmatpush1.msra.mxu0 %v3499
      %3575 = vmatprep.subr.mxu0 0.0
      %3576 = vmatpush1.msra.mxu0 %v3500
      %3577 = vmatprep.subr.mxu0 0.0
      %3578 = vmatpush1.msra.mxu0 %v3501
      %3579 = vmatprep.subr.mxu0 0.0
      %3580 = vmatpush1.msra.mxu0 %v3502
      %3581 = vmatprep.subr.mxu0 0.0
      %3582 = vmatpush1.msra.mxu0 %v3503
      %3583 = vmatprep.subr.mxu0 0.0
      %3584 = vmatpush1.msra.mxu0 %v3504
      %3585 = vmatprep.mubr.f32.mxu0 %v3452
      %3586 = vmatmul.mubr.f32.gmra.mrb[0].mxu0 %v3442
      %v3587 = vpop.f32.mrb[0].mxu0
      %v3588 = vadd.f32 0.0, %v3587
      %v3589 = vpop.f32.mrb[0].mxu0
      %3590 = vmatprep.mubr.f32.mxu0 %v3453
      %3591 = vmatmul.mubr.f32.gmra.mrb[0].mxu0 %v3443
      %v3592 = vpop.f32.mrb[0].mxu0
      %v3593 = vadd.f32 0.0, %v3592
      %v3594 = vpop.f32.mrb[0].mxu0
      %3595 = vmatprep.mubr.f32.mxu0 %v3454
      %3596 = vmatmul.mubr.f32.gmra.mrb[0].mxu0 %v3444
      %v3597 = vpop.f32.mrb[0].mxu0
      %v3598 = vadd.f32 0.0, %v3597
      %v3599 = vpop.f32.mrb[0].mxu0
      %3600 = vmatprep.mubr.f32.mxu0 %v3455
      %3601 = vmatmul.mubr.f32.gmra.mrb[0].mxu0 %v3445
      %v3602 = vpop.f32.mrb[0].mxu0
      %v3603 = vadd.f32 0.0, %v3602
      %v3604 = vpop.f32.mrb[0].mxu0
      %3605 = vmatprep.mubr.f32.mxu0 %v3456
      %3606 = vmatmul.mubr.f32.gmra.mrb[0].mxu0 %v3446
      %v3607 = vpop.f32.mrb[0].mxu0
      %v3608 = vadd.f32 0.0, %v3607
      %v3609 = vpop.f32.mrb[0].mxu0
      %3610 = vmatprep.mubr.f32.mxu0 %v3457
      %3611 = vmatmul.mubr.f32.gmra.mrb[0].mxu0 %v3447
      %v3612 = vpop.f32.mrb[0].mxu0
      %v3613 = vadd.f32 0.0, %v3612
      %v3614 = vpop.f32.mrb[0].mxu0
      %3615 = vmatprep.mubr.f32.mxu0 %v3458
      %3616 = vmatmul.mubr.f32.gmra.mrb[0].mxu0 %v3448
      %v3617 = vpop.f32.mrb[0].mxu0
      %v3618 = vadd.f32 0.0, %v3617
      %v3619 = vpop.f32.mrb[0].mxu0
      %3620 = vmatprep.mubr.f32.mxu0 %v3459
      %3621 = vmatmul.mubr.f32.gmra.mrb[0].mxu0 %v3449
      %v3622 = vpop.f32.mrb[0].mxu0
      %v3623 = vadd.f32 0.0, %v3622
      %v3624 = vpop.f32.mrb[0].mxu0
      %3625 = vmatprep.mubr.f32.mxu0 %v3460
      %3626 = vmatmul.mubr.f32.gmra.mrb[0].mxu0 %v3450
      %v3627 = vpop.f32.mrb[0].mxu0
      %v3628 = vadd.f32 0.0, %v3627
      %v3629 = vpop.f32.mrb[0].mxu0
      %3630 = vmatprep.mubr.f32.mxu0 %v3461
      %3631 = vmatmul.mubr.f32.gmra.mrb[0].mxu0 %v3451
      %v3632 = vpop.f32.mrb[0].mxu0
      %v3633 = vadd.f32 0.0, %v3632
      %v3634 = vpop.f32.mrb[0].mxu0
      %3635 = vdwg.mxu0
      %3636 = vmatprep.subr.mxu0 0.0
      %3637 = vmatpush1.msra.mxu0 %v3505
      %3638 = vmatprep.subr.mxu0 0.0
      %3639 = vmatpush1.msra.mxu0 %v3506
      %3640 = vmatprep.subr.mxu0 0.0
      %3641 = vmatpush1.msra.mxu0 %v3507
      %3642 = vmatprep.subr.mxu0 0.0
      %3643 = vmatpush1.msra.mxu0 %v3508
      %3644 = vmatprep.subr.mxu0 0.0
      %3645 = vmatpush1.msra.mxu0 %v3509
      %3646 = vmatprep.subr.mxu0 0.0
      %3647 = vmatpush1.msra.mxu0 %v3510
      %3648 = vmatprep.subr.mxu0 0.0
      %3649 = vmatpush1.msra.mxu0 %v3511
      %3650 = vmatprep.subr.mxu0 0.0
      %3651 = vmatpush1.msra.mxu0 %v3512
      %3652 = vmatprep.subr.mxu0 0.0
      %3653 = vmatpush1.msra.mxu0 %v3513
      %3654 = vmatprep.subr.mxu0 0.0
      %3655 = vmatpush1.msra.mxu0 %v3514
      %3656 = vmatprep.subr.mxu0 0.0
      %3657 = vmatpush1.msra.mxu0 %v3515
      %3658 = vmatprep.subr.mxu0 0.0
      %3659 = vmatpush1.msra.mxu0 %v3516
      %3660 = vmatprep.subr.mxu0 0.0
      %3661 = vmatpush1.msra.mxu0 %v3517
      %3662 = vmatprep.subr.mxu0 0.0
      %3663 = vmatpush1.msra.mxu0 %v3518
      %3664 = vmatprep.subr.mxu0 0.0
      %3665 = vmatpush1.msra.mxu0 %v3519
      %3666 = vmatprep.subr.mxu0 0.0
      %3667 = vmatpush1.msra.mxu0 %v3520
      %3668 = vmatprep.subr.mxu0 0.0
      %3669 = vmatpush1.msra.mxu0 0.0
      %3670 = vmatprep.subr.mxu0 0.0
      %3671 = vmatpush1.msra.mxu0 0.0
      %3672 = vmatprep.subr.mxu0 0.0
      %3673 = vmatpush1.msra.mxu0 0.0
      %3674 = vmatprep.subr.mxu0 0.0
      %3675 = vmatpush1.msra.mxu0 0.0
      %3676 = vmatprep.subr.mxu0 0.0
      %3677 = vmatpush1.msra.mxu0 0.0
      %3678 = vmatprep.subr.mxu0 0.0
      %3679 = vmatpush1.msra.mxu0 0.0
      %3680 = vmatprep.subr.mxu0 0.0
      %3681 = vmatpush1.msra.mxu0 0.0
      %3682 = vmatprep.subr.mxu0 0.0
      %3683 = vmatpush1.msra.mxu0 0.0
      %3684 = vmatprep.subr.mxu0 0.0
      %3685 = vmatpush1.msra.mxu0 0.0
      %3686 = vmatprep.subr.mxu0 0.0
      %3687 = vmatpush1.msra.mxu0 0.0
      %3688 = vmatprep.subr.mxu0 0.0
      %3689 = vmatpush1.msra.mxu0 0.0
      %3690 = vmatprep.subr.mxu0 0.0
      %3691 = vmatpush1.msra.mxu0 0.0
      %3692 = vmatprep.subr.mxu0 0.0
      %3693 = vmatpush1.msra.mxu0 0.0
      %3694 = vmatprep.subr.mxu0 0.0
      %3695 = vmatpush1.msra.mxu0 0.0
      %3696 = vmatprep.subr.mxu0 0.0
      %3697 = vmatpush1.msra.mxu0 0.0
      %3698 = vmatprep.subr.mxu0 0.0
      %3699 = vmatpush1.msra.mxu0 0.0
      %3700 = vmatprep.mubr.f32.mxu0 0.0
      %3701 = vmatmul.mubr.f32.gmra.mrb[0].mxu0 %v3462
      %v3702 = vpop.f32.mrb[0].mxu0
      %v3703 = vadd.f32 %v3588, %v3702
      %v3704 = vpop.f32.mrb[0].mxu0
      %3705 = vmatprep.mubr.f32.mxu0 0.0
      %3706 = vmatmul.mubr.f32.gmra.mrb[0].mxu0 %v3463
      %v3707 = vpop.f32.mrb[0].mxu0
      %v3708 = vadd.f32 %v3593, %v3707
      %v3709 = vpop.f32.mrb[0].mxu0
      %3710 = vmatprep.mubr.f32.mxu0 0.0
      %3711 = vmatmul.mubr.f32.gmra.mrb[0].mxu0 %v3464
      %v3712 = vpop.f32.mrb[0].mxu0
      %v3713 = vadd.f32 %v3598, %v3712
      %v3714 = vpop.f32.mrb[0].mxu0
      %3715 = vmatprep.mubr.f32.mxu0 0.0
      %3716 = vmatmul.mubr.f32.gmra.mrb[0].mxu0 %v3465
      %v3717 = vpop.f32.mrb[0].mxu0
      %v3718 = vadd.f32 %v3603, %v3717
      %v3719 = vpop.f32.mrb[0].mxu0
      %3720 = vmatprep.mubr.f32.mxu0 0.0
      %3721 = vmatmul.mubr.f32.gmra.mrb[0].mxu0 %v3466
      %v3722 = vpop.f32.mrb[0].mxu0
      %v3723 = vadd.f32 %v3608, %v3722
      %v3724 = vpop.f32.mrb[0].mxu0
      %3725 = vmatprep.mubr.f32.mxu0 0.0
      %3726 = vmatmul.mubr.f32.gmra.mrb[0].mxu0 %v3467
      %v3727 = vpop.f32.mrb[0].mxu0
      %v3728 = vadd.f32 %v3613, %v3727
      %v3729 = vpop.f32.mrb[0].mxu0
      %3730 = vmatprep.mubr.f32.mxu0 0.0
      %3731 = vmatmul.mubr.f32.gmra.mrb[0].mxu0 %v3468
      %v3732 = vpop.f32.mrb[0].mxu0
      %v3733 = vadd.f32 %v3618, %v3732
      %v3734 = vpop.f32.mrb[0].mxu0
      %3735 = vmatprep.mubr.f32.mxu0 0.0
      %3736 = vmatmul.mubr.f32.gmra.mrb[0].mxu0 %v3469
      %v3737 = vpop.f32.mrb[0].mxu0
      %v3738 = vadd.f32 %v3623, %v3737
      %v3739 = vpop.f32.mrb[0].mxu0
      %3740 = vmatprep.mubr.f32.mxu0 0.0
      %3741 = vmatmul.mubr.f32.gmra.mrb[0].mxu0 %v3470
      %v3742 = vpop.f32.mrb[0].mxu0
      %v3743 = vadd.f32 %v3628, %v3742
      %v3744 = vpop.f32.mrb[0].mxu0
      %3745 = vmatprep.mubr.f32.mxu0 0.0
      %3746 = vmatmul.mubr.f32.gmra.mrb[0].mxu0 %v3471
      %v3747 = vpop.f32.mrb[0].mxu0
      %v3748 = vadd.f32 %v3633, %v3747
      %v3749 = vpop.f32.mrb[0].mxu0
      %3750 = vdwg.mxu0
      %v3751 = vadd.f32 %v3394, %v3703
      %v3752 = vadd.f32 %v3399, %v3708
      %v3753 = vadd.f32 %v3404, %v3713
      %v3754 = vadd.f32 %v3409, %v3718
      %v3755 = vadd.f32 %v3414, %v3723
      %v3756 = vadd.f32 %v3419, %v3728
      %v3757 = vadd.f32 %v3424, %v3733
      %v3758 = vadd.f32 %v3429, %v3738
      %v3759 = vadd.f32 %v3434, %v3743
      %v3760 = vadd.f32 %v3439, %v3748
      %s3761 = scalar_lea.vmem %s2, 2
      %v3762 = vld [vmem:[%s3761] sm:$0x1]
      %v3764 = vlaneseq
      %v3765 = vshrl.u32 %v3764, 7
      %v3766 = vsub.s32 0, %v3765
      %v3767 = vrot.slane %v3762, %v3766
      %v3769 = vadd.f32 %v3751, %v3767
      %v3770 = vadd.f32 %v3752, %v3767
      %v3771 = vadd.f32 %v3753, %v3767
      %v3772 = vadd.f32 %v3754, %v3767
      %v3773 = vadd.f32 %v3755, %v3767
      %v3774 = vadd.f32 %v3756, %v3767
      %v3775 = vadd.f32 %v3757, %v3767
      %v3776 = vadd.f32 %v3758, %v3767
      %v3777 = vadd.f32 %v3759, %v3767
      %v3778 = vadd.f32 %v3760, %v3767
      %v3779 = vmul.f32 %v3769, %v3769
      %v3780 = vmul.f32 %v3770, %v3770
      %v3781 = vmul.f32 %v3771, %v3771
      %v3782 = vmul.f32 %v3772, %v3772
      %v3783 = vmul.f32 %v3773, %v3773
      %v3784 = vmul.f32 %v3774, %v3774
      %v3785 = vmul.f32 %v3775, %v3775
      %v3786 = vmul.f32 %v3776, %v3776
      %v3787 = vmul.f32 %v3777, %v3777
      %v3788 = vmul.f32 %v3778, %v3778
      %s3789 = scalar_lea.vmem %s3, 256
      %v3790 = vld [vmem:[%s3789] sm:$0xff]
      %v3791 = vld [vmem:[%s3789 + $0x8] sm:$0xff]
      %v3792 = vld [vmem:[%s3789 + $0x10] sm:$0xff]
      %v3793 = vld [vmem:[%s3789 + $0x18] sm:$0xff]
      %v3794 = vld [vmem:[%s3789 + $0x20] sm:$0xff]
      %v3795 = vld [vmem:[%s3789 + $0x28] sm:$0xff]
      %v3796 = vld [vmem:[%s3789 + $0x30] sm:$0xff]
      %v3797 = vld [vmem:[%s3789 + $0x38] sm:$0xff]
      %v3798 = vld [vmem:[%s3789 + $0x40] sm:$0xff]
      %v3799 = vld [vmem:[%s3789 + $0x48] sm:$0xff]
      %v3800 = vld [vmem:[%s3789 + $0x50] sm:$0xff]
      %v3801 = vld [vmem:[%s3789 + $0x58] sm:$0xff]
      %v3802 = vld [vmem:[%s3789 + $0x60] sm:$0xff]
      %v3803 = vld [vmem:[%s3789 + $0x68] sm:$0xff]
      %v3804 = vld [vmem:[%s3789 + $0x70] sm:$0xff]
      %v3805 = vld [vmem:[%s3789 + $0x78] sm:$0xff]
      %s3806 = scalar_lea.vmem %s4, 2
      %v3807 = vld [vmem:[%s3806] sm:$0x1]
      %v3809 = vlaneseq
      %v3810 = vshrl.u32 %v3809, 7
      %v3811 = vsub.s32 0, %v3810
      %v3812 = vrot.slane %v3807, %v3811
      %3814 = vmatprep.subr.mxu0 0.0
      %3815 = vmatpush1.msra.mxu0 %v3790
      %3816 = vmatprep.subr.mxu0 0.0
      %3817 = vmatpush1.msra.mxu0 %v3791
      %3818 = vmatprep.subr.mxu0 0.0
      %3819 = vmatpush1.msra.mxu0 %v3792
      %3820 = vmatprep.subr.mxu0 0.0
      %3821 = vmatpush1.msra.mxu0 %v3793
      %3822 = vmatprep.subr.mxu0 0.0
      %3823 = vmatpush1.msra.mxu0 %v3794
      %3824 = vmatprep.subr.mxu0 0.0
      %3825 = vmatpush1.msra.mxu0 %v3795
      %3826 = vmatprep.subr.mxu0 0.0
      %3827 = vmatpush1.msra.mxu0 %v3796
      %3828 = vmatprep.subr.mxu0 0.0
      %3829 = vmatpush1.msra.mxu0 %v3797
      %3830 = vmatprep.subr.mxu0 0.0
      %3831 = vmatpush1.msra.mxu0 %v3798
      %3832 = vmatprep.subr.mxu0 0.0
      %3833 = vmatpush1.msra.mxu0 %v3799
      %3834 = vmatprep.subr.mxu0 0.0
      %3835 = vmatpush1.msra.mxu0 %v3800
      %3836 = vmatprep.subr.mxu0 0.0
      %3837 = vmatpush1.msra.mxu0 %v3801
      %3838 = vmatprep.subr.mxu0 0.0
      %3839 = vmatpush1.msra.mxu0 %v3802
      %3840 = vmatprep.subr.mxu0 0.0
      %3841 = vmatpush1.msra.mxu0 %v3803
      %3842 = vmatprep.subr.mxu0 0.0
      %3843 = vmatpush1.msra.mxu0 %v3804
      %3844 = vmatprep.subr.mxu0 0.0
      %3845 = vmatpush1.msra.mxu0 %v3805
      %3846 = vmatprep.subr.mxu0 0.0
      %3847 = vmatpush1.msra.mxu0 0.0
      %3848 = vmatprep.subr.mxu0 0.0
      %3849 = vmatpush1.msra.mxu0 0.0
      %3850 = vmatprep.subr.mxu0 0.0
      %3851 = vmatpush1.msra.mxu0 0.0
      %3852 = vmatprep.subr.mxu0 0.0
      %3853 = vmatpush1.msra.mxu0 0.0
      %3854 = vmatprep.subr.mxu0 0.0
      %3855 = vmatpush1.msra.mxu0 0.0
      %3856 = vmatprep.subr.mxu0 0.0
      %3857 = vmatpush1.msra.mxu0 0.0
      %3858 = vmatprep.subr.mxu0 0.0
      %3859 = vmatpush1.msra.mxu0 0.0
      %3860 = vmatprep.subr.mxu0 0.0
      %3861 = vmatpush1.msra.mxu0 0.0
      %3862 = vmatprep.subr.mxu0 0.0
      %3863 = vmatpush1.msra.mxu0 0.0
      %3864 = vmatprep.subr.mxu0 0.0
      %3865 = vmatpush1.msra.mxu0 0.0
      %3866 = vmatprep.subr.mxu0 0.0
      %3867 = vmatpush1.msra.mxu0 0.0
      %3868 = vmatprep.subr.mxu0 0.0
      %3869 = vmatpush1.msra.mxu0 0.0
      %3870 = vmatprep.subr.mxu0 0.0
      %3871 = vmatpush1.msra.mxu0 0.0
      %3872 = vmatprep.subr.mxu0 0.0
      %3873 = vmatpush1.msra.mxu0 0.0
      %3874 = vmatprep.subr.mxu0 0.0
      %3875 = vmatpush1.msra.mxu0 0.0
      %3876 = vmatprep.subr.mxu0 0.0
      %3877 = vmatpush1.msra.mxu0 0.0
      %3878 = vmatprep.mubr.f32.mxu0 0.0
      %3879 = vmatmul.mubr.f32.gmra.mrb[0].mxu0 %v3779
      %v3880 = vpop.f32.mrb[0].mxu0
      %v3881 = vadd.f32 %v3812, %v3880
      %v3882 = vpop.f32.mrb[0].mxu0
      %3883 = vmatprep.mubr.f32.mxu0 0.0
      %3884 = vmatmul.mubr.f32.gmra.mrb[0].mxu0 %v3780
      %v3885 = vpop.f32.mrb[0].mxu0
      %v3886 = vadd.f32 %v3812, %v3885
      %v3887 = vpop.f32.mrb[0].mxu0
      %3888 = vmatprep.mubr.f32.mxu0 0.0
      %3889 = vmatmul.mubr.f32.gmra.mrb[0].mxu0 %v3781
      %v3890 = vpop.f32.mrb[0].mxu0
      %v3891 = vadd.f32 %v3812, %v3890
      %v3892 = vpop.f32.mrb[0].mxu0
      %3893 = vmatprep.mubr.f32.mxu0 0.0
      %3894 = vmatmul.mubr.f32.gmra.mrb[0].mxu0 %v3782
      %v3895 = vpop.f32.mrb[0].mxu0
      %v3896 = vadd.f32 %v3812, %v3895
      %v3897 = vpop.f32.mrb[0].mxu0
      %3898 = vmatprep.mubr.f32.mxu0 0.0
      %3899 = vmatmul.mubr.f32.gmra.mrb[0].mxu0 %v3783
      %v3900 = vpop.f32.mrb[0].mxu0
      %v3901 = vadd.f32 %v3812, %v3900
      %v3902 = vpop.f32.mrb[0].mxu0
      %3903 = vmatprep.mubr.f32.mxu0 0.0
      %3904 = vmatmul.mubr.f32.gmra.mrb[0].mxu0 %v3784
      %v3905 = vpop.f32.mrb[0].mxu0
      %v3906 = vadd.f32 %v3812, %v3905
      %v3907 = vpop.f32.mrb[0].mxu0
      %3908 = vmatprep.mubr.f32.mxu0 0.0
      %3909 = vmatmul.mubr.f32.gmra.mrb[0].mxu0 %v3785
      %v3910 = vpop.f32.mrb[0].mxu0
      %v3911 = vadd.f32 %v3812, %v3910
      %v3912 = vpop.f32.mrb[0].mxu0
      %3913 = vmatprep.mubr.f32.mxu0 0.0
      %3914 = vmatmul.mubr.f32.gmra.mrb[0].mxu0 %v3786
      %v3915 = vpop.f32.mrb[0].mxu0
      %v3916 = vadd.f32 %v3812, %v3915
      %v3917 = vpop.f32.mrb[0].mxu0
      %3918 = vmatprep.mubr.f32.mxu0 0.0
      %3919 = vmatmul.mubr.f32.gmra.mrb[0].mxu0 %v3787
      %v3920 = vpop.f32.mrb[0].mxu0
      %v3921 = vadd.f32 %v3812, %v3920
      %v3922 = vpop.f32.mrb[0].mxu0
      %3923 = vmatprep.mubr.f32.mxu0 0.0
      %3924 = vmatmul.mubr.f32.gmra.mrb[0].mxu0 %v3788
      %v3925 = vpop.f32.mrb[0].mxu0
      %v3926 = vadd.f32 %v3812, %v3925
      %v3927 = vpop.f32.mrb[0].mxu0
      %3928 = vdwg.mxu0
      %v3929 = vrsqrt.pop %v3881
      %v3930 = vmul.f32 %v3881, %v3929
      %vm3931 = vcmp.eq.f32.partialorder %v3881, inf
      %v3932 = vsel %vm3931, %v3881, %v3930
      %vm3933 = vcmp.eq.f32.partialorder %v3881, 0.0
      %v3934 = vand.u32 %v3881, 2147483648
      %v3935 = vsel %vm3933, %v3934, %v3932
      %v3936 = vrsqrt.pop %v3886
      %v3937 = vmul.f32 %v3886, %v3936
      %vm3938 = vcmp.eq.f32.partialorder %v3886, inf
      %v3939 = vsel %vm3938, %v3886, %v3937
      %vm3940 = vcmp.eq.f32.partialorder %v3886, 0.0
      %v3941 = vand.u32 %v3886, 2147483648
      %v3942 = vsel %vm3940, %v3941, %v3939
      %v3943 = vrsqrt.pop %v3891
      %v3944 = vmul.f32 %v3891, %v3943
      %vm3945 = vcmp.eq.f32.partialorder %v3891, inf
      %v3946 = vsel %vm3945, %v3891, %v3944
      %vm3947 = vcmp.eq.f32.partialorder %v3891, 0.0
      %v3948 = vand.u32 %v3891, 2147483648
      %v3949 = vsel %vm3947, %v3948, %v3946
      %v3950 = vrsqrt.pop %v3896
      %v3951 = vmul.f32 %v3896, %v3950
      %vm3952 = vcmp.eq.f32.partialorder %v3896, inf
      %v3953 = vsel %vm3952, %v3896, %v3951
      %vm3954 = vcmp.eq.f32.partialorder %v3896, 0.0
      %v3955 = vand.u32 %v3896, 2147483648
      %v3956 = vsel %vm3954, %v3955, %v3953
      %v3957 = vrsqrt.pop %v3901
      %v3958 = vmul.f32 %v3901, %v3957
      %vm3959 = vcmp.eq.f32.partialorder %v3901, inf
      %v3960 = vsel %vm3959, %v3901, %v3958
      %vm3961 = vcmp.eq.f32.partialorder %v3901, 0.0
      %v3962 = vand.u32 %v3901, 2147483648
      %v3963 = vsel %vm3961, %v3962, %v3960
      %v3964 = vrsqrt.pop %v3906
      %v3965 = vmul.f32 %v3906, %v3964
      %vm3966 = vcmp.eq.f32.partialorder %v3906, inf
      %v3967 = vsel %vm3966, %v3906, %v3965
      %vm3968 = vcmp.eq.f32.partialorder %v3906, 0.0
      %v3969 = vand.u32 %v3906, 2147483648
      %v3970 = vsel %vm3968, %v3969, %v3967
      %v3971 = vrsqrt.pop %v3911
      %v3972 = vmul.f32 %v3911, %v3971
      %vm3973 = vcmp.eq.f32.partialorder %v3911, inf
      %v3974 = vsel %vm3973, %v3911, %v3972
      %vm3975 = vcmp.eq.f32.partialorder %v3911, 0.0
      %v3976 = vand.u32 %v3911, 2147483648
      %v3977 = vsel %vm3975, %v3976, %v3974
      %v3978 = vrsqrt.pop %v3916
      %v3979 = vmul.f32 %v3916, %v3978
      %vm3980 = vcmp.eq.f32.partialorder %v3916, inf
      %v3981 = vsel %vm3980, %v3916, %v3979
      %vm3982 = vcmp.eq.f32.partialorder %v3916, 0.0
      %v3983 = vand.u32 %v3916, 2147483648
      %v3984 = vsel %vm3982, %v3983, %v3981
      %v3985 = vrsqrt.pop %v3921
      %v3986 = vmul.f32 %v3921, %v3985
      %vm3987 = vcmp.eq.f32.partialorder %v3921, inf
      %v3988 = vsel %vm3987, %v3921, %v3986
      %vm3989 = vcmp.eq.f32.partialorder %v3921, 0.0
      %v3990 = vand.u32 %v3921, 2147483648
      %v3991 = vsel %vm3989, %v3990, %v3988
      %v3992 = vrsqrt.pop %v3926
      %v3993 = vmul.f32 %v3926, %v3992
      %vm3994 = vcmp.eq.f32.partialorder %v3926, inf
      %v3995 = vsel %vm3994, %v3926, %v3993
      %vm3996 = vcmp.eq.f32.partialorder %v3926, 0.0
      %v3997 = vand.u32 %v3926, 2147483648
      %v3998 = vsel %vm3996, %v3997, %v3995
      %v3999 = vmul.f32 %v3769, %v3935
      %v4000 = vmul.f32 %v3770, %v3942
      %v4001 = vmul.f32 %v3771, %v3949
      %v4002 = vmul.f32 %v3772, %v3956
      %v4003 = vmul.f32 %v3773, %v3963
      %v4004 = vmul.f32 %v3774, %v3970
      %v4005 = vmul.f32 %v3775, %v3977
      %v4006 = vmul.f32 %v3776, %v3984
      %v4007 = vmul.f32 %v3777, %v3991
      %v4008 = vmul.f32 %v3778, %v3998
      %v4009 = vsel %vm1607, %v3999, 0.0
      %v4010 = vsel %vm1608, %v4000, 0.0
      %v4011 = vsel %vm1609, %v4001, 0.0
      %v4012 = vsel %vm1610, %v4002, 0.0
      %v4013 = vsel %vm1611, %v4003, 0.0
      %v4014 = vsel %vm1612, %v4004, 0.0
      %v4015 = vsel %vm1613, %v4005, 0.0
      %v4016 = vsel %vm1614, %v4006, 0.0
      %v4017 = vsel %vm1615, %v4007, 0.0
      %v4018 = vsel %vm1616, %v4008, 0.0
      %4019 = vst [vmem:[#allocation3 + $0xb] sm:$0xff] %v4009
      %4020 = vst [vmem:[#allocation3 + $0x13] sm:$0xff] %v4010
      %4021 = vst [vmem:[#allocation3 + $0x1b] sm:$0xff] %v4011
      %4022 = vst [vmem:[#allocation3 + $0x23] sm:$0xff] %v4012
      %4023 = vst [vmem:[#allocation3 + $0x2b] sm:$0xff] %v4013
      %4024 = vst [vmem:[#allocation3 + $0x33] sm:$0xff] %v4014
      %4025 = vst [vmem:[#allocation3 + $0x3b] sm:$0xff] %v4015
      %4026 = vst [vmem:[#allocation3 + $0x43] sm:$0xff] %v4016
      %4027 = vst [vmem:[#allocation3 + $0x4b] sm:$0xff] %v4017
      %4028 = vst [vmem:[#allocation3 + $0x53] sm:$0xff] %v4018
      %v4029 = vld [vmem:[#allocation3 + $0xb] sm:$0xff]
      %v4030 = vld [vmem:[#allocation3 + $0x13] sm:$0xff]
      %v4031 = vld [vmem:[#allocation3 + $0x1b] sm:$0xff]
      %v4032 = vld [vmem:[#allocation3 + $0x23] sm:$0xff]
      %v4033 = vld [vmem:[#allocation3 + $0x2b] sm:$0xff]
      %v4034 = vld [vmem:[#allocation3 + $0x33] sm:$0xff]
      %v4035 = vld [vmem:[#allocation3 + $0x3b] sm:$0xff]
      %v4036 = vld [vmem:[#allocation3 + $0x43] sm:$0xff]
      %v4037 = vld [vmem:[#allocation3 + $0x4b] sm:$0xff]
      %v4038 = vld [vmem:[#allocation3 + $0x53] sm:$0xff]
      %v4039 = vld [vmem:[%s5] sm:$0x3]
      %4040 = vmatprep.subr.mxu0 0.0
      %4041 = vmatpush1.xpose.msra.mxu0 %v4029
      %4042 = vmatprep.subr.mxu0 0.0
      %4043 = vmatpush1.xpose.msra.mxu0 %v4030
      %4044 = vmatprep.subr.mxu0 0.0
      %4045 = vmatpush1.xpose.msra.mxu0 %v4031
      %4046 = vmatprep.subr.mxu0 0.0
      %4047 = vmatpush1.xpose.msra.mxu0 %v4032
      %4048 = vmatprep.subr.mxu0 0.0
      %4049 = vmatpush1.xpose.msra.mxu0 %v4033
      %4050 = vmatprep.subr.mxu0 0.0
      %4051 = vmatpush1.xpose.msra.mxu0 %v4034
      %4052 = vmatprep.subr.mxu0 0.0
      %4053 = vmatpush1.xpose.msra.mxu0 %v4035
      %4054 = vmatprep.subr.mxu0 0.0
      %4055 = vmatpush1.xpose.msra.mxu0 %v4036
      %4056 = vmatprep.subr.mxu0 0.0
      %4057 = vmatpush1.xpose.msra.mxu0 %v4037
      %4058 = vmatprep.subr.mxu0 0.0
      %4059 = vmatpush1.xpose.msra.mxu0 %v4038
      %4060 = vmatprep.subr.mxu0 0.0
      %4061 = vmatpush1.xpose.msra.mxu0 0.0
      %4062 = vmatprep.subr.mxu0 0.0
      %4063 = vmatpush1.xpose.msra.mxu0 0.0
      %4064 = vmatprep.subr.mxu0 0.0
      %4065 = vmatpush1.xpose.msra.mxu0 0.0
      %4066 = vmatprep.subr.mxu0 0.0
      %4067 = vmatpush1.xpose.msra.mxu0 0.0
      %4068 = vmatprep.subr.mxu0 0.0
      %4069 = vmatpush1.xpose.msra.mxu0 0.0
      %4070 = vmatprep.subr.mxu0 0.0
      %4071 = vmatpush1.xpose.msra.mxu0 0.0
      %4072 = vmatprep.subr.mxu0 0.0
      %4073 = vmatpush1.xpose.msra.mxu0 0.0
      %4074 = vmatprep.subr.mxu0 0.0
      %4075 = vmatpush1.xpose.msra.mxu0 0.0
      %4076 = vmatprep.subr.mxu0 0.0
      %4077 = vmatpush1.xpose.msra.mxu0 0.0
      %4078 = vmatprep.subr.mxu0 0.0
      %4079 = vmatpush1.xpose.msra.mxu0 0.0
      %4080 = vmatprep.subr.mxu0 0.0
      %4081 = vmatpush1.xpose.msra.mxu0 0.0
      %4082 = vmatprep.subr.mxu0 0.0
      %4083 = vmatpush1.xpose.msra.mxu0 0.0
      %4084 = vmatprep.subr.mxu0 0.0
      %4085 = vmatpush1.xpose.msra.mxu0 0.0
      %4086 = vmatprep.subr.mxu0 0.0
      %4087 = vmatpush1.xpose.msra.mxu0 0.0
      %4088 = vmatprep.subr.mxu0 0.0
      %4089 = vmatpush1.xpose.msra.mxu0 0.0
      %4090 = vmatprep.subr.mxu0 0.0
      %4091 = vmatpush1.xpose.msra.mxu0 0.0
      %4092 = vmatprep.subr.mxu0 0.0
      %4093 = vmatpush1.xpose.msra.mxu0 0.0
      %4094 = vmatprep.subr.mxu0 0.0
      %4095 = vmatpush1.xpose.msra.mxu0 0.0
      %4096 = vmatprep.subr.mxu0 0.0
      %4097 = vmatpush1.xpose.msra.mxu0 0.0
      %4098 = vmatprep.subr.mxu0 0.0
      %4099 = vmatpush1.xpose.msra.mxu0 0.0
      %4100 = vmatprep.subr.mxu0 0.0
      %4101 = vmatpush1.xpose.msra.mxu0 0.0
      %4102 = vmatprep.subr.mxu0 0.0
      %4103 = vmatpush1.xpose.msra.mxu0 0.0
      %4104 = vmatprep.mubr.f32.mxu0 0.0
      %4105 = vmatmul.mubr.f32.gmra.mrb[0].mxu0 %v4039
      %v4106 = vpop.f32.mrb[0].mxu0
      %v4107 = vadd.f32 0.0, %v4106
      %v4108 = vpop.f32.mrb[0].mxu0
      %4109 = vdwg.mxu0
      %v4110 = vld [vmem:[#allocation3 + $0xc] sm:$0xff]
      %v4111 = vld [vmem:[#allocation3 + $0x14] sm:$0xff]
      %v4112 = vld [vmem:[#allocation3 + $0x1c] sm:$0xff]
      %v4113 = vld [vmem:[#allocation3 + $0x24] sm:$0xff]
      %v4114 = vld [vmem:[#allocation3 + $0x2c] sm:$0xff]
      %v4115 = vld [vmem:[#allocation3 + $0x34] sm:$0xff]
      %v4116 = vld [vmem:[#allocation3 + $0x3c] sm:$0xff]
      %v4117 = vld [vmem:[#allocation3 + $0x44] sm:$0xff]
      %v4118 = vld [vmem:[#allocation3 + $0x4c] sm:$0xff]
      %v4119 = vld [vmem:[#allocation3 + $0x54] sm:$0xff]
      %s4120 = scalar_lea.vmem %s5, 2
      %v4121 = vld [vmem:[%s4120] sm:$0x3]
      %v4122 = vld [vmem:[#allocation3 + $0xb] sm:$0xff]
      %v4123 = vld [vmem:[#allocation3 + $0x13] sm:$0xff]
      %v4124 = vld [vmem:[#allocation3 + $0x1b] sm:$0xff]
      %v4125 = vld [vmem:[#allocation3 + $0x23] sm:$0xff]
      %v4126 = vld [vmem:[#allocation3 + $0x2b] sm:$0xff]
      %v4127 = vld [vmem:[#allocation3 + $0x33] sm:$0xff]
      %v4128 = vld [vmem:[#allocation3 + $0x3b] sm:$0xff]
      %v4129 = vld [vmem:[#allocation3 + $0x43] sm:$0xff]
      %v4130 = vld [vmem:[#allocation3 + $0x4b] sm:$0xff]
      %v4131 = vld [vmem:[#allocation3 + $0x53] sm:$0xff]
      %s4132 = scalar_lea.vmem %s5, 4
      %v4133 = vld [vmem:[%s4132] sm:$0x3]
      %4134 = vmatprep.subr.mxu0 0.0
      %4135 = vmatpush1.xpose.msra.mxu0 %v4122
      %4136 = vmatprep.subr.mxu0 0.0
      %4137 = vmatpush1.xpose.msra.mxu0 %v4123
      %4138 = vmatprep.subr.mxu0 0.0
      %4139 = vmatpush1.xpose.msra.mxu0 %v4124
      %4140 = vmatprep.subr.mxu0 0.0
      %4141 = vmatpush1.xpose.msra.mxu0 %v4125
      %4142 = vmatprep.subr.mxu0 0.0
      %4143 = vmatpush1.xpose.msra.mxu0 %v4126
      %4144 = vmatprep.subr.mxu0 0.0
      %4145 = vmatpush1.xpose.msra.mxu0 %v4127
      %4146 = vmatprep.subr.mxu0 0.0
      %4147 = vmatpush1.xpose.msra.mxu0 %v4128
      %4148 = vmatprep.subr.mxu0 0.0
      %4149 = vmatpush1.xpose.msra.mxu0 %v4129
      %4150 = vmatprep.subr.mxu0 0.0
      %4151 = vmatpush1.xpose.msra.mxu0 %v4130
      %4152 = vmatprep.subr.mxu0 0.0
      %4153 = vmatpush1.xpose.msra.mxu0 %v4131
      %4154 = vmatprep.subr.mxu0 0.0
      %4155 = vmatpush1.xpose.msra.mxu0 0.0
      %4156 = vmatprep.subr.mxu0 0.0
      %4157 = vmatpush1.xpose.msra.mxu0 0.0
      %4158 = vmatprep.subr.mxu0 0.0
      %4159 = vmatpush1.xpose.msra.mxu0 0.0
      %4160 = vmatprep.subr.mxu0 0.0
      %4161 = vmatpush1.xpose.msra.mxu0 0.0
      %4162 = vmatprep.subr.mxu0 0.0
      %4163 = vmatpush1.xpose.msra.mxu0 0.0
      %4164 = vmatprep.subr.mxu0 0.0
      %4165 = vmatpush1.xpose.msra.mxu0 0.0
      %4166 = vmatprep.subr.mxu0 0.0
      %4167 = vmatpush1.xpose.msra.mxu0 0.0
      %4168 = vmatprep.subr.mxu0 0.0
      %4169 = vmatpush1.xpose.msra.mxu0 0.0
      %4170 = vmatprep.subr.mxu0 0.0
      %4171 = vmatpush1.xpose.msra.mxu0 0.0
      %4172 = vmatprep.subr.mxu0 0.0
      %4173 = vmatpush1.xpose.msra.mxu0 0.0
      %4174 = vmatprep.subr.mxu0 0.0
      %4175 = vmatpush1.xpose.msra.mxu0 0.0
      %4176 = vmatprep.subr.mxu0 0.0
      %4177 = vmatpush1.xpose.msra.mxu0 0.0
      %4178 = vmatprep.subr.mxu0 0.0
      %4179 = vmatpush1.xpose.msra.mxu0 0.0
      %4180 = vmatprep.subr.mxu0 0.0
      %4181 = vmatpush1.xpose.msra.mxu0 0.0
      %4182 = vmatprep.subr.mxu0 0.0
      %4183 = vmatpush1.xpose.msra.mxu0 0.0
      %4184 = vmatprep.subr.mxu0 0.0
      %4185 = vmatpush1.xpose.msra.mxu0 0.0
      %4186 = vmatprep.subr.mxu0 0.0
      %4187 = vmatpush1.xpose.msra.mxu0 0.0
      %4188 = vmatprep.subr.mxu0 0.0
      %4189 = vmatpush1.xpose.msra.mxu0 0.0
      %4190 = vmatprep.subr.mxu0 0.0
      %4191 = vmatpush1.xpose.msra.mxu0 0.0
      %4192 = vmatprep.subr.mxu0 0.0
      %4193 = vmatpush1.xpose.msra.mxu0 0.0
      %4194 = vmatprep.subr.mxu0 0.0
      %4195 = vmatpush1.xpose.msra.mxu0 0.0
      %4196 = vmatprep.subr.mxu0 0.0
      %4197 = vmatpush1.xpose.msra.mxu0 0.0
      %4198 = vmatprep.mubr.f32.mxu0 0.0
      %4199 = vmatmul.mubr.f32.gmra.mrb[0].mxu0 %v4133
      %v4200 = vpop.f32.mrb[0].mxu0
      %v4201 = vadd.f32 0.0, %v4200
      %v4202 = vpop.f32.mrb[0].mxu0
      %4203 = vdwg.mxu0
      %4204 = vmatprep.subr.mxu0 0.0
      %4205 = vmatpush1.xpose.msra.mxu0 %v4110
      %4206 = vmatprep.subr.mxu0 0.0
      %4207 = vmatpush1.xpose.msra.mxu0 %v4111
      %4208 = vmatprep.subr.mxu0 0.0
      %4209 = vmatpush1.xpose.msra.mxu0 %v4112
      %4210 = vmatprep.subr.mxu0 0.0
      %4211 = vmatpush1.xpose.msra.mxu0 %v4113
      %4212 = vmatprep.subr.mxu0 0.0
      %4213 = vmatpush1.xpose.msra.mxu0 %v4114
      %4214 = vmatprep.subr.mxu0 0.0
      %4215 = vmatpush1.xpose.msra.mxu0 %v4115
      %4216 = vmatprep.subr.mxu0 0.0
      %4217 = vmatpush1.xpose.msra.mxu0 %v4116
      %4218 = vmatprep.subr.mxu0 0.0
      %4219 = vmatpush1.xpose.msra.mxu0 %v4117
      %4220 = vmatprep.subr.mxu0 0.0
      %4221 = vmatpush1.xpose.msra.mxu0 %v4118
      %4222 = vmatprep.subr.mxu0 0.0
      %4223 = vmatpush1.xpose.msra.mxu0 %v4119
      %4224 = vmatprep.subr.mxu0 0.0
      %4225 = vmatpush1.xpose.msra.mxu0 0.0
      %4226 = vmatprep.subr.mxu0 0.0
      %4227 = vmatpush1.xpose.msra.mxu0 0.0
      %4228 = vmatprep.subr.mxu0 0.0
      %4229 = vmatpush1.xpose.msra.mxu0 0.0
      %4230 = vmatprep.subr.mxu0 0.0
      %4231 = vmatpush1.xpose.msra.mxu0 0.0
      %4232 = vmatprep.subr.mxu0 0.0
      %4233 = vmatpush1.xpose.msra.mxu0 0.0
      %4234 = vmatprep.subr.mxu0 0.0
      %4235 = vmatpush1.xpose.msra.mxu0 0.0
      %4236 = vmatprep.subr.mxu0 0.0
      %4237 = vmatpush1.xpose.msra.mxu0 0.0
      %4238 = vmatprep.subr.mxu0 0.0
      %4239 = vmatpush1.xpose.msra.mxu0 0.0
      %4240 = vmatprep.subr.mxu0 0.0
      %4241 = vmatpush1.xpose.msra.mxu0 0.0
      %4242 = vmatprep.subr.mxu0 0.0
      %4243 = vmatpush1.xpose.msra.mxu0 0.0
      %4244 = vmatprep.subr.mxu0 0.0
      %4245 = vmatpush1.xpose.msra.mxu0 0.0
      %4246 = vmatprep.subr.mxu0 0.0
      %4247 = vmatpush1.xpose.msra.mxu0 0.0
      %4248 = vmatprep.subr.mxu0 0.0
      %4249 = vmatpush1.xpose.msra.mxu0 0.0
      %4250 = vmatprep.subr.mxu0 0.0
      %4251 = vmatpush1.xpose.msra.mxu0 0.0
      %4252 = vmatprep.subr.mxu0 0.0
      %4253 = vmatpush1.xpose.msra.mxu0 0.0
      %4254 = vmatprep.subr.mxu0 0.0
      %4255 = vmatpush1.xpose.msra.mxu0 0.0
      %4256 = vmatprep.subr.mxu0 0.0
      %4257 = vmatpush1.xpose.msra.mxu0 0.0
      %4258 = vmatprep.subr.mxu0 0.0
      %4259 = vmatpush1.xpose.msra.mxu0 0.0
      %4260 = vmatprep.subr.mxu0 0.0
      %4261 = vmatpush1.xpose.msra.mxu0 0.0
      %4262 = vmatprep.subr.mxu0 0.0
      %4263 = vmatpush1.xpose.msra.mxu0 0.0
      %4264 = vmatprep.subr.mxu0 0.0
      %4265 = vmatpush1.xpose.msra.mxu0 0.0
      %4266 = vmatprep.subr.mxu0 0.0
      %4267 = vmatpush1.xpose.msra.mxu0 0.0
      %4268 = vmatprep.mubr.f32.mxu0 0.0
      %4269 = vmatmul.mubr.f32.gmra.mrb[0].mxu0 %v4121
      %v4270 = vpop.f32.mrb[0].mxu0
      %v4271 = vadd.f32 %v4201, %v4270
      %v4272 = vpop.f32.mrb[0].mxu0
      %4273 = vdwg.mxu0
      %v4274 = vld [vmem:[#allocation3 + $0x15] sm:$0xff]
      %v4275 = vld [vmem:[#allocation3 + $0x1d] sm:$0xff]
      %v4276 = vld [vmem:[#allocation3 + $0x25] sm:$0xff]
      %v4277 = vld [vmem:[#allocation3 + $0x2d] sm:$0xff]
      %v4278 = vld [vmem:[#allocation3 + $0x35] sm:$0xff]
      %v4279 = vld [vmem:[#allocation3 + $0x3d] sm:$0xff]
      %v4280 = vld [vmem:[#allocation3 + $0x45] sm:$0xff]
      %v4281 = vld [vmem:[#allocation3 + $0x4d] sm:$0xff]
      %v4282 = vld [vmem:[#allocation3 + $0x55] sm:$0xff]
      %v4283 = vld [vmem:[#allocation3 + $0x5d] sm:$0xff]
      %s4284 = scalar_lea.vmem %s5, 6
      %v4285 = vld [vmem:[%s4284] sm:$0x3]
      %v4286 = vld [vmem:[#allocation3 + $0xb] sm:$0xff]
      %v4287 = vld [vmem:[#allocation3 + $0x13] sm:$0xff]
      %v4288 = vld [vmem:[#allocation3 + $0x1b] sm:$0xff]
      %v4289 = vld [vmem:[#allocation3 + $0x23] sm:$0xff]
      %v4290 = vld [vmem:[#allocation3 + $0x2b] sm:$0xff]
      %v4291 = vld [vmem:[#allocation3 + $0x33] sm:$0xff]
      %v4292 = vld [vmem:[#allocation3 + $0x3b] sm:$0xff]
      %v4293 = vld [vmem:[#allocation3 + $0x43] sm:$0xff]
      %v4294 = vld [vmem:[#allocation3 + $0x4b] sm:$0xff]
      %v4295 = vld [vmem:[#allocation3 + $0x53] sm:$0xff]
      %s4296 = scalar_lea.vmem %s5, 8
      %v4297 = vld [vmem:[%s4296] sm:$0x3]
      %4298 = vmatprep.subr.mxu0 0.0
      %4299 = vmatpush1.xpose.msra.mxu0 %v4286
      %4300 = vmatprep.subr.mxu0 0.0
      %4301 = vmatpush1.xpose.msra.mxu0 %v4287
      %4302 = vmatprep.subr.mxu0 0.0
      %4303 = vmatpush1.xpose.msra.mxu0 %v4288
      %4304 = vmatprep.subr.mxu0 0.0
      %4305 = vmatpush1.xpose.msra.mxu0 %v4289
      %4306 = vmatprep.subr.mxu0 0.0
      %4307 = vmatpush1.xpose.msra.mxu0 %v4290
      %4308 = vmatprep.subr.mxu0 0.0
      %4309 = vmatpush1.xpose.msra.mxu0 %v4291
      %4310 = vmatprep.subr.mxu0 0.0
      %4311 = vmatpush1.xpose.msra.mxu0 %v4292
      %4312 = vmatprep.subr.mxu0 0.0
      %4313 = vmatpush1.xpose.msra.mxu0 %v4293
      %4314 = vmatprep.subr.mxu0 0.0
      %4315 = vmatpush1.xpose.msra.mxu0 %v4294
      %4316 = vmatprep.subr.mxu0 0.0
      %4317 = vmatpush1.xpose.msra.mxu0 %v4295
      %4318 = vmatprep.subr.mxu0 0.0
      %4319 = vmatpush1.xpose.msra.mxu0 0.0
      %4320 = vmatprep.subr.mxu0 0.0
      %4321 = vmatpush1.xpose.msra.mxu0 0.0
      %4322 = vmatprep.subr.mxu0 0.0
      %4323 = vmatpush1.xpose.msra.mxu0 0.0
      %4324 = vmatprep.subr.mxu0 0.0
      %4325 = vmatpush1.xpose.msra.mxu0 0.0
      %4326 = vmatprep.subr.mxu0 0.0
      %4327 = vmatpush1.xpose.msra.mxu0 0.0
      %4328 = vmatprep.subr.mxu0 0.0
      %4329 = vmatpush1.xpose.msra.mxu0 0.0
      %4330 = vmatprep.subr.mxu0 0.0
      %4331 = vmatpush1.xpose.msra.mxu0 0.0
      %4332 = vmatprep.subr.mxu0 0.0
      %4333 = vmatpush1.xpose.msra.mxu0 0.0
      %4334 = vmatprep.subr.mxu0 0.0
      %4335 = vmatpush1.xpose.msra.mxu0 0.0
      %4336 = vmatprep.subr.mxu0 0.0
      %4337 = vmatpush1.xpose.msra.mxu0 0.0
      %4338 = vmatprep.subr.mxu0 0.0
      %4339 = vmatpush1.xpose.msra.mxu0 0.0
      %4340 = vmatprep.subr.mxu0 0.0
      %4341 = vmatpush1.xpose.msra.mxu0 0.0
      %4342 = vmatprep.subr.mxu0 0.0
      %4343 = vmatpush1.xpose.msra.mxu0 0.0
      %4344 = vmatprep.subr.mxu0 0.0
      %4345 = vmatpush1.xpose.msra.mxu0 0.0
      %4346 = vmatprep.subr.mxu0 0.0
      %4347 = vmatpush1.xpose.msra.mxu0 0.0
      %4348 = vmatprep.subr.mxu0 0.0
      %4349 = vmatpush1.xpose.msra.mxu0 0.0
      %4350 = vmatprep.subr.mxu0 0.0
      %4351 = vmatpush1.xpose.msra.mxu0 0.0
      %4352 = vmatprep.subr.mxu0 0.0
      %4353 = vmatpush1.xpose.msra.mxu0 0.0
      %4354 = vmatprep.subr.mxu0 0.0
      %4355 = vmatpush1.xpose.msra.mxu0 0.0
      %4356 = vmatprep.subr.mxu0 0.0
      %4357 = vmatpush1.xpose.msra.mxu0 0.0
      %4358 = vmatprep.subr.mxu0 0.0
      %4359 = vmatpush1.xpose.msra.mxu0 0.0
      %4360 = vmatprep.subr.mxu0 0.0
      %4361 = vmatpush1.xpose.msra.mxu0 0.0
      %4362 = vmatprep.mubr.f32.mxu0 0.0
      %4363 = vmatmul.mubr.f32.gmra.mrb[0].mxu0 %v4297
      %v4364 = vpop.f32.mrb[0].mxu0
      %v4365 = vadd.f32 0.0, %v4364
      %v4366 = vpop.f32.mrb[0].mxu0
      %4367 = vdwg.mxu0
      %4368 = vmatprep.subr.mxu0 0.0
      %4369 = vmatpush1.xpose.msra.mxu0 %v4274
      %4370 = vmatprep.subr.mxu0 0.0
      %4371 = vmatpush1.xpose.msra.mxu0 %v4275
      %4372 = vmatprep.subr.mxu0 0.0
      %4373 = vmatpush1.xpose.msra.mxu0 %v4276
      %4374 = vmatprep.subr.mxu0 0.0
      %4375 = vmatpush1.xpose.msra.mxu0 %v4277
      %4376 = vmatprep.subr.mxu0 0.0
      %4377 = vmatpush1.xpose.msra.mxu0 %v4278
      %4378 = vmatprep.subr.mxu0 0.0
      %4379 = vmatpush1.xpose.msra.mxu0 %v4279
      %4380 = vmatprep.subr.mxu0 0.0
      %4381 = vmatpush1.xpose.msra.mxu0 %v4280
      %4382 = vmatprep.subr.mxu0 0.0
      %4383 = vmatpush1.xpose.msra.mxu0 %v4281
      %4384 = vmatprep.subr.mxu0 0.0
      %4385 = vmatpush1.xpose.msra.mxu0 %v4282
      %4386 = vmatprep.subr.mxu0 0.0
      %4387 = vmatpush1.xpose.msra.mxu0 %v4283
      %4388 = vmatprep.subr.mxu0 0.0
      %4389 = vmatpush1.xpose.msra.mxu0 0.0
      %4390 = vmatprep.subr.mxu0 0.0
      %4391 = vmatpush1.xpose.msra.mxu0 0.0
      %4392 = vmatprep.subr.mxu0 0.0
      %4393 = vmatpush1.xpose.msra.mxu0 0.0
      %4394 = vmatprep.subr.mxu0 0.0
      %4395 = vmatpush1.xpose.msra.mxu0 0.0
      %4396 = vmatprep.subr.mxu0 0.0
      %4397 = vmatpush1.xpose.msra.mxu0 0.0
      %4398 = vmatprep.subr.mxu0 0.0
      %4399 = vmatpush1.xpose.msra.mxu0 0.0
      %4400 = vmatprep.subr.mxu0 0.0
      %4401 = vmatpush1.xpose.msra.mxu0 0.0
      %4402 = vmatprep.subr.mxu0 0.0
      %4403 = vmatpush1.xpose.msra.mxu0 0.0
      %4404 = vmatprep.subr.mxu0 0.0
      %4405 = vmatpush1.xpose.msra.mxu0 0.0
      %4406 = vmatprep.subr.mxu0 0.0
      %4407 = vmatpush1.xpose.msra.mxu0 0.0
      %4408 = vmatprep.subr.mxu0 0.0
      %4409 = vmatpush1.xpose.msra.mxu0 0.0
      %4410 = vmatprep.subr.mxu0 0.0
      %4411 = vmatpush1.xpose.msra.mxu0 0.0
      %4412 = vmatprep.subr.mxu0 0.0
      %4413 = vmatpush1.xpose.msra.mxu0 0.0
      %4414 = vmatprep.subr.mxu0 0.0
      %4415 = vmatpush1.xpose.msra.mxu0 0.0
      %4416 = vmatprep.subr.mxu0 0.0
      %4417 = vmatpush1.xpose.msra.mxu0 0.0
      %4418 = vmatprep.subr.mxu0 0.0
      %4419 = vmatpush1.xpose.msra.mxu0 0.0
      %4420 = vmatprep.subr.mxu0 0.0
      %4421 = vmatpush1.xpose.msra.mxu0 0.0
      %4422 = vmatprep.subr.mxu0 0.0
      %4423 = vmatpush1.xpose.msra.mxu0 0.0
      %4424 = vmatprep.subr.mxu0 0.0
      %4425 = vmatpush1.xpose.msra.mxu0 0.0
      %4426 = vmatprep.subr.mxu0 0.0
      %4427 = vmatpush1.xpose.msra.mxu0 0.0
      %4428 = vmatprep.subr.mxu0 0.0
      %4429 = vmatpush1.xpose.msra.mxu0 0.0
      %4430 = vmatprep.subr.mxu0 0.0
      %4431 = vmatpush1.xpose.msra.mxu0 0.0
      %4432 = vmatprep.mubr.f32.mxu0 0.0
      %4433 = vmatmul.mubr.f32.gmra.mrb[0].mxu0 %v4285
      %v4434 = vpop.f32.mrb[0].mxu0
      %v4435 = vadd.f32 %v4365, %v4434
      %v4436 = vpop.f32.mrb[0].mxu0
      %4437 = vdwg.mxu0
      %v4438 = vld [vmem:[#allocation3 + $0x16] sm:$0xff]
      %v4439 = vld [vmem:[#allocation3 + $0x1e] sm:$0xff]
      %v4440 = vld [vmem:[#allocation3 + $0x26] sm:$0xff]
      %v4441 = vld [vmem:[#allocation3 + $0x2e] sm:$0xff]
      %v4442 = vld [vmem:[#allocation3 + $0x36] sm:$0xff]
      %v4443 = vld [vmem:[#allocation3 + $0x3e] sm:$0xff]
      %v4444 = vld [vmem:[#allocation3 + $0x46] sm:$0xff]
      %v4445 = vld [vmem:[#allocation3 + $0x4e] sm:$0xff]
      %v4446 = vld [vmem:[#allocation3 + $0x56] sm:$0xff]
      %v4447 = vld [vmem:[#allocation3 + $0x5e] sm:$0xff]
      %s4448 = scalar_lea.vmem %s5, 10
      %v4449 = vld [vmem:[%s4448] sm:$0x3]
      %v4450 = vld [vmem:[#allocation3 + $0x15] sm:$0xff]
      %v4451 = vld [vmem:[#allocation3 + $0x1d] sm:$0xff]
      %v4452 = vld [vmem:[#allocation3 + $0x25] sm:$0xff]
      %v4453 = vld [vmem:[#allocation3 + $0x2d] sm:$0xff]
      %v4454 = vld [vmem:[#allocation3 + $0x35] sm:$0xff]
      %v4455 = vld [vmem:[#allocation3 + $0x3d] sm:$0xff]
      %v4456 = vld [vmem:[#allocation3 + $0x45] sm:$0xff]
      %v4457 = vld [vmem:[#allocation3 + $0x4d] sm:$0xff]
      %v4458 = vld [vmem:[#allocation3 + $0x55] sm:$0xff]
      %v4459 = vld [vmem:[#allocation3 + $0x5d] sm:$0xff]
      %s4460 = scalar_lea.vmem %s5, 12
      %v4461 = vld [vmem:[%s4460] sm:$0x3]
      %4462 = vmatprep.subr.mxu0 0.0
      %4463 = vmatpush1.xpose.msra.mxu0 %v4450
      %4464 = vmatprep.subr.mxu0 0.0
      %4465 = vmatpush1.xpose.msra.mxu0 %v4451
      %4466 = vmatprep.subr.mxu0 0.0
      %4467 = vmatpush1.xpose.msra.mxu0 %v4452
      %4468 = vmatprep.subr.mxu0 0.0
      %4469 = vmatpush1.xpose.msra.mxu0 %v4453
      %4470 = vmatprep.subr.mxu0 0.0
      %4471 = vmatpush1.xpose.msra.mxu0 %v4454
      %4472 = vmatprep.subr.mxu0 0.0
      %4473 = vmatpush1.xpose.msra.mxu0 %v4455
      %4474 = vmatprep.subr.mxu0 0.0
      %4475 = vmatpush1.xpose.msra.mxu0 %v4456
      %4476 = vmatprep.subr.mxu0 0.0
      %4477 = vmatpush1.xpose.msra.mxu0 %v4457
      %4478 = vmatprep.subr.mxu0 0.0
      %4479 = vmatpush1.xpose.msra.mxu0 %v4458
      %4480 = vmatprep.subr.mxu0 0.0
      %4481 = vmatpush1.xpose.msra.mxu0 %v4459
      %4482 = vmatprep.subr.mxu0 0.0
      %4483 = vmatpush1.xpose.msra.mxu0 0.0
      %4484 = vmatprep.subr.mxu0 0.0
      %4485 = vmatpush1.xpose.msra.mxu0 0.0
      %4486 = vmatprep.subr.mxu0 0.0
      %4487 = vmatpush1.xpose.msra.mxu0 0.0
      %4488 = vmatprep.subr.mxu0 0.0
      %4489 = vmatpush1.xpose.msra.mxu0 0.0
      %4490 = vmatprep.subr.mxu0 0.0
      %4491 = vmatpush1.xpose.msra.mxu0 0.0
      %4492 = vmatprep.subr.mxu0 0.0
      %4493 = vmatpush1.xpose.msra.mxu0 0.0
      %4494 = vmatprep.subr.mxu0 0.0
      %4495 = vmatpush1.xpose.msra.mxu0 0.0
      %4496 = vmatprep.subr.mxu0 0.0
      %4497 = vmatpush1.xpose.msra.mxu0 0.0
      %4498 = vmatprep.subr.mxu0 0.0
      %4499 = vmatpush1.xpose.msra.mxu0 0.0
      %4500 = vmatprep.subr.mxu0 0.0
      %4501 = vmatpush1.xpose.msra.mxu0 0.0
      %4502 = vmatprep.subr.mxu0 0.0
      %4503 = vmatpush1.xpose.msra.mxu0 0.0
      %4504 = vmatprep.subr.mxu0 0.0
      %4505 = vmatpush1.xpose.msra.mxu0 0.0
      %4506 = vmatprep.subr.mxu0 0.0
      %4507 = vmatpush1.xpose.msra.mxu0 0.0
      %4508 = vmatprep.subr.mxu0 0.0
      %4509 = vmatpush1.xpose.msra.mxu0 0.0
      %4510 = vmatprep.subr.mxu0 0.0
      %4511 = vmatpush1.xpose.msra.mxu0 0.0
      %4512 = vmatprep.subr.mxu0 0.0
      %4513 = vmatpush1.xpose.msra.mxu0 0.0
      %4514 = vmatprep.subr.mxu0 0.0
      %4515 = vmatpush1.xpose.msra.mxu0 0.0
      %4516 = vmatprep.subr.mxu0 0.0
      %4517 = vmatpush1.xpose.msra.mxu0 0.0
      %4518 = vmatprep.subr.mxu0 0.0
      %4519 = vmatpush1.xpose.msra.mxu0 0.0
      %4520 = vmatprep.subr.mxu0 0.0
      %4521 = vmatpush1.xpose.msra.mxu0 0.0
      %4522 = vmatprep.subr.mxu0 0.0
      %4523 = vmatpush1.xpose.msra.mxu0 0.0
      %4524 = vmatprep.subr.mxu0 0.0
      %4525 = vmatpush1.xpose.msra.mxu0 0.0
      %4526 = vmatprep.mubr.f32.mxu0 0.0
      %4527 = vmatmul.mubr.f32.gmra.mrb[0].mxu0 %v4461
      %v4528 = vpop.f32.mrb[0].mxu0
      %v4529 = vadd.f32 0.0, %v4528
      %v4530 = vpop.f32.mrb[0].mxu0
      %4531 = vdwg.mxu0
      %4532 = vmatprep.subr.mxu0 0.0
      %4533 = vmatpush1.xpose.msra.mxu0 %v4438
      %4534 = vmatprep.subr.mxu0 0.0
      %4535 = vmatpush1.xpose.msra.mxu0 %v4439
      %4536 = vmatprep.subr.mxu0 0.0
      %4537 = vmatpush1.xpose.msra.mxu0 %v4440
      %4538 = vmatprep.subr.mxu0 0.0
      %4539 = vmatpush1.xpose.msra.mxu0 %v4441
      %4540 = vmatprep.subr.mxu0 0.0
      %4541 = vmatpush1.xpose.msra.mxu0 %v4442
      %4542 = vmatprep.subr.mxu0 0.0
      %4543 = vmatpush1.xpose.msra.mxu0 %v4443
      %4544 = vmatprep.subr.mxu0 0.0
      %4545 = vmatpush1.xpose.msra.mxu0 %v4444
      %4546 = vmatprep.subr.mxu0 0.0
      %4547 = vmatpush1.xpose.msra.mxu0 %v4445
      %4548 = vmatprep.subr.mxu0 0.0
      %4549 = vmatpush1.xpose.msra.mxu0 %v4446
      %4550 = vmatprep.subr.mxu0 0.0
      %4551 = vmatpush1.xpose.msra.mxu0 %v4447
      %4552 = vmatprep.subr.mxu0 0.0
      %4553 = vmatpush1.xpose.msra.mxu0 0.0
      %4554 = vmatprep.subr.mxu0 0.0
      %4555 = vmatpush1.xpose.msra.mxu0 0.0
      %4556 = vmatprep.subr.mxu0 0.0
      %4557 = vmatpush1.xpose.msra.mxu0 0.0
      %4558 = vmatprep.subr.mxu0 0.0
      %4559 = vmatpush1.xpose.msra.mxu0 0.0
      %4560 = vmatprep.subr.mxu0 0.0
      %4561 = vmatpush1.xpose.msra.mxu0 0.0
      %4562 = vmatprep.subr.mxu0 0.0
      %4563 = vmatpush1.xpose.msra.mxu0 0.0
      %4564 = vmatprep.subr.mxu0 0.0
      %4565 = vmatpush1.xpose.msra.mxu0 0.0
      %4566 = vmatprep.subr.mxu0 0.0
      %4567 = vmatpush1.xpose.msra.mxu0 0.0
      %4568 = vmatprep.subr.mxu0 0.0
      %4569 = vmatpush1.xpose.msra.mxu0 0.0
      %4570 = vmatprep.subr.mxu0 0.0
      %4571 = vmatpush1.xpose.msra.mxu0 0.0
      %4572 = vmatprep.subr.mxu0 0.0
      %4573 = vmatpush1.xpose.msra.mxu0 0.0
      %4574 = vmatprep.subr.mxu0 0.0
      %4575 = vmatpush1.xpose.msra.mxu0 0.0
      %4576 = vmatprep.subr.mxu0 0.0
      %4577 = vmatpush1.xpose.msra.mxu0 0.0
      %4578 = vmatprep.subr.mxu0 0.0
      %4579 = vmatpush1.xpose.msra.mxu0 0.0
      %4580 = vmatprep.subr.mxu0 0.0
      %4581 = vmatpush1.xpose.msra.mxu0 0.0
      %4582 = vmatprep.subr.mxu0 0.0
      %4583 = vmatpush1.xpose.msra.mxu0 0.0
      %4584 = vmatprep.subr.mxu0 0.0
      %4585 = vmatpush1.xpose.msra.mxu0 0.0
      %4586 = vmatprep.subr.mxu0 0.0
      %4587 = vmatpush1.xpose.msra.mxu0 0.0
      %4588 = vmatprep.subr.mxu0 0.0
      %4589 = vmatpush1.xpose.msra.mxu0 0.0
      %4590 = vmatprep.subr.mxu0 0.0
      %4591 = vmatpush1.xpose.msra.mxu0 0.0
      %4592 = vmatprep.subr.mxu0 0.0
      %4593 = vmatpush1.xpose.msra.mxu0 0.0
      %4594 = vmatprep.subr.mxu0 0.0
      %4595 = vmatpush1.xpose.msra.mxu0 0.0
      %4596 = vmatprep.mubr.f32.mxu0 0.0
      %4597 = vmatmul.mubr.f32.gmra.mrb[0].mxu0 %v4449
      %v4598 = vpop.f32.mrb[0].mxu0
      %v4599 = vadd.f32 %v4529, %v4598
      %v4600 = vpop.f32.mrb[0].mxu0
      %4601 = vdwg.mxu0
      %v4602 = vld [vmem:[#allocation3 + $0xc] sm:$0xff]
      %v4603 = vld [vmem:[#allocation3 + $0x14] sm:$0xff]
      %v4604 = vld [vmem:[#allocation3 + $0x1c] sm:$0xff]
      %v4605 = vld [vmem:[#allocation3 + $0x24] sm:$0xff]
      %v4606 = vld [vmem:[#allocation3 + $0x2c] sm:$0xff]
      %v4607 = vld [vmem:[#allocation3 + $0x34] sm:$0xff]
      %v4608 = vld [vmem:[#allocation3 + $0x3c] sm:$0xff]
      %v4609 = vld [vmem:[#allocation3 + $0x44] sm:$0xff]
      %v4610 = vld [vmem:[#allocation3 + $0x4c] sm:$0xff]
      %v4611 = vld [vmem:[#allocation3 + $0x54] sm:$0xff]
      %s4612 = scalar_lea.vmem %s5, 14
      %v4613 = vld [vmem:[%s4612] sm:$0x3]
      %4614 = vmatprep.subr.mxu0 0.0
      %4615 = vmatpush1.xpose.msra.mxu0 %v4602
      %4616 = vmatprep.subr.mxu0 0.0
      %4617 = vmatpush1.xpose.msra.mxu0 %v4603
      %4618 = vmatprep.subr.mxu0 0.0
      %4619 = vmatpush1.xpose.msra.mxu0 %v4604
      %4620 = vmatprep.subr.mxu0 0.0
      %4621 = vmatpush1.xpose.msra.mxu0 %v4605
      %4622 = vmatprep.subr.mxu0 0.0
      %4623 = vmatpush1.xpose.msra.mxu0 %v4606
      %4624 = vmatprep.subr.mxu0 0.0
      %4625 = vmatpush1.xpose.msra.mxu0 %v4607
      %4626 = vmatprep.subr.mxu0 0.0
      %4627 = vmatpush1.xpose.msra.mxu0 %v4608
      %4628 = vmatprep.subr.mxu0 0.0
      %4629 = vmatpush1.xpose.msra.mxu0 %v4609
      %4630 = vmatprep.subr.mxu0 0.0
      %4631 = vmatpush1.xpose.msra.mxu0 %v4610
      %4632 = vmatprep.subr.mxu0 0.0
      %4633 = vmatpush1.xpose.msra.mxu0 %v4611
      %4634 = vmatprep.subr.mxu0 0.0
      %4635 = vmatpush1.xpose.msra.mxu0 0.0
      %4636 = vmatprep.subr.mxu0 0.0
      %4637 = vmatpush1.xpose.msra.mxu0 0.0
      %4638 = vmatprep.subr.mxu0 0.0
      %4639 = vmatpush1.xpose.msra.mxu0 0.0
      %4640 = vmatprep.subr.mxu0 0.0
      %4641 = vmatpush1.xpose.msra.mxu0 0.0
      %4642 = vmatprep.subr.mxu0 0.0
      %4643 = vmatpush1.xpose.msra.mxu0 0.0
      %4644 = vmatprep.subr.mxu0 0.0
      %4645 = vmatpush1.xpose.msra.mxu0 0.0
      %4646 = vmatprep.subr.mxu0 0.0
      %4647 = vmatpush1.xpose.msra.mxu0 0.0
      %4648 = vmatprep.subr.mxu0 0.0
      %4649 = vmatpush1.xpose.msra.mxu0 0.0
      %4650 = vmatprep.subr.mxu0 0.0
      %4651 = vmatpush1.xpose.msra.mxu0 0.0
      %4652 = vmatprep.subr.mxu0 0.0
      %4653 = vmatpush1.xpose.msra.mxu0 0.0
      %4654 = vmatprep.subr.mxu0 0.0
      %4655 = vmatpush1.xpose.msra.mxu0 0.0
      %4656 = vmatprep.subr.mxu0 0.0
      %4657 = vmatpush1.xpose.msra.mxu0 0.0
      %4658 = vmatprep.subr.mxu0 0.0
      %4659 = vmatpush1.xpose.msra.mxu0 0.0
      %4660 = vmatprep.subr.mxu0 0.0
      %4661 = vmatpush1.xpose.msra.mxu0 0.0
      %4662 = vmatprep.subr.mxu0 0.0
      %4663 = vmatpush1.xpose.msra.mxu0 0.0
      %4664 = vmatprep.subr.mxu0 0.0
      %4665 = vmatpush1.xpose.msra.mxu0 0.0
      %4666 = vmatprep.subr.mxu0 0.0
      %4667 = vmatpush1.xpose.msra.mxu0 0.0
      %4668 = vmatprep.subr.mxu0 0.0
      %4669 = vmatpush1.xpose.msra.mxu0 0.0
      %4670 = vmatprep.subr.mxu0 0.0
      %4671 = vmatpush1.xpose.msra.mxu0 0.0
      %4672 = vmatprep.subr.mxu0 0.0
      %4673 = vmatpush1.xpose.msra.mxu0 0.0
      %4674 = vmatprep.subr.mxu0 0.0
      %4675 = vmatpush1.xpose.msra.mxu0 0.0
      %4676 = vmatprep.subr.mxu0 0.0
      %4677 = vmatpush1.xpose.msra.mxu0 0.0
      %4678 = vmatprep.mubr.f32.mxu0 0.0
      %4679 = vmatmul.mubr.f32.gmra.mrb[0].mxu0 %v4613
      %v4680 = vpop.f32.mrb[0].mxu0
      %v4681 = vadd.f32 0.0, %v4680
      %v4682 = vpop.f32.mrb[0].mxu0
      %4683 = vdwg.mxu0
      %v4684 = vadd.f32 %v4599, %v4681
      %v4685 = vld [vmem:[#allocation3 + $0xb] sm:$0xff]
      %v4686 = vld [vmem:[#allocation3 + $0x13] sm:$0xff]
      %v4687 = vld [vmem:[#allocation3 + $0x1b] sm:$0xff]
      %v4688 = vld [vmem:[#allocation3 + $0x23] sm:$0xff]
      %v4689 = vld [vmem:[#allocation3 + $0x2b] sm:$0xff]
      %v4690 = vld [vmem:[#allocation3 + $0x33] sm:$0xff]
      %v4691 = vld [vmem:[#allocation3 + $0x3b] sm:$0xff]
      %v4692 = vld [vmem:[#allocation3 + $0x43] sm:$0xff]
      %v4693 = vld [vmem:[#allocation3 + $0x4b] sm:$0xff]
      %v4694 = vld [vmem:[#allocation3 + $0x53] sm:$0xff]
      %s4695 = scalar_lea.vmem %s5, 16
      %v4696 = vld [vmem:[%s4695] sm:$0x3]
      %4697 = vmatprep.subr.mxu0 0.0
      %4698 = vmatpush1.xpose.msra.mxu0 %v4685
      %4699 = vmatprep.subr.mxu0 0.0
      %4700 = vmatpush1.xpose.msra.mxu0 %v4686
      %4701 = vmatprep.subr.mxu0 0.0
      %4702 = vmatpush1.xpose.msra.mxu0 %v4687
      %4703 = vmatprep.subr.mxu0 0.0
      %4704 = vmatpush1.xpose.msra.mxu0 %v4688
      %4705 = vmatprep.subr.mxu0 0.0
      %4706 = vmatpush1.xpose.msra.mxu0 %v4689
      %4707 = vmatprep.subr.mxu0 0.0
      %4708 = vmatpush1.xpose.msra.mxu0 %v4690
      %4709 = vmatprep.subr.mxu0 0.0
      %4710 = vmatpush1.xpose.msra.mxu0 %v4691
      %4711 = vmatprep.subr.mxu0 0.0
      %4712 = vmatpush1.xpose.msra.mxu0 %v4692
      %4713 = vmatprep.subr.mxu0 0.0
      %4714 = vmatpush1.xpose.msra.mxu0 %v4693
      %4715 = vmatprep.subr.mxu0 0.0
      %4716 = vmatpush1.xpose.msra.mxu0 %v4694
      %4717 = vmatprep.subr.mxu0 0.0
      %4718 = vmatpush1.xpose.msra.mxu0 0.0
      %4719 = vmatprep.subr.mxu0 0.0
      %4720 = vmatpush1.xpose.msra.mxu0 0.0
      %4721 = vmatprep.subr.mxu0 0.0
      %4722 = vmatpush1.xpose.msra.mxu0 0.0
      %4723 = vmatprep.subr.mxu0 0.0
      %4724 = vmatpush1.xpose.msra.mxu0 0.0
      %4725 = vmatprep.subr.mxu0 0.0
      %4726 = vmatpush1.xpose.msra.mxu0 0.0
      %4727 = vmatprep.subr.mxu0 0.0
      %4728 = vmatpush1.xpose.msra.mxu0 0.0
      %4729 = vmatprep.subr.mxu0 0.0
      %4730 = vmatpush1.xpose.msra.mxu0 0.0
      %4731 = vmatprep.subr.mxu0 0.0
      %4732 = vmatpush1.xpose.msra.mxu0 0.0
      %4733 = vmatprep.subr.mxu0 0.0
      %4734 = vmatpush1.xpose.msra.mxu0 0.0
      %4735 = vmatprep.subr.mxu0 0.0
      %4736 = vmatpush1.xpose.msra.mxu0 0.0
      %4737 = vmatprep.subr.mxu0 0.0
      %4738 = vmatpush1.xpose.msra.mxu0 0.0
      %4739 = vmatprep.subr.mxu0 0.0
      %4740 = vmatpush1.xpose.msra.mxu0 0.0
      %4741 = vmatprep.subr.mxu0 0.0
      %4742 = vmatpush1.xpose.msra.mxu0 0.0
      %4743 = vmatprep.subr.mxu0 0.0
      %4744 = vmatpush1.xpose.msra.mxu0 0.0
      %4745 = vmatprep.subr.mxu0 0.0
      %4746 = vmatpush1.xpose.msra.mxu0 0.0
      %4747 = vmatprep.subr.mxu0 0.0
      %4748 = vmatpush1.xpose.msra.mxu0 0.0
      %4749 = vmatprep.subr.mxu0 0.0
      %4750 = vmatpush1.xpose.msra.mxu0 0.0
      %4751 = vmatprep.subr.mxu0 0.0
      %4752 = vmatpush1.xpose.msra.mxu0 0.0
      %4753 = vmatprep.subr.mxu0 0.0
      %4754 = vmatpush1.xpose.msra.mxu0 0.0
      %4755 = vmatprep.subr.mxu0 0.0
      %4756 = vmatpush1.xpose.msra.mxu0 0.0
      %4757 = vmatprep.subr.mxu0 0.0
      %4758 = vmatpush1.xpose.msra.mxu0 0.0
      %4759 = vmatprep.subr.mxu0 0.0
      %4760 = vmatpush1.xpose.msra.mxu0 0.0
      %4761 = vmatprep.mubr.f32.mxu0 0.0
      %4762 = vmatmul.mubr.f32.gmra.mrb[0].mxu0 %v4696
      %v4763 = vpop.f32.mrb[0].mxu0
      %v4764 = vadd.f32 0.0, %v4763
      %v4765 = vpop.f32.mrb[0].mxu0
      %4766 = vdwg.mxu0
      %v4767 = vadd.f32 %v4684, %v4764
      %v4768 = vld [vmem:[%s7] sm:$0xff]
      %v4769 = vld [vmem:[%s7 + $0x8] sm:$0xff]
      %v4770 = vld [vmem:[%s7 + $0x10] sm:$0xff]
      %v4771 = vld [vmem:[%s7 + $0x18] sm:$0xff]
      %v4772 = vld [vmem:[%s7 + $0x20] sm:$0xff]
      %v4773 = vld [vmem:[%s7 + $0x28] sm:$0xff]
      %v4774 = vld [vmem:[%s7 + $0x30] sm:$0xff]
      %v4775 = vld [vmem:[%s7 + $0x38] sm:$0xff]
      %v4776 = vld [vmem:[%s7 + $0x40] sm:$0xff]
      %v4777 = vld [vmem:[%s7 + $0x48] sm:$0xff]
      %v4778 = vld [vmem:[%s7 + $0x50] sm:$0xff]
      %v4779 = vld [vmem:[%s7 + $0x58] sm:$0xff]
      %v4780 = vld [vmem:[%s7 + $0x60] sm:$0xff]
      %v4781 = vld [vmem:[%s7 + $0x68] sm:$0xff]
      %v4782 = vld [vmem:[%s7 + $0x70] sm:$0xff]
      %v4783 = vld [vmem:[%s7 + $0x78] sm:$0xff]
      %v4784 = vld [vmem:[%s7 + $0x80] sm:$0xff]
      %v4785 = vld [vmem:[%s7 + $0x88] sm:$0xff]
      %v4786 = vld [vmem:[%s7 + $0x90] sm:$0xff]
      %v4787 = vld [vmem:[%s7 + $0x98] sm:$0xff]
      %s4788 = scalar_lea.vmem %s7, 160
      %v4789 = vld [vmem:[%s4788] sm:$0xff]
      %v4790 = vld [vmem:[%s4788 + $0x8] sm:$0xff]
      %v4791 = vld [vmem:[%s4788 + $0x10] sm:$0xff]
      %v4792 = vld [vmem:[%s4788 + $0x18] sm:$0xff]
      %v4793 = vld [vmem:[%s4788 + $0x20] sm:$0xff]
      %v4794 = vld [vmem:[%s4788 + $0x28] sm:$0xff]
      %v4795 = vld [vmem:[%s4788 + $0x30] sm:$0xff]
      %v4796 = vld [vmem:[%s4788 + $0x38] sm:$0xff]
      %v4797 = vld [vmem:[%s4788 + $0x40] sm:$0xff]
      %v4798 = vld [vmem:[%s4788 + $0x48] sm:$0xff]
      %v4799 = vld [vmem:[%s4788 + $0x50] sm:$0xff]
      %v4800 = vld [vmem:[%s4788 + $0x58] sm:$0xff]
      %v4801 = vld [vmem:[%s4788 + $0x60] sm:$0xff]
      %v4802 = vld [vmem:[%s4788 + $0x68] sm:$0xff]
      %v4803 = vld [vmem:[%s4788 + $0x70] sm:$0xff]
      %v4804 = vld [vmem:[%s4788 + $0x78] sm:$0xff]
      %v4805 = vld [vmem:[%s4788 + $0x80] sm:$0xff]
      %v4806 = vld [vmem:[%s4788 + $0x88] sm:$0xff]
      %v4807 = vld [vmem:[%s4788 + $0x90] sm:$0xff]
      %v4808 = vld [vmem:[%s4788 + $0x98] sm:$0xff]
      %vm4809 = vcmask 654336
      %v4811 = vsel %vm4809, %v4271, 0
      %4813 = vmatprep.subr.mxu0 %v4790
      %4814 = vmatpush1.msra.mxu0 %v4789
      %4815 = vmatprep.subr.mxu0 %v4792
      %4816 = vmatpush1.msra.mxu0 %v4791
      %4817 = vmatprep.subr.mxu0 %v4794
      %4818 = vmatpush1.msra.mxu0 %v4793
      %4819 = vmatprep.subr.mxu0 %v4796
      %4820 = vmatpush1.msra.mxu0 %v4795
      %4821 = vmatprep.subr.mxu0 %v4798
      %4822 = vmatpush1.msra.mxu0 %v4797
      %4823 = vmatprep.subr.mxu0 %v4800
      %4824 = vmatpush1.msra.mxu0 %v4799
      %4825 = vmatprep.subr.mxu0 %v4802
      %4826 = vmatpush1.msra.mxu0 %v4801
      %4827 = vmatprep.subr.mxu0 %v4804
      %4828 = vmatpush1.msra.mxu0 %v4803
      %4829 = vmatprep.subr.mxu0 %v4806
      %4830 = vmatpush1.msra.mxu0 %v4805
      %4831 = vmatprep.subr.mxu0 %v4808
      %4832 = vmatpush1.msra.mxu0 %v4807
      %4833 = vmatprep.subr.mxu0 0.0
      %4834 = vmatpush1.msra.mxu0 0.0
      %4835 = vmatprep.subr.mxu0 0.0
      %4836 = vmatpush1.msra.mxu0 0.0
      %4837 = vmatprep.subr.mxu0 0.0
      %4838 = vmatpush1.msra.mxu0 0.0
      %4839 = vmatprep.subr.mxu0 0.0
      %4840 = vmatpush1.msra.mxu0 0.0
      %4841 = vmatprep.subr.mxu0 0.0
      %4842 = vmatpush1.msra.mxu0 0.0
      %4843 = vmatprep.subr.mxu0 0.0
      %4844 = vmatpush1.msra.mxu0 0.0
      %4845 = vmatprep.subr.mxu0 0.0
      %4846 = vmatpush1.msra.mxu0 0.0
      %4847 = vmatprep.subr.mxu0 0.0
      %4848 = vmatpush1.msra.mxu0 0.0
      %4849 = vmatprep.subr.mxu0 0.0
      %4850 = vmatpush1.msra.mxu0 0.0
      %4851 = vmatprep.subr.mxu0 0.0
      %4852 = vmatpush1.msra.mxu0 0.0
      %4853 = vmatprep.subr.mxu0 0.0
      %4854 = vmatpush1.msra.mxu0 0.0
      %4855 = vmatprep.subr.mxu0 0.0
      %4856 = vmatpush1.msra.mxu0 0.0
      %4857 = vmatprep.subr.mxu0 0.0
      %4858 = vmatpush1.msra.mxu0 0.0
      %4859 = vmatprep.subr.mxu0 0.0
      %4860 = vmatpush1.msra.mxu0 0.0
      %4861 = vmatprep.subr.mxu0 0.0
      %4862 = vmatpush1.msra.mxu0 0.0
      %4863 = vmatprep.subr.mxu0 0.0
      %4864 = vmatpush1.msra.mxu0 0.0
      %4865 = vmatprep.subr.mxu0 0.0
      %4866 = vmatpush1.msra.mxu0 0.0
      %4867 = vmatprep.subr.mxu0 0.0
      %4868 = vmatpush1.msra.mxu0 0.0
      %4869 = vmatprep.subr.mxu0 0.0
      %4870 = vmatpush1.msra.mxu0 0.0
      %4871 = vmatprep.subr.mxu0 0.0
      %4872 = vmatpush1.msra.mxu0 0.0
      %4873 = vmatprep.subr.mxu0 0.0
      %4874 = vmatpush1.msra.mxu0 0.0
      %4875 = vmatprep.subr.mxu0 0.0
      %4876 = vmatpush1.msra.mxu0 0.0
      %4877 = vmatprep.mubr.f32.mxu0 0.0
      %4878 = vmatmul.mubr.f32.gmra.mrb[0].mxu0 %v4811
      %v4879 = vpop.f32.mrb[0].mxu0
      %v4880 = vadd.f32 0.0, %v4879
      %v4881 = vpop.f32.mrb[0].mxu0
      %v4882 = vadd.f32 0.0, %v4881
      %4883 = vdwg.mxu0
      %v4885 = vsel %vm4809, %v4107, 0
      %4887 = vmatprep.subr.mxu0 %v4769
      %4888 = vmatpush1.msra.mxu0 %v4768
      %4889 = vmatprep.subr.mxu0 %v4771
      %4890 = vmatpush1.msra.mxu0 %v4770
      %4891 = vmatprep.subr.mxu0 %v4773
      %4892 = vmatpush1.msra.mxu0 %v4772
      %4893 = vmatprep.subr.mxu0 %v4775
      %4894 = vmatpush1.msra.mxu0 %v4774
      %4895 = vmatprep.subr.mxu0 %v4777
      %4896 = vmatpush1.msra.mxu0 %v4776
      %4897 = vmatprep.subr.mxu0 %v4779
      %4898 = vmatpush1.msra.mxu0 %v4778
      %4899 = vmatprep.subr.mxu0 %v4781
      %4900 = vmatpush1.msra.mxu0 %v4780
      %4901 = vmatprep.subr.mxu0 %v4783
      %4902 = vmatpush1.msra.mxu0 %v4782
      %4903 = vmatprep.subr.mxu0 %v4785
      %4904 = vmatpush1.msra.mxu0 %v4784
      %4905 = vmatprep.subr.mxu0 %v4787
      %4906 = vmatpush1.msra.mxu0 %v4786
      %4907 = vmatprep.subr.mxu0 0.0
      %4908 = vmatpush1.msra.mxu0 0.0
      %4909 = vmatprep.subr.mxu0 0.0
      %4910 = vmatpush1.msra.mxu0 0.0
      %4911 = vmatprep.subr.mxu0 0.0
      %4912 = vmatpush1.msra.mxu0 0.0
      %4913 = vmatprep.subr.mxu0 0.0
      %4914 = vmatpush1.msra.mxu0 0.0
      %4915 = vmatprep.subr.mxu0 0.0
      %4916 = vmatpush1.msra.mxu0 0.0
      %4917 = vmatprep.subr.mxu0 0.0
      %4918 = vmatpush1.msra.mxu0 0.0
      %4919 = vmatprep.subr.mxu0 0.0
      %4920 = vmatpush1.msra.mxu0 0.0
      %4921 = vmatprep.subr.mxu0 0.0
      %4922 = vmatpush1.msra.mxu0 0.0
      %4923 = vmatprep.subr.mxu0 0.0
      %4924 = vmatpush1.msra.mxu0 0.0
      %4925 = vmatprep.subr.mxu0 0.0
      %4926 = vmatpush1.msra.mxu0 0.0
      %4927 = vmatprep.subr.mxu0 0.0
      %4928 = vmatpush1.msra.mxu0 0.0
      %4929 = vmatprep.subr.mxu0 0.0
      %4930 = vmatpush1.msra.mxu0 0.0
      %4931 = vmatprep.subr.mxu0 0.0
      %4932 = vmatpush1.msra.mxu0 0.0
      %4933 = vmatprep.subr.mxu0 0.0
      %4934 = vmatpush1.msra.mxu0 0.0
      %4935 = vmatprep.subr.mxu0 0.0
      %4936 = vmatpush1.msra.mxu0 0.0
      %4937 = vmatprep.subr.mxu0 0.0
      %4938 = vmatpush1.msra.mxu0 0.0
      %4939 = vmatprep.subr.mxu0 0.0
      %4940 = vmatpush1.msra.mxu0 0.0
      %4941 = vmatprep.subr.mxu0 0.0
      %4942 = vmatpush1.msra.mxu0 0.0
      %4943 = vmatprep.subr.mxu0 0.0
      %4944 = vmatpush1.msra.mxu0 0.0
      %4945 = vmatprep.subr.mxu0 0.0
      %4946 = vmatpush1.msra.mxu0 0.0
      %4947 = vmatprep.subr.mxu0 0.0
      %4948 = vmatpush1.msra.mxu0 0.0
      %4949 = vmatprep.subr.mxu0 0.0
      %4950 = vmatpush1.msra.mxu0 0.0
      %4951 = vmatprep.mubr.f32.mxu0 0.0
      %4952 = vmatmul.mubr.f32.gmra.mrb[0].mxu0 %v4885
      %v4953 = vpop.f32.mrb[0].mxu0
      %v4954 = vadd.f32 %v4880, %v4953
      %v4955 = vpop.f32.mrb[0].mxu0
      %v4956 = vadd.f32 %v4882, %v4955
      %4957 = vdwg.mxu0
      %s4958 = scalar_lea.vmem %s7, 320
      %v4959 = vld [vmem:[%s4958] sm:$0xff]
      %v4960 = vld [vmem:[%s4958 + $0x8] sm:$0xff]
      %v4961 = vld [vmem:[%s4958 + $0x10] sm:$0xff]
      %v4962 = vld [vmem:[%s4958 + $0x18] sm:$0xff]
      %v4963 = vld [vmem:[%s4958 + $0x20] sm:$0xff]
      %v4964 = vld [vmem:[%s4958 + $0x28] sm:$0xff]
      %v4965 = vld [vmem:[%s4958 + $0x30] sm:$0xff]
      %v4966 = vld [vmem:[%s4958 + $0x38] sm:$0xff]
      %v4967 = vld [vmem:[%s4958 + $0x40] sm:$0xff]
      %v4968 = vld [vmem:[%s4958 + $0x48] sm:$0xff]
      %v4969 = vld [vmem:[%s4958 + $0x50] sm:$0xff]
      %v4970 = vld [vmem:[%s4958 + $0x58] sm:$0xff]
      %v4971 = vld [vmem:[%s4958 + $0x60] sm:$0xff]
      %v4972 = vld [vmem:[%s4958 + $0x68] sm:$0xff]
      %v4973 = vld [vmem:[%s4958 + $0x70] sm:$0xff]
      %v4974 = vld [vmem:[%s4958 + $0x78] sm:$0xff]
      %v4975 = vld [vmem:[%s4958 + $0x80] sm:$0xff]
      %v4976 = vld [vmem:[%s4958 + $0x88] sm:$0xff]
      %v4977 = vld [vmem:[%s4958 + $0x90] sm:$0xff]
      %v4978 = vld [vmem:[%s4958 + $0x98] sm:$0xff]
      %v4980 = vsel %vm4809, %v4435, 0
      %4982 = vmatprep.subr.mxu0 %v4960
      %4983 = vmatpush1.msra.mxu0 %v4959
      %4984 = vmatprep.subr.mxu0 %v4962
      %4985 = vmatpush1.msra.mxu0 %v4961
      %4986 = vmatprep.subr.mxu0 %v4964
      %4987 = vmatpush1.msra.mxu0 %v4963
      %4988 = vmatprep.subr.mxu0 %v4966
      %4989 = vmatpush1.msra.mxu0 %v4965
      %4990 = vmatprep.subr.mxu0 %v4968
      %4991 = vmatpush1.msra.mxu0 %v4967
      %4992 = vmatprep.subr.mxu0 %v4970
      %4993 = vmatpush1.msra.mxu0 %v4969
      %4994 = vmatprep.subr.mxu0 %v4972
      %4995 = vmatpush1.msra.mxu0 %v4971
      %4996 = vmatprep.subr.mxu0 %v4974
      %4997 = vmatpush1.msra.mxu0 %v4973
      %4998 = vmatprep.subr.mxu0 %v4976
      %4999 = vmatpush1.msra.mxu0 %v4975
      %5000 = vmatprep.subr.mxu0 %v4978
      %5001 = vmatpush1.msra.mxu0 %v4977
      %5002 = vmatprep.subr.mxu0 0.0
      %5003 = vmatpush1.msra.mxu0 0.0
      %5004 = vmatprep.subr.mxu0 0.0
      %5005 = vmatpush1.msra.mxu0 0.0
      %5006 = vmatprep.subr.mxu0 0.0
      %5007 = vmatpush1.msra.mxu0 0.0
      %5008 = vmatprep.subr.mxu0 0.0
      %5009 = vmatpush1.msra.mxu0 0.0
      %5010 = vmatprep.subr.mxu0 0.0
      %5011 = vmatpush1.msra.mxu0 0.0
      %5012 = vmatprep.subr.mxu0 0.0
      %5013 = vmatpush1.msra.mxu0 0.0
      %5014 = vmatprep.subr.mxu0 0.0
      %5015 = vmatpush1.msra.mxu0 0.0
      %5016 = vmatprep.subr.mxu0 0.0
      %5017 = vmatpush1.msra.mxu0 0.0
      %5018 = vmatprep.subr.mxu0 0.0
      %5019 = vmatpush1.msra.mxu0 0.0
      %5020 = vmatprep.subr.mxu0 0.0
      %5021 = vmatpush1.msra.mxu0 0.0
      %5022 = vmatprep.subr.mxu0 0.0
      %5023 = vmatpush1.msra.mxu0 0.0
      %5024 = vmatprep.subr.mxu0 0.0
      %5025 = vmatpush1.msra.mxu0 0.0
      %5026 = vmatprep.subr.mxu0 0.0
      %5027 = vmatpush1.msra.mxu0 0.0
      %5028 = vmatprep.subr.mxu0 0.0
      %5029 = vmatpush1.msra.mxu0 0.0
      %5030 = vmatprep.subr.mxu0 0.0
      %5031 = vmatpush1.msra.mxu0 0.0
      %5032 = vmatprep.subr.mxu0 0.0
      %5033 = vmatpush1.msra.mxu0 0.0
      %5034 = vmatprep.subr.mxu0 0.0
      %5035 = vmatpush1.msra.mxu0 0.0
      %5036 = vmatprep.subr.mxu0 0.0
      %5037 = vmatpush1.msra.mxu0 0.0
      %5038 = vmatprep.subr.mxu0 0.0
      %5039 = vmatpush1.msra.mxu0 0.0
      %5040 = vmatprep.subr.mxu0 0.0
      %5041 = vmatpush1.msra.mxu0 0.0
      %5042 = vmatprep.subr.mxu0 0.0
      %5043 = vmatpush1.msra.mxu0 0.0
      %5044 = vmatprep.subr.mxu0 0.0
      %5045 = vmatpush1.msra.mxu0 0.0
      %5046 = vmatprep.mubr.f32.mxu0 0.0
      %5047 = vmatmul.mubr.f32.gmra.mrb[0].mxu0 %v4980
      %v5048 = vpop.f32.mrb[0].mxu0
      %v5049 = vadd.f32 0.0, %v5048
      %v5050 = vpop.f32.mrb[0].mxu0
      %v5051 = vadd.f32 0.0, %v5050
      %5052 = vdwg.mxu0
      %v5053 = vadd.f32 %v4954, %v5049
      %v5054 = vadd.f32 %v4956, %v5051
      %s5055 = scalar_lea.vmem %s7, 480
      %v5056 = vld [vmem:[%s5055] sm:$0xff]
      %v5057 = vld [vmem:[%s5055 + $0x8] sm:$0xff]
      %v5058 = vld [vmem:[%s5055 + $0x10] sm:$0xff]
      %v5059 = vld [vmem:[%s5055 + $0x18] sm:$0xff]
      %v5060 = vld [vmem:[%s5055 + $0x20] sm:$0xff]
      %v5061 = vld [vmem:[%s5055 + $0x28] sm:$0xff]
      %v5062 = vld [vmem:[%s5055 + $0x30] sm:$0xff]
      %v5063 = vld [vmem:[%s5055 + $0x38] sm:$0xff]
      %v5064 = vld [vmem:[%s5055 + $0x40] sm:$0xff]
      %v5065 = vld [vmem:[%s5055 + $0x48] sm:$0xff]
      %v5066 = vld [vmem:[%s5055 + $0x50] sm:$0xff]
      %v5067 = vld [vmem:[%s5055 + $0x58] sm:$0xff]
      %v5068 = vld [vmem:[%s5055 + $0x60] sm:$0xff]
      %v5069 = vld [vmem:[%s5055 + $0x68] sm:$0xff]
      %v5070 = vld [vmem:[%s5055 + $0x70] sm:$0xff]
      %v5071 = vld [vmem:[%s5055 + $0x78] sm:$0xff]
      %v5072 = vld [vmem:[%s5055 + $0x80] sm:$0xff]
      %v5073 = vld [vmem:[%s5055 + $0x88] sm:$0xff]
      %v5074 = vld [vmem:[%s5055 + $0x90] sm:$0xff]
      %v5075 = vld [vmem:[%s5055 + $0x98] sm:$0xff]
      %v5077 = vsel %vm4809, %v4767, 0
      %5079 = vmatprep.subr.mxu0 %v5057
      %5080 = vmatpush1.msra.mxu0 %v5056
      %5081 = vmatprep.subr.mxu0 %v5059
      %5082 = vmatpush1.msra.mxu0 %v5058
      %5083 = vmatprep.subr.mxu0 %v5061
      %5084 = vmatpush1.msra.mxu0 %v5060
      %5085 = vmatprep.subr.mxu0 %v5063
      %5086 = vmatpush1.msra.mxu0 %v5062
      %5087 = vmatprep.subr.mxu0 %v5065
      %5088 = vmatpush1.msra.mxu0 %v5064
      %5089 = vmatprep.subr.mxu0 %v5067
      %5090 = vmatpush1.msra.mxu0 %v5066
      %5091 = vmatprep.subr.mxu0 %v5069
      %5092 = vmatpush1.msra.mxu0 %v5068
      %5093 = vmatprep.subr.mxu0 %v5071
      %5094 = vmatpush1.msra.mxu0 %v5070
      %5095 = vmatprep.subr.mxu0 %v5073
      %5096 = vmatpush1.msra.mxu0 %v5072
      %5097 = vmatprep.subr.mxu0 %v5075
      %5098 = vmatpush1.msra.mxu0 %v5074
      %5099 = vmatprep.subr.mxu0 0.0
      %5100 = vmatpush1.msra.mxu0 0.0
      %5101 = vmatprep.subr.mxu0 0.0
      %5102 = vmatpush1.msra.mxu0 0.0
      %5103 = vmatprep.subr.mxu0 0.0
      %5104 = vmatpush1.msra.mxu0 0.0
      %5105 = vmatprep.subr.mxu0 0.0
      %5106 = vmatpush1.msra.mxu0 0.0
      %5107 = vmatprep.subr.mxu0 0.0
      %5108 = vmatpush1.msra.mxu0 0.0
      %5109 = vmatprep.subr.mxu0 0.0
      %5110 = vmatpush1.msra.mxu0 0.0
      %5111 = vmatprep.subr.mxu0 0.0
      %5112 = vmatpush1.msra.mxu0 0.0
      %5113 = vmatprep.subr.mxu0 0.0
      %5114 = vmatpush1.msra.mxu0 0.0
      %5115 = vmatprep.subr.mxu0 0.0
      %5116 = vmatpush1.msra.mxu0 0.0
      %5117 = vmatprep.subr.mxu0 0.0
      %5118 = vmatpush1.msra.mxu0 0.0
      %5119 = vmatprep.subr.mxu0 0.0
      %5120 = vmatpush1.msra.mxu0 0.0
      %5121 = vmatprep.subr.mxu0 0.0
      %5122 = vmatpush1.msra.mxu0 0.0
      %5123 = vmatprep.subr.mxu0 0.0
      %5124 = vmatpush1.msra.mxu0 0.0
      %5125 = vmatprep.subr.mxu0 0.0
      %5126 = vmatpush1.msra.mxu0 0.0
      %5127 = vmatprep.subr.mxu0 0.0
      %5128 = vmatpush1.msra.mxu0 0.0
      %5129 = vmatprep.subr.mxu0 0.0
      %5130 = vmatpush1.msra.mxu0 0.0
      %5131 = vmatprep.subr.mxu0 0.0
      %5132 = vmatpush1.msra.mxu0 0.0
      %5133 = vmatprep.subr.mxu0 0.0
      %5134 = vmatpush1.msra.mxu0 0.0
      %5135 = vmatprep.subr.mxu0 0.0
      %5136 = vmatpush1.msra.mxu0 0.0
      %5137 = vmatprep.subr.mxu0 0.0
      %5138 = vmatpush1.msra.mxu0 0.0
      %5139 = vmatprep.subr.mxu0 0.0
      %5140 = vmatpush1.msra.mxu0 0.0
      %5141 = vmatprep.subr.mxu0 0.0
      %5142 = vmatpush1.msra.mxu0 0.0
      %5143 = vmatprep.mubr.f32.mxu0 0.0
      %5144 = vmatmul.mubr.f32.gmra.mrb[0].mxu0 %v5077
      %v5145 = vpop.f32.mrb[0].mxu0
      %v5146 = vadd.f32 0.0, %v5145
      %v5147 = vpop.f32.mrb[0].mxu0
      %v5148 = vadd.f32 0.0, %v5147
      %5149 = vdwg.mxu0
      %v5150 = vadd.f32 %v5053, %v5146
      %v5151 = vadd.f32 %v5054, %v5148
      %v5152 = vld [vmem:[%s6] sm:$0x3]
      %5154 = vset.pattern.permute.xlu0 0
      %5155 = vperm.xlu0 %5154, %v5152
      %v5156 = vpop.permute.xlu0 %5155
      %v5158 = vadd.f32 %v5150, %v5156
      %v5159 = vadd.f32 %v5151, %v5156
      %v5162 = vcombine.low %v5158, %v5159
      %v5164 = vunpack.c.l.s4 1983009808
      %v5165 = vunpack.c.0.s8 %v5164
      %v5166 = vlaneseq
      %v5167 = vshrl.u32 %v5166, 7
      %v5168 = vsub.s32 %v5165, %v5167
      %v5169 = vrot.slane %v5162, %v5168
      %5171 = vst [vmem:[%s332] sm:$0xf] %v5169
      %p5172 = scmp.lt.s32.totalorder %s20, 1
      %s5173 = scalar_select %p5172, %s20, 1
      %s5174 = smul.addr %s5173, 2
      %s5175 = smul.addr %s5174, 2
      %s5176 = scalar_lea.vmem %s9, %s5175
      // Predicated region
      $region57: #{balle2_decoder.1} parent=55 // pred_check
        %p5177 = pneg %p232
      $region58: #{balle2_decoder.1} parent=55 // pred_check_branch
        %5179 = sbr.rel (%p5177) target = $region60
      $region59: #{balle2_decoder.1} parent=55 // pred_region
        _
      $region60: #{balle2_decoder.1} parent=55 // pred_fallthru
        _
    $region56: #{balle2_decoder.1} parent=5 // pred_fallthru
      _
    %p5180 = scmp.le.s32.totalorder 2, %s15
    // Predicated region
    $region61: #{balle2_decoder.1} parent=5 // pred_check
      %p5181 = pneg %p5180
    $region62: #{balle2_decoder.1} parent=5 // pred_check_branch
      %5183 = sbr.rel (%p5181) target = $region64
    $region63: #{balle2_decoder.1} parent=5 // pred_region
      %s5184 = ssub.s32 %s15, 2
      // Predicated region
      $region65: #{balle2_decoder.1} parent=63 // pred_check
        %p5185 = pneg %p238
      $region66: #{balle2_decoder.1} parent=63 // pred_check_branch
        %5187 = sbr.rel (%p5185) target = $region68
      $region67: #{balle2_decoder.1} parent=63 // pred_region
        %p5188 = scmp.lt.s32.totalorder %s21, 1
        %s5189 = scalar_select %p5188, %s21, 1
        %s5190 = smul.addr %s5189, 2
        %s5191 = smul.addr %s5190, 2
        %s5192 = scalar_lea.vmem %s9, %s5191
      $region68: #{balle2_decoder.1} parent=63 // pred_fallthru
        _
    $region64: #{balle2_decoder.1} parent=5 // pred_fallthru
      _
  $region6: #{balle2_decoder.1} parent=0 // loop_footer
    %s19 = sadd.s32 1, %s15
  $region7: #{balle2_decoder.1} parent=0 // loop_footer_branch
    %14 = sbr.rel target = $region3
  $region8: #{balle2_decoder.1} parent=0 // loop_exit
    _

</llo_original>
